<compile_context>
chip_gen: v5e
topology: v5e:2x2
jax: 0.10.0
libtpu: 0.0.40
codegen_flags: <defaults>
</compile_context>

<pallas_src>
import functools

import jax
import jax.numpy as jnp
from jax.experimental import pallas as pl

# ----------------------------- config ---------------------------------------
V = 64          # vocab size
D = 32          # d_model
H = 4           # attention heads
DH = D // H     # head dim
FF = 64         # ffn hidden
NE = 2          # encoder layers
ND = 2          # decoder layers
MAXPOS = 64     # max positions (learned pos-emb has +2 offset rows)
PAD = 1         # pad_token_id (BART)
DEC_START = 2   # decoder_start_token_id (BART: eos)
NEG = -1e9      # additive mask value (finite -> NaN-free softmax)
LN_EPS = 1e-5
SCALE = float(DH) ** -0.5


# ------------------- in-kernel building blocks (on values) ------------------
def _dot(a, b):
    """a @ b on the MXU, f32 accumulation."""
    return jax.lax.dot_general(a, b, (((1,), (0,)), ((), ())),
                               preferred_element_type=jnp.float32)


def _dot_nt(a, b):
    """a @ b.T without materializing a transpose (per-head score matmul)."""
    return jax.lax.dot_general(a, b, (((1,), (1,)), ((), ())),
                               preferred_element_type=jnp.float32)


def _ln(x, g, b):
    x = x.astype(jnp.float32)
    mu = jnp.mean(x, axis=-1, keepdims=True)
    var = jnp.mean(jnp.square(x - mu), axis=-1, keepdims=True)
    return (x - mu) * jax.lax.rsqrt(var + LN_EPS) * g + b


def _mha(q, k, v, w_o, b_o, add_mask):
    """Multi-head attention with the head concat folded into the out-projection:
    out = sum_h softmax(q_h k_h^T + mask) v_h @ W_o[h*DH:(h+1)*DH, :] + b_o."""
    q = q * SCALE                                 # scale once, not per slice
    out = None
    for h in range(H):                            # static unroll
        sl = slice(h * DH, (h + 1) * DH)
        s = _dot_nt(q[:, sl], k[:, sl]) + add_mask
        s = s - jnp.max(s, axis=-1, keepdims=True)
        p = jnp.exp(s)
        # approx reciprocal = EUP path; swap for exact division if HF bit-parity needed.
        p = p * pl.reciprocal(jnp.sum(p, axis=-1, keepdims=True), approx=True)
        ctx_h = _dot(p, v[:, sl])                 # (Tq, DH)
        contrib = _dot(ctx_h, w_o[sl, :])         # fold concat into W_o rows
        out = contrib if out is None else out + contrib
    return out + b_o


def _self_attn(x, w_qkv, b_qkv, w_o, b_o, mask):
    qkv = _dot(x, w_qkv) + b_qkv                  # fused Q|K|V projection
    return _mha(qkv[:, :D], qkv[:, D:2 * D], qkv[:, 2 * D:], w_o, b_o, mask)


def _cross_attn(xq, xkv, w_q, b_q, w_kv, b_kv, w_o, b_o, mask):
    q = _dot(xq, w_q) + b_q
    kv = _dot(xkv, w_kv) + b_kv                   # fused K|V projection
    return _mha(q, kv[:, :D], kv[:, D:], w_o, b_o, mask)


def _ffn(x, w1, b1, w2, b2):
    h = jax.nn.gelu(_dot(x, w1) + b1, approximate=True)
    return _dot(h, w2) + b2


def _embed(ids, table, pos, nbatch):
    """In-kernel embedding gather: one-hot(ids) @ table on the MXU, plus the
    per-batch repeated learned positions (already offset by +2 in wrapper)."""
    m = ids.shape[0]
    v = table.shape[0]
    onehot = (jax.lax.broadcasted_iota(jnp.int32, (m, v), 1) == ids)
    x = _dot(onehot.astype(jnp.float32), table)
    return x + jnp.concatenate([pos] * nbatch, axis=0)


def _bids(mq, mk, per_q, per_k):
    """Row/col indices and batch ids for a stacked-batch (mq, mk) score matrix.
    Built with iota + threshold counting only (no integer div/mod)."""
    rq = jax.lax.broadcasted_iota(jnp.int32, (mq, mk), 0)
    ck = jax.lax.broadcasted_iota(jnp.int32, (mq, mk), 1)
    bq = jnp.zeros((mq, mk), jnp.int32)
    for b in range(1, mq // per_q):
        bq = bq + jnp.where(rq >= b * per_q, 1, 0)
    bk = jnp.zeros((mq, mk), jnp.int32)
    for b in range(1, mk // per_k):
        bk = bk + jnp.where(ck >= b * per_k, 1, 0)
    return rq, ck, bq, bk


# ----------------------------- the fused kernel ------------------------------
def _bart_kernel(*refs):
    (enc_ids, dec_ids, labels, enc_attn, dec_attn,
     shared, shared_t, pos_enc, pos_dec, lm_bias,
     e_lng, e_lnb, e_qkv_w, e_qkv_b, e_out_w, e_out_b, e_ln1g, e_ln1b,
     e_fc1w, e_fc1b, e_fc2w, e_fc2b, e_ln2g, e_ln2b,
     d_lng, d_lnb, d_sqkv_w, d_sqkv_b, d_sout_w, d_sout_b, d_ln1g, d_ln1b,
     d_cqw, d_cqb, d_ckvw, d_ckvb, d_coutw, d_coutb, d_ln2g, d_ln2b,
     d_fc1w, d_fc1b, d_fc2w, d_fc2b, d_ln3g, d_ln3b,
     logits_ref, loss_ref) = refs

    s_len = pos_enc.shape[0]
    t_len = pos_dec.shape[0]
    m_enc = enc_ids.shape[0]
    m_dec = dec_ids.shape[0]
    nb = m_enc // s_len

    table = shared[...]                                   # (V, D) VMEM-resident

    # ----------------------------- encoder ---------------------------------
    key_ok_e = enc_attn[...] > 0.5                        # (1, m_enc) bool
    _, _, bq, bk = _bids(m_enc, m_enc, s_len, s_len)
    enc_mask = jnp.where((bq == bk) & key_ok_e, 0.0, NEG)  # block-diag + pad

    x = _embed(enc_ids[...], table, pos_enc[...], nb)
    x = _ln(x, e_lng[...], e_lnb[...])
    for l in range(NE):
        a = _self_attn(x, e_qkv_w[l], e_qkv_b[l], e_out_w[l], e_out_b[l],
                       enc_mask)
        x = _ln(x + a, e_ln1g[l], e_ln1b[l])
        f = _ffn(x, e_fc1w[l], e_fc1b[l], e_fc2w[l], e_fc2b[l])
        x = _ln(x + f, e_ln2g[l], e_ln2b[l])
    enc_out = x                                            # stays in VMEM

    # ----------------------------- decoder ---------------------------------
    key_ok_d = dec_attn[...] > 0.5                         # (1, m_dec) bool
    rqd, ckd, bqd, bkd = _bids(m_dec, m_dec, t_len, t_len)
    # same-batch already enforced -> global row>=col equals per-batch causal
    dec_mask = jnp.where((bqd == bkd) & (rqd >= ckd) & key_ok_d, 0.0, NEG)
    _, _, bqc, bkc = _bids(m_dec, m_enc, t_len, s_len)
    cross_mask = jnp.where((bqc == bkc) & key_ok_e, 0.0, NEG)

    y = _embed(dec_ids[...], table, pos_dec[...], nb)
    y = _ln(y, d_lng[...], d_lnb[...])
    for l in range(ND):
        a = _self_attn(y, d_sqkv_w[l], d_sqkv_b[l], d_sout_w[l], d_sout_b[l],
                       dec_mask)
        y = _ln(y + a, d_ln1g[l], d_ln1b[l])
        c = _cross_attn(y, enc_out, d_cqw[l], d_cqb[l], d_ckvw[l], d_ckvb[l],
                        d_coutw[l], d_coutb[l], cross_mask)
        y = _ln(y + c, d_ln2g[l], d_ln2b[l])
        f = _ffn(y, d_fc1w[l], d_fc1b[l], d_fc2w[l], d_fc2b[l])
        y = _ln(y + f, d_ln3g[l], d_ln3b[l])

    # ----------------- tied LM head + masked-mean cross entropy -------------
    logits = _dot(y, shared_t[...]) + lm_bias[...]         # (m_dec, V)
    logits_ref[...] = logits.astype(logits_ref.dtype)
    mx = jnp.max(logits, axis=-1, keepdims=True)
    lse = jnp.log(jnp.sum(jnp.exp(logits - mx), axis=-1, keepdims=True)) + mx
    lbl = labels[...]                                      # (m_dec, 1) int32
    onehot = jax.lax.broadcasted_iota(jnp.int32, logits.shape, 1) == lbl
    tgt = jnp.sum(jnp.where(onehot, logits, 0.0), axis=-1, keepdims=True)
    valid = (lbl != -100).astype(jnp.float32)              # HF ignore_index
    num = jnp.sum((lse - tgt) * valid, axis=0, keepdims=True)
    den = jnp.maximum(jnp.sum(valid, axis=0, keepdims=True), 1.0)
    loss_ref[...] = num / den


# ----------------------------- model glue ------------------------------------
def init_params(key):
    p = {}
    cnt = [0]

    def nxt(shape, scale=0.02):
        cnt[0] += 1
        return jax.random.normal(jax.random.fold_in(key, cnt[0]),
                                 shape, jnp.float32) * scale

    def ones(s): return jnp.ones(s, jnp.float32)
    def zeros(s): return jnp.zeros(s, jnp.float32)

    p['shared'] = nxt((V, D))                  # tied token embedding
    p['pos'] = nxt((MAXPOS + 2, D))            # learned positions (+2 offset)
    p['final_logits_bias'] = zeros((1, V))

    # encoder (layer weights stacked on a leading axis; qkv fused on lanes)
    p['enc.ln_emb.g'], p['enc.ln_emb.b'] = ones((1, D)), zeros((1, D))
    p['enc.qkv.w'] = nxt((NE, D, 3 * D)); p['enc.qkv.b'] = zeros((NE, 1, 3 * D))
    p['enc.out.w'] = nxt((NE, D, D));     p['enc.out.b'] = zeros((NE, 1, D))
    p['enc.ln1.g'] = ones((NE, 1, D));    p['enc.ln1.b'] = zeros((NE, 1, D))
    p['enc.fc1.w'] = nxt((NE, D, FF));    p['enc.fc1.b'] = zeros((NE, 1, FF))
    p['enc.fc2.w'] = nxt((NE, FF, D));    p['enc.fc2.b'] = zeros((NE, 1, D))
    p['enc.ln2.g'] = ones((NE, 1, D));    p['enc.ln2.b'] = zeros((NE, 1, D))

    # decoder
    p['dec.ln_emb.g'], p['dec.ln_emb.b'] = ones((1, D)), zeros((1, D))
    p['dec.sqkv.w'] = nxt((ND, D, 3 * D)); p['dec.sqkv.b'] = zeros((ND, 1, 3 * D))
    p['dec.sout.w'] = nxt((ND, D, D));     p['dec.sout.b'] = zeros((ND, 1, D))
    p['dec.ln1.g'] = ones((ND, 1, D));     p['dec.ln1.b'] = zeros((ND, 1, D))
    p['dec.cq.w'] = nxt((ND, D, D));       p['dec.cq.b'] = zeros((ND, 1, D))
    p['dec.ckv.w'] = nxt((ND, D, 2 * D));  p['dec.ckv.b'] = zeros((ND, 1, 2 * D))
    p['dec.cout.w'] = nxt((ND, D, D));     p['dec.cout.b'] = zeros((ND, 1, D))
    p['dec.ln2.g'] = ones((ND, 1, D));     p['dec.ln2.b'] = zeros((ND, 1, D))
    p['dec.fc1.w'] = nxt((ND, D, FF));     p['dec.fc1.b'] = zeros((ND, 1, FF))
    p['dec.fc2.w'] = nxt((ND, FF, D));     p['dec.fc2.b'] = zeros((ND, 1, D))
    p['dec.ln3.g'] = ones((ND, 1, D));     p['dec.ln3.b'] = zeros((ND, 1, D))
    return p


def shift_tokens_right(labels, pad_id, start_id):
    shifted = jnp.zeros_like(labels)
    shifted = shifted.at[:, 1:].set(labels[:, :-1])
    shifted = shifted.at[:, 0].set(start_id)
    return jnp.where(shifted == -100, pad_id, shifted)


def bart_forward(params, input_ids, input_attn, target_ids, target_attn):
    """Mirrors BartForConditionalGeneration(input_ids, attention_mask,
    labels, decoder_attention_mask) -> {loss, logits}.  One pallas_call."""
    B, S = input_ids.shape
    T = target_ids.shape[1]
    decoder_input_ids = shift_tokens_right(target_ids, PAD, DEC_START)

    args = (
        input_ids.reshape(B * S, 1).astype(jnp.int32),          # enc token ids
        decoder_input_ids.reshape(B * T, 1).astype(jnp.int32),  # dec token ids
        target_ids.reshape(B * T, 1).astype(jnp.int32),         # CE labels
        input_attn.astype(jnp.float32).reshape(1, B * S),       # enc pad mask
        target_attn.astype(jnp.float32).reshape(1, B * T),      # dec pad mask
        params['shared'],                                        # (V, D)
        params['shared'].T,                                      # (D, V) LM head
        params['pos'][2:2 + S],                                  # learned pos (+2)
        params['pos'][2:2 + T],
        params['final_logits_bias'],
        params['enc.ln_emb.g'], params['enc.ln_emb.b'],
        params['enc.qkv.w'], params['enc.qkv.b'],
        params['enc.out.w'], params['enc.out.b'],
        params['enc.ln1.g'], params['enc.ln1.b'],
        params['enc.fc1.w'], params['enc.fc1.b'],
        params['enc.fc2.w'], params['enc.fc2.b'],
        params['enc.ln2.g'], params['enc.ln2.b'],
        params['dec.ln_emb.g'], params['dec.ln_emb.b'],
        params['dec.sqkv.w'], params['dec.sqkv.b'],
        params['dec.sout.w'], params['dec.sout.b'],
        params['dec.ln1.g'], params['dec.ln1.b'],
        params['dec.cq.w'], params['dec.cq.b'],
        params['dec.ckv.w'], params['dec.ckv.b'],
        params['dec.cout.w'], params['dec.cout.b'],
        params['dec.ln2.g'], params['dec.ln2.b'],
        params['dec.fc1.w'], params['dec.fc1.b'],
        params['dec.fc2.w'], params['dec.fc2.b'],
        params['dec.ln3.g'], params['dec.ln3.b'],
    )

    logits, loss = pl.pallas_call(
        _bart_kernel,
        out_shape=(jax.ShapeDtypeStruct((B * T, V), jnp.float32),
                   jax.ShapeDtypeStruct((1, 1), jnp.float32)),
    )(*args)
    # TODO(synk): at real distilbart sizes (D=1024, V~50k, 6+6 layers) this
    # all-weights-resident single-step design needs a layer grid axis with
    # pipelined weight DMA and a vocab-tiled online-logsumexp CE.
    return {'loss': loss[0, 0], 'logits': logits.reshape(B, T, V)}


# ----------------------------- main ------------------------------------------
if __name__ == "__main__":
    key = jax.random.PRNGKey(0)
    params = init_params(key)

    B, S, T = 2, 8, 8
    kid = jax.random.fold_in(key, 12345)
    input_ids = jax.random.randint(jax.random.fold_in(kid, 1), (B, S), 3, V,
                                   dtype=jnp.int32)
    input_attn = jnp.ones((B, S), jnp.int32).at[1, S - 2:].set(0)
    input_ids = jnp.where(input_attn == 0, PAD, input_ids)

    target_ids = jax.random.randint(jax.random.fold_in(kid, 2), (B, T), 3, V,
                                    dtype=jnp.int32)
    target_attn = jnp.ones((B, T), jnp.int32).at[1, T - 1:].set(0)
    # HF convention: padded label positions are -100 (ignored by the CE loss);
    # shift_tokens_right maps them back to PAD for the decoder inputs.
    target_ids = jnp.where(target_attn == 0, -100, target_ids)

    fwd = jax.jit(functools.partial(bart_forward, params))
    out = fwd(input_ids, input_attn, target_ids, target_attn)
    out = jax.block_until_ready(out)

    assert out['logits'].shape == (B, T, V)
    assert bool(jnp.isfinite(out['loss']))
    assert bool(jnp.all(jnp.isfinite(out['logits'])))
    print("KERNEL_OK")
</pallas_src>

<mosaic_0001>
module attributes {stable_mosaic.version = 11 : i64} {
  func.func @_bart_kernel(%arg0: memref<16x1xi32, #tpu.memory_space<vmem>>, %arg1: memref<16x1xi32, #tpu.memory_space<vmem>>, %arg2: memref<16x1xi32, #tpu.memory_space<vmem>>, %arg3: memref<1x16xf32, #tpu.memory_space<vmem>>, %arg4: memref<1x16xf32, #tpu.memory_space<vmem>>, %arg5: memref<64x32xf32, #tpu.memory_space<vmem>>, %arg6: memref<32x64xf32, #tpu.memory_space<vmem>>, %arg7: memref<8x32xf32, #tpu.memory_space<vmem>>, %arg8: memref<8x32xf32, #tpu.memory_space<vmem>>, %arg9: memref<1x64xf32, #tpu.memory_space<vmem>>, %arg10: memref<1x32xf32, #tpu.memory_space<vmem>>, %arg11: memref<1x32xf32, #tpu.memory_space<vmem>>, %arg12: memref<2x32x96xf32, #tpu.memory_space<vmem>>, %arg13: memref<2x1x96xf32, #tpu.memory_space<vmem>>, %arg14: memref<2x32x32xf32, #tpu.memory_space<vmem>>, %arg15: memref<2x1x32xf32, #tpu.memory_space<vmem>>, %arg16: memref<2x1x32xf32, #tpu.memory_space<vmem>>, %arg17: memref<2x1x32xf32, #tpu.memory_space<vmem>>, %arg18: memref<2x32x64xf32, #tpu.memory_space<vmem>>, %arg19: memref<2x1x64xf32, #tpu.memory_space<vmem>>, %arg20: memref<2x64x32xf32, #tpu.memory_space<vmem>>, %arg21: memref<2x1x32xf32, #tpu.memory_space<vmem>>, %arg22: memref<2x1x32xf32, #tpu.memory_space<vmem>>, %arg23: memref<2x1x32xf32, #tpu.memory_space<vmem>>, %arg24: memref<1x32xf32, #tpu.memory_space<vmem>>, %arg25: memref<1x32xf32, #tpu.memory_space<vmem>>, %arg26: memref<2x32x96xf32, #tpu.memory_space<vmem>>, %arg27: memref<2x1x96xf32, #tpu.memory_space<vmem>>, %arg28: memref<2x32x32xf32, #tpu.memory_space<vmem>>, %arg29: memref<2x1x32xf32, #tpu.memory_space<vmem>>, %arg30: memref<2x1x32xf32, #tpu.memory_space<vmem>>, %arg31: memref<2x1x32xf32, #tpu.memory_space<vmem>>, %arg32: memref<2x32x32xf32, #tpu.memory_space<vmem>>, %arg33: memref<2x1x32xf32, #tpu.memory_space<vmem>>, %arg34: memref<2x32x64xf32, #tpu.memory_space<vmem>>, %arg35: memref<2x1x64xf32, #tpu.memory_space<vmem>>, %arg36: memref<2x32x32xf32, #tpu.memory_space<vmem>>, %arg37: memref<2x1x32xf32, #tpu.memory_space<vmem>>, %arg38: memref<2x1x32xf32, #tpu.memory_space<vmem>>, %arg39: memref<2x1x32xf32, #tpu.memory_space<vmem>>, %arg40: memref<2x32x64xf32, #tpu.memory_space<vmem>>, %arg41: memref<2x1x64xf32, #tpu.memory_space<vmem>>, %arg42: memref<2x64x32xf32, #tpu.memory_space<vmem>>, %arg43: memref<2x1x32xf32, #tpu.memory_space<vmem>>, %arg44: memref<2x1x32xf32, #tpu.memory_space<vmem>>, %arg45: memref<2x1x32xf32, #tpu.memory_space<vmem>>, %arg46: memref<16x64xf32, #tpu.memory_space<vmem>>, %arg47: memref<1x1xf32, #tpu.memory_space<vmem>>) attributes {dimension_semantics = [], scalar_prefetch = 0 : i64, scratch_operands = 0 : i64, tpu.core_type = #tpu.core_type<tc>} {
    %c0 = arith.constant 0 : index
    %c0_0 = arith.constant 0 : index
    %0 = vector.load %arg5[%c0, %c0_0] : memref<64x32xf32, #tpu.memory_space<vmem>>, vector<64x32xf32>
    %c0_1 = arith.constant 0 : index
    %c0_2 = arith.constant 0 : index
    %1 = vector.load %arg3[%c0_1, %c0_2] : memref<1x16xf32, #tpu.memory_space<vmem>>, vector<1x16xf32>
    %cst = arith.constant 5.000000e-01 : f32
    %2 = vector.broadcast %cst : f32 to vector<1x16xf32>
    %3 = arith.cmpf ogt, %1, %2 : vector<1x16xf32>
    %4 = tpu.iota {dimensions = array<i32: 0>} : vector<16x16xi32>
    %5 = tpu.iota {dimensions = array<i32: 1>} : vector<16x16xi32>
    %c0_i32 = arith.constant 0 : i32
    %6 = vector.broadcast %c0_i32 : i32 to vector<16x16xi32>
    %c8_i32 = arith.constant 8 : i32
    %7 = vector.broadcast %c8_i32 : i32 to vector<16x16xi32>
    %8 = arith.cmpi sge, %4, %7 : vector<16x16xi32>
    %c1_i32 = arith.constant 1 : i32
    %c0_i32_3 = arith.constant 0 : i32
    %9 = vector.broadcast %c1_i32 : i32 to vector<16x16xi32>
    %10 = vector.broadcast %c0_i32_3 : i32 to vector<16x16xi32>
    %11 = arith.select %8, %9, %10 : vector<16x16xi1>, vector<16x16xi32>
    %12 = arith.addi %6, %11 : vector<16x16xi32>
    %c0_i32_4 = arith.constant 0 : i32
    %13 = vector.broadcast %c0_i32_4 : i32 to vector<16x16xi32>
    %c8_i32_5 = arith.constant 8 : i32
    %14 = vector.broadcast %c8_i32_5 : i32 to vector<16x16xi32>
    %15 = arith.cmpi sge, %5, %14 : vector<16x16xi32>
    %c1_i32_6 = arith.constant 1 : i32
    %c0_i32_7 = arith.constant 0 : i32
    %16 = vector.broadcast %c1_i32_6 : i32 to vector<16x16xi32>
    %17 = vector.broadcast %c0_i32_7 : i32 to vector<16x16xi32>
    %18 = arith.select %15, %16, %17 : vector<16x16xi1>, vector<16x16xi32>
    %19 = arith.addi %13, %18 : vector<16x16xi32>
    %20 = arith.cmpi eq, %12, %19 : vector<16x16xi32>
    %21 = vector.broadcast %3 : vector<1x16xi1> to vector<16x16xi1>
    %22 = arith.andi %20, %21 : vector<16x16xi1>
    %cst_8 = arith.constant 0.000000e+00 : f32
    %cst_9 = arith.constant -1.000000e+09 : f32
    %23 = vector.broadcast %cst_8 : f32 to vector<16x16xf32>
    %24 = vector.broadcast %cst_9 : f32 to vector<16x16xf32>
    %25 = arith.select %22, %23, %24 : vector<16x16xi1>, vector<16x16xf32>
    %c0_10 = arith.constant 0 : index
    %c0_11 = arith.constant 0 : index
    %26 = vector.load %arg0[%c0_10, %c0_11] : memref<16x1xi32, #tpu.memory_space<vmem>>, vector<16x1xi32>
    %c0_12 = arith.constant 0 : index
    %c0_13 = arith.constant 0 : index
    %27 = vector.load %arg7[%c0_12, %c0_13] : memref<8x32xf32, #tpu.memory_space<vmem>>, vector<8x32xf32>
    %28 = tpu.iota {dimensions = array<i32: 1>} : vector<16x64xi32>
    %29 = vector.broadcast %26 : vector<16x1xi32> to vector<16x64xi32>
    %30 = arith.cmpi eq, %28, %29 : vector<16x64xi32>
    %31 = arith.extui %30 : vector<16x64xi1> to vector<16x64xi32>
    %32 = arith.sitofp %31 : vector<16x64xi32> to vector<16x64xf32>
    %cst_14 = arith.constant dense<0.000000e+00> : vector<16x32xf32>
    %33 = tpu.matmul %32, %0, %cst_14 {dimension_numbers = #tpu.dot_dimension_numbers<[1], [0], [0], [1], [0, 0, 1, 1], [], []>} : vector<16x64xf32>, vector<64x32xf32>, vector<16x32xf32> -> vector<16x32xf32>
    %34 = tpu.concatenate %27, %27 in 0 : vector<8x32xf32>, vector<8x32xf32> -> vector<16x32xf32>
    %35 = arith.addf %33, %34 : vector<16x32xf32>
    %c0_15 = arith.constant 0 : index
    %c0_16 = arith.constant 0 : index
    %36 = vector.load %arg10[%c0_15, %c0_16] : memref<1x32xf32, #tpu.memory_space<vmem>>, vector<1x32xf32>
    %c0_17 = arith.constant 0 : index
    %c0_18 = arith.constant 0 : index
    %37 = vector.load %arg11[%c0_17, %c0_18] : memref<1x32xf32, #tpu.memory_space<vmem>>, vector<1x32xf32>
    %cst_19 = arith.constant dense<0.000000e+00> : vector<16xf32>
    %38 = vector.multi_reduction <add>, %35, %cst_19 [1] : vector<16x32xf32> to vector<16xf32>
    %39 = vector.shape_cast %38 : vector<16xf32> to vector<16x1xf32>
    %cst_20 = arith.constant 3.200000e+01 : f32
    %40 = vector.broadcast %cst_20 : f32 to vector<16x1xf32>
    %41 = arith.divf %39, %40 : vector<16x1xf32>
    %42 = vector.broadcast %41 : vector<16x1xf32> to vector<16x32xf32>
    %43 = arith.subf %35, %42 : vector<16x32xf32>
    %44 = arith.mulf %43, %43 : vector<16x32xf32>
    %cst_21 = arith.constant dense<0.000000e+00> : vector<16xf32>
    %45 = vector.multi_reduction <add>, %44, %cst_21 [1] : vector<16x32xf32> to vector<16xf32>
    %46 = vector.shape_cast %45 : vector<16xf32> to vector<16x1xf32>
    %cst_22 = arith.constant 3.200000e+01 : f32
    %47 = vector.broadcast %cst_22 : f32 to vector<16x1xf32>
    %48 = arith.divf %46, %47 : vector<16x1xf32>
    %49 = vector.broadcast %41 : vector<16x1xf32> to vector<16x32xf32>
    %50 = arith.subf %35, %49 : vector<16x32xf32>
    %cst_23 = arith.constant 9.99999974E-6 : f32
    %51 = vector.broadcast %cst_23 : f32 to vector<16x1xf32>
    %52 = arith.addf %48, %51 : vector<16x1xf32>
    %53 = math.rsqrt %52 : vector<16x1xf32>
    %54 = vector.broadcast %53 : vector<16x1xf32> to vector<16x32xf32>
    %55 = arith.mulf %50, %54 : vector<16x32xf32>
    %56 = vector.broadcast %36 : vector<1x32xf32> to vector<16x32xf32>
    %57 = arith.mulf %55, %56 : vector<16x32xf32>
    %58 = vector.broadcast %37 : vector<1x32xf32> to vector<16x32xf32>
    %59 = arith.addf %57, %58 : vector<16x32xf32>
    %c0_24 = arith.constant 0 : index
    %c0_25 = arith.constant 0 : index
    %c0_26 = arith.constant 0 : index
    %60 = vector.load %arg12[%c0_24, %c0_25, %c0_26] : memref<2x32x96xf32, #tpu.memory_space<vmem>>, vector<1x32x96xf32>
    %61 = vector.shape_cast %60 : vector<1x32x96xf32> to vector<32x96xf32>
    %c0_27 = arith.constant 0 : index
    %c0_28 = arith.constant 0 : index
    %c0_29 = arith.constant 0 : index
    %62 = vector.load %arg13[%c0_27, %c0_28, %c0_29] : memref<2x1x96xf32, #tpu.memory_space<vmem>>, vector<1x1x96xf32>
    %63 = vector.shape_cast %62 : vector<1x1x96xf32> to vector<1x96xf32>
    %c0_30 = arith.constant 0 : index
    %c0_31 = arith.constant 0 : index
    %c0_32 = arith.constant 0 : index
    %64 = vector.load %arg14[%c0_30, %c0_31, %c0_32] : memref<2x32x32xf32, #tpu.memory_space<vmem>>, vector<1x32x32xf32>
    %65 = vector.shape_cast %64 : vector<1x32x32xf32> to vector<32x32xf32>
    %c0_33 = arith.constant 0 : index
    %c0_34 = arith.constant 0 : index
    %c0_35 = arith.constant 0 : index
    %66 = vector.load %arg15[%c0_33, %c0_34, %c0_35] : memref<2x1x32xf32, #tpu.memory_space<vmem>>, vector<1x1x32xf32>
    %67 = vector.shape_cast %66 : vector<1x1x32xf32> to vector<1x32xf32>
    %cst_36 = arith.constant dense<0.000000e+00> : vector<16x96xf32>
    %68 = tpu.matmul %59, %61, %cst_36 {dimension_numbers = #tpu.dot_dimension_numbers<[1], [0], [0], [1], [0, 0, 1, 1], [], []>} : vector<16x32xf32>, vector<32x96xf32>, vector<16x96xf32> -> vector<16x96xf32>
    %69 = vector.broadcast %63 : vector<1x96xf32> to vector<16x96xf32>
    %70 = arith.addf %68, %69 : vector<16x96xf32>
    %71 = vector.extract_strided_slice %70 {offsets = [0, 0], sizes = [16, 32], strides = [1, 1]} : vector<16x96xf32> to vector<16x32xf32>
    %72 = vector.extract_strided_slice %70 {offsets = [0, 32], sizes = [16, 32], strides = [1, 1]} : vector<16x96xf32> to vector<16x32xf32>
    %73 = vector.extract_strided_slice %70 {offsets = [0, 64], sizes = [16, 32], strides = [1, 1]} : vector<16x96xf32> to vector<16x32xf32>
    %cst_37 = arith.constant 0.353553385 : f32
    %74 = vector.broadcast %cst_37 : f32 to vector<16x32xf32>
    %75 = arith.mulf %71, %74 : vector<16x32xf32>
    %76 = vector.extract_strided_slice %75 {offsets = [0, 0], sizes = [16, 8], strides = [1, 1]} : vector<16x32xf32> to vector<16x8xf32>
    %77 = vector.extract_strided_slice %72 {offsets = [0, 0], sizes = [16, 8], strides = [1, 1]} : vector<16x32xf32> to vector<16x8xf32>
    %cst_38 = arith.constant dense<0.000000e+00> : vector<16x16xf32>
    %78 = tpu.matmul %76, %77, %cst_38 {dimension_numbers = #tpu.dot_dimension_numbers<[1], [1], [0], [0], [0, 0, 1, 0], [], []>} : vector<16x8xf32>, vector<16x8xf32>, vector<16x16xf32> -> vector<16x16xf32>
    %79 = arith.addf %78, %25 : vector<16x16xf32>
    %cst_39 = arith.constant dense<0xFF800000> : vector<16xf32>
    %80 = vector.multi_reduction <maximumf>, %79, %cst_39 [1] : vector<16x16xf32> to vector<16xf32>
    %81 = vector.shape_cast %80 : vector<16xf32> to vector<16x1xf32>
    %82 = vector.broadcast %81 : vector<16x1xf32> to vector<16x16xf32>
    %83 = arith.subf %79, %82 : vector<16x16xf32>
    %84 = math.exp %83 : vector<16x16xf32>
    %cst_40 = arith.constant dense<0.000000e+00> : vector<16xf32>
    %85 = vector.multi_reduction <add>, %84, %cst_40 [1] : vector<16x16xf32> to vector<16xf32>
    %86 = vector.shape_cast %85 : vector<16xf32> to vector<16x1xf32>
    %87 = tpu.reciprocal %86 {approx = true} : vector<16x1xf32> -> vector<16x1xf32>
    %88 = vector.broadcast %87 : vector<16x1xf32> to vector<16x16xf32>
    %89 = arith.mulf %84, %88 : vector<16x16xf32>
    %90 = vector.extract_strided_slice %73 {offsets = [0, 0], sizes = [16, 8], strides = [1, 1]} : vector<16x32xf32> to vector<16x8xf32>
    %cst_41 = arith.constant dense<0.000000e+00> : vector<16x8xf32>
    %91 = tpu.matmul %89, %90, %cst_41 {dimension_numbers = #tpu.dot_dimension_numbers<[1], [0], [0], [1], [0, 0, 1, 1], [], []>} : vector<16x16xf32>, vector<16x8xf32>, vector<16x8xf32> -> vector<16x8xf32>
    %92 = vector.extract_strided_slice %65 {offsets = [0, 0], sizes = [8, 32], strides = [1, 1]} : vector<32x32xf32> to vector<8x32xf32>
    %cst_42 = arith.constant dense<0.000000e+00> : vector<16x32xf32>
    %93 = tpu.matmul %91, %92, %cst_42 {dimension_numbers = #tpu.dot_dimension_numbers<[1], [0], [0], [1], [0, 0, 1, 1], [], []>} : vector<16x8xf32>, vector<8x32xf32>, vector<16x32xf32> -> vector<16x32xf32>
    %94 = vector.extract_strided_slice %75 {offsets = [0, 8], sizes = [16, 8], strides = [1, 1]} : vector<16x32xf32> to vector<16x8xf32>
    %95 = vector.extract_strided_slice %72 {offsets = [0, 8], sizes = [16, 8], strides = [1, 1]} : vector<16x32xf32> to vector<16x8xf32>
    %cst_43 = arith.constant dense<0.000000e+00> : vector<16x16xf32>
    %96 = tpu.matmul %94, %95, %cst_43 {dimension_numbers = #tpu.dot_dimension_numbers<[1], [1], [0], [0], [0, 0, 1, 0], [], []>} : vector<16x8xf32>, vector<16x8xf32>, vector<16x16xf32> -> vector<16x16xf32>
    %97 = arith.addf %96, %25 : vector<16x16xf32>
    %cst_44 = arith.constant dense<0xFF800000> : vector<16xf32>
    %98 = vector.multi_reduction <maximumf>, %97, %cst_44 [1] : vector<16x16xf32> to vector<16xf32>
    %99 = vector.shape_cast %98 : vector<16xf32> to vector<16x1xf32>
    %100 = vector.broadcast %99 : vector<16x1xf32> to vector<16x16xf32>
    %101 = arith.subf %97, %100 : vector<16x16xf32>
    %102 = math.exp %101 : vector<16x16xf32>
    %cst_45 = arith.constant dense<0.000000e+00> : vector<16xf32>
    %103 = vector.multi_reduction <add>, %102, %cst_45 [1] : vector<16x16xf32> to vector<16xf32>
    %104 = vector.shape_cast %103 : vector<16xf32> to vector<16x1xf32>
    %105 = tpu.reciprocal %104 {approx = true} : vector<16x1xf32> -> vector<16x1xf32>
    %106 = vector.broadcast %105 : vector<16x1xf32> to vector<16x16xf32>
    %107 = arith.mulf %102, %106 : vector<16x16xf32>
    %108 = vector.extract_strided_slice %73 {offsets = [0, 8], sizes = [16, 8], strides = [1, 1]} : vector<16x32xf32> to vector<16x8xf32>
    %cst_46 = arith.constant dense<0.000000e+00> : vector<16x8xf32>
    %109 = tpu.matmul %107, %108, %cst_46 {dimension_numbers = #tpu.dot_dimension_numbers<[1], [0], [0], [1], [0, 0, 1, 1], [], []>} : vector<16x16xf32>, vector<16x8xf32>, vector<16x8xf32> -> vector<16x8xf32>
    %110 = vector.extract_strided_slice %65 {offsets = [8, 0], sizes = [8, 32], strides = [1, 1]} : vector<32x32xf32> to vector<8x32xf32>
    %cst_47 = arith.constant dense<0.000000e+00> : vector<16x32xf32>
    %111 = tpu.matmul %109, %110, %cst_47 {dimension_numbers = #tpu.dot_dimension_numbers<[1], [0], [0], [1], [0, 0, 1, 1], [], []>} : vector<16x8xf32>, vector<8x32xf32>, vector<16x32xf32> -> vector<16x32xf32>
    %112 = arith.addf %93, %111 : vector<16x32xf32>
    %113 = vector.extract_strided_slice %75 {offsets = [0, 16], sizes = [16, 8], strides = [1, 1]} : vector<16x32xf32> to vector<16x8xf32>
    %114 = vector.extract_strided_slice %72 {offsets = [0, 16], sizes = [16, 8], strides = [1, 1]} : vector<16x32xf32> to vector<16x8xf32>
    %cst_48 = arith.constant dense<0.000000e+00> : vector<16x16xf32>
    %115 = tpu.matmul %113, %114, %cst_48 {dimension_numbers = #tpu.dot_dimension_numbers<[1], [1], [0], [0], [0, 0, 1, 0], [], []>} : vector<16x8xf32>, vector<16x8xf32>, vector<16x16xf32> -> vector<16x16xf32>
    %116 = arith.addf %115, %25 : vector<16x16xf32>
    %cst_49 = arith.constant dense<0xFF800000> : vector<16xf32>
    %117 = vector.multi_reduction <maximumf>, %116, %cst_49 [1] : vector<16x16xf32> to vector<16xf32>
    %118 = vector.shape_cast %117 : vector<16xf32> to vector<16x1xf32>
    %119 = vector.broadcast %118 : vector<16x1xf32> to vector<16x16xf32>
    %120 = arith.subf %116, %119 : vector<16x16xf32>
    %121 = math.exp %120 : vector<16x16xf32>
    %cst_50 = arith.constant dense<0.000000e+00> : vector<16xf32>
    %122 = vector.multi_reduction <add>, %121, %cst_50 [1] : vector<16x16xf32> to vector<16xf32>
    %123 = vector.shape_cast %122 : vector<16xf32> to vector<16x1xf32>
    %124 = tpu.reciprocal %123 {approx = true} : vector<16x1xf32> -> vector<16x1xf32>
    %125 = vector.broadcast %124 : vector<16x1xf32> to vector<16x16xf32>
    %126 = arith.mulf %121, %125 : vector<16x16xf32>
    %127 = vector.extract_strided_slice %73 {offsets = [0, 16], sizes = [16, 8], strides = [1, 1]} : vector<16x32xf32> to vector<16x8xf32>
    %cst_51 = arith.constant dense<0.000000e+00> : vector<16x8xf32>
    %128 = tpu.matmul %126, %127, %cst_51 {dimension_numbers = #tpu.dot_dimension_numbers<[1], [0], [0], [1], [0, 0, 1, 1], [], []>} : vector<16x16xf32>, vector<16x8xf32>, vector<16x8xf32> -> vector<16x8xf32>
    %129 = vector.extract_strided_slice %65 {offsets = [16, 0], sizes = [8, 32], strides = [1, 1]} : vector<32x32xf32> to vector<8x32xf32>
    %cst_52 = arith.constant dense<0.000000e+00> : vector<16x32xf32>
    %130 = tpu.matmul %128, %129, %cst_52 {dimension_numbers = #tpu.dot_dimension_numbers<[1], [0], [0], [1], [0, 0, 1, 1], [], []>} : vector<16x8xf32>, vector<8x32xf32>, vector<16x32xf32> -> vector<16x32xf32>
    %131 = arith.addf %112, %130 : vector<16x32xf32>
    %132 = vector.extract_strided_slice %75 {offsets = [0, 24], sizes = [16, 8], strides = [1, 1]} : vector<16x32xf32> to vector<16x8xf32>
    %133 = vector.extract_strided_slice %72 {offsets = [0, 24], sizes = [16, 8], strides = [1, 1]} : vector<16x32xf32> to vector<16x8xf32>
    %cst_53 = arith.constant dense<0.000000e+00> : vector<16x16xf32>
    %134 = tpu.matmul %132, %133, %cst_53 {dimension_numbers = #tpu.dot_dimension_numbers<[1], [1], [0], [0], [0, 0, 1, 0], [], []>} : vector<16x8xf32>, vector<16x8xf32>, vector<16x16xf32> -> vector<16x16xf32>
    %135 = arith.addf %134, %25 : vector<16x16xf32>
    %cst_54 = arith.constant dense<0xFF800000> : vector<16xf32>
    %136 = vector.multi_reduction <maximumf>, %135, %cst_54 [1] : vector<16x16xf32> to vector<16xf32>
    %137 = vector.shape_cast %136 : vector<16xf32> to vector<16x1xf32>
    %138 = vector.broadcast %137 : vector<16x1xf32> to vector<16x16xf32>
    %139 = arith.subf %135, %138 : vector<16x16xf32>
    %140 = math.exp %139 : vector<16x16xf32>
    %cst_55 = arith.constant dense<0.000000e+00> : vector<16xf32>
    %141 = vector.multi_reduction <add>, %140, %cst_55 [1] : vector<16x16xf32> to vector<16xf32>
    %142 = vector.shape_cast %141 : vector<16xf32> to vector<16x1xf32>
    %143 = tpu.reciprocal %142 {approx = true} : vector<16x1xf32> -> vector<16x1xf32>
    %144 = vector.broadcast %143 : vector<16x1xf32> to vector<16x16xf32>
    %145 = arith.mulf %140, %144 : vector<16x16xf32>
    %146 = vector.extract_strided_slice %73 {offsets = [0, 24], sizes = [16, 8], strides = [1, 1]} : vector<16x32xf32> to vector<16x8xf32>
    %cst_56 = arith.constant dense<0.000000e+00> : vector<16x8xf32>
    %147 = tpu.matmul %145, %146, %cst_56 {dimension_numbers = #tpu.dot_dimension_numbers<[1], [0], [0], [1], [0, 0, 1, 1], [], []>} : vector<16x16xf32>, vector<16x8xf32>, vector<16x8xf32> -> vector<16x8xf32>
    %148 = vector.extract_strided_slice %65 {offsets = [24, 0], sizes = [8, 32], strides = [1, 1]} : vector<32x32xf32> to vector<8x32xf32>
    %cst_57 = arith.constant dense<0.000000e+00> : vector<16x32xf32>
    %149 = tpu.matmul %147, %148, %cst_57 {dimension_numbers = #tpu.dot_dimension_numbers<[1], [0], [0], [1], [0, 0, 1, 1], [], []>} : vector<16x8xf32>, vector<8x32xf32>, vector<16x32xf32> -> vector<16x32xf32>
    %150 = arith.addf %131, %149 : vector<16x32xf32>
    %151 = vector.broadcast %67 : vector<1x32xf32> to vector<16x32xf32>
    %152 = arith.addf %150, %151 : vector<16x32xf32>
    %153 = arith.addf %59, %152 : vector<16x32xf32>
    %c0_58 = arith.constant 0 : index
    %c0_59 = arith.constant 0 : index
    %c0_60 = arith.constant 0 : index
    %154 = vector.load %arg16[%c0_58, %c0_59, %c0_60] : memref<2x1x32xf32, #tpu.memory_space<vmem>>, vector<1x1x32xf32>
    %155 = vector.shape_cast %154 : vector<1x1x32xf32> to vector<1x32xf32>
    %c0_61 = arith.constant 0 : index
    %c0_62 = arith.constant 0 : index
    %c0_63 = arith.constant 0 : index
    %156 = vector.load %arg17[%c0_61, %c0_62, %c0_63] : memref<2x1x32xf32, #tpu.memory_space<vmem>>, vector<1x1x32xf32>
    %157 = vector.shape_cast %156 : vector<1x1x32xf32> to vector<1x32xf32>
    %cst_64 = arith.constant dense<0.000000e+00> : vector<16xf32>
    %158 = vector.multi_reduction <add>, %153, %cst_64 [1] : vector<16x32xf32> to vector<16xf32>
    %159 = vector.shape_cast %158 : vector<16xf32> to vector<16x1xf32>
    %cst_65 = arith.constant 3.200000e+01 : f32
    %160 = vector.broadcast %cst_65 : f32 to vector<16x1xf32>
    %161 = arith.divf %159, %160 : vector<16x1xf32>
    %162 = vector.broadcast %161 : vector<16x1xf32> to vector<16x32xf32>
    %163 = arith.subf %153, %162 : vector<16x32xf32>
    %164 = arith.mulf %163, %163 : vector<16x32xf32>
    %cst_66 = arith.constant dense<0.000000e+00> : vector<16xf32>
    %165 = vector.multi_reduction <add>, %164, %cst_66 [1] : vector<16x32xf32> to vector<16xf32>
    %166 = vector.shape_cast %165 : vector<16xf32> to vector<16x1xf32>
    %cst_67 = arith.constant 3.200000e+01 : f32
    %167 = vector.broadcast %cst_67 : f32 to vector<16x1xf32>
    %168 = arith.divf %166, %167 : vector<16x1xf32>
    %169 = vector.broadcast %161 : vector<16x1xf32> to vector<16x32xf32>
    %170 = arith.subf %153, %169 : vector<16x32xf32>
    %cst_68 = arith.constant 9.99999974E-6 : f32
    %171 = vector.broadcast %cst_68 : f32 to vector<16x1xf32>
    %172 = arith.addf %168, %171 : vector<16x1xf32>
    %173 = math.rsqrt %172 : vector<16x1xf32>
    %174 = vector.broadcast %173 : vector<16x1xf32> to vector<16x32xf32>
    %175 = arith.mulf %170, %174 : vector<16x32xf32>
    %176 = vector.broadcast %155 : vector<1x32xf32> to vector<16x32xf32>
    %177 = arith.mulf %175, %176 : vector<16x32xf32>
    %178 = vector.broadcast %157 : vector<1x32xf32> to vector<16x32xf32>
    %179 = arith.addf %177, %178 : vector<16x32xf32>
    %c0_69 = arith.constant 0 : index
    %c0_70 = arith.constant 0 : index
    %c0_71 = arith.constant 0 : index
    %180 = vector.load %arg18[%c0_69, %c0_70, %c0_71] : memref<2x32x64xf32, #tpu.memory_space<vmem>>, vector<1x32x64xf32>
    %181 = vector.shape_cast %180 : vector<1x32x64xf32> to vector<32x64xf32>
    %c0_72 = arith.constant 0 : index
    %c0_73 = arith.constant 0 : index
    %c0_74 = arith.constant 0 : index
    %182 = vector.load %arg19[%c0_72, %c0_73, %c0_74] : memref<2x1x64xf32, #tpu.memory_space<vmem>>, vector<1x1x64xf32>
    %183 = vector.shape_cast %182 : vector<1x1x64xf32> to vector<1x64xf32>
    %c0_75 = arith.constant 0 : index
    %c0_76 = arith.constant 0 : index
    %c0_77 = arith.constant 0 : index
    %184 = vector.load %arg20[%c0_75, %c0_76, %c0_77] : memref<2x64x32xf32, #tpu.memory_space<vmem>>, vector<1x64x32xf32>
    %185 = vector.shape_cast %184 : vector<1x64x32xf32> to vector<64x32xf32>
    %c0_78 = arith.constant 0 : index
    %c0_79 = arith.constant 0 : index
    %c0_80 = arith.constant 0 : index
    %186 = vector.load %arg21[%c0_78, %c0_79, %c0_80] : memref<2x1x32xf32, #tpu.memory_space<vmem>>, vector<1x1x32xf32>
    %187 = vector.shape_cast %186 : vector<1x1x32xf32> to vector<1x32xf32>
    %cst_81 = arith.constant dense<0.000000e+00> : vector<16x64xf32>
    %188 = tpu.matmul %179, %181, %cst_81 {dimension_numbers = #tpu.dot_dimension_numbers<[1], [0], [0], [1], [0, 0, 1, 1], [], []>} : vector<16x32xf32>, vector<32x64xf32>, vector<16x64xf32> -> vector<16x64xf32>
    %189 = vector.broadcast %183 : vector<1x64xf32> to vector<16x64xf32>
    %190 = arith.addf %188, %189 : vector<16x64xf32>
    %191 = arith.mulf %190, %190 : vector<16x64xf32>
    %192 = arith.mulf %190, %191 : vector<16x64xf32>
    %cst_82 = arith.constant 4.471500e-02 : f32
    %193 = vector.broadcast %cst_82 : f32 to vector<16x64xf32>
    %194 = arith.mulf %193, %192 : vector<16x64xf32>
    %195 = arith.addf %190, %194 : vector<16x64xf32>
    %cst_83 = arith.constant 0.797884583 : f32
    %196 = vector.broadcast %cst_83 : f32 to vector<16x64xf32>
    %197 = arith.mulf %196, %195 : vector<16x64xf32>
    %198 = math.tanh %197 : vector<16x64xf32>
    %cst_84 = arith.constant 1.000000e+00 : f32
    %199 = vector.broadcast %cst_84 : f32 to vector<16x64xf32>
    %200 = arith.addf %199, %198 : vector<16x64xf32>
    %cst_85 = arith.constant 5.000000e-01 : f32
    %201 = vector.broadcast %cst_85 : f32 to vector<16x64xf32>
    %202 = arith.mulf %201, %200 : vector<16x64xf32>
    %203 = arith.mulf %190, %202 : vector<16x64xf32>
    %cst_86 = arith.constant dense<0.000000e+00> : vector<16x32xf32>
    %204 = tpu.matmul %203, %185, %cst_86 {dimension_numbers = #tpu.dot_dimension_numbers<[1], [0], [0], [1], [0, 0, 1, 1], [], []>} : vector<16x64xf32>, vector<64x32xf32>, vector<16x32xf32> -> vector<16x32xf32>
    %205 = vector.broadcast %187 : vector<1x32xf32> to vector<16x32xf32>
    %206 = arith.addf %204, %205 : vector<16x32xf32>
    %207 = arith.addf %179, %206 : vector<16x32xf32>
    %c0_87 = arith.constant 0 : index
    %c0_88 = arith.constant 0 : index
    %c0_89 = arith.constant 0 : index
    %208 = vector.load %arg22[%c0_87, %c0_88, %c0_89] : memref<2x1x32xf32, #tpu.memory_space<vmem>>, vector<1x1x32xf32>
    %209 = vector.shape_cast %208 : vector<1x1x32xf32> to vector<1x32xf32>
    %c0_90 = arith.constant 0 : index
    %c0_91 = arith.constant 0 : index
    %c0_92 = arith.constant 0 : index
    %210 = vector.load %arg23[%c0_90, %c0_91, %c0_92] : memref<2x1x32xf32, #tpu.memory_space<vmem>>, vector<1x1x32xf32>
    %211 = vector.shape_cast %210 : vector<1x1x32xf32> to vector<1x32xf32>
    %cst_93 = arith.constant dense<0.000000e+00> : vector<16xf32>
    %212 = vector.multi_reduction <add>, %207, %cst_93 [1] : vector<16x32xf32> to vector<16xf32>
    %213 = vector.shape_cast %212 : vector<16xf32> to vector<16x1xf32>
    %cst_94 = arith.constant 3.200000e+01 : f32
    %214 = vector.broadcast %cst_94 : f32 to vector<16x1xf32>
    %215 = arith.divf %213, %214 : vector<16x1xf32>
    %216 = vector.broadcast %215 : vector<16x1xf32> to vector<16x32xf32>
    %217 = arith.subf %207, %216 : vector<16x32xf32>
    %218 = arith.mulf %217, %217 : vector<16x32xf32>
    %cst_95 = arith.constant dense<0.000000e+00> : vector<16xf32>
    %219 = vector.multi_reduction <add>, %218, %cst_95 [1] : vector<16x32xf32> to vector<16xf32>
    %220 = vector.shape_cast %219 : vector<16xf32> to vector<16x1xf32>
    %cst_96 = arith.constant 3.200000e+01 : f32
    %221 = vector.broadcast %cst_96 : f32 to vector<16x1xf32>
    %222 = arith.divf %220, %221 : vector<16x1xf32>
    %223 = vector.broadcast %215 : vector<16x1xf32> to vector<16x32xf32>
    %224 = arith.subf %207, %223 : vector<16x32xf32>
    %cst_97 = arith.constant 9.99999974E-6 : f32
    %225 = vector.broadcast %cst_97 : f32 to vector<16x1xf32>
    %226 = arith.addf %222, %225 : vector<16x1xf32>
    %227 = math.rsqrt %226 : vector<16x1xf32>
    %228 = vector.broadcast %227 : vector<16x1xf32> to vector<16x32xf32>
    %229 = arith.mulf %224, %228 : vector<16x32xf32>
    %230 = vector.broadcast %209 : vector<1x32xf32> to vector<16x32xf32>
    %231 = arith.mulf %229, %230 : vector<16x32xf32>
    %232 = vector.broadcast %211 : vector<1x32xf32> to vector<16x32xf32>
    %233 = arith.addf %231, %232 : vector<16x32xf32>
    %c1 = arith.constant 1 : index
    %c0_98 = arith.constant 0 : index
    %c0_99 = arith.constant 0 : index
    %234 = vector.load %arg12[%c1, %c0_98, %c0_99] : memref<2x32x96xf32, #tpu.memory_space<vmem>>, vector<1x32x96xf32>
    %235 = vector.shape_cast %234 : vector<1x32x96xf32> to vector<32x96xf32>
    %c1_100 = arith.constant 1 : index
    %c0_101 = arith.constant 0 : index
    %c0_102 = arith.constant 0 : index
    %236 = vector.load %arg13[%c1_100, %c0_101, %c0_102] : memref<2x1x96xf32, #tpu.memory_space<vmem>>, vector<1x1x96xf32>
    %237 = vector.shape_cast %236 : vector<1x1x96xf32> to vector<1x96xf32>
    %c1_103 = arith.constant 1 : index
    %c0_104 = arith.constant 0 : index
    %c0_105 = arith.constant 0 : index
    %238 = vector.load %arg14[%c1_103, %c0_104, %c0_105] : memref<2x32x32xf32, #tpu.memory_space<vmem>>, vector<1x32x32xf32>
    %239 = vector.shape_cast %238 : vector<1x32x32xf32> to vector<32x32xf32>
    %c1_106 = arith.constant 1 : index
    %c0_107 = arith.constant 0 : index
    %c0_108 = arith.constant 0 : index
    %240 = vector.load %arg15[%c1_106, %c0_107, %c0_108] : memref<2x1x32xf32, #tpu.memory_space<vmem>>, vector<1x1x32xf32>
    %241 = vector.shape_cast %240 : vector<1x1x32xf32> to vector<1x32xf32>
    %cst_109 = arith.constant dense<0.000000e+00> : vector<16x96xf32>
    %242 = tpu.matmul %233, %235, %cst_109 {dimension_numbers = #tpu.dot_dimension_numbers<[1], [0], [0], [1], [0, 0, 1, 1], [], []>} : vector<16x32xf32>, vector<32x96xf32>, vector<16x96xf32> -> vector<16x96xf32>
    %243 = vector.broadcast %237 : vector<1x96xf32> to vector<16x96xf32>
    %244 = arith.addf %242, %243 : vector<16x96xf32>
    %245 = vector.extract_strided_slice %244 {offsets = [0, 0], sizes = [16, 32], strides = [1, 1]} : vector<16x96xf32> to vector<16x32xf32>
    %246 = vector.extract_strided_slice %244 {offsets = [0, 32], sizes = [16, 32], strides = [1, 1]} : vector<16x96xf32> to vector<16x32xf32>
    %247 = vector.extract_strided_slice %244 {offsets = [0, 64], sizes = [16, 32], strides = [1, 1]} : vector<16x96xf32> to vector<16x32xf32>
    %cst_110 = arith.constant 0.353553385 : f32
    %248 = vector.broadcast %cst_110 : f32 to vector<16x32xf32>
    %249 = arith.mulf %245, %248 : vector<16x32xf32>
    %250 = vector.extract_strided_slice %249 {offsets = [0, 0], sizes = [16, 8], strides = [1, 1]} : vector<16x32xf32> to vector<16x8xf32>
    %251 = vector.extract_strided_slice %246 {offsets = [0, 0], sizes = [16, 8], strides = [1, 1]} : vector<16x32xf32> to vector<16x8xf32>
    %cst_111 = arith.constant dense<0.000000e+00> : vector<16x16xf32>
    %252 = tpu.matmul %250, %251, %cst_111 {dimension_numbers = #tpu.dot_dimension_numbers<[1], [1], [0], [0], [0, 0, 1, 0], [], []>} : vector<16x8xf32>, vector<16x8xf32>, vector<16x16xf32> -> vector<16x16xf32>
    %253 = arith.addf %252, %25 : vector<16x16xf32>
    %cst_112 = arith.constant dense<0xFF800000> : vector<16xf32>
    %254 = vector.multi_reduction <maximumf>, %253, %cst_112 [1] : vector<16x16xf32> to vector<16xf32>
    %255 = vector.shape_cast %254 : vector<16xf32> to vector<16x1xf32>
    %256 = vector.broadcast %255 : vector<16x1xf32> to vector<16x16xf32>
    %257 = arith.subf %253, %256 : vector<16x16xf32>
    %258 = math.exp %257 : vector<16x16xf32>
    %cst_113 = arith.constant dense<0.000000e+00> : vector<16xf32>
    %259 = vector.multi_reduction <add>, %258, %cst_113 [1] : vector<16x16xf32> to vector<16xf32>
    %260 = vector.shape_cast %259 : vector<16xf32> to vector<16x1xf32>
    %261 = tpu.reciprocal %260 {approx = true} : vector<16x1xf32> -> vector<16x1xf32>
    %262 = vector.broadcast %261 : vector<16x1xf32> to vector<16x16xf32>
    %263 = arith.mulf %258, %262 : vector<16x16xf32>
    %264 = vector.extract_strided_slice %247 {offsets = [0, 0], sizes = [16, 8], strides = [1, 1]} : vector<16x32xf32> to vector<16x8xf32>
    %cst_114 = arith.constant dense<0.000000e+00> : vector<16x8xf32>
    %265 = tpu.matmul %263, %264, %cst_114 {dimension_numbers = #tpu.dot_dimension_numbers<[1], [0], [0], [1], [0, 0, 1, 1], [], []>} : vector<16x16xf32>, vector<16x8xf32>, vector<16x8xf32> -> vector<16x8xf32>
    %266 = vector.extract_strided_slice %239 {offsets = [0, 0], sizes = [8, 32], strides = [1, 1]} : vector<32x32xf32> to vector<8x32xf32>
    %cst_115 = arith.constant dense<0.000000e+00> : vector<16x32xf32>
    %267 = tpu.matmul %265, %266, %cst_115 {dimension_numbers = #tpu.dot_dimension_numbers<[1], [0], [0], [1], [0, 0, 1, 1], [], []>} : vector<16x8xf32>, vector<8x32xf32>, vector<16x32xf32> -> vector<16x32xf32>
    %268 = vector.extract_strided_slice %249 {offsets = [0, 8], sizes = [16, 8], strides = [1, 1]} : vector<16x32xf32> to vector<16x8xf32>
    %269 = vector.extract_strided_slice %246 {offsets = [0, 8], sizes = [16, 8], strides = [1, 1]} : vector<16x32xf32> to vector<16x8xf32>
    %cst_116 = arith.constant dense<0.000000e+00> : vector<16x16xf32>
    %270 = tpu.matmul %268, %269, %cst_116 {dimension_numbers = #tpu.dot_dimension_numbers<[1], [1], [0], [0], [0, 0, 1, 0], [], []>} : vector<16x8xf32>, vector<16x8xf32>, vector<16x16xf32> -> vector<16x16xf32>
    %271 = arith.addf %270, %25 : vector<16x16xf32>
    %cst_117 = arith.constant dense<0xFF800000> : vector<16xf32>
    %272 = vector.multi_reduction <maximumf>, %271, %cst_117 [1] : vector<16x16xf32> to vector<16xf32>
    %273 = vector.shape_cast %272 : vector<16xf32> to vector<16x1xf32>
    %274 = vector.broadcast %273 : vector<16x1xf32> to vector<16x16xf32>
    %275 = arith.subf %271, %274 : vector<16x16xf32>
    %276 = math.exp %275 : vector<16x16xf32>
    %cst_118 = arith.constant dense<0.000000e+00> : vector<16xf32>
    %277 = vector.multi_reduction <add>, %276, %cst_118 [1] : vector<16x16xf32> to vector<16xf32>
    %278 = vector.shape_cast %277 : vector<16xf32> to vector<16x1xf32>
    %279 = tpu.reciprocal %278 {approx = true} : vector<16x1xf32> -> vector<16x1xf32>
    %280 = vector.broadcast %279 : vector<16x1xf32> to vector<16x16xf32>
    %281 = arith.mulf %276, %280 : vector<16x16xf32>
    %282 = vector.extract_strided_slice %247 {offsets = [0, 8], sizes = [16, 8], strides = [1, 1]} : vector<16x32xf32> to vector<16x8xf32>
    %cst_119 = arith.constant dense<0.000000e+00> : vector<16x8xf32>
    %283 = tpu.matmul %281, %282, %cst_119 {dimension_numbers = #tpu.dot_dimension_numbers<[1], [0], [0], [1], [0, 0, 1, 1], [], []>} : vector<16x16xf32>, vector<16x8xf32>, vector<16x8xf32> -> vector<16x8xf32>
    %284 = vector.extract_strided_slice %239 {offsets = [8, 0], sizes = [8, 32], strides = [1, 1]} : vector<32x32xf32> to vector<8x32xf32>
    %cst_120 = arith.constant dense<0.000000e+00> : vector<16x32xf32>
    %285 = tpu.matmul %283, %284, %cst_120 {dimension_numbers = #tpu.dot_dimension_numbers<[1], [0], [0], [1], [0, 0, 1, 1], [], []>} : vector<16x8xf32>, vector<8x32xf32>, vector<16x32xf32> -> vector<16x32xf32>
    %286 = arith.addf %267, %285 : vector<16x32xf32>
    %287 = vector.extract_strided_slice %249 {offsets = [0, 16], sizes = [16, 8], strides = [1, 1]} : vector<16x32xf32> to vector<16x8xf32>
    %288 = vector.extract_strided_slice %246 {offsets = [0, 16], sizes = [16, 8], strides = [1, 1]} : vector<16x32xf32> to vector<16x8xf32>
    %cst_121 = arith.constant dense<0.000000e+00> : vector<16x16xf32>
    %289 = tpu.matmul %287, %288, %cst_121 {dimension_numbers = #tpu.dot_dimension_numbers<[1], [1], [0], [0], [0, 0, 1, 0], [], []>} : vector<16x8xf32>, vector<16x8xf32>, vector<16x16xf32> -> vector<16x16xf32>
    %290 = arith.addf %289, %25 : vector<16x16xf32>
    %cst_122 = arith.constant dense<0xFF800000> : vector<16xf32>
    %291 = vector.multi_reduction <maximumf>, %290, %cst_122 [1] : vector<16x16xf32> to vector<16xf32>
    %292 = vector.shape_cast %291 : vector<16xf32> to vector<16x1xf32>
    %293 = vector.broadcast %292 : vector<16x1xf32> to vector<16x16xf32>
    %294 = arith.subf %290, %293 : vector<16x16xf32>
    %295 = math.exp %294 : vector<16x16xf32>
    %cst_123 = arith.constant dense<0.000000e+00> : vector<16xf32>
    %296 = vector.multi_reduction <add>, %295, %cst_123 [1] : vector<16x16xf32> to vector<16xf32>
    %297 = vector.shape_cast %296 : vector<16xf32> to vector<16x1xf32>
    %298 = tpu.reciprocal %297 {approx = true} : vector<16x1xf32> -> vector<16x1xf32>
    %299 = vector.broadcast %298 : vector<16x1xf32> to vector<16x16xf32>
    %300 = arith.mulf %295, %299 : vector<16x16xf32>
    %301 = vector.extract_strided_slice %247 {offsets = [0, 16], sizes = [16, 8], strides = [1, 1]} : vector<16x32xf32> to vector<16x8xf32>
    %cst_124 = arith.constant dense<0.000000e+00> : vector<16x8xf32>
    %302 = tpu.matmul %300, %301, %cst_124 {dimension_numbers = #tpu.dot_dimension_numbers<[1], [0], [0], [1], [0, 0, 1, 1], [], []>} : vector<16x16xf32>, vector<16x8xf32>, vector<16x8xf32> -> vector<16x8xf32>
    %303 = vector.extract_strided_slice %239 {offsets = [16, 0], sizes = [8, 32], strides = [1, 1]} : vector<32x32xf32> to vector<8x32xf32>
    %cst_125 = arith.constant dense<0.000000e+00> : vector<16x32xf32>
    %304 = tpu.matmul %302, %303, %cst_125 {dimension_numbers = #tpu.dot_dimension_numbers<[1], [0], [0], [1], [0, 0, 1, 1], [], []>} : vector<16x8xf32>, vector<8x32xf32>, vector<16x32xf32> -> vector<16x32xf32>
    %305 = arith.addf %286, %304 : vector<16x32xf32>
    %306 = vector.extract_strided_slice %249 {offsets = [0, 24], sizes = [16, 8], strides = [1, 1]} : vector<16x32xf32> to vector<16x8xf32>
    %307 = vector.extract_strided_slice %246 {offsets = [0, 24], sizes = [16, 8], strides = [1, 1]} : vector<16x32xf32> to vector<16x8xf32>
    %cst_126 = arith.constant dense<0.000000e+00> : vector<16x16xf32>
    %308 = tpu.matmul %306, %307, %cst_126 {dimension_numbers = #tpu.dot_dimension_numbers<[1], [1], [0], [0], [0, 0, 1, 0], [], []>} : vector<16x8xf32>, vector<16x8xf32>, vector<16x16xf32> -> vector<16x16xf32>
    %309 = arith.addf %308, %25 : vector<16x16xf32>
    %cst_127 = arith.constant dense<0xFF800000> : vector<16xf32>
    %310 = vector.multi_reduction <maximumf>, %309, %cst_127 [1] : vector<16x16xf32> to vector<16xf32>
    %311 = vector.shape_cast %310 : vector<16xf32> to vector<16x1xf32>
    %312 = vector.broadcast %311 : vector<16x1xf32> to vector<16x16xf32>
    %313 = arith.subf %309, %312 : vector<16x16xf32>
    %314 = math.exp %313 : vector<16x16xf32>
    %cst_128 = arith.constant dense<0.000000e+00> : vector<16xf32>
    %315 = vector.multi_reduction <add>, %314, %cst_128 [1] : vector<16x16xf32> to vector<16xf32>
    %316 = vector.shape_cast %315 : vector<16xf32> to vector<16x1xf32>
    %317 = tpu.reciprocal %316 {approx = true} : vector<16x1xf32> -> vector<16x1xf32>
    %318 = vector.broadcast %317 : vector<16x1xf32> to vector<16x16xf32>
    %319 = arith.mulf %314, %318 : vector<16x16xf32>
    %320 = vector.extract_strided_slice %247 {offsets = [0, 24], sizes = [16, 8], strides = [1, 1]} : vector<16x32xf32> to vector<16x8xf32>
    %cst_129 = arith.constant dense<0.000000e+00> : vector<16x8xf32>
    %321 = tpu.matmul %319, %320, %cst_129 {dimension_numbers = #tpu.dot_dimension_numbers<[1], [0], [0], [1], [0, 0, 1, 1], [], []>} : vector<16x16xf32>, vector<16x8xf32>, vector<16x8xf32> -> vector<16x8xf32>
    %322 = vector.extract_strided_slice %239 {offsets = [24, 0], sizes = [8, 32], strides = [1, 1]} : vector<32x32xf32> to vector<8x32xf32>
    %cst_130 = arith.constant dense<0.000000e+00> : vector<16x32xf32>
    %323 = tpu.matmul %321, %322, %cst_130 {dimension_numbers = #tpu.dot_dimension_numbers<[1], [0], [0], [1], [0, 0, 1, 1], [], []>} : vector<16x8xf32>, vector<8x32xf32>, vector<16x32xf32> -> vector<16x32xf32>
    %324 = arith.addf %305, %323 : vector<16x32xf32>
    %325 = vector.broadcast %241 : vector<1x32xf32> to vector<16x32xf32>
    %326 = arith.addf %324, %325 : vector<16x32xf32>
    %327 = arith.addf %233, %326 : vector<16x32xf32>
    %c1_131 = arith.constant 1 : index
    %c0_132 = arith.constant 0 : index
    %c0_133 = arith.constant 0 : index
    %328 = vector.load %arg16[%c1_131, %c0_132, %c0_133] : memref<2x1x32xf32, #tpu.memory_space<vmem>>, vector<1x1x32xf32>
    %329 = vector.shape_cast %328 : vector<1x1x32xf32> to vector<1x32xf32>
    %c1_134 = arith.constant 1 : index
    %c0_135 = arith.constant 0 : index
    %c0_136 = arith.constant 0 : index
    %330 = vector.load %arg17[%c1_134, %c0_135, %c0_136] : memref<2x1x32xf32, #tpu.memory_space<vmem>>, vector<1x1x32xf32>
    %331 = vector.shape_cast %330 : vector<1x1x32xf32> to vector<1x32xf32>
    %cst_137 = arith.constant dense<0.000000e+00> : vector<16xf32>
    %332 = vector.multi_reduction <add>, %327, %cst_137 [1] : vector<16x32xf32> to vector<16xf32>
    %333 = vector.shape_cast %332 : vector<16xf32> to vector<16x1xf32>
    %cst_138 = arith.constant 3.200000e+01 : f32
    %334 = vector.broadcast %cst_138 : f32 to vector<16x1xf32>
    %335 = arith.divf %333, %334 : vector<16x1xf32>
    %336 = vector.broadcast %335 : vector<16x1xf32> to vector<16x32xf32>
    %337 = arith.subf %327, %336 : vector<16x32xf32>
    %338 = arith.mulf %337, %337 : vector<16x32xf32>
    %cst_139 = arith.constant dense<0.000000e+00> : vector<16xf32>
    %339 = vector.multi_reduction <add>, %338, %cst_139 [1] : vector<16x32xf32> to vector<16xf32>
    %340 = vector.shape_cast %339 : vector<16xf32> to vector<16x1xf32>
    %cst_140 = arith.constant 3.200000e+01 : f32
    %341 = vector.broadcast %cst_140 : f32 to vector<16x1xf32>
    %342 = arith.divf %340, %341 : vector<16x1xf32>
    %343 = vector.broadcast %335 : vector<16x1xf32> to vector<16x32xf32>
    %344 = arith.subf %327, %343 : vector<16x32xf32>
    %cst_141 = arith.constant 9.99999974E-6 : f32
    %345 = vector.broadcast %cst_141 : f32 to vector<16x1xf32>
    %346 = arith.addf %342, %345 : vector<16x1xf32>
    %347 = math.rsqrt %346 : vector<16x1xf32>
    %348 = vector.broadcast %347 : vector<16x1xf32> to vector<16x32xf32>
    %349 = arith.mulf %344, %348 : vector<16x32xf32>
    %350 = vector.broadcast %329 : vector<1x32xf32> to vector<16x32xf32>
    %351 = arith.mulf %349, %350 : vector<16x32xf32>
    %352 = vector.broadcast %331 : vector<1x32xf32> to vector<16x32xf32>
    %353 = arith.addf %351, %352 : vector<16x32xf32>
    %c1_142 = arith.constant 1 : index
    %c0_143 = arith.constant 0 : index
    %c0_144 = arith.constant 0 : index
    %354 = vector.load %arg18[%c1_142, %c0_143, %c0_144] : memref<2x32x64xf32, #tpu.memory_space<vmem>>, vector<1x32x64xf32>
    %355 = vector.shape_cast %354 : vector<1x32x64xf32> to vector<32x64xf32>
    %c1_145 = arith.constant 1 : index
    %c0_146 = arith.constant 0 : index
    %c0_147 = arith.constant 0 : index
    %356 = vector.load %arg19[%c1_145, %c0_146, %c0_147] : memref<2x1x64xf32, #tpu.memory_space<vmem>>, vector<1x1x64xf32>
    %357 = vector.shape_cast %356 : vector<1x1x64xf32> to vector<1x64xf32>
    %c1_148 = arith.constant 1 : index
    %c0_149 = arith.constant 0 : index
    %c0_150 = arith.constant 0 : index
    %358 = vector.load %arg20[%c1_148, %c0_149, %c0_150] : memref<2x64x32xf32, #tpu.memory_space<vmem>>, vector<1x64x32xf32>
    %359 = vector.shape_cast %358 : vector<1x64x32xf32> to vector<64x32xf32>
    %c1_151 = arith.constant 1 : index
    %c0_152 = arith.constant 0 : index
    %c0_153 = arith.constant 0 : index
    %360 = vector.load %arg21[%c1_151, %c0_152, %c0_153] : memref<2x1x32xf32, #tpu.memory_space<vmem>>, vector<1x1x32xf32>
    %361 = vector.shape_cast %360 : vector<1x1x32xf32> to vector<1x32xf32>
    %cst_154 = arith.constant dense<0.000000e+00> : vector<16x64xf32>
    %362 = tpu.matmul %353, %355, %cst_154 {dimension_numbers = #tpu.dot_dimension_numbers<[1], [0], [0], [1], [0, 0, 1, 1], [], []>} : vector<16x32xf32>, vector<32x64xf32>, vector<16x64xf32> -> vector<16x64xf32>
    %363 = vector.broadcast %357 : vector<1x64xf32> to vector<16x64xf32>
    %364 = arith.addf %362, %363 : vector<16x64xf32>
    %365 = arith.mulf %364, %364 : vector<16x64xf32>
    %366 = arith.mulf %364, %365 : vector<16x64xf32>
    %cst_155 = arith.constant 4.471500e-02 : f32
    %367 = vector.broadcast %cst_155 : f32 to vector<16x64xf32>
    %368 = arith.mulf %367, %366 : vector<16x64xf32>
    %369 = arith.addf %364, %368 : vector<16x64xf32>
    %cst_156 = arith.constant 0.797884583 : f32
    %370 = vector.broadcast %cst_156 : f32 to vector<16x64xf32>
    %371 = arith.mulf %370, %369 : vector<16x64xf32>
    %372 = math.tanh %371 : vector<16x64xf32>
    %cst_157 = arith.constant 1.000000e+00 : f32
    %373 = vector.broadcast %cst_157 : f32 to vector<16x64xf32>
    %374 = arith.addf %373, %372 : vector<16x64xf32>
    %cst_158 = arith.constant 5.000000e-01 : f32
    %375 = vector.broadcast %cst_158 : f32 to vector<16x64xf32>
    %376 = arith.mulf %375, %374 : vector<16x64xf32>
    %377 = arith.mulf %364, %376 : vector<16x64xf32>
    %cst_159 = arith.constant dense<0.000000e+00> : vector<16x32xf32>
    %378 = tpu.matmul %377, %359, %cst_159 {dimension_numbers = #tpu.dot_dimension_numbers<[1], [0], [0], [1], [0, 0, 1, 1], [], []>} : vector<16x64xf32>, vector<64x32xf32>, vector<16x32xf32> -> vector<16x32xf32>
    %379 = vector.broadcast %361 : vector<1x32xf32> to vector<16x32xf32>
    %380 = arith.addf %378, %379 : vector<16x32xf32>
    %381 = arith.addf %353, %380 : vector<16x32xf32>
    %c1_160 = arith.constant 1 : index
    %c0_161 = arith.constant 0 : index
    %c0_162 = arith.constant 0 : index
    %382 = vector.load %arg22[%c1_160, %c0_161, %c0_162] : memref<2x1x32xf32, #tpu.memory_space<vmem>>, vector<1x1x32xf32>
    %383 = vector.shape_cast %382 : vector<1x1x32xf32> to vector<1x32xf32>
    %c1_163 = arith.constant 1 : index
    %c0_164 = arith.constant 0 : index
    %c0_165 = arith.constant 0 : index
    %384 = vector.load %arg23[%c1_163, %c0_164, %c0_165] : memref<2x1x32xf32, #tpu.memory_space<vmem>>, vector<1x1x32xf32>
    %385 = vector.shape_cast %384 : vector<1x1x32xf32> to vector<1x32xf32>
    %cst_166 = arith.constant dense<0.000000e+00> : vector<16xf32>
    %386 = vector.multi_reduction <add>, %381, %cst_166 [1] : vector<16x32xf32> to vector<16xf32>
    %387 = vector.shape_cast %386 : vector<16xf32> to vector<16x1xf32>
    %cst_167 = arith.constant 3.200000e+01 : f32
    %388 = vector.broadcast %cst_167 : f32 to vector<16x1xf32>
    %389 = arith.divf %387, %388 : vector<16x1xf32>
    %390 = vector.broadcast %389 : vector<16x1xf32> to vector<16x32xf32>
    %391 = arith.subf %381, %390 : vector<16x32xf32>
    %392 = arith.mulf %391, %391 : vector<16x32xf32>
    %cst_168 = arith.constant dense<0.000000e+00> : vector<16xf32>
    %393 = vector.multi_reduction <add>, %392, %cst_168 [1] : vector<16x32xf32> to vector<16xf32>
    %394 = vector.shape_cast %393 : vector<16xf32> to vector<16x1xf32>
    %cst_169 = arith.constant 3.200000e+01 : f32
    %395 = vector.broadcast %cst_169 : f32 to vector<16x1xf32>
    %396 = arith.divf %394, %395 : vector<16x1xf32>
    %397 = vector.broadcast %389 : vector<16x1xf32> to vector<16x32xf32>
    %398 = arith.subf %381, %397 : vector<16x32xf32>
    %cst_170 = arith.constant 9.99999974E-6 : f32
    %399 = vector.broadcast %cst_170 : f32 to vector<16x1xf32>
    %400 = arith.addf %396, %399 : vector<16x1xf32>
    %401 = math.rsqrt %400 : vector<16x1xf32>
    %402 = vector.broadcast %401 : vector<16x1xf32> to vector<16x32xf32>
    %403 = arith.mulf %398, %402 : vector<16x32xf32>
    %404 = vector.broadcast %383 : vector<1x32xf32> to vector<16x32xf32>
    %405 = arith.mulf %403, %404 : vector<16x32xf32>
    %406 = vector.broadcast %385 : vector<1x32xf32> to vector<16x32xf32>
    %407 = arith.addf %405, %406 : vector<16x32xf32>
    %c0_171 = arith.constant 0 : index
    %c0_172 = arith.constant 0 : index
    %408 = vector.load %arg4[%c0_171, %c0_172] : memref<1x16xf32, #tpu.memory_space<vmem>>, vector<1x16xf32>
    %cst_173 = arith.constant 5.000000e-01 : f32
    %409 = vector.broadcast %cst_173 : f32 to vector<1x16xf32>
    %410 = arith.cmpf ogt, %408, %409 : vector<1x16xf32>
    %411 = tpu.iota {dimensions = array<i32: 0>} : vector<16x16xi32>
    %412 = tpu.iota {dimensions = array<i32: 1>} : vector<16x16xi32>
    %c0_i32_174 = arith.constant 0 : i32
    %413 = vector.broadcast %c0_i32_174 : i32 to vector<16x16xi32>
    %c8_i32_175 = arith.constant 8 : i32
    %414 = vector.broadcast %c8_i32_175 : i32 to vector<16x16xi32>
    %415 = arith.cmpi sge, %411, %414 : vector<16x16xi32>
    %c1_i32_176 = arith.constant 1 : i32
    %c0_i32_177 = arith.constant 0 : i32
    %416 = vector.broadcast %c1_i32_176 : i32 to vector<16x16xi32>
    %417 = vector.broadcast %c0_i32_177 : i32 to vector<16x16xi32>
    %418 = arith.select %415, %416, %417 : vector<16x16xi1>, vector<16x16xi32>
    %419 = arith.addi %413, %418 : vector<16x16xi32>
    %c0_i32_178 = arith.constant 0 : i32
    %420 = vector.broadcast %c0_i32_178 : i32 to vector<16x16xi32>
    %c8_i32_179 = arith.constant 8 : i32
    %421 = vector.broadcast %c8_i32_179 : i32 to vector<16x16xi32>
    %422 = arith.cmpi sge, %412, %421 : vector<16x16xi32>
    %c1_i32_180 = arith.constant 1 : i32
    %c0_i32_181 = arith.constant 0 : i32
    %423 = vector.broadcast %c1_i32_180 : i32 to vector<16x16xi32>
    %424 = vector.broadcast %c0_i32_181 : i32 to vector<16x16xi32>
    %425 = arith.select %422, %423, %424 : vector<16x16xi1>, vector<16x16xi32>
    %426 = arith.addi %420, %425 : vector<16x16xi32>
    %427 = arith.cmpi eq, %419, %426 : vector<16x16xi32>
    %428 = arith.cmpi sge, %411, %412 : vector<16x16xi32>
    %429 = arith.andi %427, %428 : vector<16x16xi1>
    %430 = vector.broadcast %410 : vector<1x16xi1> to vector<16x16xi1>
    %431 = arith.andi %429, %430 : vector<16x16xi1>
    %cst_182 = arith.constant 0.000000e+00 : f32
    %cst_183 = arith.constant -1.000000e+09 : f32
    %432 = vector.broadcast %cst_182 : f32 to vector<16x16xf32>
    %433 = vector.broadcast %cst_183 : f32 to vector<16x16xf32>
    %434 = arith.select %431, %432, %433 : vector<16x16xi1>, vector<16x16xf32>
    %435 = tpu.iota {dimensions = array<i32: 0>} : vector<16x16xi32>
    %436 = tpu.iota {dimensions = array<i32: 1>} : vector<16x16xi32>
    %c0_i32_184 = arith.constant 0 : i32
    %437 = vector.broadcast %c0_i32_184 : i32 to vector<16x16xi32>
    %c8_i32_185 = arith.constant 8 : i32
    %438 = vector.broadcast %c8_i32_185 : i32 to vector<16x16xi32>
    %439 = arith.cmpi sge, %435, %438 : vector<16x16xi32>
    %c1_i32_186 = arith.constant 1 : i32
    %c0_i32_187 = arith.constant 0 : i32
    %440 = vector.broadcast %c1_i32_186 : i32 to vector<16x16xi32>
    %441 = vector.broadcast %c0_i32_187 : i32 to vector<16x16xi32>
    %442 = arith.select %439, %440, %441 : vector<16x16xi1>, vector<16x16xi32>
    %443 = arith.addi %437, %442 : vector<16x16xi32>
    %c0_i32_188 = arith.constant 0 : i32
    %444 = vector.broadcast %c0_i32_188 : i32 to vector<16x16xi32>
    %c8_i32_189 = arith.constant 8 : i32
    %445 = vector.broadcast %c8_i32_189 : i32 to vector<16x16xi32>
    %446 = arith.cmpi sge, %436, %445 : vector<16x16xi32>
    %c1_i32_190 = arith.constant 1 : i32
    %c0_i32_191 = arith.constant 0 : i32
    %447 = vector.broadcast %c1_i32_190 : i32 to vector<16x16xi32>
    %448 = vector.broadcast %c0_i32_191 : i32 to vector<16x16xi32>
    %449 = arith.select %446, %447, %448 : vector<16x16xi1>, vector<16x16xi32>
    %450 = arith.addi %444, %449 : vector<16x16xi32>
    %451 = arith.cmpi eq, %443, %450 : vector<16x16xi32>
    %452 = vector.broadcast %3 : vector<1x16xi1> to vector<16x16xi1>
    %453 = arith.andi %451, %452 : vector<16x16xi1>
    %cst_192 = arith.constant 0.000000e+00 : f32
    %cst_193 = arith.constant -1.000000e+09 : f32
    %454 = vector.broadcast %cst_192 : f32 to vector<16x16xf32>
    %455 = vector.broadcast %cst_193 : f32 to vector<16x16xf32>
    %456 = arith.select %453, %454, %455 : vector<16x16xi1>, vector<16x16xf32>
    %c0_194 = arith.constant 0 : index
    %c0_195 = arith.constant 0 : index
    %457 = vector.load %arg1[%c0_194, %c0_195] : memref<16x1xi32, #tpu.memory_space<vmem>>, vector<16x1xi32>
    %c0_196 = arith.constant 0 : index
    %c0_197 = arith.constant 0 : index
    %458 = vector.load %arg8[%c0_196, %c0_197] : memref<8x32xf32, #tpu.memory_space<vmem>>, vector<8x32xf32>
    %459 = tpu.iota {dimensions = array<i32: 1>} : vector<16x64xi32>
    %460 = vector.broadcast %457 : vector<16x1xi32> to vector<16x64xi32>
    %461 = arith.cmpi eq, %459, %460 : vector<16x64xi32>
    %462 = arith.extui %461 : vector<16x64xi1> to vector<16x64xi32>
    %463 = arith.sitofp %462 : vector<16x64xi32> to vector<16x64xf32>
    %cst_198 = arith.constant dense<0.000000e+00> : vector<16x32xf32>
    %464 = tpu.matmul %463, %0, %cst_198 {dimension_numbers = #tpu.dot_dimension_numbers<[1], [0], [0], [1], [0, 0, 1, 1], [], []>} : vector<16x64xf32>, vector<64x32xf32>, vector<16x32xf32> -> vector<16x32xf32>
    %465 = tpu.concatenate %458, %458 in 0 : vector<8x32xf32>, vector<8x32xf32> -> vector<16x32xf32>
    %466 = arith.addf %464, %465 : vector<16x32xf32>
    %c0_199 = arith.constant 0 : index
    %c0_200 = arith.constant 0 : index
    %467 = vector.load %arg24[%c0_199, %c0_200] : memref<1x32xf32, #tpu.memory_space<vmem>>, vector<1x32xf32>
    %c0_201 = arith.constant 0 : index
    %c0_202 = arith.constant 0 : index
    %468 = vector.load %arg25[%c0_201, %c0_202] : memref<1x32xf32, #tpu.memory_space<vmem>>, vector<1x32xf32>
    %cst_203 = arith.constant dense<0.000000e+00> : vector<16xf32>
    %469 = vector.multi_reduction <add>, %466, %cst_203 [1] : vector<16x32xf32> to vector<16xf32>
    %470 = vector.shape_cast %469 : vector<16xf32> to vector<16x1xf32>
    %cst_204 = arith.constant 3.200000e+01 : f32
    %471 = vector.broadcast %cst_204 : f32 to vector<16x1xf32>
    %472 = arith.divf %470, %471 : vector<16x1xf32>
    %473 = vector.broadcast %472 : vector<16x1xf32> to vector<16x32xf32>
    %474 = arith.subf %466, %473 : vector<16x32xf32>
    %475 = arith.mulf %474, %474 : vector<16x32xf32>
    %cst_205 = arith.constant dense<0.000000e+00> : vector<16xf32>
    %476 = vector.multi_reduction <add>, %475, %cst_205 [1] : vector<16x32xf32> to vector<16xf32>
    %477 = vector.shape_cast %476 : vector<16xf32> to vector<16x1xf32>
    %cst_206 = arith.constant 3.200000e+01 : f32
    %478 = vector.broadcast %cst_206 : f32 to vector<16x1xf32>
    %479 = arith.divf %477, %478 : vector<16x1xf32>
    %480 = vector.broadcast %472 : vector<16x1xf32> to vector<16x32xf32>
    %481 = arith.subf %466, %480 : vector<16x32xf32>
    %cst_207 = arith.constant 9.99999974E-6 : f32
    %482 = vector.broadcast %cst_207 : f32 to vector<16x1xf32>
    %483 = arith.addf %479, %482 : vector<16x1xf32>
    %484 = math.rsqrt %483 : vector<16x1xf32>
    %485 = vector.broadcast %484 : vector<16x1xf32> to vector<16x32xf32>
    %486 = arith.mulf %481, %485 : vector<16x32xf32>
    %487 = vector.broadcast %467 : vector<1x32xf32> to vector<16x32xf32>
    %488 = arith.mulf %486, %487 : vector<16x32xf32>
    %489 = vector.broadcast %468 : vector<1x32xf32> to vector<16x32xf32>
    %490 = arith.addf %488, %489 : vector<16x32xf32>
    %c0_208 = arith.constant 0 : index
    %c0_209 = arith.constant 0 : index
    %c0_210 = arith.constant 0 : index
    %491 = vector.load %arg26[%c0_208, %c0_209, %c0_210] : memref<2x32x96xf32, #tpu.memory_space<vmem>>, vector<1x32x96xf32>
    %492 = vector.shape_cast %491 : vector<1x32x96xf32> to vector<32x96xf32>
    %c0_211 = arith.constant 0 : index
    %c0_212 = arith.constant 0 : index
    %c0_213 = arith.constant 0 : index
    %493 = vector.load %arg27[%c0_211, %c0_212, %c0_213] : memref<2x1x96xf32, #tpu.memory_space<vmem>>, vector<1x1x96xf32>
    %494 = vector.shape_cast %493 : vector<1x1x96xf32> to vector<1x96xf32>
    %c0_214 = arith.constant 0 : index
    %c0_215 = arith.constant 0 : index
    %c0_216 = arith.constant 0 : index
    %495 = vector.load %arg28[%c0_214, %c0_215, %c0_216] : memref<2x32x32xf32, #tpu.memory_space<vmem>>, vector<1x32x32xf32>
    %496 = vector.shape_cast %495 : vector<1x32x32xf32> to vector<32x32xf32>
    %c0_217 = arith.constant 0 : index
    %c0_218 = arith.constant 0 : index
    %c0_219 = arith.constant 0 : index
    %497 = vector.load %arg29[%c0_217, %c0_218, %c0_219] : memref<2x1x32xf32, #tpu.memory_space<vmem>>, vector<1x1x32xf32>
    %498 = vector.shape_cast %497 : vector<1x1x32xf32> to vector<1x32xf32>
    %cst_220 = arith.constant dense<0.000000e+00> : vector<16x96xf32>
    %499 = tpu.matmul %490, %492, %cst_220 {dimension_numbers = #tpu.dot_dimension_numbers<[1], [0], [0], [1], [0, 0, 1, 1], [], []>} : vector<16x32xf32>, vector<32x96xf32>, vector<16x96xf32> -> vector<16x96xf32>
    %500 = vector.broadcast %494 : vector<1x96xf32> to vector<16x96xf32>
    %501 = arith.addf %499, %500 : vector<16x96xf32>
    %502 = vector.extract_strided_slice %501 {offsets = [0, 0], sizes = [16, 32], strides = [1, 1]} : vector<16x96xf32> to vector<16x32xf32>
    %503 = vector.extract_strided_slice %501 {offsets = [0, 32], sizes = [16, 32], strides = [1, 1]} : vector<16x96xf32> to vector<16x32xf32>
    %504 = vector.extract_strided_slice %501 {offsets = [0, 64], sizes = [16, 32], strides = [1, 1]} : vector<16x96xf32> to vector<16x32xf32>
    %cst_221 = arith.constant 0.353553385 : f32
    %505 = vector.broadcast %cst_221 : f32 to vector<16x32xf32>
    %506 = arith.mulf %502, %505 : vector<16x32xf32>
    %507 = vector.extract_strided_slice %506 {offsets = [0, 0], sizes = [16, 8], strides = [1, 1]} : vector<16x32xf32> to vector<16x8xf32>
    %508 = vector.extract_strided_slice %503 {offsets = [0, 0], sizes = [16, 8], strides = [1, 1]} : vector<16x32xf32> to vector<16x8xf32>
    %cst_222 = arith.constant dense<0.000000e+00> : vector<16x16xf32>
    %509 = tpu.matmul %507, %508, %cst_222 {dimension_numbers = #tpu.dot_dimension_numbers<[1], [1], [0], [0], [0, 0, 1, 0], [], []>} : vector<16x8xf32>, vector<16x8xf32>, vector<16x16xf32> -> vector<16x16xf32>
    %510 = arith.addf %509, %434 : vector<16x16xf32>
    %cst_223 = arith.constant dense<0xFF800000> : vector<16xf32>
    %511 = vector.multi_reduction <maximumf>, %510, %cst_223 [1] : vector<16x16xf32> to vector<16xf32>
    %512 = vector.shape_cast %511 : vector<16xf32> to vector<16x1xf32>
    %513 = vector.broadcast %512 : vector<16x1xf32> to vector<16x16xf32>
    %514 = arith.subf %510, %513 : vector<16x16xf32>
    %515 = math.exp %514 : vector<16x16xf32>
    %cst_224 = arith.constant dense<0.000000e+00> : vector<16xf32>
    %516 = vector.multi_reduction <add>, %515, %cst_224 [1] : vector<16x16xf32> to vector<16xf32>
    %517 = vector.shape_cast %516 : vector<16xf32> to vector<16x1xf32>
    %518 = tpu.reciprocal %517 {approx = true} : vector<16x1xf32> -> vector<16x1xf32>
    %519 = vector.broadcast %518 : vector<16x1xf32> to vector<16x16xf32>
    %520 = arith.mulf %515, %519 : vector<16x16xf32>
    %521 = vector.extract_strided_slice %504 {offsets = [0, 0], sizes = [16, 8], strides = [1, 1]} : vector<16x32xf32> to vector<16x8xf32>
    %cst_225 = arith.constant dense<0.000000e+00> : vector<16x8xf32>
    %522 = tpu.matmul %520, %521, %cst_225 {dimension_numbers = #tpu.dot_dimension_numbers<[1], [0], [0], [1], [0, 0, 1, 1], [], []>} : vector<16x16xf32>, vector<16x8xf32>, vector<16x8xf32> -> vector<16x8xf32>
    %523 = vector.extract_strided_slice %496 {offsets = [0, 0], sizes = [8, 32], strides = [1, 1]} : vector<32x32xf32> to vector<8x32xf32>
    %cst_226 = arith.constant dense<0.000000e+00> : vector<16x32xf32>
    %524 = tpu.matmul %522, %523, %cst_226 {dimension_numbers = #tpu.dot_dimension_numbers<[1], [0], [0], [1], [0, 0, 1, 1], [], []>} : vector<16x8xf32>, vector<8x32xf32>, vector<16x32xf32> -> vector<16x32xf32>
    %525 = vector.extract_strided_slice %506 {offsets = [0, 8], sizes = [16, 8], strides = [1, 1]} : vector<16x32xf32> to vector<16x8xf32>
    %526 = vector.extract_strided_slice %503 {offsets = [0, 8], sizes = [16, 8], strides = [1, 1]} : vector<16x32xf32> to vector<16x8xf32>
    %cst_227 = arith.constant dense<0.000000e+00> : vector<16x16xf32>
    %527 = tpu.matmul %525, %526, %cst_227 {dimension_numbers = #tpu.dot_dimension_numbers<[1], [1], [0], [0], [0, 0, 1, 0], [], []>} : vector<16x8xf32>, vector<16x8xf32>, vector<16x16xf32> -> vector<16x16xf32>
    %528 = arith.addf %527, %434 : vector<16x16xf32>
    %cst_228 = arith.constant dense<0xFF800000> : vector<16xf32>
    %529 = vector.multi_reduction <maximumf>, %528, %cst_228 [1] : vector<16x16xf32> to vector<16xf32>
    %530 = vector.shape_cast %529 : vector<16xf32> to vector<16x1xf32>
    %531 = vector.broadcast %530 : vector<16x1xf32> to vector<16x16xf32>
    %532 = arith.subf %528, %531 : vector<16x16xf32>
    %533 = math.exp %532 : vector<16x16xf32>
    %cst_229 = arith.constant dense<0.000000e+00> : vector<16xf32>
    %534 = vector.multi_reduction <add>, %533, %cst_229 [1] : vector<16x16xf32> to vector<16xf32>
    %535 = vector.shape_cast %534 : vector<16xf32> to vector<16x1xf32>
    %536 = tpu.reciprocal %535 {approx = true} : vector<16x1xf32> -> vector<16x1xf32>
    %537 = vector.broadcast %536 : vector<16x1xf32> to vector<16x16xf32>
    %538 = arith.mulf %533, %537 : vector<16x16xf32>
    %539 = vector.extract_strided_slice %504 {offsets = [0, 8], sizes = [16, 8], strides = [1, 1]} : vector<16x32xf32> to vector<16x8xf32>
    %cst_230 = arith.constant dense<0.000000e+00> : vector<16x8xf32>
    %540 = tpu.matmul %538, %539, %cst_230 {dimension_numbers = #tpu.dot_dimension_numbers<[1], [0], [0], [1], [0, 0, 1, 1], [], []>} : vector<16x16xf32>, vector<16x8xf32>, vector<16x8xf32> -> vector<16x8xf32>
    %541 = vector.extract_strided_slice %496 {offsets = [8, 0], sizes = [8, 32], strides = [1, 1]} : vector<32x32xf32> to vector<8x32xf32>
    %cst_231 = arith.constant dense<0.000000e+00> : vector<16x32xf32>
    %542 = tpu.matmul %540, %541, %cst_231 {dimension_numbers = #tpu.dot_dimension_numbers<[1], [0], [0], [1], [0, 0, 1, 1], [], []>} : vector<16x8xf32>, vector<8x32xf32>, vector<16x32xf32> -> vector<16x32xf32>
    %543 = arith.addf %524, %542 : vector<16x32xf32>
    %544 = vector.extract_strided_slice %506 {offsets = [0, 16], sizes = [16, 8], strides = [1, 1]} : vector<16x32xf32> to vector<16x8xf32>
    %545 = vector.extract_strided_slice %503 {offsets = [0, 16], sizes = [16, 8], strides = [1, 1]} : vector<16x32xf32> to vector<16x8xf32>
    %cst_232 = arith.constant dense<0.000000e+00> : vector<16x16xf32>
    %546 = tpu.matmul %544, %545, %cst_232 {dimension_numbers = #tpu.dot_dimension_numbers<[1], [1], [0], [0], [0, 0, 1, 0], [], []>} : vector<16x8xf32>, vector<16x8xf32>, vector<16x16xf32> -> vector<16x16xf32>
    %547 = arith.addf %546, %434 : vector<16x16xf32>
    %cst_233 = arith.constant dense<0xFF800000> : vector<16xf32>
    %548 = vector.multi_reduction <maximumf>, %547, %cst_233 [1] : vector<16x16xf32> to vector<16xf32>
    %549 = vector.shape_cast %548 : vector<16xf32> to vector<16x1xf32>
    %550 = vector.broadcast %549 : vector<16x1xf32> to vector<16x16xf32>
    %551 = arith.subf %547, %550 : vector<16x16xf32>
    %552 = math.exp %551 : vector<16x16xf32>
    %cst_234 = arith.constant dense<0.000000e+00> : vector<16xf32>
    %553 = vector.multi_reduction <add>, %552, %cst_234 [1] : vector<16x16xf32> to vector<16xf32>
    %554 = vector.shape_cast %553 : vector<16xf32> to vector<16x1xf32>
    %555 = tpu.reciprocal %554 {approx = true} : vector<16x1xf32> -> vector<16x1xf32>
    %556 = vector.broadcast %555 : vector<16x1xf32> to vector<16x16xf32>
    %557 = arith.mulf %552, %556 : vector<16x16xf32>
    %558 = vector.extract_strided_slice %504 {offsets = [0, 16], sizes = [16, 8], strides = [1, 1]} : vector<16x32xf32> to vector<16x8xf32>
    %cst_235 = arith.constant dense<0.000000e+00> : vector<16x8xf32>
    %559 = tpu.matmul %557, %558, %cst_235 {dimension_numbers = #tpu.dot_dimension_numbers<[1], [0], [0], [1], [0, 0, 1, 1], [], []>} : vector<16x16xf32>, vector<16x8xf32>, vector<16x8xf32> -> vector<16x8xf32>
    %560 = vector.extract_strided_slice %496 {offsets = [16, 0], sizes = [8, 32], strides = [1, 1]} : vector<32x32xf32> to vector<8x32xf32>
    %cst_236 = arith.constant dense<0.000000e+00> : vector<16x32xf32>
    %561 = tpu.matmul %559, %560, %cst_236 {dimension_numbers = #tpu.dot_dimension_numbers<[1], [0], [0], [1], [0, 0, 1, 1], [], []>} : vector<16x8xf32>, vector<8x32xf32>, vector<16x32xf32> -> vector<16x32xf32>
    %562 = arith.addf %543, %561 : vector<16x32xf32>
    %563 = vector.extract_strided_slice %506 {offsets = [0, 24], sizes = [16, 8], strides = [1, 1]} : vector<16x32xf32> to vector<16x8xf32>
    %564 = vector.extract_strided_slice %503 {offsets = [0, 24], sizes = [16, 8], strides = [1, 1]} : vector<16x32xf32> to vector<16x8xf32>
    %cst_237 = arith.constant dense<0.000000e+00> : vector<16x16xf32>
    %565 = tpu.matmul %563, %564, %cst_237 {dimension_numbers = #tpu.dot_dimension_numbers<[1], [1], [0], [0], [0, 0, 1, 0], [], []>} : vector<16x8xf32>, vector<16x8xf32>, vector<16x16xf32> -> vector<16x16xf32>
    %566 = arith.addf %565, %434 : vector<16x16xf32>
    %cst_238 = arith.constant dense<0xFF800000> : vector<16xf32>
    %567 = vector.multi_reduction <maximumf>, %566, %cst_238 [1] : vector<16x16xf32> to vector<16xf32>
    %568 = vector.shape_cast %567 : vector<16xf32> to vector<16x1xf32>
    %569 = vector.broadcast %568 : vector<16x1xf32> to vector<16x16xf32>
    %570 = arith.subf %566, %569 : vector<16x16xf32>
    %571 = math.exp %570 : vector<16x16xf32>
    %cst_239 = arith.constant dense<0.000000e+00> : vector<16xf32>
    %572 = vector.multi_reduction <add>, %571, %cst_239 [1] : vector<16x16xf32> to vector<16xf32>
    %573 = vector.shape_cast %572 : vector<16xf32> to vector<16x1xf32>
    %574 = tpu.reciprocal %573 {approx = true} : vector<16x1xf32> -> vector<16x1xf32>
    %575 = vector.broadcast %574 : vector<16x1xf32> to vector<16x16xf32>
    %576 = arith.mulf %571, %575 : vector<16x16xf32>
    %577 = vector.extract_strided_slice %504 {offsets = [0, 24], sizes = [16, 8], strides = [1, 1]} : vector<16x32xf32> to vector<16x8xf32>
    %cst_240 = arith.constant dense<0.000000e+00> : vector<16x8xf32>
    %578 = tpu.matmul %576, %577, %cst_240 {dimension_numbers = #tpu.dot_dimension_numbers<[1], [0], [0], [1], [0, 0, 1, 1], [], []>} : vector<16x16xf32>, vector<16x8xf32>, vector<16x8xf32> -> vector<16x8xf32>
    %579 = vector.extract_strided_slice %496 {offsets = [24, 0], sizes = [8, 32], strides = [1, 1]} : vector<32x32xf32> to vector<8x32xf32>
    %cst_241 = arith.constant dense<0.000000e+00> : vector<16x32xf32>
    %580 = tpu.matmul %578, %579, %cst_241 {dimension_numbers = #tpu.dot_dimension_numbers<[1], [0], [0], [1], [0, 0, 1, 1], [], []>} : vector<16x8xf32>, vector<8x32xf32>, vector<16x32xf32> -> vector<16x32xf32>
    %581 = arith.addf %562, %580 : vector<16x32xf32>
    %582 = vector.broadcast %498 : vector<1x32xf32> to vector<16x32xf32>
    %583 = arith.addf %581, %582 : vector<16x32xf32>
    %584 = arith.addf %490, %583 : vector<16x32xf32>
    %c0_242 = arith.constant 0 : index
    %c0_243 = arith.constant 0 : index
    %c0_244 = arith.constant 0 : index
    %585 = vector.load %arg30[%c0_242, %c0_243, %c0_244] : memref<2x1x32xf32, #tpu.memory_space<vmem>>, vector<1x1x32xf32>
    %586 = vector.shape_cast %585 : vector<1x1x32xf32> to vector<1x32xf32>
    %c0_245 = arith.constant 0 : index
    %c0_246 = arith.constant 0 : index
    %c0_247 = arith.constant 0 : index
    %587 = vector.load %arg31[%c0_245, %c0_246, %c0_247] : memref<2x1x32xf32, #tpu.memory_space<vmem>>, vector<1x1x32xf32>
    %588 = vector.shape_cast %587 : vector<1x1x32xf32> to vector<1x32xf32>
    %cst_248 = arith.constant dense<0.000000e+00> : vector<16xf32>
    %589 = vector.multi_reduction <add>, %584, %cst_248 [1] : vector<16x32xf32> to vector<16xf32>
    %590 = vector.shape_cast %589 : vector<16xf32> to vector<16x1xf32>
    %cst_249 = arith.constant 3.200000e+01 : f32
    %591 = vector.broadcast %cst_249 : f32 to vector<16x1xf32>
    %592 = arith.divf %590, %591 : vector<16x1xf32>
    %593 = vector.broadcast %592 : vector<16x1xf32> to vector<16x32xf32>
    %594 = arith.subf %584, %593 : vector<16x32xf32>
    %595 = arith.mulf %594, %594 : vector<16x32xf32>
    %cst_250 = arith.constant dense<0.000000e+00> : vector<16xf32>
    %596 = vector.multi_reduction <add>, %595, %cst_250 [1] : vector<16x32xf32> to vector<16xf32>
    %597 = vector.shape_cast %596 : vector<16xf32> to vector<16x1xf32>
    %cst_251 = arith.constant 3.200000e+01 : f32
    %598 = vector.broadcast %cst_251 : f32 to vector<16x1xf32>
    %599 = arith.divf %597, %598 : vector<16x1xf32>
    %600 = vector.broadcast %592 : vector<16x1xf32> to vector<16x32xf32>
    %601 = arith.subf %584, %600 : vector<16x32xf32>
    %cst_252 = arith.constant 9.99999974E-6 : f32
    %602 = vector.broadcast %cst_252 : f32 to vector<16x1xf32>
    %603 = arith.addf %599, %602 : vector<16x1xf32>
    %604 = math.rsqrt %603 : vector<16x1xf32>
    %605 = vector.broadcast %604 : vector<16x1xf32> to vector<16x32xf32>
    %606 = arith.mulf %601, %605 : vector<16x32xf32>
    %607 = vector.broadcast %586 : vector<1x32xf32> to vector<16x32xf32>
    %608 = arith.mulf %606, %607 : vector<16x32xf32>
    %609 = vector.broadcast %588 : vector<1x32xf32> to vector<16x32xf32>
    %610 = arith.addf %608, %609 : vector<16x32xf32>
    %c0_253 = arith.constant 0 : index
    %c0_254 = arith.constant 0 : index
    %c0_255 = arith.constant 0 : index
    %611 = vector.load %arg32[%c0_253, %c0_254, %c0_255] : memref<2x32x32xf32, #tpu.memory_space<vmem>>, vector<1x32x32xf32>
    %612 = vector.shape_cast %611 : vector<1x32x32xf32> to vector<32x32xf32>
    %c0_256 = arith.constant 0 : index
    %c0_257 = arith.constant 0 : index
    %c0_258 = arith.constant 0 : index
    %613 = vector.load %arg33[%c0_256, %c0_257, %c0_258] : memref<2x1x32xf32, #tpu.memory_space<vmem>>, vector<1x1x32xf32>
    %614 = vector.shape_cast %613 : vector<1x1x32xf32> to vector<1x32xf32>
    %c0_259 = arith.constant 0 : index
    %c0_260 = arith.constant 0 : index
    %c0_261 = arith.constant 0 : index
    %615 = vector.load %arg34[%c0_259, %c0_260, %c0_261] : memref<2x32x64xf32, #tpu.memory_space<vmem>>, vector<1x32x64xf32>
    %616 = vector.shape_cast %615 : vector<1x32x64xf32> to vector<32x64xf32>
    %c0_262 = arith.constant 0 : index
    %c0_263 = arith.constant 0 : index
    %c0_264 = arith.constant 0 : index
    %617 = vector.load %arg35[%c0_262, %c0_263, %c0_264] : memref<2x1x64xf32, #tpu.memory_space<vmem>>, vector<1x1x64xf32>
    %618 = vector.shape_cast %617 : vector<1x1x64xf32> to vector<1x64xf32>
    %c0_265 = arith.constant 0 : index
    %c0_266 = arith.constant 0 : index
    %c0_267 = arith.constant 0 : index
    %619 = vector.load %arg36[%c0_265, %c0_266, %c0_267] : memref<2x32x32xf32, #tpu.memory_space<vmem>>, vector<1x32x32xf32>
    %620 = vector.shape_cast %619 : vector<1x32x32xf32> to vector<32x32xf32>
    %c0_268 = arith.constant 0 : index
    %c0_269 = arith.constant 0 : index
    %c0_270 = arith.constant 0 : index
    %621 = vector.load %arg37[%c0_268, %c0_269, %c0_270] : memref<2x1x32xf32, #tpu.memory_space<vmem>>, vector<1x1x32xf32>
    %622 = vector.shape_cast %621 : vector<1x1x32xf32> to vector<1x32xf32>
    %cst_271 = arith.constant dense<0.000000e+00> : vector<16x32xf32>
    %623 = tpu.matmul %610, %612, %cst_271 {dimension_numbers = #tpu.dot_dimension_numbers<[1], [0], [0], [1], [0, 0, 1, 1], [], []>} : vector<16x32xf32>, vector<32x32xf32>, vector<16x32xf32> -> vector<16x32xf32>
    %624 = vector.broadcast %614 : vector<1x32xf32> to vector<16x32xf32>
    %625 = arith.addf %623, %624 : vector<16x32xf32>
    %cst_272 = arith.constant dense<0.000000e+00> : vector<16x64xf32>
    %626 = tpu.matmul %407, %616, %cst_272 {dimension_numbers = #tpu.dot_dimension_numbers<[1], [0], [0], [1], [0, 0, 1, 1], [], []>} : vector<16x32xf32>, vector<32x64xf32>, vector<16x64xf32> -> vector<16x64xf32>
    %627 = vector.broadcast %618 : vector<1x64xf32> to vector<16x64xf32>
    %628 = arith.addf %626, %627 : vector<16x64xf32>
    %629 = vector.extract_strided_slice %628 {offsets = [0, 0], sizes = [16, 32], strides = [1, 1]} : vector<16x64xf32> to vector<16x32xf32>
    %630 = vector.extract_strided_slice %628 {offsets = [0, 32], sizes = [16, 32], strides = [1, 1]} : vector<16x64xf32> to vector<16x32xf32>
    %cst_273 = arith.constant 0.353553385 : f32
    %631 = vector.broadcast %cst_273 : f32 to vector<16x32xf32>
    %632 = arith.mulf %625, %631 : vector<16x32xf32>
    %633 = vector.extract_strided_slice %632 {offsets = [0, 0], sizes = [16, 8], strides = [1, 1]} : vector<16x32xf32> to vector<16x8xf32>
    %634 = vector.extract_strided_slice %629 {offsets = [0, 0], sizes = [16, 8], strides = [1, 1]} : vector<16x32xf32> to vector<16x8xf32>
    %cst_274 = arith.constant dense<0.000000e+00> : vector<16x16xf32>
    %635 = tpu.matmul %633, %634, %cst_274 {dimension_numbers = #tpu.dot_dimension_numbers<[1], [1], [0], [0], [0, 0, 1, 0], [], []>} : vector<16x8xf32>, vector<16x8xf32>, vector<16x16xf32> -> vector<16x16xf32>
    %636 = arith.addf %635, %456 : vector<16x16xf32>
    %cst_275 = arith.constant dense<0xFF800000> : vector<16xf32>
    %637 = vector.multi_reduction <maximumf>, %636, %cst_275 [1] : vector<16x16xf32> to vector<16xf32>
    %638 = vector.shape_cast %637 : vector<16xf32> to vector<16x1xf32>
    %639 = vector.broadcast %638 : vector<16x1xf32> to vector<16x16xf32>
    %640 = arith.subf %636, %639 : vector<16x16xf32>
    %641 = math.exp %640 : vector<16x16xf32>
    %cst_276 = arith.constant dense<0.000000e+00> : vector<16xf32>
    %642 = vector.multi_reduction <add>, %641, %cst_276 [1] : vector<16x16xf32> to vector<16xf32>
    %643 = vector.shape_cast %642 : vector<16xf32> to vector<16x1xf32>
    %644 = tpu.reciprocal %643 {approx = true} : vector<16x1xf32> -> vector<16x1xf32>
    %645 = vector.broadcast %644 : vector<16x1xf32> to vector<16x16xf32>
    %646 = arith.mulf %641, %645 : vector<16x16xf32>
    %647 = vector.extract_strided_slice %630 {offsets = [0, 0], sizes = [16, 8], strides = [1, 1]} : vector<16x32xf32> to vector<16x8xf32>
    %cst_277 = arith.constant dense<0.000000e+00> : vector<16x8xf32>
    %648 = tpu.matmul %646, %647, %cst_277 {dimension_numbers = #tpu.dot_dimension_numbers<[1], [0], [0], [1], [0, 0, 1, 1], [], []>} : vector<16x16xf32>, vector<16x8xf32>, vector<16x8xf32> -> vector<16x8xf32>
    %649 = vector.extract_strided_slice %620 {offsets = [0, 0], sizes = [8, 32], strides = [1, 1]} : vector<32x32xf32> to vector<8x32xf32>
    %cst_278 = arith.constant dense<0.000000e+00> : vector<16x32xf32>
    %650 = tpu.matmul %648, %649, %cst_278 {dimension_numbers = #tpu.dot_dimension_numbers<[1], [0], [0], [1], [0, 0, 1, 1], [], []>} : vector<16x8xf32>, vector<8x32xf32>, vector<16x32xf32> -> vector<16x32xf32>
    %651 = vector.extract_strided_slice %632 {offsets = [0, 8], sizes = [16, 8], strides = [1, 1]} : vector<16x32xf32> to vector<16x8xf32>
    %652 = vector.extract_strided_slice %629 {offsets = [0, 8], sizes = [16, 8], strides = [1, 1]} : vector<16x32xf32> to vector<16x8xf32>
    %cst_279 = arith.constant dense<0.000000e+00> : vector<16x16xf32>
    %653 = tpu.matmul %651, %652, %cst_279 {dimension_numbers = #tpu.dot_dimension_numbers<[1], [1], [0], [0], [0, 0, 1, 0], [], []>} : vector<16x8xf32>, vector<16x8xf32>, vector<16x16xf32> -> vector<16x16xf32>
    %654 = arith.addf %653, %456 : vector<16x16xf32>
    %cst_280 = arith.constant dense<0xFF800000> : vector<16xf32>
    %655 = vector.multi_reduction <maximumf>, %654, %cst_280 [1] : vector<16x16xf32> to vector<16xf32>
    %656 = vector.shape_cast %655 : vector<16xf32> to vector<16x1xf32>
    %657 = vector.broadcast %656 : vector<16x1xf32> to vector<16x16xf32>
    %658 = arith.subf %654, %657 : vector<16x16xf32>
    %659 = math.exp %658 : vector<16x16xf32>
    %cst_281 = arith.constant dense<0.000000e+00> : vector<16xf32>
    %660 = vector.multi_reduction <add>, %659, %cst_281 [1] : vector<16x16xf32> to vector<16xf32>
    %661 = vector.shape_cast %660 : vector<16xf32> to vector<16x1xf32>
    %662 = tpu.reciprocal %661 {approx = true} : vector<16x1xf32> -> vector<16x1xf32>
    %663 = vector.broadcast %662 : vector<16x1xf32> to vector<16x16xf32>
    %664 = arith.mulf %659, %663 : vector<16x16xf32>
    %665 = vector.extract_strided_slice %630 {offsets = [0, 8], sizes = [16, 8], strides = [1, 1]} : vector<16x32xf32> to vector<16x8xf32>
    %cst_282 = arith.constant dense<0.000000e+00> : vector<16x8xf32>
    %666 = tpu.matmul %664, %665, %cst_282 {dimension_numbers = #tpu.dot_dimension_numbers<[1], [0], [0], [1], [0, 0, 1, 1], [], []>} : vector<16x16xf32>, vector<16x8xf32>, vector<16x8xf32> -> vector<16x8xf32>
    %667 = vector.extract_strided_slice %620 {offsets = [8, 0], sizes = [8, 32], strides = [1, 1]} : vector<32x32xf32> to vector<8x32xf32>
    %cst_283 = arith.constant dense<0.000000e+00> : vector<16x32xf32>
    %668 = tpu.matmul %666, %667, %cst_283 {dimension_numbers = #tpu.dot_dimension_numbers<[1], [0], [0], [1], [0, 0, 1, 1], [], []>} : vector<16x8xf32>, vector<8x32xf32>, vector<16x32xf32> -> vector<16x32xf32>
    %669 = arith.addf %650, %668 : vector<16x32xf32>
    %670 = vector.extract_strided_slice %632 {offsets = [0, 16], sizes = [16, 8], strides = [1, 1]} : vector<16x32xf32> to vector<16x8xf32>
    %671 = vector.extract_strided_slice %629 {offsets = [0, 16], sizes = [16, 8], strides = [1, 1]} : vector<16x32xf32> to vector<16x8xf32>
    %cst_284 = arith.constant dense<0.000000e+00> : vector<16x16xf32>
    %672 = tpu.matmul %670, %671, %cst_284 {dimension_numbers = #tpu.dot_dimension_numbers<[1], [1], [0], [0], [0, 0, 1, 0], [], []>} : vector<16x8xf32>, vector<16x8xf32>, vector<16x16xf32> -> vector<16x16xf32>
    %673 = arith.addf %672, %456 : vector<16x16xf32>
    %cst_285 = arith.constant dense<0xFF800000> : vector<16xf32>
    %674 = vector.multi_reduction <maximumf>, %673, %cst_285 [1] : vector<16x16xf32> to vector<16xf32>
    %675 = vector.shape_cast %674 : vector<16xf32> to vector<16x1xf32>
    %676 = vector.broadcast %675 : vector<16x1xf32> to vector<16x16xf32>
    %677 = arith.subf %673, %676 : vector<16x16xf32>
    %678 = math.exp %677 : vector<16x16xf32>
    %cst_286 = arith.constant dense<0.000000e+00> : vector<16xf32>
    %679 = vector.multi_reduction <add>, %678, %cst_286 [1] : vector<16x16xf32> to vector<16xf32>
    %680 = vector.shape_cast %679 : vector<16xf32> to vector<16x1xf32>
    %681 = tpu.reciprocal %680 {approx = true} : vector<16x1xf32> -> vector<16x1xf32>
    %682 = vector.broadcast %681 : vector<16x1xf32> to vector<16x16xf32>
    %683 = arith.mulf %678, %682 : vector<16x16xf32>
    %684 = vector.extract_strided_slice %630 {offsets = [0, 16], sizes = [16, 8], strides = [1, 1]} : vector<16x32xf32> to vector<16x8xf32>
    %cst_287 = arith.constant dense<0.000000e+00> : vector<16x8xf32>
    %685 = tpu.matmul %683, %684, %cst_287 {dimension_numbers = #tpu.dot_dimension_numbers<[1], [0], [0], [1], [0, 0, 1, 1], [], []>} : vector<16x16xf32>, vector<16x8xf32>, vector<16x8xf32> -> vector<16x8xf32>
    %686 = vector.extract_strided_slice %620 {offsets = [16, 0], sizes = [8, 32], strides = [1, 1]} : vector<32x32xf32> to vector<8x32xf32>
    %cst_288 = arith.constant dense<0.000000e+00> : vector<16x32xf32>
    %687 = tpu.matmul %685, %686, %cst_288 {dimension_numbers = #tpu.dot_dimension_numbers<[1], [0], [0], [1], [0, 0, 1, 1], [], []>} : vector<16x8xf32>, vector<8x32xf32>, vector<16x32xf32> -> vector<16x32xf32>
    %688 = arith.addf %669, %687 : vector<16x32xf32>
    %689 = vector.extract_strided_slice %632 {offsets = [0, 24], sizes = [16, 8], strides = [1, 1]} : vector<16x32xf32> to vector<16x8xf32>
    %690 = vector.extract_strided_slice %629 {offsets = [0, 24], sizes = [16, 8], strides = [1, 1]} : vector<16x32xf32> to vector<16x8xf32>
    %cst_289 = arith.constant dense<0.000000e+00> : vector<16x16xf32>
    %691 = tpu.matmul %689, %690, %cst_289 {dimension_numbers = #tpu.dot_dimension_numbers<[1], [1], [0], [0], [0, 0, 1, 0], [], []>} : vector<16x8xf32>, vector<16x8xf32>, vector<16x16xf32> -> vector<16x16xf32>
    %692 = arith.addf %691, %456 : vector<16x16xf32>
    %cst_290 = arith.constant dense<0xFF800000> : vector<16xf32>
    %693 = vector.multi_reduction <maximumf>, %692, %cst_290 [1] : vector<16x16xf32> to vector<16xf32>
    %694 = vector.shape_cast %693 : vector<16xf32> to vector<16x1xf32>
    %695 = vector.broadcast %694 : vector<16x1xf32> to vector<16x16xf32>
    %696 = arith.subf %692, %695 : vector<16x16xf32>
    %697 = math.exp %696 : vector<16x16xf32>
    %cst_291 = arith.constant dense<0.000000e+00> : vector<16xf32>
    %698 = vector.multi_reduction <add>, %697, %cst_291 [1] : vector<16x16xf32> to vector<16xf32>
    %699 = vector.shape_cast %698 : vector<16xf32> to vector<16x1xf32>
    %700 = tpu.reciprocal %699 {approx = true} : vector<16x1xf32> -> vector<16x1xf32>
    %701 = vector.broadcast %700 : vector<16x1xf32> to vector<16x16xf32>
    %702 = arith.mulf %697, %701 : vector<16x16xf32>
    %703 = vector.extract_strided_slice %630 {offsets = [0, 24], sizes = [16, 8], strides = [1, 1]} : vector<16x32xf32> to vector<16x8xf32>
    %cst_292 = arith.constant dense<0.000000e+00> : vector<16x8xf32>
    %704 = tpu.matmul %702, %703, %cst_292 {dimension_numbers = #tpu.dot_dimension_numbers<[1], [0], [0], [1], [0, 0, 1, 1], [], []>} : vector<16x16xf32>, vector<16x8xf32>, vector<16x8xf32> -> vector<16x8xf32>
    %705 = vector.extract_strided_slice %620 {offsets = [24, 0], sizes = [8, 32], strides = [1, 1]} : vector<32x32xf32> to vector<8x32xf32>
    %cst_293 = arith.constant dense<0.000000e+00> : vector<16x32xf32>
    %706 = tpu.matmul %704, %705, %cst_293 {dimension_numbers = #tpu.dot_dimension_numbers<[1], [0], [0], [1], [0, 0, 1, 1], [], []>} : vector<16x8xf32>, vector<8x32xf32>, vector<16x32xf32> -> vector<16x32xf32>
    %707 = arith.addf %688, %706 : vector<16x32xf32>
    %708 = vector.broadcast %622 : vector<1x32xf32> to vector<16x32xf32>
    %709 = arith.addf %707, %708 : vector<16x32xf32>
    %710 = arith.addf %610, %709 : vector<16x32xf32>
    %c0_294 = arith.constant 0 : index
    %c0_295 = arith.constant 0 : index
    %c0_296 = arith.constant 0 : index
    %711 = vector.load %arg38[%c0_294, %c0_295, %c0_296] : memref<2x1x32xf32, #tpu.memory_space<vmem>>, vector<1x1x32xf32>
    %712 = vector.shape_cast %711 : vector<1x1x32xf32> to vector<1x32xf32>
    %c0_297 = arith.constant 0 : index
    %c0_298 = arith.constant 0 : index
    %c0_299 = arith.constant 0 : index
    %713 = vector.load %arg39[%c0_297, %c0_298, %c0_299] : memref<2x1x32xf32, #tpu.memory_space<vmem>>, vector<1x1x32xf32>
    %714 = vector.shape_cast %713 : vector<1x1x32xf32> to vector<1x32xf32>
    %cst_300 = arith.constant dense<0.000000e+00> : vector<16xf32>
    %715 = vector.multi_reduction <add>, %710, %cst_300 [1] : vector<16x32xf32> to vector<16xf32>
    %716 = vector.shape_cast %715 : vector<16xf32> to vector<16x1xf32>
    %cst_301 = arith.constant 3.200000e+01 : f32
    %717 = vector.broadcast %cst_301 : f32 to vector<16x1xf32>
    %718 = arith.divf %716, %717 : vector<16x1xf32>
    %719 = vector.broadcast %718 : vector<16x1xf32> to vector<16x32xf32>
    %720 = arith.subf %710, %719 : vector<16x32xf32>
    %721 = arith.mulf %720, %720 : vector<16x32xf32>
    %cst_302 = arith.constant dense<0.000000e+00> : vector<16xf32>
    %722 = vector.multi_reduction <add>, %721, %cst_302 [1] : vector<16x32xf32> to vector<16xf32>
    %723 = vector.shape_cast %722 : vector<16xf32> to vector<16x1xf32>
    %cst_303 = arith.constant 3.200000e+01 : f32
    %724 = vector.broadcast %cst_303 : f32 to vector<16x1xf32>
    %725 = arith.divf %723, %724 : vector<16x1xf32>
    %726 = vector.broadcast %718 : vector<16x1xf32> to vector<16x32xf32>
    %727 = arith.subf %710, %726 : vector<16x32xf32>
    %cst_304 = arith.constant 9.99999974E-6 : f32
    %728 = vector.broadcast %cst_304 : f32 to vector<16x1xf32>
    %729 = arith.addf %725, %728 : vector<16x1xf32>
    %730 = math.rsqrt %729 : vector<16x1xf32>
    %731 = vector.broadcast %730 : vector<16x1xf32> to vector<16x32xf32>
    %732 = arith.mulf %727, %731 : vector<16x32xf32>
    %733 = vector.broadcast %712 : vector<1x32xf32> to vector<16x32xf32>
    %734 = arith.mulf %732, %733 : vector<16x32xf32>
    %735 = vector.broadcast %714 : vector<1x32xf32> to vector<16x32xf32>
    %736 = arith.addf %734, %735 : vector<16x32xf32>
    %c0_305 = arith.constant 0 : index
    %c0_306 = arith.constant 0 : index
    %c0_307 = arith.constant 0 : index
    %737 = vector.load %arg40[%c0_305, %c0_306, %c0_307] : memref<2x32x64xf32, #tpu.memory_space<vmem>>, vector<1x32x64xf32>
    %738 = vector.shape_cast %737 : vector<1x32x64xf32> to vector<32x64xf32>
    %c0_308 = arith.constant 0 : index
    %c0_309 = arith.constant 0 : index
    %c0_310 = arith.constant 0 : index
    %739 = vector.load %arg41[%c0_308, %c0_309, %c0_310] : memref<2x1x64xf32, #tpu.memory_space<vmem>>, vector<1x1x64xf32>
    %740 = vector.shape_cast %739 : vector<1x1x64xf32> to vector<1x64xf32>
    %c0_311 = arith.constant 0 : index
    %c0_312 = arith.constant 0 : index
    %c0_313 = arith.constant 0 : index
    %741 = vector.load %arg42[%c0_311, %c0_312, %c0_313] : memref<2x64x32xf32, #tpu.memory_space<vmem>>, vector<1x64x32xf32>
    %742 = vector.shape_cast %741 : vector<1x64x32xf32> to vector<64x32xf32>
    %c0_314 = arith.constant 0 : index
    %c0_315 = arith.constant 0 : index
    %c0_316 = arith.constant 0 : index
    %743 = vector.load %arg43[%c0_314, %c0_315, %c0_316] : memref<2x1x32xf32, #tpu.memory_space<vmem>>, vector<1x1x32xf32>
    %744 = vector.shape_cast %743 : vector<1x1x32xf32> to vector<1x32xf32>
    %cst_317 = arith.constant dense<0.000000e+00> : vector<16x64xf32>
    %745 = tpu.matmul %736, %738, %cst_317 {dimension_numbers = #tpu.dot_dimension_numbers<[1], [0], [0], [1], [0, 0, 1, 1], [], []>} : vector<16x32xf32>, vector<32x64xf32>, vector<16x64xf32> -> vector<16x64xf32>
    %746 = vector.broadcast %740 : vector<1x64xf32> to vector<16x64xf32>
    %747 = arith.addf %745, %746 : vector<16x64xf32>
    %748 = arith.mulf %747, %747 : vector<16x64xf32>
    %749 = arith.mulf %747, %748 : vector<16x64xf32>
    %cst_318 = arith.constant 4.471500e-02 : f32
    %750 = vector.broadcast %cst_318 : f32 to vector<16x64xf32>
    %751 = arith.mulf %750, %749 : vector<16x64xf32>
    %752 = arith.addf %747, %751 : vector<16x64xf32>
    %cst_319 = arith.constant 0.797884583 : f32
    %753 = vector.broadcast %cst_319 : f32 to vector<16x64xf32>
    %754 = arith.mulf %753, %752 : vector<16x64xf32>
    %755 = math.tanh %754 : vector<16x64xf32>
    %cst_320 = arith.constant 1.000000e+00 : f32
    %756 = vector.broadcast %cst_320 : f32 to vector<16x64xf32>
    %757 = arith.addf %756, %755 : vector<16x64xf32>
    %cst_321 = arith.constant 5.000000e-01 : f32
    %758 = vector.broadcast %cst_321 : f32 to vector<16x64xf32>
    %759 = arith.mulf %758, %757 : vector<16x64xf32>
    %760 = arith.mulf %747, %759 : vector<16x64xf32>
    %cst_322 = arith.constant dense<0.000000e+00> : vector<16x32xf32>
    %761 = tpu.matmul %760, %742, %cst_322 {dimension_numbers = #tpu.dot_dimension_numbers<[1], [0], [0], [1], [0, 0, 1, 1], [], []>} : vector<16x64xf32>, vector<64x32xf32>, vector<16x32xf32> -> vector<16x32xf32>
    %762 = vector.broadcast %744 : vector<1x32xf32> to vector<16x32xf32>
    %763 = arith.addf %761, %762 : vector<16x32xf32>
    %764 = arith.addf %736, %763 : vector<16x32xf32>
    %c0_323 = arith.constant 0 : index
    %c0_324 = arith.constant 0 : index
    %c0_325 = arith.constant 0 : index
    %765 = vector.load %arg44[%c0_323, %c0_324, %c0_325] : memref<2x1x32xf32, #tpu.memory_space<vmem>>, vector<1x1x32xf32>
    %766 = vector.shape_cast %765 : vector<1x1x32xf32> to vector<1x32xf32>
    %c0_326 = arith.constant 0 : index
    %c0_327 = arith.constant 0 : index
    %c0_328 = arith.constant 0 : index
    %767 = vector.load %arg45[%c0_326, %c0_327, %c0_328] : memref<2x1x32xf32, #tpu.memory_space<vmem>>, vector<1x1x32xf32>
    %768 = vector.shape_cast %767 : vector<1x1x32xf32> to vector<1x32xf32>
    %cst_329 = arith.constant dense<0.000000e+00> : vector<16xf32>
    %769 = vector.multi_reduction <add>, %764, %cst_329 [1] : vector<16x32xf32> to vector<16xf32>
    %770 = vector.shape_cast %769 : vector<16xf32> to vector<16x1xf32>
    %cst_330 = arith.constant 3.200000e+01 : f32
    %771 = vector.broadcast %cst_330 : f32 to vector<16x1xf32>
    %772 = arith.divf %770, %771 : vector<16x1xf32>
    %773 = vector.broadcast %772 : vector<16x1xf32> to vector<16x32xf32>
    %774 = arith.subf %764, %773 : vector<16x32xf32>
    %775 = arith.mulf %774, %774 : vector<16x32xf32>
    %cst_331 = arith.constant dense<0.000000e+00> : vector<16xf32>
    %776 = vector.multi_reduction <add>, %775, %cst_331 [1] : vector<16x32xf32> to vector<16xf32>
    %777 = vector.shape_cast %776 : vector<16xf32> to vector<16x1xf32>
    %cst_332 = arith.constant 3.200000e+01 : f32
    %778 = vector.broadcast %cst_332 : f32 to vector<16x1xf32>
    %779 = arith.divf %777, %778 : vector<16x1xf32>
    %780 = vector.broadcast %772 : vector<16x1xf32> to vector<16x32xf32>
    %781 = arith.subf %764, %780 : vector<16x32xf32>
    %cst_333 = arith.constant 9.99999974E-6 : f32
    %782 = vector.broadcast %cst_333 : f32 to vector<16x1xf32>
    %783 = arith.addf %779, %782 : vector<16x1xf32>
    %784 = math.rsqrt %783 : vector<16x1xf32>
    %785 = vector.broadcast %784 : vector<16x1xf32> to vector<16x32xf32>
    %786 = arith.mulf %781, %785 : vector<16x32xf32>
    %787 = vector.broadcast %766 : vector<1x32xf32> to vector<16x32xf32>
    %788 = arith.mulf %786, %787 : vector<16x32xf32>
    %789 = vector.broadcast %768 : vector<1x32xf32> to vector<16x32xf32>
    %790 = arith.addf %788, %789 : vector<16x32xf32>
    %c1_334 = arith.constant 1 : index
    %c0_335 = arith.constant 0 : index
    %c0_336 = arith.constant 0 : index
    %791 = vector.load %arg26[%c1_334, %c0_335, %c0_336] : memref<2x32x96xf32, #tpu.memory_space<vmem>>, vector<1x32x96xf32>
    %792 = vector.shape_cast %791 : vector<1x32x96xf32> to vector<32x96xf32>
    %c1_337 = arith.constant 1 : index
    %c0_338 = arith.constant 0 : index
    %c0_339 = arith.constant 0 : index
    %793 = vector.load %arg27[%c1_337, %c0_338, %c0_339] : memref<2x1x96xf32, #tpu.memory_space<vmem>>, vector<1x1x96xf32>
    %794 = vector.shape_cast %793 : vector<1x1x96xf32> to vector<1x96xf32>
    %c1_340 = arith.constant 1 : index
    %c0_341 = arith.constant 0 : index
    %c0_342 = arith.constant 0 : index
    %795 = vector.load %arg28[%c1_340, %c0_341, %c0_342] : memref<2x32x32xf32, #tpu.memory_space<vmem>>, vector<1x32x32xf32>
    %796 = vector.shape_cast %795 : vector<1x32x32xf32> to vector<32x32xf32>
    %c1_343 = arith.constant 1 : index
    %c0_344 = arith.constant 0 : index
    %c0_345 = arith.constant 0 : index
    %797 = vector.load %arg29[%c1_343, %c0_344, %c0_345] : memref<2x1x32xf32, #tpu.memory_space<vmem>>, vector<1x1x32xf32>
    %798 = vector.shape_cast %797 : vector<1x1x32xf32> to vector<1x32xf32>
    %cst_346 = arith.constant dense<0.000000e+00> : vector<16x96xf32>
    %799 = tpu.matmul %790, %792, %cst_346 {dimension_numbers = #tpu.dot_dimension_numbers<[1], [0], [0], [1], [0, 0, 1, 1], [], []>} : vector<16x32xf32>, vector<32x96xf32>, vector<16x96xf32> -> vector<16x96xf32>
    %800 = vector.broadcast %794 : vector<1x96xf32> to vector<16x96xf32>
    %801 = arith.addf %799, %800 : vector<16x96xf32>
    %802 = vector.extract_strided_slice %801 {offsets = [0, 0], sizes = [16, 32], strides = [1, 1]} : vector<16x96xf32> to vector<16x32xf32>
    %803 = vector.extract_strided_slice %801 {offsets = [0, 32], sizes = [16, 32], strides = [1, 1]} : vector<16x96xf32> to vector<16x32xf32>
    %804 = vector.extract_strided_slice %801 {offsets = [0, 64], sizes = [16, 32], strides = [1, 1]} : vector<16x96xf32> to vector<16x32xf32>
    %cst_347 = arith.constant 0.353553385 : f32
    %805 = vector.broadcast %cst_347 : f32 to vector<16x32xf32>
    %806 = arith.mulf %802, %805 : vector<16x32xf32>
    %807 = vector.extract_strided_slice %806 {offsets = [0, 0], sizes = [16, 8], strides = [1, 1]} : vector<16x32xf32> to vector<16x8xf32>
    %808 = vector.extract_strided_slice %803 {offsets = [0, 0], sizes = [16, 8], strides = [1, 1]} : vector<16x32xf32> to vector<16x8xf32>
    %cst_348 = arith.constant dense<0.000000e+00> : vector<16x16xf32>
    %809 = tpu.matmul %807, %808, %cst_348 {dimension_numbers = #tpu.dot_dimension_numbers<[1], [1], [0], [0], [0, 0, 1, 0], [], []>} : vector<16x8xf32>, vector<16x8xf32>, vector<16x16xf32> -> vector<16x16xf32>
    %810 = arith.addf %809, %434 : vector<16x16xf32>
    %cst_349 = arith.constant dense<0xFF800000> : vector<16xf32>
    %811 = vector.multi_reduction <maximumf>, %810, %cst_349 [1] : vector<16x16xf32> to vector<16xf32>
    %812 = vector.shape_cast %811 : vector<16xf32> to vector<16x1xf32>
    %813 = vector.broadcast %812 : vector<16x1xf32> to vector<16x16xf32>
    %814 = arith.subf %810, %813 : vector<16x16xf32>
    %815 = math.exp %814 : vector<16x16xf32>
    %cst_350 = arith.constant dense<0.000000e+00> : vector<16xf32>
    %816 = vector.multi_reduction <add>, %815, %cst_350 [1] : vector<16x16xf32> to vector<16xf32>
    %817 = vector.shape_cast %816 : vector<16xf32> to vector<16x1xf32>
    %818 = tpu.reciprocal %817 {approx = true} : vector<16x1xf32> -> vector<16x1xf32>
    %819 = vector.broadcast %818 : vector<16x1xf32> to vector<16x16xf32>
    %820 = arith.mulf %815, %819 : vector<16x16xf32>
    %821 = vector.extract_strided_slice %804 {offsets = [0, 0], sizes = [16, 8], strides = [1, 1]} : vector<16x32xf32> to vector<16x8xf32>
    %cst_351 = arith.constant dense<0.000000e+00> : vector<16x8xf32>
    %822 = tpu.matmul %820, %821, %cst_351 {dimension_numbers = #tpu.dot_dimension_numbers<[1], [0], [0], [1], [0, 0, 1, 1], [], []>} : vector<16x16xf32>, vector<16x8xf32>, vector<16x8xf32> -> vector<16x8xf32>
    %823 = vector.extract_strided_slice %796 {offsets = [0, 0], sizes = [8, 32], strides = [1, 1]} : vector<32x32xf32> to vector<8x32xf32>
    %cst_352 = arith.constant dense<0.000000e+00> : vector<16x32xf32>
    %824 = tpu.matmul %822, %823, %cst_352 {dimension_numbers = #tpu.dot_dimension_numbers<[1], [0], [0], [1], [0, 0, 1, 1], [], []>} : vector<16x8xf32>, vector<8x32xf32>, vector<16x32xf32> -> vector<16x32xf32>
    %825 = vector.extract_strided_slice %806 {offsets = [0, 8], sizes = [16, 8], strides = [1, 1]} : vector<16x32xf32> to vector<16x8xf32>
    %826 = vector.extract_strided_slice %803 {offsets = [0, 8], sizes = [16, 8], strides = [1, 1]} : vector<16x32xf32> to vector<16x8xf32>
    %cst_353 = arith.constant dense<0.000000e+00> : vector<16x16xf32>
    %827 = tpu.matmul %825, %826, %cst_353 {dimension_numbers = #tpu.dot_dimension_numbers<[1], [1], [0], [0], [0, 0, 1, 0], [], []>} : vector<16x8xf32>, vector<16x8xf32>, vector<16x16xf32> -> vector<16x16xf32>
    %828 = arith.addf %827, %434 : vector<16x16xf32>
    %cst_354 = arith.constant dense<0xFF800000> : vector<16xf32>
    %829 = vector.multi_reduction <maximumf>, %828, %cst_354 [1] : vector<16x16xf32> to vector<16xf32>
    %830 = vector.shape_cast %829 : vector<16xf32> to vector<16x1xf32>
    %831 = vector.broadcast %830 : vector<16x1xf32> to vector<16x16xf32>
    %832 = arith.subf %828, %831 : vector<16x16xf32>
    %833 = math.exp %832 : vector<16x16xf32>
    %cst_355 = arith.constant dense<0.000000e+00> : vector<16xf32>
    %834 = vector.multi_reduction <add>, %833, %cst_355 [1] : vector<16x16xf32> to vector<16xf32>
    %835 = vector.shape_cast %834 : vector<16xf32> to vector<16x1xf32>
    %836 = tpu.reciprocal %835 {approx = true} : vector<16x1xf32> -> vector<16x1xf32>
    %837 = vector.broadcast %836 : vector<16x1xf32> to vector<16x16xf32>
    %838 = arith.mulf %833, %837 : vector<16x16xf32>
    %839 = vector.extract_strided_slice %804 {offsets = [0, 8], sizes = [16, 8], strides = [1, 1]} : vector<16x32xf32> to vector<16x8xf32>
    %cst_356 = arith.constant dense<0.000000e+00> : vector<16x8xf32>
    %840 = tpu.matmul %838, %839, %cst_356 {dimension_numbers = #tpu.dot_dimension_numbers<[1], [0], [0], [1], [0, 0, 1, 1], [], []>} : vector<16x16xf32>, vector<16x8xf32>, vector<16x8xf32> -> vector<16x8xf32>
    %841 = vector.extract_strided_slice %796 {offsets = [8, 0], sizes = [8, 32], strides = [1, 1]} : vector<32x32xf32> to vector<8x32xf32>
    %cst_357 = arith.constant dense<0.000000e+00> : vector<16x32xf32>
    %842 = tpu.matmul %840, %841, %cst_357 {dimension_numbers = #tpu.dot_dimension_numbers<[1], [0], [0], [1], [0, 0, 1, 1], [], []>} : vector<16x8xf32>, vector<8x32xf32>, vector<16x32xf32> -> vector<16x32xf32>
    %843 = arith.addf %824, %842 : vector<16x32xf32>
    %844 = vector.extract_strided_slice %806 {offsets = [0, 16], sizes = [16, 8], strides = [1, 1]} : vector<16x32xf32> to vector<16x8xf32>
    %845 = vector.extract_strided_slice %803 {offsets = [0, 16], sizes = [16, 8], strides = [1, 1]} : vector<16x32xf32> to vector<16x8xf32>
    %cst_358 = arith.constant dense<0.000000e+00> : vector<16x16xf32>
    %846 = tpu.matmul %844, %845, %cst_358 {dimension_numbers = #tpu.dot_dimension_numbers<[1], [1], [0], [0], [0, 0, 1, 0], [], []>} : vector<16x8xf32>, vector<16x8xf32>, vector<16x16xf32> -> vector<16x16xf32>
    %847 = arith.addf %846, %434 : vector<16x16xf32>
    %cst_359 = arith.constant dense<0xFF800000> : vector<16xf32>
    %848 = vector.multi_reduction <maximumf>, %847, %cst_359 [1] : vector<16x16xf32> to vector<16xf32>
    %849 = vector.shape_cast %848 : vector<16xf32> to vector<16x1xf32>
    %850 = vector.broadcast %849 : vector<16x1xf32> to vector<16x16xf32>
    %851 = arith.subf %847, %850 : vector<16x16xf32>
    %852 = math.exp %851 : vector<16x16xf32>
    %cst_360 = arith.constant dense<0.000000e+00> : vector<16xf32>
    %853 = vector.multi_reduction <add>, %852, %cst_360 [1] : vector<16x16xf32> to vector<16xf32>
    %854 = vector.shape_cast %853 : vector<16xf32> to vector<16x1xf32>
    %855 = tpu.reciprocal %854 {approx = true} : vector<16x1xf32> -> vector<16x1xf32>
    %856 = vector.broadcast %855 : vector<16x1xf32> to vector<16x16xf32>
    %857 = arith.mulf %852, %856 : vector<16x16xf32>
    %858 = vector.extract_strided_slice %804 {offsets = [0, 16], sizes = [16, 8], strides = [1, 1]} : vector<16x32xf32> to vector<16x8xf32>
    %cst_361 = arith.constant dense<0.000000e+00> : vector<16x8xf32>
    %859 = tpu.matmul %857, %858, %cst_361 {dimension_numbers = #tpu.dot_dimension_numbers<[1], [0], [0], [1], [0, 0, 1, 1], [], []>} : vector<16x16xf32>, vector<16x8xf32>, vector<16x8xf32> -> vector<16x8xf32>
    %860 = vector.extract_strided_slice %796 {offsets = [16, 0], sizes = [8, 32], strides = [1, 1]} : vector<32x32xf32> to vector<8x32xf32>
    %cst_362 = arith.constant dense<0.000000e+00> : vector<16x32xf32>
    %861 = tpu.matmul %859, %860, %cst_362 {dimension_numbers = #tpu.dot_dimension_numbers<[1], [0], [0], [1], [0, 0, 1, 1], [], []>} : vector<16x8xf32>, vector<8x32xf32>, vector<16x32xf32> -> vector<16x32xf32>
    %862 = arith.addf %843, %861 : vector<16x32xf32>
    %863 = vector.extract_strided_slice %806 {offsets = [0, 24], sizes = [16, 8], strides = [1, 1]} : vector<16x32xf32> to vector<16x8xf32>
    %864 = vector.extract_strided_slice %803 {offsets = [0, 24], sizes = [16, 8], strides = [1, 1]} : vector<16x32xf32> to vector<16x8xf32>
    %cst_363 = arith.constant dense<0.000000e+00> : vector<16x16xf32>
    %865 = tpu.matmul %863, %864, %cst_363 {dimension_numbers = #tpu.dot_dimension_numbers<[1], [1], [0], [0], [0, 0, 1, 0], [], []>} : vector<16x8xf32>, vector<16x8xf32>, vector<16x16xf32> -> vector<16x16xf32>
    %866 = arith.addf %865, %434 : vector<16x16xf32>
    %cst_364 = arith.constant dense<0xFF800000> : vector<16xf32>
    %867 = vector.multi_reduction <maximumf>, %866, %cst_364 [1] : vector<16x16xf32> to vector<16xf32>
    %868 = vector.shape_cast %867 : vector<16xf32> to vector<16x1xf32>
    %869 = vector.broadcast %868 : vector<16x1xf32> to vector<16x16xf32>
    %870 = arith.subf %866, %869 : vector<16x16xf32>
    %871 = math.exp %870 : vector<16x16xf32>
    %cst_365 = arith.constant dense<0.000000e+00> : vector<16xf32>
    %872 = vector.multi_reduction <add>, %871, %cst_365 [1] : vector<16x16xf32> to vector<16xf32>
    %873 = vector.shape_cast %872 : vector<16xf32> to vector<16x1xf32>
    %874 = tpu.reciprocal %873 {approx = true} : vector<16x1xf32> -> vector<16x1xf32>
    %875 = vector.broadcast %874 : vector<16x1xf32> to vector<16x16xf32>
    %876 = arith.mulf %871, %875 : vector<16x16xf32>
    %877 = vector.extract_strided_slice %804 {offsets = [0, 24], sizes = [16, 8], strides = [1, 1]} : vector<16x32xf32> to vector<16x8xf32>
    %cst_366 = arith.constant dense<0.000000e+00> : vector<16x8xf32>
    %878 = tpu.matmul %876, %877, %cst_366 {dimension_numbers = #tpu.dot_dimension_numbers<[1], [0], [0], [1], [0, 0, 1, 1], [], []>} : vector<16x16xf32>, vector<16x8xf32>, vector<16x8xf32> -> vector<16x8xf32>
    %879 = vector.extract_strided_slice %796 {offsets = [24, 0], sizes = [8, 32], strides = [1, 1]} : vector<32x32xf32> to vector<8x32xf32>
    %cst_367 = arith.constant dense<0.000000e+00> : vector<16x32xf32>
    %880 = tpu.matmul %878, %879, %cst_367 {dimension_numbers = #tpu.dot_dimension_numbers<[1], [0], [0], [1], [0, 0, 1, 1], [], []>} : vector<16x8xf32>, vector<8x32xf32>, vector<16x32xf32> -> vector<16x32xf32>
    %881 = arith.addf %862, %880 : vector<16x32xf32>
    %882 = vector.broadcast %798 : vector<1x32xf32> to vector<16x32xf32>
    %883 = arith.addf %881, %882 : vector<16x32xf32>
    %884 = arith.addf %790, %883 : vector<16x32xf32>
    %c1_368 = arith.constant 1 : index
    %c0_369 = arith.constant 0 : index
    %c0_370 = arith.constant 0 : index
    %885 = vector.load %arg30[%c1_368, %c0_369, %c0_370] : memref<2x1x32xf32, #tpu.memory_space<vmem>>, vector<1x1x32xf32>
    %886 = vector.shape_cast %885 : vector<1x1x32xf32> to vector<1x32xf32>
    %c1_371 = arith.constant 1 : index
    %c0_372 = arith.constant 0 : index
    %c0_373 = arith.constant 0 : index
    %887 = vector.load %arg31[%c1_371, %c0_372, %c0_373] : memref<2x1x32xf32, #tpu.memory_space<vmem>>, vector<1x1x32xf32>
    %888 = vector.shape_cast %887 : vector<1x1x32xf32> to vector<1x32xf32>
    %cst_374 = arith.constant dense<0.000000e+00> : vector<16xf32>
    %889 = vector.multi_reduction <add>, %884, %cst_374 [1] : vector<16x32xf32> to vector<16xf32>
    %890 = vector.shape_cast %889 : vector<16xf32> to vector<16x1xf32>
    %cst_375 = arith.constant 3.200000e+01 : f32
    %891 = vector.broadcast %cst_375 : f32 to vector<16x1xf32>
    %892 = arith.divf %890, %891 : vector<16x1xf32>
    %893 = vector.broadcast %892 : vector<16x1xf32> to vector<16x32xf32>
    %894 = arith.subf %884, %893 : vector<16x32xf32>
    %895 = arith.mulf %894, %894 : vector<16x32xf32>
    %cst_376 = arith.constant dense<0.000000e+00> : vector<16xf32>
    %896 = vector.multi_reduction <add>, %895, %cst_376 [1] : vector<16x32xf32> to vector<16xf32>
    %897 = vector.shape_cast %896 : vector<16xf32> to vector<16x1xf32>
    %cst_377 = arith.constant 3.200000e+01 : f32
    %898 = vector.broadcast %cst_377 : f32 to vector<16x1xf32>
    %899 = arith.divf %897, %898 : vector<16x1xf32>
    %900 = vector.broadcast %892 : vector<16x1xf32> to vector<16x32xf32>
    %901 = arith.subf %884, %900 : vector<16x32xf32>
    %cst_378 = arith.constant 9.99999974E-6 : f32
    %902 = vector.broadcast %cst_378 : f32 to vector<16x1xf32>
    %903 = arith.addf %899, %902 : vector<16x1xf32>
    %904 = math.rsqrt %903 : vector<16x1xf32>
    %905 = vector.broadcast %904 : vector<16x1xf32> to vector<16x32xf32>
    %906 = arith.mulf %901, %905 : vector<16x32xf32>
    %907 = vector.broadcast %886 : vector<1x32xf32> to vector<16x32xf32>
    %908 = arith.mulf %906, %907 : vector<16x32xf32>
    %909 = vector.broadcast %888 : vector<1x32xf32> to vector<16x32xf32>
    %910 = arith.addf %908, %909 : vector<16x32xf32>
    %c1_379 = arith.constant 1 : index
    %c0_380 = arith.constant 0 : index
    %c0_381 = arith.constant 0 : index
    %911 = vector.load %arg32[%c1_379, %c0_380, %c0_381] : memref<2x32x32xf32, #tpu.memory_space<vmem>>, vector<1x32x32xf32>
    %912 = vector.shape_cast %911 : vector<1x32x32xf32> to vector<32x32xf32>
    %c1_382 = arith.constant 1 : index
    %c0_383 = arith.constant 0 : index
    %c0_384 = arith.constant 0 : index
    %913 = vector.load %arg33[%c1_382, %c0_383, %c0_384] : memref<2x1x32xf32, #tpu.memory_space<vmem>>, vector<1x1x32xf32>
    %914 = vector.shape_cast %913 : vector<1x1x32xf32> to vector<1x32xf32>
    %c1_385 = arith.constant 1 : index
    %c0_386 = arith.constant 0 : index
    %c0_387 = arith.constant 0 : index
    %915 = vector.load %arg34[%c1_385, %c0_386, %c0_387] : memref<2x32x64xf32, #tpu.memory_space<vmem>>, vector<1x32x64xf32>
    %916 = vector.shape_cast %915 : vector<1x32x64xf32> to vector<32x64xf32>
    %c1_388 = arith.constant 1 : index
    %c0_389 = arith.constant 0 : index
    %c0_390 = arith.constant 0 : index
    %917 = vector.load %arg35[%c1_388, %c0_389, %c0_390] : memref<2x1x64xf32, #tpu.memory_space<vmem>>, vector<1x1x64xf32>
    %918 = vector.shape_cast %917 : vector<1x1x64xf32> to vector<1x64xf32>
    %c1_391 = arith.constant 1 : index
    %c0_392 = arith.constant 0 : index
    %c0_393 = arith.constant 0 : index
    %919 = vector.load %arg36[%c1_391, %c0_392, %c0_393] : memref<2x32x32xf32, #tpu.memory_space<vmem>>, vector<1x32x32xf32>
    %920 = vector.shape_cast %919 : vector<1x32x32xf32> to vector<32x32xf32>
    %c1_394 = arith.constant 1 : index
    %c0_395 = arith.constant 0 : index
    %c0_396 = arith.constant 0 : index
    %921 = vector.load %arg37[%c1_394, %c0_395, %c0_396] : memref<2x1x32xf32, #tpu.memory_space<vmem>>, vector<1x1x32xf32>
    %922 = vector.shape_cast %921 : vector<1x1x32xf32> to vector<1x32xf32>
    %cst_397 = arith.constant dense<0.000000e+00> : vector<16x32xf32>
    %923 = tpu.matmul %910, %912, %cst_397 {dimension_numbers = #tpu.dot_dimension_numbers<[1], [0], [0], [1], [0, 0, 1, 1], [], []>} : vector<16x32xf32>, vector<32x32xf32>, vector<16x32xf32> -> vector<16x32xf32>
    %924 = vector.broadcast %914 : vector<1x32xf32> to vector<16x32xf32>
    %925 = arith.addf %923, %924 : vector<16x32xf32>
    %cst_398 = arith.constant dense<0.000000e+00> : vector<16x64xf32>
    %926 = tpu.matmul %407, %916, %cst_398 {dimension_numbers = #tpu.dot_dimension_numbers<[1], [0], [0], [1], [0, 0, 1, 1], [], []>} : vector<16x32xf32>, vector<32x64xf32>, vector<16x64xf32> -> vector<16x64xf32>
    %927 = vector.broadcast %918 : vector<1x64xf32> to vector<16x64xf32>
    %928 = arith.addf %926, %927 : vector<16x64xf32>
    %929 = vector.extract_strided_slice %928 {offsets = [0, 0], sizes = [16, 32], strides = [1, 1]} : vector<16x64xf32> to vector<16x32xf32>
    %930 = vector.extract_strided_slice %928 {offsets = [0, 32], sizes = [16, 32], strides = [1, 1]} : vector<16x64xf32> to vector<16x32xf32>
    %cst_399 = arith.constant 0.353553385 : f32
    %931 = vector.broadcast %cst_399 : f32 to vector<16x32xf32>
    %932 = arith.mulf %925, %931 : vector<16x32xf32>
    %933 = vector.extract_strided_slice %932 {offsets = [0, 0], sizes = [16, 8], strides = [1, 1]} : vector<16x32xf32> to vector<16x8xf32>
    %934 = vector.extract_strided_slice %929 {offsets = [0, 0], sizes = [16, 8], strides = [1, 1]} : vector<16x32xf32> to vector<16x8xf32>
    %cst_400 = arith.constant dense<0.000000e+00> : vector<16x16xf32>
    %935 = tpu.matmul %933, %934, %cst_400 {dimension_numbers = #tpu.dot_dimension_numbers<[1], [1], [0], [0], [0, 0, 1, 0], [], []>} : vector<16x8xf32>, vector<16x8xf32>, vector<16x16xf32> -> vector<16x16xf32>
    %936 = arith.addf %935, %456 : vector<16x16xf32>
    %cst_401 = arith.constant dense<0xFF800000> : vector<16xf32>
    %937 = vector.multi_reduction <maximumf>, %936, %cst_401 [1] : vector<16x16xf32> to vector<16xf32>
    %938 = vector.shape_cast %937 : vector<16xf32> to vector<16x1xf32>
    %939 = vector.broadcast %938 : vector<16x1xf32> to vector<16x16xf32>
    %940 = arith.subf %936, %939 : vector<16x16xf32>
    %941 = math.exp %940 : vector<16x16xf32>
    %cst_402 = arith.constant dense<0.000000e+00> : vector<16xf32>
    %942 = vector.multi_reduction <add>, %941, %cst_402 [1] : vector<16x16xf32> to vector<16xf32>
    %943 = vector.shape_cast %942 : vector<16xf32> to vector<16x1xf32>
    %944 = tpu.reciprocal %943 {approx = true} : vector<16x1xf32> -> vector<16x1xf32>
    %945 = vector.broadcast %944 : vector<16x1xf32> to vector<16x16xf32>
    %946 = arith.mulf %941, %945 : vector<16x16xf32>
    %947 = vector.extract_strided_slice %930 {offsets = [0, 0], sizes = [16, 8], strides = [1, 1]} : vector<16x32xf32> to vector<16x8xf32>
    %cst_403 = arith.constant dense<0.000000e+00> : vector<16x8xf32>
    %948 = tpu.matmul %946, %947, %cst_403 {dimension_numbers = #tpu.dot_dimension_numbers<[1], [0], [0], [1], [0, 0, 1, 1], [], []>} : vector<16x16xf32>, vector<16x8xf32>, vector<16x8xf32> -> vector<16x8xf32>
    %949 = vector.extract_strided_slice %920 {offsets = [0, 0], sizes = [8, 32], strides = [1, 1]} : vector<32x32xf32> to vector<8x32xf32>
    %cst_404 = arith.constant dense<0.000000e+00> : vector<16x32xf32>
    %950 = tpu.matmul %948, %949, %cst_404 {dimension_numbers = #tpu.dot_dimension_numbers<[1], [0], [0], [1], [0, 0, 1, 1], [], []>} : vector<16x8xf32>, vector<8x32xf32>, vector<16x32xf32> -> vector<16x32xf32>
    %951 = vector.extract_strided_slice %932 {offsets = [0, 8], sizes = [16, 8], strides = [1, 1]} : vector<16x32xf32> to vector<16x8xf32>
    %952 = vector.extract_strided_slice %929 {offsets = [0, 8], sizes = [16, 8], strides = [1, 1]} : vector<16x32xf32> to vector<16x8xf32>
    %cst_405 = arith.constant dense<0.000000e+00> : vector<16x16xf32>
    %953 = tpu.matmul %951, %952, %cst_405 {dimension_numbers = #tpu.dot_dimension_numbers<[1], [1], [0], [0], [0, 0, 1, 0], [], []>} : vector<16x8xf32>, vector<16x8xf32>, vector<16x16xf32> -> vector<16x16xf32>
    %954 = arith.addf %953, %456 : vector<16x16xf32>
    %cst_406 = arith.constant dense<0xFF800000> : vector<16xf32>
    %955 = vector.multi_reduction <maximumf>, %954, %cst_406 [1] : vector<16x16xf32> to vector<16xf32>
    %956 = vector.shape_cast %955 : vector<16xf32> to vector<16x1xf32>
    %957 = vector.broadcast %956 : vector<16x1xf32> to vector<16x16xf32>
    %958 = arith.subf %954, %957 : vector<16x16xf32>
    %959 = math.exp %958 : vector<16x16xf32>
    %cst_407 = arith.constant dense<0.000000e+00> : vector<16xf32>
    %960 = vector.multi_reduction <add>, %959, %cst_407 [1] : vector<16x16xf32> to vector<16xf32>
    %961 = vector.shape_cast %960 : vector<16xf32> to vector<16x1xf32>
    %962 = tpu.reciprocal %961 {approx = true} : vector<16x1xf32> -> vector<16x1xf32>
    %963 = vector.broadcast %962 : vector<16x1xf32> to vector<16x16xf32>
    %964 = arith.mulf %959, %963 : vector<16x16xf32>
    %965 = vector.extract_strided_slice %930 {offsets = [0, 8], sizes = [16, 8], strides = [1, 1]} : vector<16x32xf32> to vector<16x8xf32>
    %cst_408 = arith.constant dense<0.000000e+00> : vector<16x8xf32>
    %966 = tpu.matmul %964, %965, %cst_408 {dimension_numbers = #tpu.dot_dimension_numbers<[1], [0], [0], [1], [0, 0, 1, 1], [], []>} : vector<16x16xf32>, vector<16x8xf32>, vector<16x8xf32> -> vector<16x8xf32>
    %967 = vector.extract_strided_slice %920 {offsets = [8, 0], sizes = [8, 32], strides = [1, 1]} : vector<32x32xf32> to vector<8x32xf32>
    %cst_409 = arith.constant dense<0.000000e+00> : vector<16x32xf32>
    %968 = tpu.matmul %966, %967, %cst_409 {dimension_numbers = #tpu.dot_dimension_numbers<[1], [0], [0], [1], [0, 0, 1, 1], [], []>} : vector<16x8xf32>, vector<8x32xf32>, vector<16x32xf32> -> vector<16x32xf32>
    %969 = arith.addf %950, %968 : vector<16x32xf32>
    %970 = vector.extract_strided_slice %932 {offsets = [0, 16], sizes = [16, 8], strides = [1, 1]} : vector<16x32xf32> to vector<16x8xf32>
    %971 = vector.extract_strided_slice %929 {offsets = [0, 16], sizes = [16, 8], strides = [1, 1]} : vector<16x32xf32> to vector<16x8xf32>
    %cst_410 = arith.constant dense<0.000000e+00> : vector<16x16xf32>
    %972 = tpu.matmul %970, %971, %cst_410 {dimension_numbers = #tpu.dot_dimension_numbers<[1], [1], [0], [0], [0, 0, 1, 0], [], []>} : vector<16x8xf32>, vector<16x8xf32>, vector<16x16xf32> -> vector<16x16xf32>
    %973 = arith.addf %972, %456 : vector<16x16xf32>
    %cst_411 = arith.constant dense<0xFF800000> : vector<16xf32>
    %974 = vector.multi_reduction <maximumf>, %973, %cst_411 [1] : vector<16x16xf32> to vector<16xf32>
    %975 = vector.shape_cast %974 : vector<16xf32> to vector<16x1xf32>
    %976 = vector.broadcast %975 : vector<16x1xf32> to vector<16x16xf32>
    %977 = arith.subf %973, %976 : vector<16x16xf32>
    %978 = math.exp %977 : vector<16x16xf32>
    %cst_412 = arith.constant dense<0.000000e+00> : vector<16xf32>
    %979 = vector.multi_reduction <add>, %978, %cst_412 [1] : vector<16x16xf32> to vector<16xf32>
    %980 = vector.shape_cast %979 : vector<16xf32> to vector<16x1xf32>
    %981 = tpu.reciprocal %980 {approx = true} : vector<16x1xf32> -> vector<16x1xf32>
    %982 = vector.broadcast %981 : vector<16x1xf32> to vector<16x16xf32>
    %983 = arith.mulf %978, %982 : vector<16x16xf32>
    %984 = vector.extract_strided_slice %930 {offsets = [0, 16], sizes = [16, 8], strides = [1, 1]} : vector<16x32xf32> to vector<16x8xf32>
    %cst_413 = arith.constant dense<0.000000e+00> : vector<16x8xf32>
    %985 = tpu.matmul %983, %984, %cst_413 {dimension_numbers = #tpu.dot_dimension_numbers<[1], [0], [0], [1], [0, 0, 1, 1], [], []>} : vector<16x16xf32>, vector<16x8xf32>, vector<16x8xf32> -> vector<16x8xf32>
    %986 = vector.extract_strided_slice %920 {offsets = [16, 0], sizes = [8, 32], strides = [1, 1]} : vector<32x32xf32> to vector<8x32xf32>
    %cst_414 = arith.constant dense<0.000000e+00> : vector<16x32xf32>
    %987 = tpu.matmul %985, %986, %cst_414 {dimension_numbers = #tpu.dot_dimension_numbers<[1], [0], [0], [1], [0, 0, 1, 1], [], []>} : vector<16x8xf32>, vector<8x32xf32>, vector<16x32xf32> -> vector<16x32xf32>
    %988 = arith.addf %969, %987 : vector<16x32xf32>
    %989 = vector.extract_strided_slice %932 {offsets = [0, 24], sizes = [16, 8], strides = [1, 1]} : vector<16x32xf32> to vector<16x8xf32>
    %990 = vector.extract_strided_slice %929 {offsets = [0, 24], sizes = [16, 8], strides = [1, 1]} : vector<16x32xf32> to vector<16x8xf32>
    %cst_415 = arith.constant dense<0.000000e+00> : vector<16x16xf32>
    %991 = tpu.matmul %989, %990, %cst_415 {dimension_numbers = #tpu.dot_dimension_numbers<[1], [1], [0], [0], [0, 0, 1, 0], [], []>} : vector<16x8xf32>, vector<16x8xf32>, vector<16x16xf32> -> vector<16x16xf32>
    %992 = arith.addf %991, %456 : vector<16x16xf32>
    %cst_416 = arith.constant dense<0xFF800000> : vector<16xf32>
    %993 = vector.multi_reduction <maximumf>, %992, %cst_416 [1] : vector<16x16xf32> to vector<16xf32>
    %994 = vector.shape_cast %993 : vector<16xf32> to vector<16x1xf32>
    %995 = vector.broadcast %994 : vector<16x1xf32> to vector<16x16xf32>
    %996 = arith.subf %992, %995 : vector<16x16xf32>
    %997 = math.exp %996 : vector<16x16xf32>
    %cst_417 = arith.constant dense<0.000000e+00> : vector<16xf32>
    %998 = vector.multi_reduction <add>, %997, %cst_417 [1] : vector<16x16xf32> to vector<16xf32>
    %999 = vector.shape_cast %998 : vector<16xf32> to vector<16x1xf32>
    %1000 = tpu.reciprocal %999 {approx = true} : vector<16x1xf32> -> vector<16x1xf32>
    %1001 = vector.broadcast %1000 : vector<16x1xf32> to vector<16x16xf32>
    %1002 = arith.mulf %997, %1001 : vector<16x16xf32>
    %1003 = vector.extract_strided_slice %930 {offsets = [0, 24], sizes = [16, 8], strides = [1, 1]} : vector<16x32xf32> to vector<16x8xf32>
    %cst_418 = arith.constant dense<0.000000e+00> : vector<16x8xf32>
    %1004 = tpu.matmul %1002, %1003, %cst_418 {dimension_numbers = #tpu.dot_dimension_numbers<[1], [0], [0], [1], [0, 0, 1, 1], [], []>} : vector<16x16xf32>, vector<16x8xf32>, vector<16x8xf32> -> vector<16x8xf32>
    %1005 = vector.extract_strided_slice %920 {offsets = [24, 0], sizes = [8, 32], strides = [1, 1]} : vector<32x32xf32> to vector<8x32xf32>
    %cst_419 = arith.constant dense<0.000000e+00> : vector<16x32xf32>
    %1006 = tpu.matmul %1004, %1005, %cst_419 {dimension_numbers = #tpu.dot_dimension_numbers<[1], [0], [0], [1], [0, 0, 1, 1], [], []>} : vector<16x8xf32>, vector<8x32xf32>, vector<16x32xf32> -> vector<16x32xf32>
    %1007 = arith.addf %988, %1006 : vector<16x32xf32>
    %1008 = vector.broadcast %922 : vector<1x32xf32> to vector<16x32xf32>
    %1009 = arith.addf %1007, %1008 : vector<16x32xf32>
    %1010 = arith.addf %910, %1009 : vector<16x32xf32>
    %c1_420 = arith.constant 1 : index
    %c0_421 = arith.constant 0 : index
    %c0_422 = arith.constant 0 : index
    %1011 = vector.load %arg38[%c1_420, %c0_421, %c0_422] : memref<2x1x32xf32, #tpu.memory_space<vmem>>, vector<1x1x32xf32>
    %1012 = vector.shape_cast %1011 : vector<1x1x32xf32> to vector<1x32xf32>
    %c1_423 = arith.constant 1 : index
    %c0_424 = arith.constant 0 : index
    %c0_425 = arith.constant 0 : index
    %1013 = vector.load %arg39[%c1_423, %c0_424, %c0_425] : memref<2x1x32xf32, #tpu.memory_space<vmem>>, vector<1x1x32xf32>
    %1014 = vector.shape_cast %1013 : vector<1x1x32xf32> to vector<1x32xf32>
    %cst_426 = arith.constant dense<0.000000e+00> : vector<16xf32>
    %1015 = vector.multi_reduction <add>, %1010, %cst_426 [1] : vector<16x32xf32> to vector<16xf32>
    %1016 = vector.shape_cast %1015 : vector<16xf32> to vector<16x1xf32>
    %cst_427 = arith.constant 3.200000e+01 : f32
    %1017 = vector.broadcast %cst_427 : f32 to vector<16x1xf32>
    %1018 = arith.divf %1016, %1017 : vector<16x1xf32>
    %1019 = vector.broadcast %1018 : vector<16x1xf32> to vector<16x32xf32>
    %1020 = arith.subf %1010, %1019 : vector<16x32xf32>
    %1021 = arith.mulf %1020, %1020 : vector<16x32xf32>
    %cst_428 = arith.constant dense<0.000000e+00> : vector<16xf32>
    %1022 = vector.multi_reduction <add>, %1021, %cst_428 [1] : vector<16x32xf32> to vector<16xf32>
    %1023 = vector.shape_cast %1022 : vector<16xf32> to vector<16x1xf32>
    %cst_429 = arith.constant 3.200000e+01 : f32
    %1024 = vector.broadcast %cst_429 : f32 to vector<16x1xf32>
    %1025 = arith.divf %1023, %1024 : vector<16x1xf32>
    %1026 = vector.broadcast %1018 : vector<16x1xf32> to vector<16x32xf32>
    %1027 = arith.subf %1010, %1026 : vector<16x32xf32>
    %cst_430 = arith.constant 9.99999974E-6 : f32
    %1028 = vector.broadcast %cst_430 : f32 to vector<16x1xf32>
    %1029 = arith.addf %1025, %1028 : vector<16x1xf32>
    %1030 = math.rsqrt %1029 : vector<16x1xf32>
    %1031 = vector.broadcast %1030 : vector<16x1xf32> to vector<16x32xf32>
    %1032 = arith.mulf %1027, %1031 : vector<16x32xf32>
    %1033 = vector.broadcast %1012 : vector<1x32xf32> to vector<16x32xf32>
    %1034 = arith.mulf %1032, %1033 : vector<16x32xf32>
    %1035 = vector.broadcast %1014 : vector<1x32xf32> to vector<16x32xf32>
    %1036 = arith.addf %1034, %1035 : vector<16x32xf32>
    %c1_431 = arith.constant 1 : index
    %c0_432 = arith.constant 0 : index
    %c0_433 = arith.constant 0 : index
    %1037 = vector.load %arg40[%c1_431, %c0_432, %c0_433] : memref<2x32x64xf32, #tpu.memory_space<vmem>>, vector<1x32x64xf32>
    %1038 = vector.shape_cast %1037 : vector<1x32x64xf32> to vector<32x64xf32>
    %c1_434 = arith.constant 1 : index
    %c0_435 = arith.constant 0 : index
    %c0_436 = arith.constant 0 : index
    %1039 = vector.load %arg41[%c1_434, %c0_435, %c0_436] : memref<2x1x64xf32, #tpu.memory_space<vmem>>, vector<1x1x64xf32>
    %1040 = vector.shape_cast %1039 : vector<1x1x64xf32> to vector<1x64xf32>
    %c1_437 = arith.constant 1 : index
    %c0_438 = arith.constant 0 : index
    %c0_439 = arith.constant 0 : index
    %1041 = vector.load %arg42[%c1_437, %c0_438, %c0_439] : memref<2x64x32xf32, #tpu.memory_space<vmem>>, vector<1x64x32xf32>
    %1042 = vector.shape_cast %1041 : vector<1x64x32xf32> to vector<64x32xf32>
    %c1_440 = arith.constant 1 : index
    %c0_441 = arith.constant 0 : index
    %c0_442 = arith.constant 0 : index
    %1043 = vector.load %arg43[%c1_440, %c0_441, %c0_442] : memref<2x1x32xf32, #tpu.memory_space<vmem>>, vector<1x1x32xf32>
    %1044 = vector.shape_cast %1043 : vector<1x1x32xf32> to vector<1x32xf32>
    %cst_443 = arith.constant dense<0.000000e+00> : vector<16x64xf32>
    %1045 = tpu.matmul %1036, %1038, %cst_443 {dimension_numbers = #tpu.dot_dimension_numbers<[1], [0], [0], [1], [0, 0, 1, 1], [], []>} : vector<16x32xf32>, vector<32x64xf32>, vector<16x64xf32> -> vector<16x64xf32>
    %1046 = vector.broadcast %1040 : vector<1x64xf32> to vector<16x64xf32>
    %1047 = arith.addf %1045, %1046 : vector<16x64xf32>
    %1048 = arith.mulf %1047, %1047 : vector<16x64xf32>
    %1049 = arith.mulf %1047, %1048 : vector<16x64xf32>
    %cst_444 = arith.constant 4.471500e-02 : f32
    %1050 = vector.broadcast %cst_444 : f32 to vector<16x64xf32>
    %1051 = arith.mulf %1050, %1049 : vector<16x64xf32>
    %1052 = arith.addf %1047, %1051 : vector<16x64xf32>
    %cst_445 = arith.constant 0.797884583 : f32
    %1053 = vector.broadcast %cst_445 : f32 to vector<16x64xf32>
    %1054 = arith.mulf %1053, %1052 : vector<16x64xf32>
    %1055 = math.tanh %1054 : vector<16x64xf32>
    %cst_446 = arith.constant 1.000000e+00 : f32
    %1056 = vector.broadcast %cst_446 : f32 to vector<16x64xf32>
    %1057 = arith.addf %1056, %1055 : vector<16x64xf32>
    %cst_447 = arith.constant 5.000000e-01 : f32
    %1058 = vector.broadcast %cst_447 : f32 to vector<16x64xf32>
    %1059 = arith.mulf %1058, %1057 : vector<16x64xf32>
    %1060 = arith.mulf %1047, %1059 : vector<16x64xf32>
    %cst_448 = arith.constant dense<0.000000e+00> : vector<16x32xf32>
    %1061 = tpu.matmul %1060, %1042, %cst_448 {dimension_numbers = #tpu.dot_dimension_numbers<[1], [0], [0], [1], [0, 0, 1, 1], [], []>} : vector<16x64xf32>, vector<64x32xf32>, vector<16x32xf32> -> vector<16x32xf32>
    %1062 = vector.broadcast %1044 : vector<1x32xf32> to vector<16x32xf32>
    %1063 = arith.addf %1061, %1062 : vector<16x32xf32>
    %1064 = arith.addf %1036, %1063 : vector<16x32xf32>
    %c1_449 = arith.constant 1 : index
    %c0_450 = arith.constant 0 : index
    %c0_451 = arith.constant 0 : index
    %1065 = vector.load %arg44[%c1_449, %c0_450, %c0_451] : memref<2x1x32xf32, #tpu.memory_space<vmem>>, vector<1x1x32xf32>
    %1066 = vector.shape_cast %1065 : vector<1x1x32xf32> to vector<1x32xf32>
    %c1_452 = arith.constant 1 : index
    %c0_453 = arith.constant 0 : index
    %c0_454 = arith.constant 0 : index
    %1067 = vector.load %arg45[%c1_452, %c0_453, %c0_454] : memref<2x1x32xf32, #tpu.memory_space<vmem>>, vector<1x1x32xf32>
    %1068 = vector.shape_cast %1067 : vector<1x1x32xf32> to vector<1x32xf32>
    %cst_455 = arith.constant dense<0.000000e+00> : vector<16xf32>
    %1069 = vector.multi_reduction <add>, %1064, %cst_455 [1] : vector<16x32xf32> to vector<16xf32>
    %1070 = vector.shape_cast %1069 : vector<16xf32> to vector<16x1xf32>
    %cst_456 = arith.constant 3.200000e+01 : f32
    %1071 = vector.broadcast %cst_456 : f32 to vector<16x1xf32>
    %1072 = arith.divf %1070, %1071 : vector<16x1xf32>
    %1073 = vector.broadcast %1072 : vector<16x1xf32> to vector<16x32xf32>
    %1074 = arith.subf %1064, %1073 : vector<16x32xf32>
    %1075 = arith.mulf %1074, %1074 : vector<16x32xf32>
    %cst_457 = arith.constant dense<0.000000e+00> : vector<16xf32>
    %1076 = vector.multi_reduction <add>, %1075, %cst_457 [1] : vector<16x32xf32> to vector<16xf32>
    %1077 = vector.shape_cast %1076 : vector<16xf32> to vector<16x1xf32>
    %cst_458 = arith.constant 3.200000e+01 : f32
    %1078 = vector.broadcast %cst_458 : f32 to vector<16x1xf32>
    %1079 = arith.divf %1077, %1078 : vector<16x1xf32>
    %1080 = vector.broadcast %1072 : vector<16x1xf32> to vector<16x32xf32>
    %1081 = arith.subf %1064, %1080 : vector<16x32xf32>
    %cst_459 = arith.constant 9.99999974E-6 : f32
    %1082 = vector.broadcast %cst_459 : f32 to vector<16x1xf32>
    %1083 = arith.addf %1079, %1082 : vector<16x1xf32>
    %1084 = math.rsqrt %1083 : vector<16x1xf32>
    %1085 = vector.broadcast %1084 : vector<16x1xf32> to vector<16x32xf32>
    %1086 = arith.mulf %1081, %1085 : vector<16x32xf32>
    %1087 = vector.broadcast %1066 : vector<1x32xf32> to vector<16x32xf32>
    %1088 = arith.mulf %1086, %1087 : vector<16x32xf32>
    %1089 = vector.broadcast %1068 : vector<1x32xf32> to vector<16x32xf32>
    %1090 = arith.addf %1088, %1089 : vector<16x32xf32>
    %c0_460 = arith.constant 0 : index
    %c0_461 = arith.constant 0 : index
    %1091 = vector.load %arg6[%c0_460, %c0_461] : memref<32x64xf32, #tpu.memory_space<vmem>>, vector<32x64xf32>
    %cst_462 = arith.constant dense<0.000000e+00> : vector<16x64xf32>
    %1092 = tpu.matmul %1090, %1091, %cst_462 {dimension_numbers = #tpu.dot_dimension_numbers<[1], [0], [0], [1], [0, 0, 1, 1], [], []>} : vector<16x32xf32>, vector<32x64xf32>, vector<16x64xf32> -> vector<16x64xf32>
    %c0_463 = arith.constant 0 : index
    %c0_464 = arith.constant 0 : index
    %1093 = vector.load %arg9[%c0_463, %c0_464] : memref<1x64xf32, #tpu.memory_space<vmem>>, vector<1x64xf32>
    %1094 = vector.broadcast %1093 : vector<1x64xf32> to vector<16x64xf32>
    %1095 = arith.addf %1092, %1094 : vector<16x64xf32>
    %c0_465 = arith.constant 0 : index
    %c0_466 = arith.constant 0 : index
    %1096 = vector.load %arg46[%c0_465, %c0_466] : memref<16x64xf32, #tpu.memory_space<vmem>>, vector<16x64xf32>
    tpu.vector_store %arg46[%c0_465, %c0_466], %1095 {strides = array<i32>} : memref<16x64xf32, #tpu.memory_space<vmem>>, vector<16x64xf32>,
    %cst_467 = arith.constant dense<0xFF800000> : vector<16xf32>
    %1097 = vector.multi_reduction <maximumf>, %1095, %cst_467 [1] : vector<16x64xf32> to vector<16xf32>
    %1098 = vector.shape_cast %1097 : vector<16xf32> to vector<16x1xf32>
    %1099 = vector.broadcast %1098 : vector<16x1xf32> to vector<16x64xf32>
    %1100 = arith.subf %1095, %1099 : vector<16x64xf32>
    %1101 = math.exp %1100 : vector<16x64xf32>
    %cst_468 = arith.constant dense<0.000000e+00> : vector<16xf32>
    %1102 = vector.multi_reduction <add>, %1101, %cst_468 [1] : vector<16x64xf32> to vector<16xf32>
    %1103 = vector.shape_cast %1102 : vector<16xf32> to vector<16x1xf32>
    %1104 = math.log %1103 : vector<16x1xf32>
    %1105 = arith.addf %1104, %1098 : vector<16x1xf32>
    %c0_469 = arith.constant 0 : index
    %c0_470 = arith.constant 0 : index
    %1106 = vector.load %arg2[%c0_469, %c0_470] : memref<16x1xi32, #tpu.memory_space<vmem>>, vector<16x1xi32>
    %1107 = tpu.iota {dimensions = array<i32: 1>} : vector<16x64xi32>
    %1108 = vector.broadcast %1106 : vector<16x1xi32> to vector<16x64xi32>
    %1109 = arith.cmpi eq, %1107, %1108 : vector<16x64xi32>
    %cst_471 = arith.constant 0.000000e+00 : f32
    %1110 = vector.broadcast %cst_471 : f32 to vector<16x64xf32>
    %1111 = arith.select %1109, %1095, %1110 : vector<16x64xi1>, vector<16x64xf32>
    %cst_472 = arith.constant dense<0.000000e+00> : vector<16xf32>
    %1112 = vector.multi_reduction <add>, %1111, %cst_472 [1] : vector<16x64xf32> to vector<16xf32>
    %1113 = vector.shape_cast %1112 : vector<16xf32> to vector<16x1xf32>
    %c-100_i32 = arith.constant -100 : i32
    %1114 = vector.broadcast %c-100_i32 : i32 to vector<16x1xi32>
    %1115 = arith.cmpi ne, %1106, %1114 : vector<16x1xi32>
    %1116 = arith.extui %1115 : vector<16x1xi1> to vector<16x1xi32>
    %1117 = arith.sitofp %1116 : vector<16x1xi32> to vector<16x1xf32>
    %1118 = arith.subf %1105, %1113 : vector<16x1xf32>
    %1119 = arith.mulf %1118, %1117 : vector<16x1xf32>
    %cst_473 = arith.constant dense<0.000000e+00> : vector<1xf32>
    %1120 = vector.multi_reduction <add>, %1119, %cst_473 [0] : vector<16x1xf32> to vector<1xf32>
    %1121 = vector.shape_cast %1120 : vector<1xf32> to vector<1x1xf32>
    %cst_474 = arith.constant dense<0.000000e+00> : vector<1xf32>
    %1122 = vector.multi_reduction <add>, %1117, %cst_474 [0] : vector<16x1xf32> to vector<1xf32>
    %1123 = vector.shape_cast %1122 : vector<1xf32> to vector<1x1xf32>
    %cst_475 = arith.constant 1.000000e+00 : f32
    %1124 = vector.broadcast %cst_475 : f32 to vector<1x1xf32>
    %1125 = arith.maximumf %1123, %1124 : vector<1x1xf32>
    %1126 = arith.divf %1121, %1125 : vector<1x1xf32>
    %c0_476 = arith.constant 0 : index
    %c0_477 = arith.constant 0 : index
    %1127 = vector.load %arg47[%c0_476, %c0_477] : memref<1x1xf32, #tpu.memory_space<vmem>>, vector<1x1xf32>
    tpu.vector_store %arg47[%c0_476, %c0_477], %1126 {strides = array<i32>} : memref<1x1xf32, #tpu.memory_space<vmem>>, vector<1x1xf32>,
    return
  }
}

</mosaic_0001>

<llo_original>
// kernel: bart_forward.1
$region0: #{bart_forward.1}
  #allocation0 [shape = 'u32[]', space=smem, size = 0x4, offset = 0x4, fixed_abs, tag = 'smem constant byte address 0x4 - core index']
  #allocation1 [shape = 'u32[72,128]{1,0:T(1,128)}', space=vmem, size = 0x9000, scoped, tag = 'internal scratch']
  %s0 = inlined_call_operand.smem [shape: u32[48], index: -1, kind: input, shape index: {}]
  %s1 = sld [smem:[%s0]]
  %s2 = scalar_lea.smem %s0, 1
  %s3 = sld [smem:[%s2]]
  %s4 = scalar_lea.smem %s0, 2
  %s5 = sld [smem:[%s4]]
  %s6 = scalar_lea.smem %s0, 3
  %s7 = sld [smem:[%s6]]
  %s8 = scalar_lea.smem %s0, 4
  %s9 = sld [smem:[%s8]]
  %s10 = scalar_lea.smem %s0, 5
  %s11 = sld [smem:[%s10]]
  %s12 = scalar_lea.smem %s0, 6
  %s13 = sld [smem:[%s12]]
  %s14 = scalar_lea.smem %s0, 7
  %s15 = sld [smem:[%s14]]
  %s16 = scalar_lea.smem %s0, 8
  %s17 = sld [smem:[%s16]]
  %s18 = scalar_lea.smem %s0, 9
  %s19 = sld [smem:[%s18]]
  %s20 = scalar_lea.smem %s0, 10
  %s21 = sld [smem:[%s20]]
  %s22 = scalar_lea.smem %s0, 11
  %s23 = sld [smem:[%s22]]
  %s24 = scalar_lea.smem %s0, 12
  %s25 = sld [smem:[%s24]]
  %s26 = scalar_lea.smem %s0, 13
  %s27 = sld [smem:[%s26]]
  %s28 = scalar_lea.smem %s0, 14
  %s29 = sld [smem:[%s28]]
  %s30 = scalar_lea.smem %s0, 15
  %s31 = sld [smem:[%s30]]
  %s32 = scalar_lea.smem %s0, 16
  %s33 = sld [smem:[%s32]]
  %s34 = scalar_lea.smem %s0, 17
  %s35 = sld [smem:[%s34]]
  %s36 = scalar_lea.smem %s0, 18
  %s37 = sld [smem:[%s36]]
  %s38 = scalar_lea.smem %s0, 19
  %s39 = sld [smem:[%s38]]
  %s40 = scalar_lea.smem %s0, 20
  %s41 = sld [smem:[%s40]]
  %s42 = scalar_lea.smem %s0, 21
  %s43 = sld [smem:[%s42]]
  %s44 = scalar_lea.smem %s0, 22
  %s45 = sld [smem:[%s44]]
  %s46 = scalar_lea.smem %s0, 23
  %s47 = sld [smem:[%s46]]
  %s48 = scalar_lea.smem %s0, 24
  %s49 = sld [smem:[%s48]]
  %s50 = scalar_lea.smem %s0, 25
  %s51 = sld [smem:[%s50]]
  %s52 = scalar_lea.smem %s0, 26
  %s53 = sld [smem:[%s52]]
  %s54 = scalar_lea.smem %s0, 27
  %s55 = sld [smem:[%s54]]
  %s56 = scalar_lea.smem %s0, 28
  %s57 = sld [smem:[%s56]]
  %s58 = scalar_lea.smem %s0, 29
  %s59 = sld [smem:[%s58]]
  %s60 = scalar_lea.smem %s0, 30
  %s61 = sld [smem:[%s60]]
  %s62 = scalar_lea.smem %s0, 31
  %s63 = sld [smem:[%s62]]
  %s64 = scalar_lea.smem %s0, 32
  %s65 = sld [smem:[%s64]]
  %s66 = scalar_lea.smem %s0, 33
  %s67 = sld [smem:[%s66]]
  %s68 = scalar_lea.smem %s0, 34
  %s69 = sld [smem:[%s68]]
  %s70 = scalar_lea.smem %s0, 35
  %s71 = sld [smem:[%s70]]
  %s72 = scalar_lea.smem %s0, 36
  %s73 = sld [smem:[%s72]]
  %s74 = scalar_lea.smem %s0, 37
  %s75 = sld [smem:[%s74]]
  %s76 = scalar_lea.smem %s0, 38
  %s77 = sld [smem:[%s76]]
  %s78 = scalar_lea.smem %s0, 39
  %s79 = sld [smem:[%s78]]
  %s80 = scalar_lea.smem %s0, 40
  %s81 = sld [smem:[%s80]]
  %s82 = scalar_lea.smem %s0, 41
  %s83 = sld [smem:[%s82]]
  %s84 = scalar_lea.smem %s0, 42
  %s85 = sld [smem:[%s84]]
  %s86 = scalar_lea.smem %s0, 43
  %s87 = sld [smem:[%s86]]
  %s88 = scalar_lea.smem %s0, 44
  %s89 = sld [smem:[%s88]]
  %s90 = scalar_lea.smem %s0, 45
  %s91 = sld [smem:[%s90]]
  %s92 = scalar_lea.smem %s0, 46
  %s93 = sld [smem:[%s92]]
  %s94 = scalar_lea.smem %s0, 47
  %s95 = sld [smem:[%s94]]
  %96 = xla_tuple %s93, %s95
  %s97 = sld [smem:[#allocation0]]
  $region250: #{bart_forward.1} parent=0
    _
  %s99 = ssub.s32 1, %s97
  %s100 = scalar_select 0, %s99, %s97
  $region1: #{bart_forward.1} parent=0
    #allocation2 [shape = 'u8[32768]{0}', space=vmem, size = 0x8000, scoped, tag = 'input window, operand 5, single buffered']
    #allocation3 [shape = 's32[1]{0}', space=sflag, size = 0x4, scoped, tag = 'scoped memory for bart_forward.1']
    #allocation4 [shape = 's32[1]{0}', space=sflag, size = 0x4, scoped, tag = 'scoped memory for bart_forward.1']
    #allocation5 [shape = 'u8[16384]{0}', space=vmem, size = 0x4000, scoped, tag = 'input window, operand 6, single buffered']
    #allocation6 [shape = 's32[1]{0}', space=sflag, size = 0x4, scoped, tag = 'scoped memory for bart_forward.1']
    #allocation7 [shape = 'u8[32768]{0}', space=vmem, size = 0x8000, scoped, tag = 'input window, operand 12, single buffered']
    #allocation8 [shape = 'u8[32768]{0}', space=vmem, size = 0x8000, scoped, tag = 'input window, operand 14, single buffered']
    #allocation9 [shape = 's32[1]{0}', space=sflag, size = 0x4, scoped, tag = 'scoped memory for bart_forward.1']
    #allocation10 [shape = 'u8[32768]{0}', space=vmem, size = 0x8000, scoped, tag = 'input window, operand 18, single buffered']
    #allocation11 [shape = 'u8[65536]{0}', space=vmem, size = 0x10000, scoped, tag = 'input window, operand 20, single buffered']
    #allocation12 [shape = 's32[1]{0}', space=sflag, size = 0x4, scoped, tag = 'scoped memory for bart_forward.1']
    #allocation13 [shape = 'u8[32768]{0}', space=vmem, size = 0x8000, scoped, tag = 'input window, operand 26, single buffered']
    #allocation14 [shape = 'u8[32768]{0}', space=vmem, size = 0x8000, scoped, tag = 'input window, operand 28, single buffered']
    #allocation15 [shape = 's32[1]{0}', space=sflag, size = 0x4, scoped, tag = 'scoped memory for bart_forward.1']
    #allocation16 [shape = 'u8[32768]{0}', space=vmem, size = 0x8000, scoped, tag = 'input window, operand 32, single buffered']
    #allocation17 [shape = 'u8[32768]{0}', space=vmem, size = 0x8000, scoped, tag = 'input window, operand 34, single buffered']
    #allocation18 [shape = 's32[1]{0}', space=sflag, size = 0x4, scoped, tag = 'scoped memory for bart_forward.1']
    #allocation19 [shape = 'u8[32768]{0}', space=vmem, size = 0x8000, scoped, tag = 'input window, operand 36, single buffered']
    #allocation20 [shape = 'u8[65536]{0}', space=vmem, size = 0x10000, scoped, tag = 'input window, operand 42, single buffered']
    #allocation21 [shape = 's32[1]{0}', space=sflag, size = 0x4, scoped, tag = 'scoped memory for bart_forward.1']
    #allocation22 [shape = 'u8[8192]{0}', space=vmem, size = 0x2000, scoped, tag = 'output window, operand 0, single buffered']
    #allocation23 [shape = 'u8[512]{0}', space=vmem, size = 0x400, scoped, tag = 'output window, operand 1, single buffered']
    #allocation24 [shape = 's32[1]{0}', space=sflag, size = 0x4, scoped, tag = 'scoped memory for bart_forward.1']
    %101 = vsyncpa [#allocation3], 0
    %102 = vsyncpa [#allocation6], 0
    %103 = vsyncpa [#allocation9], 0
    %104 = vsyncpa [#allocation12], 0
    %105 = vsyncpa [#allocation15], 0
    %106 = vsyncpa [#allocation18], 0
    %107 = vsyncpa [#allocation21], 0
    %108 = vsyncpa [#allocation4], 0
    %109 = vsyncpa [#allocation24], 0
    // Predicated region
    $region2: #{bart_forward.1} parent=1 // pred_check
      _
    $region3: #{bart_forward.1} parent=1 // pred_check_branch
      %111 = sbr.rel (0) target = $region5
    $region4: #{bart_forward.1} parent=1 // pred_region
      _
    $region5: #{bart_forward.1} parent=1 // pred_fallthru
      _
    // Predicated region
    $region6: #{bart_forward.1} parent=1 // pred_check
      _
    $region7: #{bart_forward.1} parent=1 // pred_check_branch
      %113 = sbr.rel (0) target = $region9
    $region8: #{bart_forward.1} parent=1 // pred_region
      _
    $region9: #{bart_forward.1} parent=1 // pred_fallthru
      _
    // Predicated region
    $region10: #{bart_forward.1} parent=1 // pred_check
      _
    $region11: #{bart_forward.1} parent=1 // pred_check_branch
      %115 = sbr.rel (0) target = $region13
    $region12: #{bart_forward.1} parent=1 // pred_region
      _
    $region13: #{bart_forward.1} parent=1 // pred_fallthru
      _
    // Predicated region
    $region14: #{bart_forward.1} parent=1 // pred_check
      _
    $region15: #{bart_forward.1} parent=1 // pred_check_branch
      %117 = sbr.rel (0) target = $region17
    $region16: #{bart_forward.1} parent=1 // pred_region
      _
    $region17: #{bart_forward.1} parent=1 // pred_fallthru
      _
    // Predicated region
    $region18: #{bart_forward.1} parent=1 // pred_check
      _
    $region19: #{bart_forward.1} parent=1 // pred_check_branch
      %119 = sbr.rel (0) target = $region21
    $region20: #{bart_forward.1} parent=1 // pred_region
      _
    $region21: #{bart_forward.1} parent=1 // pred_fallthru
      _
    // Predicated region
    $region22: #{bart_forward.1} parent=1 // pred_check
      _
    $region23: #{bart_forward.1} parent=1 // pred_check_branch
      %121 = sbr.rel (0) target = $region25
    $region24: #{bart_forward.1} parent=1 // pred_region
      %123 = vsyncadd [#allocation3], 0
      %s124 = sshll.u32 %s11, 4
      %s125 = int_to_ptr.hbm [resolvable:$true] %s124
      %s126 = sshll.u32 [#allocation2], 4
      %s127 = int_to_ptr.vmem [resolvable:$true] %s126
      %132 = dma.hbm_to_vmem [thread:$0]  %s125, 1024, %s127, [#allocation3], 128, 128, 8
    $region25: #{bart_forward.1} parent=1 // pred_fallthru
      _
    // Predicated region
    $region26: #{bart_forward.1} parent=1 // pred_check
      _
    $region27: #{bart_forward.1} parent=1 // pred_check_branch
      %134 = sbr.rel (0) target = $region29
    $region28: #{bart_forward.1} parent=1 // pred_region
      %136 = vsyncadd [#allocation6], 0
      %s137 = sshll.u32 %s13, 4
      %s138 = int_to_ptr.hbm [resolvable:$true] %s137
      %s139 = sshll.u32 [#allocation5], 4
      %s140 = int_to_ptr.vmem [resolvable:$true] %s139
      %145 = dma.hbm_to_vmem [thread:$0]  %s138, 512, %s140, [#allocation6], 128, 128, 8
    $region29: #{bart_forward.1} parent=1 // pred_fallthru
      _
    // Predicated region
    $region30: #{bart_forward.1} parent=1 // pred_check
      _
    $region31: #{bart_forward.1} parent=1 // pred_check_branch
      %147 = sbr.rel (0) target = $region33
    $region32: #{bart_forward.1} parent=1 // pred_region
      _
    $region33: #{bart_forward.1} parent=1 // pred_fallthru
      _
    // Predicated region
    $region34: #{bart_forward.1} parent=1 // pred_check
      _
    $region35: #{bart_forward.1} parent=1 // pred_check_branch
      %149 = sbr.rel (0) target = $region37
    $region36: #{bart_forward.1} parent=1 // pred_region
      _
    $region37: #{bart_forward.1} parent=1 // pred_fallthru
      _
    // Predicated region
    $region38: #{bart_forward.1} parent=1 // pred_check
      _
    $region39: #{bart_forward.1} parent=1 // pred_check_branch
      %151 = sbr.rel (0) target = $region41
    $region40: #{bart_forward.1} parent=1 // pred_region
      _
    $region41: #{bart_forward.1} parent=1 // pred_fallthru
      _
    // Predicated region
    $region42: #{bart_forward.1} parent=1 // pred_check
      _
    $region43: #{bart_forward.1} parent=1 // pred_check_branch
      %153 = sbr.rel (0) target = $region45
    $region44: #{bart_forward.1} parent=1 // pred_region
      _
    $region45: #{bart_forward.1} parent=1 // pred_fallthru
      _
    // Predicated region
    $region46: #{bart_forward.1} parent=1 // pred_check
      _
    $region47: #{bart_forward.1} parent=1 // pred_check_branch
      %155 = sbr.rel (0) target = $region49
    $region48: #{bart_forward.1} parent=1 // pred_region
      _
    $region49: #{bart_forward.1} parent=1 // pred_fallthru
      _
    // Predicated region
    $region50: #{bart_forward.1} parent=1 // pred_check
      _
    $region51: #{bart_forward.1} parent=1 // pred_check_branch
      %157 = sbr.rel (0) target = $region53
    $region52: #{bart_forward.1} parent=1 // pred_region
      %159 = vsyncadd [#allocation6], 0
      %s160 = sshll.u32 %s25, 4
      %s161 = int_to_ptr.hbm [resolvable:$true] %s160
      %s162 = sshll.u32 [#allocation7], 4
      %s163 = int_to_ptr.vmem [resolvable:$true] %s162
      %168 = dma.hbm_to_vmem [thread:$0]  %s161, 1024, %s163, [#allocation6], 128, 128, 8
    $region53: #{bart_forward.1} parent=1 // pred_fallthru
      _
    // Predicated region
    $region54: #{bart_forward.1} parent=1 // pred_check
      _
    $region55: #{bart_forward.1} parent=1 // pred_check_branch
      %170 = sbr.rel (0) target = $region57
    $region56: #{bart_forward.1} parent=1 // pred_region
      _
    $region57: #{bart_forward.1} parent=1 // pred_fallthru
      _
    // Predicated region
    $region58: #{bart_forward.1} parent=1 // pred_check
      _
    $region59: #{bart_forward.1} parent=1 // pred_check_branch
      %172 = sbr.rel (0) target = $region61
    $region60: #{bart_forward.1} parent=1 // pred_region
      %174 = vsyncadd [#allocation9], 0
      %s175 = sshll.u32 %s29, 4
      %s176 = int_to_ptr.hbm [resolvable:$true] %s175
      %s177 = sshll.u32 [#allocation8], 4
      %s178 = int_to_ptr.vmem [resolvable:$true] %s177
      %183 = dma.hbm_to_vmem [thread:$0]  %s176, 1024, %s178, [#allocation9], 128, 128, 8
    $region61: #{bart_forward.1} parent=1 // pred_fallthru
      _
    // Predicated region
    $region62: #{bart_forward.1} parent=1 // pred_check
      _
    $region63: #{bart_forward.1} parent=1 // pred_check_branch
      %185 = sbr.rel (0) target = $region65
    $region64: #{bart_forward.1} parent=1 // pred_region
      _
    $region65: #{bart_forward.1} parent=1 // pred_fallthru
      _
    // Predicated region
    $region66: #{bart_forward.1} parent=1 // pred_check
      _
    $region67: #{bart_forward.1} parent=1 // pred_check_branch
      %187 = sbr.rel (0) target = $region69
    $region68: #{bart_forward.1} parent=1 // pred_region
      _
    $region69: #{bart_forward.1} parent=1 // pred_fallthru
      _
    // Predicated region
    $region70: #{bart_forward.1} parent=1 // pred_check
      _
    $region71: #{bart_forward.1} parent=1 // pred_check_branch
      %189 = sbr.rel (0) target = $region73
    $region72: #{bart_forward.1} parent=1 // pred_region
      _
    $region73: #{bart_forward.1} parent=1 // pred_fallthru
      _
    // Predicated region
    $region74: #{bart_forward.1} parent=1 // pred_check
      _
    $region75: #{bart_forward.1} parent=1 // pred_check_branch
      %191 = sbr.rel (0) target = $region77
    $region76: #{bart_forward.1} parent=1 // pred_region
      %193 = vsyncadd [#allocation9], 0
      %s194 = sshll.u32 %s37, 4
      %s195 = int_to_ptr.hbm [resolvable:$true] %s194
      %s196 = sshll.u32 [#allocation10], 4
      %s197 = int_to_ptr.vmem [resolvable:$true] %s196
      %202 = dma.hbm_to_vmem [thread:$0]  %s195, 1024, %s197, [#allocation9], 128, 128, 8
    $region77: #{bart_forward.1} parent=1 // pred_fallthru
      _
    // Predicated region
    $region78: #{bart_forward.1} parent=1 // pred_check
      _
    $region79: #{bart_forward.1} parent=1 // pred_check_branch
      %204 = sbr.rel (0) target = $region81
    $region80: #{bart_forward.1} parent=1 // pred_region
      _
    $region81: #{bart_forward.1} parent=1 // pred_fallthru
      _
    // Predicated region
    $region82: #{bart_forward.1} parent=1 // pred_check
      _
    $region83: #{bart_forward.1} parent=1 // pred_check_branch
      %206 = sbr.rel (0) target = $region85
    $region84: #{bart_forward.1} parent=1 // pred_region
      %208 = vsyncadd [#allocation12], 0
      %s209 = sshll.u32 %s41, 4
      %s210 = int_to_ptr.hbm [resolvable:$true] %s209
      %s211 = sshll.u32 [#allocation11], 4
      %s212 = int_to_ptr.vmem [resolvable:$true] %s211
      %217 = dma.hbm_to_vmem [thread:$0]  %s210, 2048, %s212, [#allocation12], 128, 128, 8
    $region85: #{bart_forward.1} parent=1 // pred_fallthru
      _
    // Predicated region
    $region86: #{bart_forward.1} parent=1 // pred_check
      _
    $region87: #{bart_forward.1} parent=1 // pred_check_branch
      %219 = sbr.rel (0) target = $region89
    $region88: #{bart_forward.1} parent=1 // pred_region
      _
    $region89: #{bart_forward.1} parent=1 // pred_fallthru
      _
    // Predicated region
    $region90: #{bart_forward.1} parent=1 // pred_check
      _
    $region91: #{bart_forward.1} parent=1 // pred_check_branch
      %221 = sbr.rel (0) target = $region93
    $region92: #{bart_forward.1} parent=1 // pred_region
      _
    $region93: #{bart_forward.1} parent=1 // pred_fallthru
      _
    // Predicated region
    $region94: #{bart_forward.1} parent=1 // pred_check
      _
    $region95: #{bart_forward.1} parent=1 // pred_check_branch
      %223 = sbr.rel (0) target = $region97
    $region96: #{bart_forward.1} parent=1 // pred_region
      _
    $region97: #{bart_forward.1} parent=1 // pred_fallthru
      _
    // Predicated region
    $region98: #{bart_forward.1} parent=1 // pred_check
      _
    $region99: #{bart_forward.1} parent=1 // pred_check_branch
      %225 = sbr.rel (0) target = $region101
    $region100: #{bart_forward.1} parent=1 // pred_region
      _
    $region101: #{bart_forward.1} parent=1 // pred_fallthru
      _
    // Predicated region
    $region102: #{bart_forward.1} parent=1 // pred_check
      _
    $region103: #{bart_forward.1} parent=1 // pred_check_branch
      %227 = sbr.rel (0) target = $region105
    $region104: #{bart_forward.1} parent=1 // pred_region
      _
    $region105: #{bart_forward.1} parent=1 // pred_fallthru
      _
    // Predicated region
    $region106: #{bart_forward.1} parent=1 // pred_check
      _
    $region107: #{bart_forward.1} parent=1 // pred_check_branch
      %229 = sbr.rel (0) target = $region109
    $region108: #{bart_forward.1} parent=1 // pred_region
      %231 = vsyncadd [#allocation12], 0
      %s232 = sshll.u32 %s53, 4
      %s233 = int_to_ptr.hbm [resolvable:$true] %s232
      %s234 = sshll.u32 [#allocation13], 4
      %s235 = int_to_ptr.vmem [resolvable:$true] %s234
      %240 = dma.hbm_to_vmem [thread:$0]  %s233, 1024, %s235, [#allocation12], 128, 128, 8
    $region109: #{bart_forward.1} parent=1 // pred_fallthru
      _
    // Predicated region
    $region110: #{bart_forward.1} parent=1 // pred_check
      _
    $region111: #{bart_forward.1} parent=1 // pred_check_branch
      %242 = sbr.rel (0) target = $region113
    $region112: #{bart_forward.1} parent=1 // pred_region
      _
    $region113: #{bart_forward.1} parent=1 // pred_fallthru
      _
    // Predicated region
    $region114: #{bart_forward.1} parent=1 // pred_check
      _
    $region115: #{bart_forward.1} parent=1 // pred_check_branch
      %244 = sbr.rel (0) target = $region117
    $region116: #{bart_forward.1} parent=1 // pred_region
      %246 = vsyncadd [#allocation15], 0
      %s247 = sshll.u32 %s57, 4
      %s248 = int_to_ptr.hbm [resolvable:$true] %s247
      %s249 = sshll.u32 [#allocation14], 4
      %s250 = int_to_ptr.vmem [resolvable:$true] %s249
      %255 = dma.hbm_to_vmem [thread:$0]  %s248, 1024, %s250, [#allocation15], 128, 128, 8
    $region117: #{bart_forward.1} parent=1 // pred_fallthru
      _
    // Predicated region
    $region118: #{bart_forward.1} parent=1 // pred_check
      _
    $region119: #{bart_forward.1} parent=1 // pred_check_branch
      %257 = sbr.rel (0) target = $region121
    $region120: #{bart_forward.1} parent=1 // pred_region
      _
    $region121: #{bart_forward.1} parent=1 // pred_fallthru
      _
    // Predicated region
    $region122: #{bart_forward.1} parent=1 // pred_check
      _
    $region123: #{bart_forward.1} parent=1 // pred_check_branch
      %259 = sbr.rel (0) target = $region125
    $region124: #{bart_forward.1} parent=1 // pred_region
      _
    $region125: #{bart_forward.1} parent=1 // pred_fallthru
      _
    // Predicated region
    $region126: #{bart_forward.1} parent=1 // pred_check
      _
    $region127: #{bart_forward.1} parent=1 // pred_check_branch
      %261 = sbr.rel (0) target = $region129
    $region128: #{bart_forward.1} parent=1 // pred_region
      _
    $region129: #{bart_forward.1} parent=1 // pred_fallthru
      _
    // Predicated region
    $region130: #{bart_forward.1} parent=1 // pred_check
      _
    $region131: #{bart_forward.1} parent=1 // pred_check_branch
      %263 = sbr.rel (0) target = $region133
    $region132: #{bart_forward.1} parent=1 // pred_region
      %265 = vsyncadd [#allocation15], 0
      %s266 = sshll.u32 %s65, 4
      %s267 = int_to_ptr.hbm [resolvable:$true] %s266
      %s268 = sshll.u32 [#allocation16], 4
      %s269 = int_to_ptr.vmem [resolvable:$true] %s268
      %274 = dma.hbm_to_vmem [thread:$0]  %s267, 1024, %s269, [#allocation15], 128, 128, 8
    $region133: #{bart_forward.1} parent=1 // pred_fallthru
      _
    // Predicated region
    $region134: #{bart_forward.1} parent=1 // pred_check
      _
    $region135: #{bart_forward.1} parent=1 // pred_check_branch
      %276 = sbr.rel (0) target = $region137
    $region136: #{bart_forward.1} parent=1 // pred_region
      _
    $region137: #{bart_forward.1} parent=1 // pred_fallthru
      _
    // Predicated region
    $region138: #{bart_forward.1} parent=1 // pred_check
      _
    $region139: #{bart_forward.1} parent=1 // pred_check_branch
      %278 = sbr.rel (0) target = $region141
    $region140: #{bart_forward.1} parent=1 // pred_region
      %280 = vsyncadd [#allocation18], 0
      %s281 = sshll.u32 %s69, 4
      %s282 = int_to_ptr.hbm [resolvable:$true] %s281
      %s283 = sshll.u32 [#allocation17], 4
      %s284 = int_to_ptr.vmem [resolvable:$true] %s283
      %289 = dma.hbm_to_vmem [thread:$0]  %s282, 1024, %s284, [#allocation18], 128, 128, 8
    $region141: #{bart_forward.1} parent=1 // pred_fallthru
      _
    // Predicated region
    $region142: #{bart_forward.1} parent=1 // pred_check
      _
    $region143: #{bart_forward.1} parent=1 // pred_check_branch
      %291 = sbr.rel (0) target = $region145
    $region144: #{bart_forward.1} parent=1 // pred_region
      _
    $region145: #{bart_forward.1} parent=1 // pred_fallthru
      _
    // Predicated region
    $region146: #{bart_forward.1} parent=1 // pred_check
      _
    $region147: #{bart_forward.1} parent=1 // pred_check_branch
      %293 = sbr.rel (0) target = $region149
    $region148: #{bart_forward.1} parent=1 // pred_region
      %295 = vsyncadd [#allocation18], 0
      %s296 = sshll.u32 %s73, 4
      %s297 = int_to_ptr.hbm [resolvable:$true] %s296
      %s298 = sshll.u32 [#allocation19], 4
      %s299 = int_to_ptr.vmem [resolvable:$true] %s298
      %304 = dma.hbm_to_vmem [thread:$0]  %s297, 1024, %s299, [#allocation18], 128, 128, 8
    $region149: #{bart_forward.1} parent=1 // pred_fallthru
      _
    // Predicated region
    $region150: #{bart_forward.1} parent=1 // pred_check
      _
    $region151: #{bart_forward.1} parent=1 // pred_check_branch
      %306 = sbr.rel (0) target = $region153
    $region152: #{bart_forward.1} parent=1 // pred_region
      _
    $region153: #{bart_forward.1} parent=1 // pred_fallthru
      _
    // Predicated region
    $region154: #{bart_forward.1} parent=1 // pred_check
      _
    $region155: #{bart_forward.1} parent=1 // pred_check_branch
      %308 = sbr.rel (0) target = $region157
    $region156: #{bart_forward.1} parent=1 // pred_region
      _
    $region157: #{bart_forward.1} parent=1 // pred_fallthru
      _
    // Predicated region
    $region158: #{bart_forward.1} parent=1 // pred_check
      _
    $region159: #{bart_forward.1} parent=1 // pred_check_branch
      %310 = sbr.rel (0) target = $region161
    $region160: #{bart_forward.1} parent=1 // pred_region
      _
    $region161: #{bart_forward.1} parent=1 // pred_fallthru
      _
    // Predicated region
    $region162: #{bart_forward.1} parent=1 // pred_check
      _
    $region163: #{bart_forward.1} parent=1 // pred_check_branch
      %312 = sbr.rel (0) target = $region165
    $region164: #{bart_forward.1} parent=1 // pred_region
      _
    $region165: #{bart_forward.1} parent=1 // pred_fallthru
      _
    // Predicated region
    $region166: #{bart_forward.1} parent=1 // pred_check
      _
    $region167: #{bart_forward.1} parent=1 // pred_check_branch
      %314 = sbr.rel (0) target = $region169
    $region168: #{bart_forward.1} parent=1 // pred_region
      _
    $region169: #{bart_forward.1} parent=1 // pred_fallthru
      _
    // Predicated region
    $region170: #{bart_forward.1} parent=1 // pred_check
      _
    $region171: #{bart_forward.1} parent=1 // pred_check_branch
      %316 = sbr.rel (0) target = $region173
    $region172: #{bart_forward.1} parent=1 // pred_region
      %318 = vsyncadd [#allocation21], 0
      %s319 = sshll.u32 %s85, 4
      %s320 = int_to_ptr.hbm [resolvable:$true] %s319
      %s321 = sshll.u32 [#allocation20], 4
      %s322 = int_to_ptr.vmem [resolvable:$true] %s321
      %327 = dma.hbm_to_vmem [thread:$0]  %s320, 2048, %s322, [#allocation21], 128, 128, 8
    $region173: #{bart_forward.1} parent=1 // pred_fallthru
      _
    // Predicated region
    $region174: #{bart_forward.1} parent=1 // pred_check
      _
    $region175: #{bart_forward.1} parent=1 // pred_check_branch
      %329 = sbr.rel (0) target = $region177
    $region176: #{bart_forward.1} parent=1 // pred_region
      _
    $region177: #{bart_forward.1} parent=1 // pred_fallthru
      _
    // Predicated region
    $region178: #{bart_forward.1} parent=1 // pred_check
      _
    $region179: #{bart_forward.1} parent=1 // pred_check_branch
      %331 = sbr.rel (0) target = $region181
    $region180: #{bart_forward.1} parent=1 // pred_region
      _
    $region181: #{bart_forward.1} parent=1 // pred_fallthru
      _
    // Predicated region
    $region182: #{bart_forward.1} parent=1 // pred_check
      _
    $region183: #{bart_forward.1} parent=1 // pred_check_branch
      %333 = sbr.rel (0) target = $region185
    $region184: #{bart_forward.1} parent=1 // pred_region
      _
    $region185: #{bart_forward.1} parent=1 // pred_fallthru
      _
    // Predicated region
    $region186: #{bart_forward.1} parent=1 // pred_check
      _
    $region187: #{bart_forward.1} parent=1 // pred_check_branch
      %335 = sbr.rel (0) target = $region189
    $region188: #{bart_forward.1} parent=1 // pred_region
      %337 = dma.done [#allocation3], 1024
    $region189: #{bart_forward.1} parent=1 // pred_fallthru
      _
    // Predicated region
    $region190: #{bart_forward.1} parent=1 // pred_check
      _
    $region191: #{bart_forward.1} parent=1 // pred_check_branch
      %339 = sbr.rel (0) target = $region193
    $region192: #{bart_forward.1} parent=1 // pred_region
      %341 = dma.done [#allocation6], 512
    $region193: #{bart_forward.1} parent=1 // pred_fallthru
      _
    // Predicated region
    $region194: #{bart_forward.1} parent=1 // pred_check
      _
    $region195: #{bart_forward.1} parent=1 // pred_check_branch
      %343 = sbr.rel (0) target = $region197
    $region196: #{bart_forward.1} parent=1 // pred_region
      %345 = dma.done [#allocation6], 1024
    $region197: #{bart_forward.1} parent=1 // pred_fallthru
      _
    // Predicated region
    $region198: #{bart_forward.1} parent=1 // pred_check
      _
    $region199: #{bart_forward.1} parent=1 // pred_check_branch
      %347 = sbr.rel (0) target = $region201
    $region200: #{bart_forward.1} parent=1 // pred_region
      %349 = dma.done [#allocation9], 1024
    $region201: #{bart_forward.1} parent=1 // pred_fallthru
      _
    // Predicated region
    $region202: #{bart_forward.1} parent=1 // pred_check
      _
    $region203: #{bart_forward.1} parent=1 // pred_check_branch
      %351 = sbr.rel (0) target = $region205
    $region204: #{bart_forward.1} parent=1 // pred_region
      %353 = dma.done [#allocation9], 1024
    $region205: #{bart_forward.1} parent=1 // pred_fallthru
      _
    // Predicated region
    $region206: #{bart_forward.1} parent=1 // pred_check
      _
    $region207: #{bart_forward.1} parent=1 // pred_check_branch
      %355 = sbr.rel (0) target = $region209
    $region208: #{bart_forward.1} parent=1 // pred_region
      %357 = dma.done [#allocation12], 2048
    $region209: #{bart_forward.1} parent=1 // pred_fallthru
      _
    // Predicated region
    $region210: #{bart_forward.1} parent=1 // pred_check
      _
    $region211: #{bart_forward.1} parent=1 // pred_check_branch
      %359 = sbr.rel (0) target = $region213
    $region212: #{bart_forward.1} parent=1 // pred_region
      %361 = dma.done [#allocation12], 1024
    $region213: #{bart_forward.1} parent=1 // pred_fallthru
      _
    // Predicated region
    $region214: #{bart_forward.1} parent=1 // pred_check
      _
    $region215: #{bart_forward.1} parent=1 // pred_check_branch
      %363 = sbr.rel (0) target = $region217
    $region216: #{bart_forward.1} parent=1 // pred_region
      %365 = dma.done [#allocation15], 1024
    $region217: #{bart_forward.1} parent=1 // pred_fallthru
      _
    // Predicated region
    $region218: #{bart_forward.1} parent=1 // pred_check
      _
    $region219: #{bart_forward.1} parent=1 // pred_check_branch
      %367 = sbr.rel (0) target = $region221
    $region220: #{bart_forward.1} parent=1 // pred_region
      %369 = dma.done [#allocation15], 1024
    $region221: #{bart_forward.1} parent=1 // pred_fallthru
      _
    // Predicated region
    $region222: #{bart_forward.1} parent=1 // pred_check
      _
    $region223: #{bart_forward.1} parent=1 // pred_check_branch
      %371 = sbr.rel (0) target = $region225
    $region224: #{bart_forward.1} parent=1 // pred_region
      %373 = dma.done [#allocation18], 1024
    $region225: #{bart_forward.1} parent=1 // pred_fallthru
      _
    // Predicated region
    $region226: #{bart_forward.1} parent=1 // pred_check
      _
    $region227: #{bart_forward.1} parent=1 // pred_check_branch
      %375 = sbr.rel (0) target = $region229
    $region228: #{bart_forward.1} parent=1 // pred_region
      %377 = dma.done [#allocation18], 1024
    $region229: #{bart_forward.1} parent=1 // pred_fallthru
      _
    // Predicated region
    $region230: #{bart_forward.1} parent=1 // pred_check
      _
    $region231: #{bart_forward.1} parent=1 // pred_check_branch
      %379 = sbr.rel (0) target = $region233
    $region232: #{bart_forward.1} parent=1 // pred_region
      %381 = dma.done [#allocation21], 2048
    $region233: #{bart_forward.1} parent=1 // pred_fallthru
      _
    %v382 = vld [vmem:[#allocation2] sm:$0xff]
    %v383 = vld [vmem:[#allocation2 + $0x8] sm:$0xff]
    %v384 = vld [vmem:[#allocation2 + $0x10] sm:$0xff]
    %v385 = vld [vmem:[#allocation2 + $0x18] sm:$0xff]
    %v386 = vld [vmem:[#allocation2 + $0x20] sm:$0xff]
    %v387 = vld [vmem:[#allocation2 + $0x28] sm:$0xff]
    %v388 = vld [vmem:[#allocation2 + $0x30] sm:$0xff]
    %v389 = vld [vmem:[#allocation2 + $0x38] sm:$0xff]
    %v390 = vld [vmem:[%s7] sm:$0x1]
    %vm391 = vcmp.gt.f32.partialorder %v390, 0.5
    %v392 = vlaneseq
    %v393 = vshrl.u32 %v392, 7
    %v394 = vadd.s32 %v393, 8
    %v395 = vlaneseq
    %v396 = vand.u32 %v395, 127
    %vm397 = vcmp.ge.s32.totalorder %v393, 8
    %vm398 = vcmp.ge.s32.totalorder %v394, 8
    %v399 = vsel %vm397, 1, 0
    %v400 = vsel %vm398, 1, 0
    %vm401 = vcmp.ge.s32.totalorder %v396, 8
    %v402 = vsel %vm401, 1, 0
    %vm403 = vcmp.eq.s32.totalorder %v399, %v402
    %vm404 = vcmp.eq.s32.totalorder %v400, %v402
    %v405 = vsel %vm391, 1, 0
    %v406 = vperm.slane %v405, 0
    %vm407 = vcmp.eq.s32.totalorder %v406, 1
    %vm408 = vmand %vm403, %vm407
    %vm409 = vmand %vm404, %vm407
    %v410 = vsel %vm408, 0.0, -1e+09
    %v411 = vsel %vm409, 0.0, -1e+09
    %v412 = vld [vmem:[%s1] sm:$0xff]
    %v413 = vld [vmem:[%s1 + $0x8] sm:$0xff]
    %v414 = vld [vmem:[%s15] sm:$0xff]
    %415 = vset.pattern.permute.xlu0 0
    %416 = vperm.xlu0 %415, %v412
    %v417 = vpop.permute.xlu0 %416
    %418 = vset.pattern.permute.xlu0 0
    %419 = vperm.xlu0 %418, %v413
    %v420 = vpop.permute.xlu0 %419
    %vm421 = vcmp.eq.s32.totalorder %v396, %v417
    %vm422 = vcmp.eq.s32.totalorder %v396, %v420
    %v423 = vsel %vm421, 1, 0
    %v424 = vsel %vm422, 1, 0
    %v425 = vcvt.s32.f32 %v423
    %v426 = vcvt.s32.f32 %v424
    %vm427 = vcmask 523264
    %v429 = vsel %vm427, %v425, 0
    %v432 = vsel %vm427, %v426, 0
    %434 = vmatpush.msra.mxu0 0.0
    %435 = vmatpush.msra.mxu0 0.0
    %436 = vmatpush.msra.mxu0 0.0
    %437 = vmatpush.msra.mxu0 0.0
    %438 = vmatpush.msra.mxu0 0.0
    %439 = vmatpush.msra.mxu0 0.0
    %440 = vmatpush.msra.mxu0 0.0
    %441 = vmatpush.msra.mxu0 0.0
    %442 = vmatpush.msra.mxu0 %v389
    %443 = vmatpush.msra.mxu0 %v388
    %444 = vmatpush.msra.mxu0 %v387
    %445 = vmatpush.msra.mxu0 %v386
    %446 = vmatpush.msra.mxu0 %v385
    %447 = vmatpush.msra.mxu0 %v384
    %448 = vmatpush.msra.mxu0 %v383
    %449 = vmatpush.msra.mxu0 %v382
    %450 = vmatmul.f32.gmra.mxu0 %v429
    %v451 = vpop.f32.mrf.mxu0
    %v452 = vadd.f32 %v414, %v451
    %453 = vmatmul.f32.gmra.mxu0 %v432
    %v454 = vpop.f32.mrf.mxu0
    %v455 = vadd.f32 %v414, %v454
    %456 = vdwg.mxu0
    %v457 = vld [vmem:[%s21] sm:$0x1]
    %v458 = vld [vmem:[%s23] sm:$0x1]
    %vm459 = vcmask 261120
    %v460 = vsel %vm459, %v452, 0.0
    %461 = vadd.xlane.f32.xlu0 %v460
    %v462 = vpop.xlane.xlu0 %461
    %v463 = vsel %vm459, %v455, 0.0
    %464 = vadd.xlane.f32.xlu0 %v463
    %v465 = vpop.xlane.xlu0 %464
    %v466 = vrcp.pop 32.0
    %v467 = vmul.f32 32.0, %v466
    %v468 = vsub.f32 1.0, %v467
    %v469 = vmul.f32 %v466, %v468
    %v470 = vadd.f32 %v466, %v469
    %vm471 = vweird.f32 %v466
    %v472 = vsel %vm471, %v466, %v470
    %v473 = vmul.f32 %v462, %v472
    %v474 = vmul.f32 %v465, %v472
    %v475 = vsub.f32 %v452, %v473
    %v476 = vsub.f32 %v455, %v474
    %v477 = vmul.f32 %v475, %v475
    %v478 = vmul.f32 %v476, %v476
    %v479 = vsel %vm459, %v477, 0.0
    %480 = vadd.xlane.f32.xlu0 %v479
    %v481 = vpop.xlane.xlu0 %480
    %v482 = vsel %vm459, %v478, 0.0
    %483 = vadd.xlane.f32.xlu0 %v482
    %v484 = vpop.xlane.xlu0 %483
    %v485 = vmul.f32 %v481, %v472
    %v486 = vmul.f32 %v484, %v472
    %v487 = vadd.f32 %v485, 1e-05
    %v488 = vadd.f32 %v486, 1e-05
    %v489 = vrsqrt.pop %v487
    %v490 = vmul.f32 %v489, %v487
    %v491 = vmul.f32 %v490, %v489
    %v492 = vmul.f32 0.5, %v491
    %v493 = vsub.f32 1.5, %v492
    %v494 = vmul.f32 %v489, %v493
    %vm495 = vweird.f32 %v487
    %vm496 = vweird.f32 %v489
    %vm497 = vmor %vm495, %vm496
    %v498 = vsel %vm497, %v489, %v494
    %v499 = vrsqrt.pop %v488
    %v500 = vmul.f32 %v499, %v488
    %v501 = vmul.f32 %v500, %v499
    %v502 = vmul.f32 0.5, %v501
    %v503 = vsub.f32 1.5, %v502
    %v504 = vmul.f32 %v499, %v503
    %vm505 = vweird.f32 %v488
    %vm506 = vweird.f32 %v499
    %vm507 = vmor %vm505, %vm506
    %v508 = vsel %vm507, %v499, %v504
    %v509 = vmul.f32 %v475, %v498
    %v510 = vmul.f32 %v476, %v508
    %v512 = vperm.slane %v457, 0
    %v514 = vmul.f32 %v509, %v512
    %v515 = vmul.f32 %v510, %v512
    %v517 = vperm.slane %v458, 0
    %v519 = vadd.f32 %v514, %v517
    %v520 = vadd.f32 %v515, %v517
    %v521 = vld [vmem:[#allocation7] sm:$0xff]
    %v522 = vld [vmem:[#allocation7 + $0x8] sm:$0xff]
    %v523 = vld [vmem:[#allocation7 + $0x10] sm:$0xff]
    %v524 = vld [vmem:[#allocation7 + $0x18] sm:$0xff]
    %v525 = vld [vmem:[%s27] sm:$0x1]
    %v526 = vld [vmem:[#allocation8] sm:$0xff]
    %v527 = vld [vmem:[#allocation8 + $0x8] sm:$0xff]
    %v528 = vld [vmem:[#allocation8 + $0x10] sm:$0xff]
    %v529 = vld [vmem:[#allocation8 + $0x18] sm:$0xff]
    %v530 = vld [vmem:[%s31] sm:$0x1]
    %v532 = vperm.slane %v525, 0
    %v535 = vsel %vm459, %v519, 0
    %v538 = vsel %vm459, %v520, 0
    %540 = vmatpush.msra.mxu0 0.0
    %541 = vmatpush.msra.mxu0 0.0
    %542 = vmatpush.msra.mxu0 0.0
    %543 = vmatpush.msra.mxu0 0.0
    %544 = vmatpush.msra.mxu0 0.0
    %545 = vmatpush.msra.mxu0 0.0
    %546 = vmatpush.msra.mxu0 0.0
    %547 = vmatpush.msra.mxu0 0.0
    %548 = vmatpush.msra.mxu0 0.0
    %549 = vmatpush.msra.mxu0 0.0
    %550 = vmatpush.msra.mxu0 0.0
    %551 = vmatpush.msra.mxu0 0.0
    %552 = vmatpush.msra.mxu0 %v524
    %553 = vmatpush.msra.mxu0 %v523
    %554 = vmatpush.msra.mxu0 %v522
    %555 = vmatpush.msra.mxu0 %v521
    %556 = vmatmul.f32.gmra.mxu0 %v535
    %v557 = vpop.f32.mrf.mxu0
    %v558 = vadd.f32 %v532, %v557
    %559 = vmatmul.f32.gmra.mxu0 %v538
    %v560 = vpop.f32.mrf.mxu0
    %v561 = vadd.f32 %v532, %v560
    %562 = vdwg.mxu0
    %v563 = vmul.f32 %v558, 0.35355338
    %v564 = vmul.f32 %v561, 0.35355338
    %567 = vrot.lane.b32.xlu0 %v558, 96
    %v568 = vpop.permute.xlu0 %567
    %569 = vrot.lane.b32.xlu0 %v561, 96
    %v570 = vpop.permute.xlu0 %569
    %vm571 = vcmask 64512
    %v573 = vsel %vm571, %v563, 0
    %v576 = vsel %vm571, %v564, 0
    %v578 = vsel %vm571, %v568, 0
    %v580 = vsel %vm571, %v570, 0
    %582 = vmatpush.xpose.msra.mxu0 0.0
    %583 = vmatpush.xpose.msra.mxu0 0.0
    %584 = vmatpush.xpose.msra.mxu0 0.0
    %585 = vmatpush.xpose.msra.mxu0 0.0
    %586 = vmatpush.xpose.msra.mxu0 0.0
    %587 = vmatpush.xpose.msra.mxu0 0.0
    %588 = vmatpush.xpose.msra.mxu0 0.0
    %589 = vmatpush.xpose.msra.mxu0 0.0
    %590 = vmatpush.xpose.msra.mxu0 0.0
    %591 = vmatpush.xpose.msra.mxu0 0.0
    %592 = vmatpush.xpose.msra.mxu0 0.0
    %593 = vmatpush.xpose.msra.mxu0 0.0
    %594 = vmatpush.xpose.msra.mxu0 0.0
    %595 = vmatpush.xpose.msra.mxu0 0.0
    %596 = vmatpush.xpose.msra.mxu0 %v580
    %597 = vmatpush.xpose.msra.mxu0 %v578
    %598 = vmatmul.f32.gmra.mxu0 %v573
    %v599 = vpop.f32.mrf.mxu0
    %v600 = vadd.f32 %v410, %v599
    %601 = vmatmul.f32.gmra.mxu0 %v576
    %v602 = vpop.f32.mrf.mxu0
    %v603 = vadd.f32 %v411, %v602
    %604 = vdwg.mxu0
    %vm605 = vcmask 130048
    %v606 = vsel %vm605, %v600, -inf
    %607 = vmax.xlane.f32.xlu0 %v606
    %v608 = vpop.xlane.xlu0 %607
    %v609 = vsel %vm605, %v603, -inf
    %610 = vmax.xlane.f32.xlu0 %v609
    %v611 = vpop.xlane.xlu0 %610
    %v612 = vsub.f32 %v600, %v608
    %v613 = vsub.f32 %v603, %v611
    %v614 = vmul.f32 %v612, 1.442695
    %v615 = vpow.pop %v614
    %v616 = vmul.f32 %v613, 1.442695
    %v617 = vpow.pop %v616
    %v618 = vsel %vm605, %v615, 0.0
    %619 = vadd.xlane.f32.xlu0 %v618
    %v620 = vpop.xlane.xlu0 %619
    %v621 = vsel %vm605, %v617, 0.0
    %622 = vadd.xlane.f32.xlu0 %v621
    %v623 = vpop.xlane.xlu0 %622
    %v624 = vrcp.pop %v620
    %v625 = vrcp.pop %v623
    %v626 = vmul.f32 %v615, %v624
    %v627 = vmul.f32 %v617, %v625
    %628 = vrot.lane.b32.xlu0 %v558, 64
    %v629 = vpop.permute.xlu0 %628
    %630 = vrot.lane.b32.xlu0 %v561, 64
    %v631 = vpop.permute.xlu0 %630
    %v635 = vsel %vm605, %v626, 0
    %v638 = vsel %vm605, %v627, 0
    %640 = vmatpush.msra.mxu0 0.0
    %641 = vmatpush.msra.mxu0 0.0
    %642 = vmatpush.msra.mxu0 0.0
    %643 = vmatpush.msra.mxu0 0.0
    %644 = vmatpush.msra.mxu0 0.0
    %645 = vmatpush.msra.mxu0 0.0
    %646 = vmatpush.msra.mxu0 0.0
    %647 = vmatpush.msra.mxu0 0.0
    %648 = vmatpush.msra.mxu0 0.0
    %649 = vmatpush.msra.mxu0 0.0
    %650 = vmatpush.msra.mxu0 0.0
    %651 = vmatpush.msra.mxu0 0.0
    %652 = vmatpush.msra.mxu0 0.0
    %653 = vmatpush.msra.mxu0 0.0
    %654 = vmatpush.msra.mxu0 %v631
    %655 = vmatpush.msra.mxu0 %v629
    %656 = vmatmul.f32.gmra.mxu0 %v635
    %v657 = vpop.f32.mrf.mxu0
    %v658 = vadd.f32 0.0, %v657
    %659 = vmatmul.f32.gmra.mxu0 %v638
    %v660 = vpop.f32.mrf.mxu0
    %v661 = vadd.f32 0.0, %v660
    %662 = vdwg.mxu0
    %663 = vrot.lane.b32.xlu0 %v563, 120
    %v664 = vpop.permute.xlu0 %663
    %665 = vrot.lane.b32.xlu0 %v564, 120
    %v666 = vpop.permute.xlu0 %665
    %667 = vrot.lane.b32.xlu0 %v558, 88
    %v668 = vpop.permute.xlu0 %667
    %669 = vrot.lane.b32.xlu0 %v561, 88
    %v670 = vpop.permute.xlu0 %669
    %v671 = vsel %vm571, %v664, 0
    %v673 = vsel %vm571, %v666, 0
    %v675 = vsel %vm571, %v668, 0
    %v677 = vsel %vm571, %v670, 0
    %679 = vmatpush.xpose.msra.mxu0 0.0
    %680 = vmatpush.xpose.msra.mxu0 0.0
    %681 = vmatpush.xpose.msra.mxu0 0.0
    %682 = vmatpush.xpose.msra.mxu0 0.0
    %683 = vmatpush.xpose.msra.mxu0 0.0
    %684 = vmatpush.xpose.msra.mxu0 0.0
    %685 = vmatpush.xpose.msra.mxu0 0.0
    %686 = vmatpush.xpose.msra.mxu0 0.0
    %687 = vmatpush.xpose.msra.mxu0 0.0
    %688 = vmatpush.xpose.msra.mxu0 0.0
    %689 = vmatpush.xpose.msra.mxu0 0.0
    %690 = vmatpush.xpose.msra.mxu0 0.0
    %691 = vmatpush.xpose.msra.mxu0 0.0
    %692 = vmatpush.xpose.msra.mxu0 0.0
    %693 = vmatpush.xpose.msra.mxu0 %v677
    %694 = vmatpush.xpose.msra.mxu0 %v675
    %695 = vmatmul.f32.gmra.mxu0 %v671
    %v696 = vpop.f32.mrf.mxu0
    %v697 = vadd.f32 %v410, %v696
    %698 = vmatmul.f32.gmra.mxu0 %v673
    %v699 = vpop.f32.mrf.mxu0
    %v700 = vadd.f32 %v411, %v699
    %701 = vdwg.mxu0
    %v702 = vsel %vm605, %v697, -inf
    %703 = vmax.xlane.f32.xlu0 %v702
    %v704 = vpop.xlane.xlu0 %703
    %v705 = vsel %vm605, %v700, -inf
    %706 = vmax.xlane.f32.xlu0 %v705
    %v707 = vpop.xlane.xlu0 %706
    %v708 = vsub.f32 %v697, %v704
    %v709 = vsub.f32 %v700, %v707
    %v710 = vmul.f32 %v708, 1.442695
    %v711 = vpow.pop %v710
    %v712 = vmul.f32 %v709, 1.442695
    %v713 = vpow.pop %v712
    %v714 = vsel %vm605, %v711, 0.0
    %715 = vadd.xlane.f32.xlu0 %v714
    %v716 = vpop.xlane.xlu0 %715
    %v717 = vsel %vm605, %v713, 0.0
    %718 = vadd.xlane.f32.xlu0 %v717
    %v719 = vpop.xlane.xlu0 %718
    %v720 = vrcp.pop %v716
    %v721 = vrcp.pop %v719
    %v722 = vmul.f32 %v711, %v720
    %v723 = vmul.f32 %v713, %v721
    %724 = vrot.lane.b32.xlu0 %v558, 56
    %v725 = vpop.permute.xlu0 %724
    %726 = vrot.lane.b32.xlu0 %v561, 56
    %v727 = vpop.permute.xlu0 %726
    %v731 = vsel %vm605, %v722, 0
    %v734 = vsel %vm605, %v723, 0
    %736 = vmatpush.msra.mxu0 0.0
    %737 = vmatpush.msra.mxu0 0.0
    %738 = vmatpush.msra.mxu0 0.0
    %739 = vmatpush.msra.mxu0 0.0
    %740 = vmatpush.msra.mxu0 0.0
    %741 = vmatpush.msra.mxu0 0.0
    %742 = vmatpush.msra.mxu0 0.0
    %743 = vmatpush.msra.mxu0 0.0
    %744 = vmatpush.msra.mxu0 0.0
    %745 = vmatpush.msra.mxu0 0.0
    %746 = vmatpush.msra.mxu0 0.0
    %747 = vmatpush.msra.mxu0 0.0
    %748 = vmatpush.msra.mxu0 0.0
    %749 = vmatpush.msra.mxu0 0.0
    %750 = vmatpush.msra.mxu0 %v727
    %751 = vmatpush.msra.mxu0 %v725
    %752 = vmatmul.f32.gmra.mxu0 %v731
    %v753 = vpop.f32.mrf.mxu0
    %v754 = vadd.f32 0.0, %v753
    %755 = vmatmul.f32.gmra.mxu0 %v734
    %v756 = vpop.f32.mrf.mxu0
    %v757 = vadd.f32 0.0, %v756
    %758 = vdwg.mxu0
    %v760 = vsel %vm571, %v754, 0
    %v763 = vsel %vm571, %v757, 0
    %765 = vmatpush.msra.mxu0 0.0
    %766 = vmatpush.msra.mxu0 0.0
    %767 = vmatpush.msra.mxu0 0.0
    %768 = vmatpush.msra.mxu0 0.0
    %769 = vmatpush.msra.mxu0 0.0
    %770 = vmatpush.msra.mxu0 0.0
    %771 = vmatpush.msra.mxu0 0.0
    %772 = vmatpush.msra.mxu0 0.0
    %773 = vmatpush.msra.mxu0 0.0
    %774 = vmatpush.msra.mxu0 0.0
    %775 = vmatpush.msra.mxu0 0.0
    %776 = vmatpush.msra.mxu0 0.0
    %777 = vmatpush.msra.mxu0 0.0
    %778 = vmatpush.msra.mxu0 0.0
    %779 = vmatpush.msra.mxu0 0.0
    %780 = vmatpush.msra.mxu0 %v527
    %781 = vmatmul.f32.gmra.mxu0 %v760
    %v782 = vpop.f32.mrf.mxu0
    %v783 = vadd.f32 0.0, %v782
    %784 = vmatmul.f32.gmra.mxu0 %v763
    %v785 = vpop.f32.mrf.mxu0
    %v786 = vadd.f32 0.0, %v785
    %787 = vdwg.mxu0
    %v789 = vsel %vm571, %v658, 0
    %v792 = vsel %vm571, %v661, 0
    %794 = vmatpush.msra.mxu0 0.0
    %795 = vmatpush.msra.mxu0 0.0
    %796 = vmatpush.msra.mxu0 0.0
    %797 = vmatpush.msra.mxu0 0.0
    %798 = vmatpush.msra.mxu0 0.0
    %799 = vmatpush.msra.mxu0 0.0
    %800 = vmatpush.msra.mxu0 0.0
    %801 = vmatpush.msra.mxu0 0.0
    %802 = vmatpush.msra.mxu0 0.0
    %803 = vmatpush.msra.mxu0 0.0
    %804 = vmatpush.msra.mxu0 0.0
    %805 = vmatpush.msra.mxu0 0.0
    %806 = vmatpush.msra.mxu0 0.0
    %807 = vmatpush.msra.mxu0 0.0
    %808 = vmatpush.msra.mxu0 0.0
    %809 = vmatpush.msra.mxu0 %v526
    %810 = vmatmul.f32.gmra.mxu0 %v789
    %v811 = vpop.f32.mrf.mxu0
    %v812 = vadd.f32 %v783, %v811
    %813 = vmatmul.f32.gmra.mxu0 %v792
    %v814 = vpop.f32.mrf.mxu0
    %v815 = vadd.f32 %v786, %v814
    %816 = vdwg.mxu0
    %817 = vrot.lane.b32.xlu0 %v563, 112
    %v818 = vpop.permute.xlu0 %817
    %819 = vrot.lane.b32.xlu0 %v564, 112
    %v820 = vpop.permute.xlu0 %819
    %821 = vrot.lane.b32.xlu0 %v558, 80
    %v822 = vpop.permute.xlu0 %821
    %823 = vrot.lane.b32.xlu0 %v561, 80
    %v824 = vpop.permute.xlu0 %823
    %v825 = vsel %vm571, %v818, 0
    %v827 = vsel %vm571, %v820, 0
    %v829 = vsel %vm571, %v822, 0
    %v831 = vsel %vm571, %v824, 0
    %833 = vmatpush.xpose.msra.mxu0 0.0
    %834 = vmatpush.xpose.msra.mxu0 0.0
    %835 = vmatpush.xpose.msra.mxu0 0.0
    %836 = vmatpush.xpose.msra.mxu0 0.0
    %837 = vmatpush.xpose.msra.mxu0 0.0
    %838 = vmatpush.xpose.msra.mxu0 0.0
    %839 = vmatpush.xpose.msra.mxu0 0.0
    %840 = vmatpush.xpose.msra.mxu0 0.0
    %841 = vmatpush.xpose.msra.mxu0 0.0
    %842 = vmatpush.xpose.msra.mxu0 0.0
    %843 = vmatpush.xpose.msra.mxu0 0.0
    %844 = vmatpush.xpose.msra.mxu0 0.0
    %845 = vmatpush.xpose.msra.mxu0 0.0
    %846 = vmatpush.xpose.msra.mxu0 0.0
    %847 = vmatpush.xpose.msra.mxu0 %v831
    %848 = vmatpush.xpose.msra.mxu0 %v829
    %849 = vmatmul.f32.gmra.mxu0 %v825
    %v850 = vpop.f32.mrf.mxu0
    %v851 = vadd.f32 %v410, %v850
    %852 = vmatmul.f32.gmra.mxu0 %v827
    %v853 = vpop.f32.mrf.mxu0
    %v854 = vadd.f32 %v411, %v853
    %855 = vdwg.mxu0
    %v856 = vsel %vm605, %v851, -inf
    %857 = vmax.xlane.f32.xlu0 %v856
    %v858 = vpop.xlane.xlu0 %857
    %v859 = vsel %vm605, %v854, -inf
    %860 = vmax.xlane.f32.xlu0 %v859
    %v861 = vpop.xlane.xlu0 %860
    %v862 = vsub.f32 %v851, %v858
    %v863 = vsub.f32 %v854, %v861
    %v864 = vmul.f32 %v862, 1.442695
    %v865 = vpow.pop %v864
    %v866 = vmul.f32 %v863, 1.442695
    %v867 = vpow.pop %v866
    %v868 = vsel %vm605, %v865, 0.0
    %869 = vadd.xlane.f32.xlu0 %v868
    %v870 = vpop.xlane.xlu0 %869
    %v871 = vsel %vm605, %v867, 0.0
    %872 = vadd.xlane.f32.xlu0 %v871
    %v873 = vpop.xlane.xlu0 %872
    %v874 = vrcp.pop %v870
    %v875 = vrcp.pop %v873
    %v876 = vmul.f32 %v865, %v874
    %v877 = vmul.f32 %v867, %v875
    %878 = vrot.lane.b32.xlu0 %v558, 48
    %v879 = vpop.permute.xlu0 %878
    %880 = vrot.lane.b32.xlu0 %v561, 48
    %v881 = vpop.permute.xlu0 %880
    %v885 = vsel %vm605, %v876, 0
    %v888 = vsel %vm605, %v877, 0
    %890 = vmatpush.msra.mxu0 0.0
    %891 = vmatpush.msra.mxu0 0.0
    %892 = vmatpush.msra.mxu0 0.0
    %893 = vmatpush.msra.mxu0 0.0
    %894 = vmatpush.msra.mxu0 0.0
    %895 = vmatpush.msra.mxu0 0.0
    %896 = vmatpush.msra.mxu0 0.0
    %897 = vmatpush.msra.mxu0 0.0
    %898 = vmatpush.msra.mxu0 0.0
    %899 = vmatpush.msra.mxu0 0.0
    %900 = vmatpush.msra.mxu0 0.0
    %901 = vmatpush.msra.mxu0 0.0
    %902 = vmatpush.msra.mxu0 0.0
    %903 = vmatpush.msra.mxu0 0.0
    %904 = vmatpush.msra.mxu0 %v881
    %905 = vmatpush.msra.mxu0 %v879
    %906 = vmatmul.f32.gmra.mxu0 %v885
    %v907 = vpop.f32.mrf.mxu0
    %v908 = vadd.f32 0.0, %v907
    %909 = vmatmul.f32.gmra.mxu0 %v888
    %v910 = vpop.f32.mrf.mxu0
    %v911 = vadd.f32 0.0, %v910
    %912 = vdwg.mxu0
    %v914 = vsel %vm571, %v908, 0
    %v917 = vsel %vm571, %v911, 0
    %919 = vmatpush.msra.mxu0 0.0
    %920 = vmatpush.msra.mxu0 0.0
    %921 = vmatpush.msra.mxu0 0.0
    %922 = vmatpush.msra.mxu0 0.0
    %923 = vmatpush.msra.mxu0 0.0
    %924 = vmatpush.msra.mxu0 0.0
    %925 = vmatpush.msra.mxu0 0.0
    %926 = vmatpush.msra.mxu0 0.0
    %927 = vmatpush.msra.mxu0 0.0
    %928 = vmatpush.msra.mxu0 0.0
    %929 = vmatpush.msra.mxu0 0.0
    %930 = vmatpush.msra.mxu0 0.0
    %931 = vmatpush.msra.mxu0 0.0
    %932 = vmatpush.msra.mxu0 0.0
    %933 = vmatpush.msra.mxu0 0.0
    %934 = vmatpush.msra.mxu0 %v528
    %935 = vmatmul.f32.gmra.mxu0 %v914
    %v936 = vpop.f32.mrf.mxu0
    %v937 = vadd.f32 0.0, %v936
    %938 = vmatmul.f32.gmra.mxu0 %v917
    %v939 = vpop.f32.mrf.mxu0
    %v940 = vadd.f32 0.0, %v939
    %941 = vdwg.mxu0
    %v942 = vadd.f32 %v812, %v937
    %v943 = vadd.f32 %v815, %v940
    %944 = vrot.lane.b32.xlu0 %v563, 104
    %v945 = vpop.permute.xlu0 %944
    %946 = vrot.lane.b32.xlu0 %v564, 104
    %v947 = vpop.permute.xlu0 %946
    %948 = vrot.lane.b32.xlu0 %v558, 72
    %v949 = vpop.permute.xlu0 %948
    %950 = vrot.lane.b32.xlu0 %v561, 72
    %v951 = vpop.permute.xlu0 %950
    %v952 = vsel %vm571, %v945, 0
    %v954 = vsel %vm571, %v947, 0
    %v956 = vsel %vm571, %v949, 0
    %v958 = vsel %vm571, %v951, 0
    %960 = vmatpush.xpose.msra.mxu0 0.0
    %961 = vmatpush.xpose.msra.mxu0 0.0
    %962 = vmatpush.xpose.msra.mxu0 0.0
    %963 = vmatpush.xpose.msra.mxu0 0.0
    %964 = vmatpush.xpose.msra.mxu0 0.0
    %965 = vmatpush.xpose.msra.mxu0 0.0
    %966 = vmatpush.xpose.msra.mxu0 0.0
    %967 = vmatpush.xpose.msra.mxu0 0.0
    %968 = vmatpush.xpose.msra.mxu0 0.0
    %969 = vmatpush.xpose.msra.mxu0 0.0
    %970 = vmatpush.xpose.msra.mxu0 0.0
    %971 = vmatpush.xpose.msra.mxu0 0.0
    %972 = vmatpush.xpose.msra.mxu0 0.0
    %973 = vmatpush.xpose.msra.mxu0 0.0
    %974 = vmatpush.xpose.msra.mxu0 %v958
    %975 = vmatpush.xpose.msra.mxu0 %v956
    %976 = vmatmul.f32.gmra.mxu0 %v952
    %v977 = vpop.f32.mrf.mxu0
    %v978 = vadd.f32 %v410, %v977
    %979 = vmatmul.f32.gmra.mxu0 %v954
    %v980 = vpop.f32.mrf.mxu0
    %v981 = vadd.f32 %v411, %v980
    %982 = vdwg.mxu0
    %v983 = vsel %vm605, %v978, -inf
    %984 = vmax.xlane.f32.xlu0 %v983
    %v985 = vpop.xlane.xlu0 %984
    %v986 = vsel %vm605, %v981, -inf
    %987 = vmax.xlane.f32.xlu0 %v986
    %v988 = vpop.xlane.xlu0 %987
    %v989 = vsub.f32 %v978, %v985
    %v990 = vsub.f32 %v981, %v988
    %v991 = vmul.f32 %v989, 1.442695
    %v992 = vpow.pop %v991
    %v993 = vmul.f32 %v990, 1.442695
    %v994 = vpow.pop %v993
    %v995 = vsel %vm605, %v992, 0.0
    %996 = vadd.xlane.f32.xlu0 %v995
    %v997 = vpop.xlane.xlu0 %996
    %v998 = vsel %vm605, %v994, 0.0
    %999 = vadd.xlane.f32.xlu0 %v998
    %v1000 = vpop.xlane.xlu0 %999
    %v1001 = vrcp.pop %v997
    %v1002 = vrcp.pop %v1000
    %v1003 = vmul.f32 %v992, %v1001
    %v1004 = vmul.f32 %v994, %v1002
    %1005 = vrot.lane.b32.xlu0 %v558, 40
    %v1006 = vpop.permute.xlu0 %1005
    %1007 = vrot.lane.b32.xlu0 %v561, 40
    %v1008 = vpop.permute.xlu0 %1007
    %v1012 = vsel %vm605, %v1003, 0
    %v1015 = vsel %vm605, %v1004, 0
    %1017 = vmatpush.msra.mxu0 0.0
    %1018 = vmatpush.msra.mxu0 0.0
    %1019 = vmatpush.msra.mxu0 0.0
    %1020 = vmatpush.msra.mxu0 0.0
    %1021 = vmatpush.msra.mxu0 0.0
    %1022 = vmatpush.msra.mxu0 0.0
    %1023 = vmatpush.msra.mxu0 0.0
    %1024 = vmatpush.msra.mxu0 0.0
    %1025 = vmatpush.msra.mxu0 0.0
    %1026 = vmatpush.msra.mxu0 0.0
    %1027 = vmatpush.msra.mxu0 0.0
    %1028 = vmatpush.msra.mxu0 0.0
    %1029 = vmatpush.msra.mxu0 0.0
    %1030 = vmatpush.msra.mxu0 0.0
    %1031 = vmatpush.msra.mxu0 %v1008
    %1032 = vmatpush.msra.mxu0 %v1006
    %1033 = vmatmul.f32.gmra.mxu0 %v1012
    %v1034 = vpop.f32.mrf.mxu0
    %v1035 = vadd.f32 0.0, %v1034
    %1036 = vmatmul.f32.gmra.mxu0 %v1015
    %v1037 = vpop.f32.mrf.mxu0
    %v1038 = vadd.f32 0.0, %v1037
    %1039 = vdwg.mxu0
    %v1041 = vsel %vm571, %v1035, 0
    %v1044 = vsel %vm571, %v1038, 0
    %1046 = vmatpush.msra.mxu0 0.0
    %1047 = vmatpush.msra.mxu0 0.0
    %1048 = vmatpush.msra.mxu0 0.0
    %1049 = vmatpush.msra.mxu0 0.0
    %1050 = vmatpush.msra.mxu0 0.0
    %1051 = vmatpush.msra.mxu0 0.0
    %1052 = vmatpush.msra.mxu0 0.0
    %1053 = vmatpush.msra.mxu0 0.0
    %1054 = vmatpush.msra.mxu0 0.0
    %1055 = vmatpush.msra.mxu0 0.0
    %1056 = vmatpush.msra.mxu0 0.0
    %1057 = vmatpush.msra.mxu0 0.0
    %1058 = vmatpush.msra.mxu0 0.0
    %1059 = vmatpush.msra.mxu0 0.0
    %1060 = vmatpush.msra.mxu0 0.0
    %1061 = vmatpush.msra.mxu0 %v529
    %1062 = vmatmul.f32.gmra.mxu0 %v1041
    %v1063 = vpop.f32.mrf.mxu0
    %v1064 = vadd.f32 0.0, %v1063
    %1065 = vmatmul.f32.gmra.mxu0 %v1044
    %v1066 = vpop.f32.mrf.mxu0
    %v1067 = vadd.f32 0.0, %v1066
    %1068 = vdwg.mxu0
    %v1069 = vadd.f32 %v942, %v1064
    %v1070 = vadd.f32 %v943, %v1067
    %v1072 = vperm.slane %v530, 0
    %v1074 = vadd.f32 %v1069, %v1072
    %v1075 = vadd.f32 %v1070, %v1072
    %v1076 = vadd.f32 %v519, %v1074
    %v1077 = vadd.f32 %v520, %v1075
    %v1078 = vld [vmem:[%s33] sm:$0x1]
    %v1079 = vld [vmem:[%s35] sm:$0x1]
    %v1080 = vsel %vm459, %v1076, 0.0
    %1081 = vadd.xlane.f32.xlu0 %v1080
    %v1082 = vpop.xlane.xlu0 %1081
    %v1083 = vsel %vm459, %v1077, 0.0
    %1084 = vadd.xlane.f32.xlu0 %v1083
    %v1085 = vpop.xlane.xlu0 %1084
    %v1086 = vmul.f32 %v1082, %v472
    %v1087 = vmul.f32 %v1085, %v472
    %v1088 = vsub.f32 %v1076, %v1086
    %v1089 = vsub.f32 %v1077, %v1087
    %v1090 = vmul.f32 %v1088, %v1088
    %v1091 = vmul.f32 %v1089, %v1089
    %v1092 = vsel %vm459, %v1090, 0.0
    %1093 = vadd.xlane.f32.xlu0 %v1092
    %v1094 = vpop.xlane.xlu0 %1093
    %v1095 = vsel %vm459, %v1091, 0.0
    %1096 = vadd.xlane.f32.xlu0 %v1095
    %v1097 = vpop.xlane.xlu0 %1096
    %v1098 = vmul.f32 %v1094, %v472
    %v1099 = vmul.f32 %v1097, %v472
    %v1100 = vadd.f32 %v1098, 1e-05
    %v1101 = vadd.f32 %v1099, 1e-05
    %v1102 = vrsqrt.pop %v1100
    %v1103 = vmul.f32 %v1102, %v1100
    %v1104 = vmul.f32 %v1103, %v1102
    %v1105 = vmul.f32 0.5, %v1104
    %v1106 = vsub.f32 1.5, %v1105
    %v1107 = vmul.f32 %v1102, %v1106
    %vm1108 = vweird.f32 %v1100
    %vm1109 = vweird.f32 %v1102
    %vm1110 = vmor %vm1108, %vm1109
    %v1111 = vsel %vm1110, %v1102, %v1107
    %v1112 = vrsqrt.pop %v1101
    %v1113 = vmul.f32 %v1112, %v1101
    %v1114 = vmul.f32 %v1113, %v1112
    %v1115 = vmul.f32 0.5, %v1114
    %v1116 = vsub.f32 1.5, %v1115
    %v1117 = vmul.f32 %v1112, %v1116
    %vm1118 = vweird.f32 %v1101
    %vm1119 = vweird.f32 %v1112
    %vm1120 = vmor %vm1118, %vm1119
    %v1121 = vsel %vm1120, %v1112, %v1117
    %v1122 = vmul.f32 %v1088, %v1111
    %v1123 = vmul.f32 %v1089, %v1121
    %v1125 = vperm.slane %v1078, 0
    %v1127 = vmul.f32 %v1122, %v1125
    %v1128 = vmul.f32 %v1123, %v1125
    %v1130 = vperm.slane %v1079, 0
    %v1132 = vadd.f32 %v1127, %v1130
    %v1133 = vadd.f32 %v1128, %v1130
    %v1134 = vld [vmem:[#allocation10] sm:$0xff]
    %v1135 = vld [vmem:[#allocation10 + $0x8] sm:$0xff]
    %v1136 = vld [vmem:[#allocation10 + $0x10] sm:$0xff]
    %v1137 = vld [vmem:[#allocation10 + $0x18] sm:$0xff]
    %v1138 = vld [vmem:[%s39] sm:$0x1]
    %v1139 = vld [vmem:[#allocation11] sm:$0xff]
    %v1140 = vld [vmem:[#allocation11 + $0x8] sm:$0xff]
    %v1141 = vld [vmem:[#allocation11 + $0x10] sm:$0xff]
    %v1142 = vld [vmem:[#allocation11 + $0x18] sm:$0xff]
    %v1143 = vld [vmem:[#allocation11 + $0x20] sm:$0xff]
    %v1144 = vld [vmem:[#allocation11 + $0x28] sm:$0xff]
    %v1145 = vld [vmem:[#allocation11 + $0x30] sm:$0xff]
    %v1146 = vld [vmem:[#allocation11 + $0x38] sm:$0xff]
    %v1147 = vld [vmem:[%s43] sm:$0x1]
    %v1149 = vperm.slane %v1138, 0
    %v1152 = vsel %vm459, %v1132, 0
    %v1155 = vsel %vm459, %v1133, 0
    %1157 = vmatpush.msra.mxu0 0.0
    %1158 = vmatpush.msra.mxu0 0.0
    %1159 = vmatpush.msra.mxu0 0.0
    %1160 = vmatpush.msra.mxu0 0.0
    %1161 = vmatpush.msra.mxu0 0.0
    %1162 = vmatpush.msra.mxu0 0.0
    %1163 = vmatpush.msra.mxu0 0.0
    %1164 = vmatpush.msra.mxu0 0.0
    %1165 = vmatpush.msra.mxu0 0.0
    %1166 = vmatpush.msra.mxu0 0.0
    %1167 = vmatpush.msra.mxu0 0.0
    %1168 = vmatpush.msra.mxu0 0.0
    %1169 = vmatpush.msra.mxu0 %v1137
    %1170 = vmatpush.msra.mxu0 %v1136
    %1171 = vmatpush.msra.mxu0 %v1135
    %1172 = vmatpush.msra.mxu0 %v1134
    %1173 = vmatmul.f32.gmra.mxu0 %v1152
    %v1174 = vpop.f32.mrf.mxu0
    %v1175 = vadd.f32 %v1149, %v1174
    %1176 = vmatmul.f32.gmra.mxu0 %v1155
    %v1177 = vpop.f32.mrf.mxu0
    %v1178 = vadd.f32 %v1149, %v1177
    %1179 = vdwg.mxu0
    %v1180 = vmul.f32 %v1175, %v1175
    %v1181 = vmul.f32 %v1178, %v1178
    %v1182 = vmul.f32 %v1175, %v1180
    %v1183 = vmul.f32 %v1178, %v1181
    %v1184 = vmul.f32 %v1182, 0.044715
    %v1185 = vmul.f32 %v1183, 0.044715
    %v1186 = vadd.f32 %v1175, %v1184
    %v1187 = vadd.f32 %v1178, %v1185
    %v1188 = vmul.f32 %v1186, 0.7978846
    %v1189 = vmul.f32 %v1187, 0.7978846
    %v1190 = vtanh.pop %v1188
    %v1191 = vtanh.pop %v1189
    %v1192 = vadd.f32 %v1190, 1.0
    %v1193 = vadd.f32 %v1191, 1.0
    %v1194 = vmul.f32 %v1192, 0.5
    %v1195 = vmul.f32 %v1193, 0.5
    %v1196 = vmul.f32 %v1175, %v1194
    %v1197 = vmul.f32 %v1178, %v1195
    %v1199 = vperm.slane %v1147, 0
    %v1202 = vsel %vm427, %v1196, 0
    %v1205 = vsel %vm427, %v1197, 0
    %1207 = vmatpush.msra.mxu0 0.0
    %1208 = vmatpush.msra.mxu0 0.0
    %1209 = vmatpush.msra.mxu0 0.0
    %1210 = vmatpush.msra.mxu0 0.0
    %1211 = vmatpush.msra.mxu0 0.0
    %1212 = vmatpush.msra.mxu0 0.0
    %1213 = vmatpush.msra.mxu0 0.0
    %1214 = vmatpush.msra.mxu0 0.0
    %1215 = vmatpush.msra.mxu0 %v1146
    %1216 = vmatpush.msra.mxu0 %v1145
    %1217 = vmatpush.msra.mxu0 %v1144
    %1218 = vmatpush.msra.mxu0 %v1143
    %1219 = vmatpush.msra.mxu0 %v1142
    %1220 = vmatpush.msra.mxu0 %v1141
    %1221 = vmatpush.msra.mxu0 %v1140
    %1222 = vmatpush.msra.mxu0 %v1139
    %1223 = vmatmul.f32.gmra.mxu0 %v1202
    %v1224 = vpop.f32.mrf.mxu0
    %v1225 = vadd.f32 %v1199, %v1224
    %1226 = vmatmul.f32.gmra.mxu0 %v1205
    %v1227 = vpop.f32.mrf.mxu0
    %v1228 = vadd.f32 %v1199, %v1227
    %1229 = vdwg.mxu0
    %v1230 = vadd.f32 %v1132, %v1225
    %v1231 = vadd.f32 %v1133, %v1228
    %v1232 = vld [vmem:[%s45] sm:$0x1]
    %v1233 = vld [vmem:[%s47] sm:$0x1]
    %v1234 = vsel %vm459, %v1230, 0.0
    %1235 = vadd.xlane.f32.xlu0 %v1234
    %v1236 = vpop.xlane.xlu0 %1235
    %v1237 = vsel %vm459, %v1231, 0.0
    %1238 = vadd.xlane.f32.xlu0 %v1237
    %v1239 = vpop.xlane.xlu0 %1238
    %v1240 = vmul.f32 %v1236, %v472
    %v1241 = vmul.f32 %v1239, %v472
    %v1242 = vsub.f32 %v1230, %v1240
    %v1243 = vsub.f32 %v1231, %v1241
    %v1244 = vmul.f32 %v1242, %v1242
    %v1245 = vmul.f32 %v1243, %v1243
    %v1246 = vsel %vm459, %v1244, 0.0
    %1247 = vadd.xlane.f32.xlu0 %v1246
    %v1248 = vpop.xlane.xlu0 %1247
    %v1249 = vsel %vm459, %v1245, 0.0
    %1250 = vadd.xlane.f32.xlu0 %v1249
    %v1251 = vpop.xlane.xlu0 %1250
    %v1252 = vmul.f32 %v1248, %v472
    %v1253 = vmul.f32 %v1251, %v472
    %v1254 = vadd.f32 %v1252, 1e-05
    %v1255 = vadd.f32 %v1253, 1e-05
    %v1256 = vrsqrt.pop %v1254
    %v1257 = vmul.f32 %v1256, %v1254
    %v1258 = vmul.f32 %v1257, %v1256
    %v1259 = vmul.f32 0.5, %v1258
    %v1260 = vsub.f32 1.5, %v1259
    %v1261 = vmul.f32 %v1256, %v1260
    %vm1262 = vweird.f32 %v1254
    %vm1263 = vweird.f32 %v1256
    %vm1264 = vmor %vm1262, %vm1263
    %v1265 = vsel %vm1264, %v1256, %v1261
    %v1266 = vrsqrt.pop %v1255
    %v1267 = vmul.f32 %v1266, %v1255
    %v1268 = vmul.f32 %v1267, %v1266
    %v1269 = vmul.f32 0.5, %v1268
    %v1270 = vsub.f32 1.5, %v1269
    %v1271 = vmul.f32 %v1266, %v1270
    %vm1272 = vweird.f32 %v1255
    %vm1273 = vweird.f32 %v1266
    %vm1274 = vmor %vm1272, %vm1273
    %v1275 = vsel %vm1274, %v1266, %v1271
    %v1276 = vmul.f32 %v1242, %v1265
    %v1277 = vmul.f32 %v1243, %v1275
    %v1279 = vperm.slane %v1232, 0
    %v1281 = vmul.f32 %v1276, %v1279
    %v1282 = vmul.f32 %v1277, %v1279
    %v1284 = vperm.slane %v1233, 0
    %v1286 = vadd.f32 %v1281, %v1284
    %v1287 = vadd.f32 %v1282, %v1284
    %s1288 = scalar_lea.vmem [#allocation7], 32
    %v1289 = vld [vmem:[%s1288] sm:$0xff]
    %v1290 = vld [vmem:[%s1288 + $0x8] sm:$0xff]
    %v1291 = vld [vmem:[%s1288 + $0x10] sm:$0xff]
    %v1292 = vld [vmem:[%s1288 + $0x18] sm:$0xff]
    %s1293 = scalar_lea.vmem %s27, 1
    %v1294 = vld [vmem:[%s1293] sm:$0x1]
    %s1295 = scalar_lea.vmem [#allocation8], 32
    %v1296 = vld [vmem:[%s1295] sm:$0xff]
    %v1297 = vld [vmem:[%s1295 + $0x8] sm:$0xff]
    %v1298 = vld [vmem:[%s1295 + $0x10] sm:$0xff]
    %v1299 = vld [vmem:[%s1295 + $0x18] sm:$0xff]
    %s1300 = scalar_lea.vmem %s31, 1
    %v1301 = vld [vmem:[%s1300] sm:$0x1]
    %v1303 = vperm.slane %v1294, 0
    %v1306 = vsel %vm459, %v1286, 0
    %v1309 = vsel %vm459, %v1287, 0
    %1311 = vmatpush.msra.mxu0 0.0
    %1312 = vmatpush.msra.mxu0 0.0
    %1313 = vmatpush.msra.mxu0 0.0
    %1314 = vmatpush.msra.mxu0 0.0
    %1315 = vmatpush.msra.mxu0 0.0
    %1316 = vmatpush.msra.mxu0 0.0
    %1317 = vmatpush.msra.mxu0 0.0
    %1318 = vmatpush.msra.mxu0 0.0
    %1319 = vmatpush.msra.mxu0 0.0
    %1320 = vmatpush.msra.mxu0 0.0
    %1321 = vmatpush.msra.mxu0 0.0
    %1322 = vmatpush.msra.mxu0 0.0
    %1323 = vmatpush.msra.mxu0 %v1292
    %1324 = vmatpush.msra.mxu0 %v1291
    %1325 = vmatpush.msra.mxu0 %v1290
    %1326 = vmatpush.msra.mxu0 %v1289
    %1327 = vmatmul.f32.gmra.mxu0 %v1306
    %v1328 = vpop.f32.mrf.mxu0
    %v1329 = vadd.f32 %v1303, %v1328
    %1330 = vmatmul.f32.gmra.mxu0 %v1309
    %v1331 = vpop.f32.mrf.mxu0
    %v1332 = vadd.f32 %v1303, %v1331
    %1333 = vdwg.mxu0
    %v1334 = vmul.f32 %v1329, 0.35355338
    %v1335 = vmul.f32 %v1332, 0.35355338
    %1338 = vrot.lane.b32.xlu0 %v1329, 96
    %v1339 = vpop.permute.xlu0 %1338
    %1340 = vrot.lane.b32.xlu0 %v1332, 96
    %v1341 = vpop.permute.xlu0 %1340
    %v1343 = vsel %vm571, %v1334, 0
    %v1346 = vsel %vm571, %v1335, 0
    %v1348 = vsel %vm571, %v1339, 0
    %v1350 = vsel %vm571, %v1341, 0
    %1352 = vmatpush.xpose.msra.mxu0 0.0
    %1353 = vmatpush.xpose.msra.mxu0 0.0
    %1354 = vmatpush.xpose.msra.mxu0 0.0
    %1355 = vmatpush.xpose.msra.mxu0 0.0
    %1356 = vmatpush.xpose.msra.mxu0 0.0
    %1357 = vmatpush.xpose.msra.mxu0 0.0
    %1358 = vmatpush.xpose.msra.mxu0 0.0
    %1359 = vmatpush.xpose.msra.mxu0 0.0
    %1360 = vmatpush.xpose.msra.mxu0 0.0
    %1361 = vmatpush.xpose.msra.mxu0 0.0
    %1362 = vmatpush.xpose.msra.mxu0 0.0
    %1363 = vmatpush.xpose.msra.mxu0 0.0
    %1364 = vmatpush.xpose.msra.mxu0 0.0
    %1365 = vmatpush.xpose.msra.mxu0 0.0
    %1366 = vmatpush.xpose.msra.mxu0 %v1350
    %1367 = vmatpush.xpose.msra.mxu0 %v1348
    %1368 = vmatmul.f32.gmra.mxu0 %v1343
    %v1369 = vpop.f32.mrf.mxu0
    %v1370 = vadd.f32 %v410, %v1369
    %1371 = vmatmul.f32.gmra.mxu0 %v1346
    %v1372 = vpop.f32.mrf.mxu0
    %v1373 = vadd.f32 %v411, %v1372
    %1374 = vdwg.mxu0
    %v1375 = vsel %vm605, %v1370, -inf
    %1376 = vmax.xlane.f32.xlu0 %v1375
    %v1377 = vpop.xlane.xlu0 %1376
    %v1378 = vsel %vm605, %v1373, -inf
    %1379 = vmax.xlane.f32.xlu0 %v1378
    %v1380 = vpop.xlane.xlu0 %1379
    %v1381 = vsub.f32 %v1370, %v1377
    %v1382 = vsub.f32 %v1373, %v1380
    %v1383 = vmul.f32 %v1381, 1.442695
    %v1384 = vpow.pop %v1383
    %v1385 = vmul.f32 %v1382, 1.442695
    %v1386 = vpow.pop %v1385
    %v1387 = vsel %vm605, %v1384, 0.0
    %1388 = vadd.xlane.f32.xlu0 %v1387
    %v1389 = vpop.xlane.xlu0 %1388
    %v1390 = vsel %vm605, %v1386, 0.0
    %1391 = vadd.xlane.f32.xlu0 %v1390
    %v1392 = vpop.xlane.xlu0 %1391
    %v1393 = vrcp.pop %v1389
    %v1394 = vrcp.pop %v1392
    %v1395 = vmul.f32 %v1384, %v1393
    %v1396 = vmul.f32 %v1386, %v1394
    %1397 = vrot.lane.b32.xlu0 %v1329, 64
    %v1398 = vpop.permute.xlu0 %1397
    %1399 = vrot.lane.b32.xlu0 %v1332, 64
    %v1400 = vpop.permute.xlu0 %1399
    %v1404 = vsel %vm605, %v1395, 0
    %v1407 = vsel %vm605, %v1396, 0
    %1409 = vmatpush.msra.mxu0 0.0
    %1410 = vmatpush.msra.mxu0 0.0
    %1411 = vmatpush.msra.mxu0 0.0
    %1412 = vmatpush.msra.mxu0 0.0
    %1413 = vmatpush.msra.mxu0 0.0
    %1414 = vmatpush.msra.mxu0 0.0
    %1415 = vmatpush.msra.mxu0 0.0
    %1416 = vmatpush.msra.mxu0 0.0
    %1417 = vmatpush.msra.mxu0 0.0
    %1418 = vmatpush.msra.mxu0 0.0
    %1419 = vmatpush.msra.mxu0 0.0
    %1420 = vmatpush.msra.mxu0 0.0
    %1421 = vmatpush.msra.mxu0 0.0
    %1422 = vmatpush.msra.mxu0 0.0
    %1423 = vmatpush.msra.mxu0 %v1400
    %1424 = vmatpush.msra.mxu0 %v1398
    %1425 = vmatmul.f32.gmra.mxu0 %v1404
    %v1426 = vpop.f32.mrf.mxu0
    %v1427 = vadd.f32 0.0, %v1426
    %1428 = vmatmul.f32.gmra.mxu0 %v1407
    %v1429 = vpop.f32.mrf.mxu0
    %v1430 = vadd.f32 0.0, %v1429
    %1431 = vdwg.mxu0
    %1432 = vrot.lane.b32.xlu0 %v1334, 120
    %v1433 = vpop.permute.xlu0 %1432
    %1434 = vrot.lane.b32.xlu0 %v1335, 120
    %v1435 = vpop.permute.xlu0 %1434
    %1436 = vrot.lane.b32.xlu0 %v1329, 88
    %v1437 = vpop.permute.xlu0 %1436
    %1438 = vrot.lane.b32.xlu0 %v1332, 88
    %v1439 = vpop.permute.xlu0 %1438
    %v1440 = vsel %vm571, %v1433, 0
    %v1442 = vsel %vm571, %v1435, 0
    %v1444 = vsel %vm571, %v1437, 0
    %v1446 = vsel %vm571, %v1439, 0
    %1448 = vmatpush.xpose.msra.mxu0 0.0
    %1449 = vmatpush.xpose.msra.mxu0 0.0
    %1450 = vmatpush.xpose.msra.mxu0 0.0
    %1451 = vmatpush.xpose.msra.mxu0 0.0
    %1452 = vmatpush.xpose.msra.mxu0 0.0
    %1453 = vmatpush.xpose.msra.mxu0 0.0
    %1454 = vmatpush.xpose.msra.mxu0 0.0
    %1455 = vmatpush.xpose.msra.mxu0 0.0
    %1456 = vmatpush.xpose.msra.mxu0 0.0
    %1457 = vmatpush.xpose.msra.mxu0 0.0
    %1458 = vmatpush.xpose.msra.mxu0 0.0
    %1459 = vmatpush.xpose.msra.mxu0 0.0
    %1460 = vmatpush.xpose.msra.mxu0 0.0
    %1461 = vmatpush.xpose.msra.mxu0 0.0
    %1462 = vmatpush.xpose.msra.mxu0 %v1446
    %1463 = vmatpush.xpose.msra.mxu0 %v1444
    %1464 = vmatmul.f32.gmra.mxu0 %v1440
    %v1465 = vpop.f32.mrf.mxu0
    %v1466 = vadd.f32 %v410, %v1465
    %1467 = vmatmul.f32.gmra.mxu0 %v1442
    %v1468 = vpop.f32.mrf.mxu0
    %v1469 = vadd.f32 %v411, %v1468
    %1470 = vdwg.mxu0
    %v1471 = vsel %vm605, %v1466, -inf
    %1472 = vmax.xlane.f32.xlu0 %v1471
    %v1473 = vpop.xlane.xlu0 %1472
    %v1474 = vsel %vm605, %v1469, -inf
    %1475 = vmax.xlane.f32.xlu0 %v1474
    %v1476 = vpop.xlane.xlu0 %1475
    %v1477 = vsub.f32 %v1466, %v1473
    %v1478 = vsub.f32 %v1469, %v1476
    %v1479 = vmul.f32 %v1477, 1.442695
    %v1480 = vpow.pop %v1479
    %v1481 = vmul.f32 %v1478, 1.442695
    %v1482 = vpow.pop %v1481
    %v1483 = vsel %vm605, %v1480, 0.0
    %1484 = vadd.xlane.f32.xlu0 %v1483
    %v1485 = vpop.xlane.xlu0 %1484
    %v1486 = vsel %vm605, %v1482, 0.0
    %1487 = vadd.xlane.f32.xlu0 %v1486
    %v1488 = vpop.xlane.xlu0 %1487
    %v1489 = vrcp.pop %v1485
    %v1490 = vrcp.pop %v1488
    %v1491 = vmul.f32 %v1480, %v1489
    %v1492 = vmul.f32 %v1482, %v1490
    %1493 = vrot.lane.b32.xlu0 %v1329, 56
    %v1494 = vpop.permute.xlu0 %1493
    %1495 = vrot.lane.b32.xlu0 %v1332, 56
    %v1496 = vpop.permute.xlu0 %1495
    %v1500 = vsel %vm605, %v1491, 0
    %v1503 = vsel %vm605, %v1492, 0
    %1505 = vmatpush.msra.mxu0 0.0
    %1506 = vmatpush.msra.mxu0 0.0
    %1507 = vmatpush.msra.mxu0 0.0
    %1508 = vmatpush.msra.mxu0 0.0
    %1509 = vmatpush.msra.mxu0 0.0
    %1510 = vmatpush.msra.mxu0 0.0
    %1511 = vmatpush.msra.mxu0 0.0
    %1512 = vmatpush.msra.mxu0 0.0
    %1513 = vmatpush.msra.mxu0 0.0
    %1514 = vmatpush.msra.mxu0 0.0
    %1515 = vmatpush.msra.mxu0 0.0
    %1516 = vmatpush.msra.mxu0 0.0
    %1517 = vmatpush.msra.mxu0 0.0
    %1518 = vmatpush.msra.mxu0 0.0
    %1519 = vmatpush.msra.mxu0 %v1496
    %1520 = vmatpush.msra.mxu0 %v1494
    %1521 = vmatmul.f32.gmra.mxu0 %v1500
    %v1522 = vpop.f32.mrf.mxu0
    %v1523 = vadd.f32 0.0, %v1522
    %1524 = vmatmul.f32.gmra.mxu0 %v1503
    %v1525 = vpop.f32.mrf.mxu0
    %v1526 = vadd.f32 0.0, %v1525
    %1527 = vdwg.mxu0
    %v1529 = vsel %vm571, %v1523, 0
    %v1532 = vsel %vm571, %v1526, 0
    %1534 = vmatpush.msra.mxu0 0.0
    %1535 = vmatpush.msra.mxu0 0.0
    %1536 = vmatpush.msra.mxu0 0.0
    %1537 = vmatpush.msra.mxu0 0.0
    %1538 = vmatpush.msra.mxu0 0.0
    %1539 = vmatpush.msra.mxu0 0.0
    %1540 = vmatpush.msra.mxu0 0.0
    %1541 = vmatpush.msra.mxu0 0.0
    %1542 = vmatpush.msra.mxu0 0.0
    %1543 = vmatpush.msra.mxu0 0.0
    %1544 = vmatpush.msra.mxu0 0.0
    %1545 = vmatpush.msra.mxu0 0.0
    %1546 = vmatpush.msra.mxu0 0.0
    %1547 = vmatpush.msra.mxu0 0.0
    %1548 = vmatpush.msra.mxu0 0.0
    %1549 = vmatpush.msra.mxu0 %v1297
    %1550 = vmatmul.f32.gmra.mxu0 %v1529
    %v1551 = vpop.f32.mrf.mxu0
    %v1552 = vadd.f32 0.0, %v1551
    %1553 = vmatmul.f32.gmra.mxu0 %v1532
    %v1554 = vpop.f32.mrf.mxu0
    %v1555 = vadd.f32 0.0, %v1554
    %1556 = vdwg.mxu0
    %v1558 = vsel %vm571, %v1427, 0
    %v1561 = vsel %vm571, %v1430, 0
    %1563 = vmatpush.msra.mxu0 0.0
    %1564 = vmatpush.msra.mxu0 0.0
    %1565 = vmatpush.msra.mxu0 0.0
    %1566 = vmatpush.msra.mxu0 0.0
    %1567 = vmatpush.msra.mxu0 0.0
    %1568 = vmatpush.msra.mxu0 0.0
    %1569 = vmatpush.msra.mxu0 0.0
    %1570 = vmatpush.msra.mxu0 0.0
    %1571 = vmatpush.msra.mxu0 0.0
    %1572 = vmatpush.msra.mxu0 0.0
    %1573 = vmatpush.msra.mxu0 0.0
    %1574 = vmatpush.msra.mxu0 0.0
    %1575 = vmatpush.msra.mxu0 0.0
    %1576 = vmatpush.msra.mxu0 0.0
    %1577 = vmatpush.msra.mxu0 0.0
    %1578 = vmatpush.msra.mxu0 %v1296
    %1579 = vmatmul.f32.gmra.mxu0 %v1558
    %v1580 = vpop.f32.mrf.mxu0
    %v1581 = vadd.f32 %v1552, %v1580
    %1582 = vmatmul.f32.gmra.mxu0 %v1561
    %v1583 = vpop.f32.mrf.mxu0
    %v1584 = vadd.f32 %v1555, %v1583
    %1585 = vdwg.mxu0
    %1586 = vrot.lane.b32.xlu0 %v1334, 112
    %v1587 = vpop.permute.xlu0 %1586
    %1588 = vrot.lane.b32.xlu0 %v1335, 112
    %v1589 = vpop.permute.xlu0 %1588
    %1590 = vrot.lane.b32.xlu0 %v1329, 80
    %v1591 = vpop.permute.xlu0 %1590
    %1592 = vrot.lane.b32.xlu0 %v1332, 80
    %v1593 = vpop.permute.xlu0 %1592
    %v1594 = vsel %vm571, %v1587, 0
    %v1596 = vsel %vm571, %v1589, 0
    %v1598 = vsel %vm571, %v1591, 0
    %v1600 = vsel %vm571, %v1593, 0
    %1602 = vmatpush.xpose.msra.mxu0 0.0
    %1603 = vmatpush.xpose.msra.mxu0 0.0
    %1604 = vmatpush.xpose.msra.mxu0 0.0
    %1605 = vmatpush.xpose.msra.mxu0 0.0
    %1606 = vmatpush.xpose.msra.mxu0 0.0
    %1607 = vmatpush.xpose.msra.mxu0 0.0
    %1608 = vmatpush.xpose.msra.mxu0 0.0
    %1609 = vmatpush.xpose.msra.mxu0 0.0
    %1610 = vmatpush.xpose.msra.mxu0 0.0
    %1611 = vmatpush.xpose.msra.mxu0 0.0
    %1612 = vmatpush.xpose.msra.mxu0 0.0
    %1613 = vmatpush.xpose.msra.mxu0 0.0
    %1614 = vmatpush.xpose.msra.mxu0 0.0
    %1615 = vmatpush.xpose.msra.mxu0 0.0
    %1616 = vmatpush.xpose.msra.mxu0 %v1600
    %1617 = vmatpush.xpose.msra.mxu0 %v1598
    %1618 = vmatmul.f32.gmra.mxu0 %v1594
    %v1619 = vpop.f32.mrf.mxu0
    %v1620 = vadd.f32 %v410, %v1619
    %1621 = vmatmul.f32.gmra.mxu0 %v1596
    %v1622 = vpop.f32.mrf.mxu0
    %v1623 = vadd.f32 %v411, %v1622
    %1624 = vdwg.mxu0
    %v1625 = vsel %vm605, %v1620, -inf
    %1626 = vmax.xlane.f32.xlu0 %v1625
    %v1627 = vpop.xlane.xlu0 %1626
    %v1628 = vsel %vm605, %v1623, -inf
    %1629 = vmax.xlane.f32.xlu0 %v1628
    %v1630 = vpop.xlane.xlu0 %1629
    %v1631 = vsub.f32 %v1620, %v1627
    %v1632 = vsub.f32 %v1623, %v1630
    %v1633 = vmul.f32 %v1631, 1.442695
    %v1634 = vpow.pop %v1633
    %v1635 = vmul.f32 %v1632, 1.442695
    %v1636 = vpow.pop %v1635
    %v1637 = vsel %vm605, %v1634, 0.0
    %1638 = vadd.xlane.f32.xlu0 %v1637
    %v1639 = vpop.xlane.xlu0 %1638
    %v1640 = vsel %vm605, %v1636, 0.0
    %1641 = vadd.xlane.f32.xlu0 %v1640
    %v1642 = vpop.xlane.xlu0 %1641
    %v1643 = vrcp.pop %v1639
    %v1644 = vrcp.pop %v1642
    %v1645 = vmul.f32 %v1634, %v1643
    %v1646 = vmul.f32 %v1636, %v1644
    %1647 = vrot.lane.b32.xlu0 %v1329, 48
    %v1648 = vpop.permute.xlu0 %1647
    %1649 = vrot.lane.b32.xlu0 %v1332, 48
    %v1650 = vpop.permute.xlu0 %1649
    %v1654 = vsel %vm605, %v1645, 0
    %v1657 = vsel %vm605, %v1646, 0
    %1659 = vmatpush.msra.mxu0 0.0
    %1660 = vmatpush.msra.mxu0 0.0
    %1661 = vmatpush.msra.mxu0 0.0
    %1662 = vmatpush.msra.mxu0 0.0
    %1663 = vmatpush.msra.mxu0 0.0
    %1664 = vmatpush.msra.mxu0 0.0
    %1665 = vmatpush.msra.mxu0 0.0
    %1666 = vmatpush.msra.mxu0 0.0
    %1667 = vmatpush.msra.mxu0 0.0
    %1668 = vmatpush.msra.mxu0 0.0
    %1669 = vmatpush.msra.mxu0 0.0
    %1670 = vmatpush.msra.mxu0 0.0
    %1671 = vmatpush.msra.mxu0 0.0
    %1672 = vmatpush.msra.mxu0 0.0
    %1673 = vmatpush.msra.mxu0 %v1650
    %1674 = vmatpush.msra.mxu0 %v1648
    %1675 = vmatmul.f32.gmra.mxu0 %v1654
    %v1676 = vpop.f32.mrf.mxu0
    %v1677 = vadd.f32 0.0, %v1676
    %1678 = vmatmul.f32.gmra.mxu0 %v1657
    %v1679 = vpop.f32.mrf.mxu0
    %v1680 = vadd.f32 0.0, %v1679
    %1681 = vdwg.mxu0
    %v1683 = vsel %vm571, %v1677, 0
    %v1686 = vsel %vm571, %v1680, 0
    %1688 = vmatpush.msra.mxu0 0.0
    %1689 = vmatpush.msra.mxu0 0.0
    %1690 = vmatpush.msra.mxu0 0.0
    %1691 = vmatpush.msra.mxu0 0.0
    %1692 = vmatpush.msra.mxu0 0.0
    %1693 = vmatpush.msra.mxu0 0.0
    %1694 = vmatpush.msra.mxu0 0.0
    %1695 = vmatpush.msra.mxu0 0.0
    %1696 = vmatpush.msra.mxu0 0.0
    %1697 = vmatpush.msra.mxu0 0.0
    %1698 = vmatpush.msra.mxu0 0.0
    %1699 = vmatpush.msra.mxu0 0.0
    %1700 = vmatpush.msra.mxu0 0.0
    %1701 = vmatpush.msra.mxu0 0.0
    %1702 = vmatpush.msra.mxu0 0.0
    %1703 = vmatpush.msra.mxu0 %v1298
    %1704 = vmatmul.f32.gmra.mxu0 %v1683
    %v1705 = vpop.f32.mrf.mxu0
    %v1706 = vadd.f32 0.0, %v1705
    %1707 = vmatmul.f32.gmra.mxu0 %v1686
    %v1708 = vpop.f32.mrf.mxu0
    %v1709 = vadd.f32 0.0, %v1708
    %1710 = vdwg.mxu0
    %v1711 = vadd.f32 %v1581, %v1706
    %v1712 = vadd.f32 %v1584, %v1709
    %1713 = vrot.lane.b32.xlu0 %v1334, 104
    %v1714 = vpop.permute.xlu0 %1713
    %1715 = vrot.lane.b32.xlu0 %v1335, 104
    %v1716 = vpop.permute.xlu0 %1715
    %1717 = vrot.lane.b32.xlu0 %v1329, 72
    %v1718 = vpop.permute.xlu0 %1717
    %1719 = vrot.lane.b32.xlu0 %v1332, 72
    %v1720 = vpop.permute.xlu0 %1719
    %v1721 = vsel %vm571, %v1714, 0
    %v1723 = vsel %vm571, %v1716, 0
    %v1725 = vsel %vm571, %v1718, 0
    %v1727 = vsel %vm571, %v1720, 0
    %1729 = vmatpush.xpose.msra.mxu0 0.0
    %1730 = vmatpush.xpose.msra.mxu0 0.0
    %1731 = vmatpush.xpose.msra.mxu0 0.0
    %1732 = vmatpush.xpose.msra.mxu0 0.0
    %1733 = vmatpush.xpose.msra.mxu0 0.0
    %1734 = vmatpush.xpose.msra.mxu0 0.0
    %1735 = vmatpush.xpose.msra.mxu0 0.0
    %1736 = vmatpush.xpose.msra.mxu0 0.0
    %1737 = vmatpush.xpose.msra.mxu0 0.0
    %1738 = vmatpush.xpose.msra.mxu0 0.0
    %1739 = vmatpush.xpose.msra.mxu0 0.0
    %1740 = vmatpush.xpose.msra.mxu0 0.0
    %1741 = vmatpush.xpose.msra.mxu0 0.0
    %1742 = vmatpush.xpose.msra.mxu0 0.0
    %1743 = vmatpush.xpose.msra.mxu0 %v1727
    %1744 = vmatpush.xpose.msra.mxu0 %v1725
    %1745 = vmatmul.f32.gmra.mxu0 %v1721
    %v1746 = vpop.f32.mrf.mxu0
    %v1747 = vadd.f32 %v410, %v1746
    %1748 = vmatmul.f32.gmra.mxu0 %v1723
    %v1749 = vpop.f32.mrf.mxu0
    %v1750 = vadd.f32 %v411, %v1749
    %1751 = vdwg.mxu0
    %v1752 = vsel %vm605, %v1747, -inf
    %1753 = vmax.xlane.f32.xlu0 %v1752
    %v1754 = vpop.xlane.xlu0 %1753
    %v1755 = vsel %vm605, %v1750, -inf
    %1756 = vmax.xlane.f32.xlu0 %v1755
    %v1757 = vpop.xlane.xlu0 %1756
    %v1758 = vsub.f32 %v1747, %v1754
    %v1759 = vsub.f32 %v1750, %v1757
    %v1760 = vmul.f32 %v1758, 1.442695
    %v1761 = vpow.pop %v1760
    %v1762 = vmul.f32 %v1759, 1.442695
    %v1763 = vpow.pop %v1762
    %v1764 = vsel %vm605, %v1761, 0.0
    %1765 = vadd.xlane.f32.xlu0 %v1764
    %v1766 = vpop.xlane.xlu0 %1765
    %v1767 = vsel %vm605, %v1763, 0.0
    %1768 = vadd.xlane.f32.xlu0 %v1767
    %v1769 = vpop.xlane.xlu0 %1768
    %v1770 = vrcp.pop %v1766
    %v1771 = vrcp.pop %v1769
    %v1772 = vmul.f32 %v1761, %v1770
    %v1773 = vmul.f32 %v1763, %v1771
    %1774 = vrot.lane.b32.xlu0 %v1329, 40
    %v1775 = vpop.permute.xlu0 %1774
    %1776 = vrot.lane.b32.xlu0 %v1332, 40
    %v1777 = vpop.permute.xlu0 %1776
    %v1781 = vsel %vm605, %v1772, 0
    %v1784 = vsel %vm605, %v1773, 0
    %1786 = vmatpush.msra.mxu0 0.0
    %1787 = vmatpush.msra.mxu0 0.0
    %1788 = vmatpush.msra.mxu0 0.0
    %1789 = vmatpush.msra.mxu0 0.0
    %1790 = vmatpush.msra.mxu0 0.0
    %1791 = vmatpush.msra.mxu0 0.0
    %1792 = vmatpush.msra.mxu0 0.0
    %1793 = vmatpush.msra.mxu0 0.0
    %1794 = vmatpush.msra.mxu0 0.0
    %1795 = vmatpush.msra.mxu0 0.0
    %1796 = vmatpush.msra.mxu0 0.0
    %1797 = vmatpush.msra.mxu0 0.0
    %1798 = vmatpush.msra.mxu0 0.0
    %1799 = vmatpush.msra.mxu0 0.0
    %1800 = vmatpush.msra.mxu0 %v1777
    %1801 = vmatpush.msra.mxu0 %v1775
    %1802 = vmatmul.f32.gmra.mxu0 %v1781
    %v1803 = vpop.f32.mrf.mxu0
    %v1804 = vadd.f32 0.0, %v1803
    %1805 = vmatmul.f32.gmra.mxu0 %v1784
    %v1806 = vpop.f32.mrf.mxu0
    %v1807 = vadd.f32 0.0, %v1806
    %1808 = vdwg.mxu0
    %v1810 = vsel %vm571, %v1804, 0
    %v1813 = vsel %vm571, %v1807, 0
    %1815 = vmatpush.msra.mxu0 0.0
    %1816 = vmatpush.msra.mxu0 0.0
    %1817 = vmatpush.msra.mxu0 0.0
    %1818 = vmatpush.msra.mxu0 0.0
    %1819 = vmatpush.msra.mxu0 0.0
    %1820 = vmatpush.msra.mxu0 0.0
    %1821 = vmatpush.msra.mxu0 0.0
    %1822 = vmatpush.msra.mxu0 0.0
    %1823 = vmatpush.msra.mxu0 0.0
    %1824 = vmatpush.msra.mxu0 0.0
    %1825 = vmatpush.msra.mxu0 0.0
    %1826 = vmatpush.msra.mxu0 0.0
    %1827 = vmatpush.msra.mxu0 0.0
    %1828 = vmatpush.msra.mxu0 0.0
    %1829 = vmatpush.msra.mxu0 0.0
    %1830 = vmatpush.msra.mxu0 %v1299
    %1831 = vmatmul.f32.gmra.mxu0 %v1810
    %v1832 = vpop.f32.mrf.mxu0
    %v1833 = vadd.f32 0.0, %v1832
    %1834 = vmatmul.f32.gmra.mxu0 %v1813
    %v1835 = vpop.f32.mrf.mxu0
    %v1836 = vadd.f32 0.0, %v1835
    %1837 = vdwg.mxu0
    %v1838 = vadd.f32 %v1711, %v1833
    %v1839 = vadd.f32 %v1712, %v1836
    %v1841 = vperm.slane %v1301, 0
    %v1843 = vadd.f32 %v1838, %v1841
    %v1844 = vadd.f32 %v1839, %v1841
    %v1845 = vadd.f32 %v1286, %v1843
    %v1846 = vadd.f32 %v1287, %v1844
    %s1847 = scalar_lea.vmem %s33, 1
    %v1848 = vld [vmem:[%s1847] sm:$0x1]
    %s1849 = scalar_lea.vmem %s35, 1
    %v1850 = vld [vmem:[%s1849] sm:$0x1]
    %v1851 = vsel %vm459, %v1845, 0.0
    %1852 = vadd.xlane.f32.xlu0 %v1851
    %v1853 = vpop.xlane.xlu0 %1852
    %v1854 = vsel %vm459, %v1846, 0.0
    %1855 = vadd.xlane.f32.xlu0 %v1854
    %v1856 = vpop.xlane.xlu0 %1855
    %v1857 = vmul.f32 %v1853, %v472
    %v1858 = vmul.f32 %v1856, %v472
    %v1859 = vsub.f32 %v1845, %v1857
    %v1860 = vsub.f32 %v1846, %v1858
    %v1861 = vmul.f32 %v1859, %v1859
    %v1862 = vmul.f32 %v1860, %v1860
    %v1863 = vsel %vm459, %v1861, 0.0
    %1864 = vadd.xlane.f32.xlu0 %v1863
    %v1865 = vpop.xlane.xlu0 %1864
    %v1866 = vsel %vm459, %v1862, 0.0
    %1867 = vadd.xlane.f32.xlu0 %v1866
    %v1868 = vpop.xlane.xlu0 %1867
    %v1869 = vmul.f32 %v1865, %v472
    %v1870 = vmul.f32 %v1868, %v472
    %v1871 = vadd.f32 %v1869, 1e-05
    %v1872 = vadd.f32 %v1870, 1e-05
    %v1873 = vrsqrt.pop %v1871
    %v1874 = vmul.f32 %v1873, %v1871
    %v1875 = vmul.f32 %v1874, %v1873
    %v1876 = vmul.f32 0.5, %v1875
    %v1877 = vsub.f32 1.5, %v1876
    %v1878 = vmul.f32 %v1873, %v1877
    %vm1879 = vweird.f32 %v1871
    %vm1880 = vweird.f32 %v1873
    %vm1881 = vmor %vm1879, %vm1880
    %v1882 = vsel %vm1881, %v1873, %v1878
    %v1883 = vrsqrt.pop %v1872
    %v1884 = vmul.f32 %v1883, %v1872
    %v1885 = vmul.f32 %v1884, %v1883
    %v1886 = vmul.f32 0.5, %v1885
    %v1887 = vsub.f32 1.5, %v1886
    %v1888 = vmul.f32 %v1883, %v1887
    %vm1889 = vweird.f32 %v1872
    %vm1890 = vweird.f32 %v1883
    %vm1891 = vmor %vm1889, %vm1890
    %v1892 = vsel %vm1891, %v1883, %v1888
    %v1893 = vmul.f32 %v1859, %v1882
    %v1894 = vmul.f32 %v1860, %v1892
    %v1896 = vperm.slane %v1848, 0
    %v1898 = vmul.f32 %v1893, %v1896
    %v1899 = vmul.f32 %v1894, %v1896
    %v1901 = vperm.slane %v1850, 0
    %v1903 = vadd.f32 %v1898, %v1901
    %v1904 = vadd.f32 %v1899, %v1901
    %s1905 = scalar_lea.vmem [#allocation10], 32
    %v1906 = vld [vmem:[%s1905] sm:$0xff]
    %v1907 = vld [vmem:[%s1905 + $0x8] sm:$0xff]
    %v1908 = vld [vmem:[%s1905 + $0x10] sm:$0xff]
    %v1909 = vld [vmem:[%s1905 + $0x18] sm:$0xff]
    %s1910 = scalar_lea.vmem %s39, 1
    %v1911 = vld [vmem:[%s1910] sm:$0x1]
    %s1912 = scalar_lea.vmem [#allocation11], 64
    %v1913 = vld [vmem:[%s1912] sm:$0xff]
    %v1914 = vld [vmem:[%s1912 + $0x8] sm:$0xff]
    %v1915 = vld [vmem:[%s1912 + $0x10] sm:$0xff]
    %v1916 = vld [vmem:[%s1912 + $0x18] sm:$0xff]
    %v1917 = vld [vmem:[%s1912 + $0x20] sm:$0xff]
    %v1918 = vld [vmem:[%s1912 + $0x28] sm:$0xff]
    %v1919 = vld [vmem:[%s1912 + $0x30] sm:$0xff]
    %v1920 = vld [vmem:[%s1912 + $0x38] sm:$0xff]
    %s1921 = scalar_lea.vmem %s43, 1
    %v1922 = vld [vmem:[%s1921] sm:$0x1]
    %v1924 = vperm.slane %v1911, 0
    %v1927 = vsel %vm459, %v1903, 0
    %v1930 = vsel %vm459, %v1904, 0
    %1932 = vmatpush.msra.mxu0 0.0
    %1933 = vmatpush.msra.mxu0 0.0
    %1934 = vmatpush.msra.mxu0 0.0
    %1935 = vmatpush.msra.mxu0 0.0
    %1936 = vmatpush.msra.mxu0 0.0
    %1937 = vmatpush.msra.mxu0 0.0
    %1938 = vmatpush.msra.mxu0 0.0
    %1939 = vmatpush.msra.mxu0 0.0
    %1940 = vmatpush.msra.mxu0 0.0
    %1941 = vmatpush.msra.mxu0 0.0
    %1942 = vmatpush.msra.mxu0 0.0
    %1943 = vmatpush.msra.mxu0 0.0
    %1944 = vmatpush.msra.mxu0 %v1909
    %1945 = vmatpush.msra.mxu0 %v1908
    %1946 = vmatpush.msra.mxu0 %v1907
    %1947 = vmatpush.msra.mxu0 %v1906
    %1948 = vmatmul.f32.gmra.mxu0 %v1927
    %v1949 = vpop.f32.mrf.mxu0
    %v1950 = vadd.f32 %v1924, %v1949
    %1951 = vmatmul.f32.gmra.mxu0 %v1930
    %v1952 = vpop.f32.mrf.mxu0
    %v1953 = vadd.f32 %v1924, %v1952
    %1954 = vdwg.mxu0
    %v1955 = vmul.f32 %v1950, %v1950
    %v1956 = vmul.f32 %v1953, %v1953
    %v1957 = vmul.f32 %v1950, %v1955
    %v1958 = vmul.f32 %v1953, %v1956
    %v1959 = vmul.f32 %v1957, 0.044715
    %v1960 = vmul.f32 %v1958, 0.044715
    %v1961 = vadd.f32 %v1950, %v1959
    %v1962 = vadd.f32 %v1953, %v1960
    %v1963 = vmul.f32 %v1961, 0.7978846
    %v1964 = vmul.f32 %v1962, 0.7978846
    %v1965 = vtanh.pop %v1963
    %v1966 = vtanh.pop %v1964
    %v1967 = vadd.f32 %v1965, 1.0
    %v1968 = vadd.f32 %v1966, 1.0
    %v1969 = vmul.f32 %v1967, 0.5
    %v1970 = vmul.f32 %v1968, 0.5
    %v1971 = vmul.f32 %v1950, %v1969
    %v1972 = vmul.f32 %v1953, %v1970
    %v1974 = vperm.slane %v1922, 0
    %v1977 = vsel %vm427, %v1971, 0
    %v1980 = vsel %vm427, %v1972, 0
    %1982 = vmatpush.msra.mxu0 0.0
    %1983 = vmatpush.msra.mxu0 0.0
    %1984 = vmatpush.msra.mxu0 0.0
    %1985 = vmatpush.msra.mxu0 0.0
    %1986 = vmatpush.msra.mxu0 0.0
    %1987 = vmatpush.msra.mxu0 0.0
    %1988 = vmatpush.msra.mxu0 0.0
    %1989 = vmatpush.msra.mxu0 0.0
    %1990 = vmatpush.msra.mxu0 %v1920
    %1991 = vmatpush.msra.mxu0 %v1919
    %1992 = vmatpush.msra.mxu0 %v1918
    %1993 = vmatpush.msra.mxu0 %v1917
    %1994 = vmatpush.msra.mxu0 %v1916
    %1995 = vmatpush.msra.mxu0 %v1915
    %1996 = vmatpush.msra.mxu0 %v1914
    %1997 = vmatpush.msra.mxu0 %v1913
    %1998 = vmatmul.f32.gmra.mxu0 %v1977
    %v1999 = vpop.f32.mrf.mxu0
    %v2000 = vadd.f32 %v1974, %v1999
    %2001 = vmatmul.f32.gmra.mxu0 %v1980
    %v2002 = vpop.f32.mrf.mxu0
    %v2003 = vadd.f32 %v1974, %v2002
    %2004 = vdwg.mxu0
    %v2005 = vadd.f32 %v1903, %v2000
    %v2006 = vadd.f32 %v1904, %v2003
    %s2007 = scalar_lea.vmem %s45, 1
    %v2008 = vld [vmem:[%s2007] sm:$0x1]
    %s2009 = scalar_lea.vmem %s47, 1
    %v2010 = vld [vmem:[%s2009] sm:$0x1]
    %v2011 = vsel %vm459, %v2005, 0.0
    %2012 = vadd.xlane.f32.xlu0 %v2011
    %v2013 = vpop.xlane.xlu0 %2012
    %v2014 = vsel %vm459, %v2006, 0.0
    %2015 = vadd.xlane.f32.xlu0 %v2014
    %v2016 = vpop.xlane.xlu0 %2015
    %v2017 = vmul.f32 %v2013, %v472
    %v2018 = vmul.f32 %v2016, %v472
    %v2019 = vsub.f32 %v2005, %v2017
    %v2020 = vsub.f32 %v2006, %v2018
    %v2021 = vmul.f32 %v2019, %v2019
    %v2022 = vmul.f32 %v2020, %v2020
    %v2023 = vsel %vm459, %v2021, 0.0
    %2024 = vadd.xlane.f32.xlu0 %v2023
    %v2025 = vpop.xlane.xlu0 %2024
    %v2026 = vsel %vm459, %v2022, 0.0
    %2027 = vadd.xlane.f32.xlu0 %v2026
    %v2028 = vpop.xlane.xlu0 %2027
    %v2029 = vmul.f32 %v2025, %v472
    %v2030 = vmul.f32 %v2028, %v472
    %v2031 = vadd.f32 %v2029, 1e-05
    %v2032 = vadd.f32 %v2030, 1e-05
    %v2033 = vrsqrt.pop %v2031
    %v2034 = vmul.f32 %v2033, %v2031
    %v2035 = vmul.f32 %v2034, %v2033
    %v2036 = vmul.f32 0.5, %v2035
    %v2037 = vsub.f32 1.5, %v2036
    %v2038 = vmul.f32 %v2033, %v2037
    %vm2039 = vweird.f32 %v2031
    %vm2040 = vweird.f32 %v2033
    %vm2041 = vmor %vm2039, %vm2040
    %v2042 = vsel %vm2041, %v2033, %v2038
    %v2043 = vrsqrt.pop %v2032
    %v2044 = vmul.f32 %v2043, %v2032
    %v2045 = vmul.f32 %v2044, %v2043
    %v2046 = vmul.f32 0.5, %v2045
    %v2047 = vsub.f32 1.5, %v2046
    %v2048 = vmul.f32 %v2043, %v2047
    %vm2049 = vweird.f32 %v2032
    %vm2050 = vweird.f32 %v2043
    %vm2051 = vmor %vm2049, %vm2050
    %v2052 = vsel %vm2051, %v2043, %v2048
    %v2053 = vmul.f32 %v2019, %v2042
    %v2054 = vmul.f32 %v2020, %v2052
    %v2056 = vperm.slane %v2008, 0
    %v2058 = vmul.f32 %v2053, %v2056
    %v2059 = vmul.f32 %v2054, %v2056
    %v2061 = vperm.slane %v2010, 0
    %v2063 = vadd.f32 %v2058, %v2061
    %v2064 = vadd.f32 %v2059, %v2061
    %v2065 = vld [vmem:[%s9] sm:$0x1]
    %vm2066 = vcmp.gt.f32.partialorder %v2065, 0.5
    %vm2067 = vcmp.ge.s32.totalorder %v393, %v396
    %vm2068 = vcmp.ge.s32.totalorder %v394, %v396
    %vm2069 = vmand %vm403, %vm2067
    %vm2070 = vmand %vm404, %vm2068
    %v2071 = vsel %vm2066, 1, 0
    %v2072 = vperm.slane %v2071, 0
    %vm2073 = vcmp.eq.s32.totalorder %v2072, 1
    %vm2074 = vmand %vm2069, %vm2073
    %vm2075 = vmand %vm2070, %vm2073
    %v2076 = vsel %vm2074, 0.0, -1e+09
    %v2077 = vsel %vm2075, 0.0, -1e+09
    %v2078 = vld [vmem:[%s3] sm:$0xff]
    %v2079 = vld [vmem:[%s3 + $0x8] sm:$0xff]
    %v2080 = vld [vmem:[%s17] sm:$0xff]
    %2081 = vset.pattern.permute.xlu0 0
    %2082 = vperm.xlu0 %2081, %v2078
    %v2083 = vpop.permute.xlu0 %2082
    %2084 = vset.pattern.permute.xlu0 0
    %2085 = vperm.xlu0 %2084, %v2079
    %v2086 = vpop.permute.xlu0 %2085
    %vm2087 = vcmp.eq.s32.totalorder %v396, %v2083
    %vm2088 = vcmp.eq.s32.totalorder %v396, %v2086
    %v2089 = vsel %vm2087, 1, 0
    %v2090 = vsel %vm2088, 1, 0
    %v2091 = vcvt.s32.f32 %v2089
    %v2092 = vcvt.s32.f32 %v2090
    %v2094 = vsel %vm427, %v2091, 0
    %v2097 = vsel %vm427, %v2092, 0
    %2099 = vmatpush.msra.mxu0 0.0
    %2100 = vmatpush.msra.mxu0 0.0
    %2101 = vmatpush.msra.mxu0 0.0
    %2102 = vmatpush.msra.mxu0 0.0
    %2103 = vmatpush.msra.mxu0 0.0
    %2104 = vmatpush.msra.mxu0 0.0
    %2105 = vmatpush.msra.mxu0 0.0
    %2106 = vmatpush.msra.mxu0 0.0
    %2107 = vmatpush.msra.mxu0 %v389
    %2108 = vmatpush.msra.mxu0 %v388
    %2109 = vmatpush.msra.mxu0 %v387
    %2110 = vmatpush.msra.mxu0 %v386
    %2111 = vmatpush.msra.mxu0 %v385
    %2112 = vmatpush.msra.mxu0 %v384
    %2113 = vmatpush.msra.mxu0 %v383
    %2114 = vmatpush.msra.mxu0 %v382
    %2115 = vmatmul.f32.gmra.mxu0 %v2094
    %v2116 = vpop.f32.mrf.mxu0
    %v2117 = vadd.f32 %v2080, %v2116
    %2118 = vmatmul.f32.gmra.mxu0 %v2097
    %v2119 = vpop.f32.mrf.mxu0
    %v2120 = vadd.f32 %v2080, %v2119
    %2121 = vdwg.mxu0
    %v2122 = vld [vmem:[%s49] sm:$0x1]
    %v2123 = vld [vmem:[%s51] sm:$0x1]
    %v2124 = vsel %vm459, %v2117, 0.0
    %2125 = vadd.xlane.f32.xlu0 %v2124
    %v2126 = vpop.xlane.xlu0 %2125
    %v2127 = vsel %vm459, %v2120, 0.0
    %2128 = vadd.xlane.f32.xlu0 %v2127
    %v2129 = vpop.xlane.xlu0 %2128
    %v2130 = vmul.f32 %v2126, %v472
    %v2131 = vmul.f32 %v2129, %v472
    %v2132 = vsub.f32 %v2117, %v2130
    %v2133 = vsub.f32 %v2120, %v2131
    %v2134 = vmul.f32 %v2132, %v2132
    %v2135 = vmul.f32 %v2133, %v2133
    %v2136 = vsel %vm459, %v2134, 0.0
    %2137 = vadd.xlane.f32.xlu0 %v2136
    %v2138 = vpop.xlane.xlu0 %2137
    %v2139 = vsel %vm459, %v2135, 0.0
    %2140 = vadd.xlane.f32.xlu0 %v2139
    %v2141 = vpop.xlane.xlu0 %2140
    %v2142 = vmul.f32 %v2138, %v472
    %v2143 = vmul.f32 %v2141, %v472
    %v2144 = vadd.f32 %v2142, 1e-05
    %v2145 = vadd.f32 %v2143, 1e-05
    %v2146 = vrsqrt.pop %v2144
    %v2147 = vmul.f32 %v2146, %v2144
    %v2148 = vmul.f32 %v2147, %v2146
    %v2149 = vmul.f32 0.5, %v2148
    %v2150 = vsub.f32 1.5, %v2149
    %v2151 = vmul.f32 %v2146, %v2150
    %vm2152 = vweird.f32 %v2144
    %vm2153 = vweird.f32 %v2146
    %vm2154 = vmor %vm2152, %vm2153
    %v2155 = vsel %vm2154, %v2146, %v2151
    %v2156 = vrsqrt.pop %v2145
    %v2157 = vmul.f32 %v2156, %v2145
    %v2158 = vmul.f32 %v2157, %v2156
    %v2159 = vmul.f32 0.5, %v2158
    %v2160 = vsub.f32 1.5, %v2159
    %v2161 = vmul.f32 %v2156, %v2160
    %vm2162 = vweird.f32 %v2145
    %vm2163 = vweird.f32 %v2156
    %vm2164 = vmor %vm2162, %vm2163
    %v2165 = vsel %vm2164, %v2156, %v2161
    %v2166 = vmul.f32 %v2132, %v2155
    %v2167 = vmul.f32 %v2133, %v2165
    %v2169 = vperm.slane %v2122, 0
    %v2171 = vmul.f32 %v2166, %v2169
    %v2172 = vmul.f32 %v2167, %v2169
    %v2174 = vperm.slane %v2123, 0
    %v2176 = vadd.f32 %v2171, %v2174
    %v2177 = vadd.f32 %v2172, %v2174
    %v2178 = vld [vmem:[#allocation13] sm:$0xff]
    %v2179 = vld [vmem:[#allocation13 + $0x8] sm:$0xff]
    %v2180 = vld [vmem:[#allocation13 + $0x10] sm:$0xff]
    %v2181 = vld [vmem:[#allocation13 + $0x18] sm:$0xff]
    %v2182 = vld [vmem:[%s55] sm:$0x1]
    %v2183 = vld [vmem:[#allocation14] sm:$0xff]
    %v2184 = vld [vmem:[#allocation14 + $0x8] sm:$0xff]
    %v2185 = vld [vmem:[#allocation14 + $0x10] sm:$0xff]
    %v2186 = vld [vmem:[#allocation14 + $0x18] sm:$0xff]
    %v2187 = vld [vmem:[%s59] sm:$0x1]
    %v2189 = vperm.slane %v2182, 0
    %v2192 = vsel %vm459, %v2176, 0
    %v2195 = vsel %vm459, %v2177, 0
    %2197 = vmatpush.msra.mxu0 0.0
    %2198 = vmatpush.msra.mxu0 0.0
    %2199 = vmatpush.msra.mxu0 0.0
    %2200 = vmatpush.msra.mxu0 0.0
    %2201 = vmatpush.msra.mxu0 0.0
    %2202 = vmatpush.msra.mxu0 0.0
    %2203 = vmatpush.msra.mxu0 0.0
    %2204 = vmatpush.msra.mxu0 0.0
    %2205 = vmatpush.msra.mxu0 0.0
    %2206 = vmatpush.msra.mxu0 0.0
    %2207 = vmatpush.msra.mxu0 0.0
    %2208 = vmatpush.msra.mxu0 0.0
    %2209 = vmatpush.msra.mxu0 %v2181
    %2210 = vmatpush.msra.mxu0 %v2180
    %2211 = vmatpush.msra.mxu0 %v2179
    %2212 = vmatpush.msra.mxu0 %v2178
    %2213 = vmatmul.f32.gmra.mxu0 %v2192
    %v2214 = vpop.f32.mrf.mxu0
    %v2215 = vadd.f32 %v2189, %v2214
    %2216 = vmatmul.f32.gmra.mxu0 %v2195
    %v2217 = vpop.f32.mrf.mxu0
    %v2218 = vadd.f32 %v2189, %v2217
    %2219 = vdwg.mxu0
    %v2220 = vmul.f32 %v2215, 0.35355338
    %v2221 = vmul.f32 %v2218, 0.35355338
    %2224 = vrot.lane.b32.xlu0 %v2215, 96
    %v2225 = vpop.permute.xlu0 %2224
    %2226 = vrot.lane.b32.xlu0 %v2218, 96
    %v2227 = vpop.permute.xlu0 %2226
    %v2229 = vsel %vm571, %v2220, 0
    %v2232 = vsel %vm571, %v2221, 0
    %v2234 = vsel %vm571, %v2225, 0
    %v2236 = vsel %vm571, %v2227, 0
    %2238 = vmatpush.xpose.msra.mxu0 0.0
    %2239 = vmatpush.xpose.msra.mxu0 0.0
    %2240 = vmatpush.xpose.msra.mxu0 0.0
    %2241 = vmatpush.xpose.msra.mxu0 0.0
    %2242 = vmatpush.xpose.msra.mxu0 0.0
    %2243 = vmatpush.xpose.msra.mxu0 0.0
    %2244 = vmatpush.xpose.msra.mxu0 0.0
    %2245 = vmatpush.xpose.msra.mxu0 0.0
    %2246 = vmatpush.xpose.msra.mxu0 0.0
    %2247 = vmatpush.xpose.msra.mxu0 0.0
    %2248 = vmatpush.xpose.msra.mxu0 0.0
    %2249 = vmatpush.xpose.msra.mxu0 0.0
    %2250 = vmatpush.xpose.msra.mxu0 0.0
    %2251 = vmatpush.xpose.msra.mxu0 0.0
    %2252 = vmatpush.xpose.msra.mxu0 %v2236
    %2253 = vmatpush.xpose.msra.mxu0 %v2234
    %2254 = vmatmul.f32.gmra.mxu0 %v2229
    %v2255 = vpop.f32.mrf.mxu0
    %v2256 = vadd.f32 %v2076, %v2255
    %2257 = vmatmul.f32.gmra.mxu0 %v2232
    %v2258 = vpop.f32.mrf.mxu0
    %v2259 = vadd.f32 %v2077, %v2258
    %2260 = vdwg.mxu0
    %v2261 = vsel %vm605, %v2256, -inf
    %2262 = vmax.xlane.f32.xlu0 %v2261
    %v2263 = vpop.xlane.xlu0 %2262
    %v2264 = vsel %vm605, %v2259, -inf
    %2265 = vmax.xlane.f32.xlu0 %v2264
    %v2266 = vpop.xlane.xlu0 %2265
    %v2267 = vsub.f32 %v2256, %v2263
    %v2268 = vsub.f32 %v2259, %v2266
    %v2269 = vmul.f32 %v2267, 1.442695
    %v2270 = vpow.pop %v2269
    %v2271 = vmul.f32 %v2268, 1.442695
    %v2272 = vpow.pop %v2271
    %v2273 = vsel %vm605, %v2270, 0.0
    %2274 = vadd.xlane.f32.xlu0 %v2273
    %v2275 = vpop.xlane.xlu0 %2274
    %v2276 = vsel %vm605, %v2272, 0.0
    %2277 = vadd.xlane.f32.xlu0 %v2276
    %v2278 = vpop.xlane.xlu0 %2277
    %v2279 = vrcp.pop %v2275
    %v2280 = vrcp.pop %v2278
    %v2281 = vmul.f32 %v2270, %v2279
    %v2282 = vmul.f32 %v2272, %v2280
    %2283 = vrot.lane.b32.xlu0 %v2215, 64
    %v2284 = vpop.permute.xlu0 %2283
    %2285 = vrot.lane.b32.xlu0 %v2218, 64
    %v2286 = vpop.permute.xlu0 %2285
    %v2290 = vsel %vm605, %v2281, 0
    %v2293 = vsel %vm605, %v2282, 0
    %2295 = vmatpush.msra.mxu0 0.0
    %2296 = vmatpush.msra.mxu0 0.0
    %2297 = vmatpush.msra.mxu0 0.0
    %2298 = vmatpush.msra.mxu0 0.0
    %2299 = vmatpush.msra.mxu0 0.0
    %2300 = vmatpush.msra.mxu0 0.0
    %2301 = vmatpush.msra.mxu0 0.0
    %2302 = vmatpush.msra.mxu0 0.0
    %2303 = vmatpush.msra.mxu0 0.0
    %2304 = vmatpush.msra.mxu0 0.0
    %2305 = vmatpush.msra.mxu0 0.0
    %2306 = vmatpush.msra.mxu0 0.0
    %2307 = vmatpush.msra.mxu0 0.0
    %2308 = vmatpush.msra.mxu0 0.0
    %2309 = vmatpush.msra.mxu0 %v2286
    %2310 = vmatpush.msra.mxu0 %v2284
    %2311 = vmatmul.f32.gmra.mxu0 %v2290
    %v2312 = vpop.f32.mrf.mxu0
    %v2313 = vadd.f32 0.0, %v2312
    %2314 = vmatmul.f32.gmra.mxu0 %v2293
    %v2315 = vpop.f32.mrf.mxu0
    %v2316 = vadd.f32 0.0, %v2315
    %2317 = vdwg.mxu0
    %2318 = vrot.lane.b32.xlu0 %v2220, 120
    %v2319 = vpop.permute.xlu0 %2318
    %2320 = vrot.lane.b32.xlu0 %v2221, 120
    %v2321 = vpop.permute.xlu0 %2320
    %2322 = vrot.lane.b32.xlu0 %v2215, 88
    %v2323 = vpop.permute.xlu0 %2322
    %2324 = vrot.lane.b32.xlu0 %v2218, 88
    %v2325 = vpop.permute.xlu0 %2324
    %v2326 = vsel %vm571, %v2319, 0
    %v2328 = vsel %vm571, %v2321, 0
    %v2330 = vsel %vm571, %v2323, 0
    %v2332 = vsel %vm571, %v2325, 0
    %2334 = vmatpush.xpose.msra.mxu0 0.0
    %2335 = vmatpush.xpose.msra.mxu0 0.0
    %2336 = vmatpush.xpose.msra.mxu0 0.0
    %2337 = vmatpush.xpose.msra.mxu0 0.0
    %2338 = vmatpush.xpose.msra.mxu0 0.0
    %2339 = vmatpush.xpose.msra.mxu0 0.0
    %2340 = vmatpush.xpose.msra.mxu0 0.0
    %2341 = vmatpush.xpose.msra.mxu0 0.0
    %2342 = vmatpush.xpose.msra.mxu0 0.0
    %2343 = vmatpush.xpose.msra.mxu0 0.0
    %2344 = vmatpush.xpose.msra.mxu0 0.0
    %2345 = vmatpush.xpose.msra.mxu0 0.0
    %2346 = vmatpush.xpose.msra.mxu0 0.0
    %2347 = vmatpush.xpose.msra.mxu0 0.0
    %2348 = vmatpush.xpose.msra.mxu0 %v2332
    %2349 = vmatpush.xpose.msra.mxu0 %v2330
    %2350 = vmatmul.f32.gmra.mxu0 %v2326
    %v2351 = vpop.f32.mrf.mxu0
    %v2352 = vadd.f32 %v2076, %v2351
    %2353 = vmatmul.f32.gmra.mxu0 %v2328
    %v2354 = vpop.f32.mrf.mxu0
    %v2355 = vadd.f32 %v2077, %v2354
    %2356 = vdwg.mxu0
    %v2357 = vsel %vm605, %v2352, -inf
    %2358 = vmax.xlane.f32.xlu0 %v2357
    %v2359 = vpop.xlane.xlu0 %2358
    %v2360 = vsel %vm605, %v2355, -inf
    %2361 = vmax.xlane.f32.xlu0 %v2360
    %v2362 = vpop.xlane.xlu0 %2361
    %v2363 = vsub.f32 %v2352, %v2359
    %v2364 = vsub.f32 %v2355, %v2362
    %v2365 = vmul.f32 %v2363, 1.442695
    %v2366 = vpow.pop %v2365
    %v2367 = vmul.f32 %v2364, 1.442695
    %v2368 = vpow.pop %v2367
    %v2369 = vsel %vm605, %v2366, 0.0
    %2370 = vadd.xlane.f32.xlu0 %v2369
    %v2371 = vpop.xlane.xlu0 %2370
    %v2372 = vsel %vm605, %v2368, 0.0
    %2373 = vadd.xlane.f32.xlu0 %v2372
    %v2374 = vpop.xlane.xlu0 %2373
    %v2375 = vrcp.pop %v2371
    %v2376 = vrcp.pop %v2374
    %v2377 = vmul.f32 %v2366, %v2375
    %v2378 = vmul.f32 %v2368, %v2376
    %2379 = vrot.lane.b32.xlu0 %v2215, 56
    %v2380 = vpop.permute.xlu0 %2379
    %2381 = vrot.lane.b32.xlu0 %v2218, 56
    %v2382 = vpop.permute.xlu0 %2381
    %v2386 = vsel %vm605, %v2377, 0
    %v2389 = vsel %vm605, %v2378, 0
    %2391 = vmatpush.msra.mxu0 0.0
    %2392 = vmatpush.msra.mxu0 0.0
    %2393 = vmatpush.msra.mxu0 0.0
    %2394 = vmatpush.msra.mxu0 0.0
    %2395 = vmatpush.msra.mxu0 0.0
    %2396 = vmatpush.msra.mxu0 0.0
    %2397 = vmatpush.msra.mxu0 0.0
    %2398 = vmatpush.msra.mxu0 0.0
    %2399 = vmatpush.msra.mxu0 0.0
    %2400 = vmatpush.msra.mxu0 0.0
    %2401 = vmatpush.msra.mxu0 0.0
    %2402 = vmatpush.msra.mxu0 0.0
    %2403 = vmatpush.msra.mxu0 0.0
    %2404 = vmatpush.msra.mxu0 0.0
    %2405 = vmatpush.msra.mxu0 %v2382
    %2406 = vmatpush.msra.mxu0 %v2380
    %2407 = vmatmul.f32.gmra.mxu0 %v2386
    %v2408 = vpop.f32.mrf.mxu0
    %v2409 = vadd.f32 0.0, %v2408
    %2410 = vmatmul.f32.gmra.mxu0 %v2389
    %v2411 = vpop.f32.mrf.mxu0
    %v2412 = vadd.f32 0.0, %v2411
    %2413 = vdwg.mxu0
    %v2415 = vsel %vm571, %v2409, 0
    %v2418 = vsel %vm571, %v2412, 0
    %2420 = vmatpush.msra.mxu0 0.0
    %2421 = vmatpush.msra.mxu0 0.0
    %2422 = vmatpush.msra.mxu0 0.0
    %2423 = vmatpush.msra.mxu0 0.0
    %2424 = vmatpush.msra.mxu0 0.0
    %2425 = vmatpush.msra.mxu0 0.0
    %2426 = vmatpush.msra.mxu0 0.0
    %2427 = vmatpush.msra.mxu0 0.0
    %2428 = vmatpush.msra.mxu0 0.0
    %2429 = vmatpush.msra.mxu0 0.0
    %2430 = vmatpush.msra.mxu0 0.0
    %2431 = vmatpush.msra.mxu0 0.0
    %2432 = vmatpush.msra.mxu0 0.0
    %2433 = vmatpush.msra.mxu0 0.0
    %2434 = vmatpush.msra.mxu0 0.0
    %2435 = vmatpush.msra.mxu0 %v2184
    %2436 = vmatmul.f32.gmra.mxu0 %v2415
    %v2437 = vpop.f32.mrf.mxu0
    %v2438 = vadd.f32 0.0, %v2437
    %2439 = vmatmul.f32.gmra.mxu0 %v2418
    %v2440 = vpop.f32.mrf.mxu0
    %v2441 = vadd.f32 0.0, %v2440
    %2442 = vdwg.mxu0
    %v2444 = vsel %vm571, %v2313, 0
    %v2447 = vsel %vm571, %v2316, 0
    %2449 = vmatpush.msra.mxu0 0.0
    %2450 = vmatpush.msra.mxu0 0.0
    %2451 = vmatpush.msra.mxu0 0.0
    %2452 = vmatpush.msra.mxu0 0.0
    %2453 = vmatpush.msra.mxu0 0.0
    %2454 = vmatpush.msra.mxu0 0.0
    %2455 = vmatpush.msra.mxu0 0.0
    %2456 = vmatpush.msra.mxu0 0.0
    %2457 = vmatpush.msra.mxu0 0.0
    %2458 = vmatpush.msra.mxu0 0.0
    %2459 = vmatpush.msra.mxu0 0.0
    %2460 = vmatpush.msra.mxu0 0.0
    %2461 = vmatpush.msra.mxu0 0.0
    %2462 = vmatpush.msra.mxu0 0.0
    %2463 = vmatpush.msra.mxu0 0.0
    %2464 = vmatpush.msra.mxu0 %v2183
    %2465 = vmatmul.f32.gmra.mxu0 %v2444
    %v2466 = vpop.f32.mrf.mxu0
    %v2467 = vadd.f32 %v2438, %v2466
    %2468 = vmatmul.f32.gmra.mxu0 %v2447
    %v2469 = vpop.f32.mrf.mxu0
    %v2470 = vadd.f32 %v2441, %v2469
    %2471 = vdwg.mxu0
    %2472 = vrot.lane.b32.xlu0 %v2220, 112
    %v2473 = vpop.permute.xlu0 %2472
    %2474 = vrot.lane.b32.xlu0 %v2221, 112
    %v2475 = vpop.permute.xlu0 %2474
    %2476 = vrot.lane.b32.xlu0 %v2215, 80
    %v2477 = vpop.permute.xlu0 %2476
    %2478 = vrot.lane.b32.xlu0 %v2218, 80
    %v2479 = vpop.permute.xlu0 %2478
    %v2480 = vsel %vm571, %v2473, 0
    %v2482 = vsel %vm571, %v2475, 0
    %v2484 = vsel %vm571, %v2477, 0
    %v2486 = vsel %vm571, %v2479, 0
    %2488 = vmatpush.xpose.msra.mxu0 0.0
    %2489 = vmatpush.xpose.msra.mxu0 0.0
    %2490 = vmatpush.xpose.msra.mxu0 0.0
    %2491 = vmatpush.xpose.msra.mxu0 0.0
    %2492 = vmatpush.xpose.msra.mxu0 0.0
    %2493 = vmatpush.xpose.msra.mxu0 0.0
    %2494 = vmatpush.xpose.msra.mxu0 0.0
    %2495 = vmatpush.xpose.msra.mxu0 0.0
    %2496 = vmatpush.xpose.msra.mxu0 0.0
    %2497 = vmatpush.xpose.msra.mxu0 0.0
    %2498 = vmatpush.xpose.msra.mxu0 0.0
    %2499 = vmatpush.xpose.msra.mxu0 0.0
    %2500 = vmatpush.xpose.msra.mxu0 0.0
    %2501 = vmatpush.xpose.msra.mxu0 0.0
    %2502 = vmatpush.xpose.msra.mxu0 %v2486
    %2503 = vmatpush.xpose.msra.mxu0 %v2484
    %2504 = vmatmul.f32.gmra.mxu0 %v2480
    %v2505 = vpop.f32.mrf.mxu0
    %v2506 = vadd.f32 %v2076, %v2505
    %2507 = vmatmul.f32.gmra.mxu0 %v2482
    %v2508 = vpop.f32.mrf.mxu0
    %v2509 = vadd.f32 %v2077, %v2508
    %2510 = vdwg.mxu0
    %v2511 = vsel %vm605, %v2506, -inf
    %2512 = vmax.xlane.f32.xlu0 %v2511
    %v2513 = vpop.xlane.xlu0 %2512
    %v2514 = vsel %vm605, %v2509, -inf
    %2515 = vmax.xlane.f32.xlu0 %v2514
    %v2516 = vpop.xlane.xlu0 %2515
    %v2517 = vsub.f32 %v2506, %v2513
    %v2518 = vsub.f32 %v2509, %v2516
    %v2519 = vmul.f32 %v2517, 1.442695
    %v2520 = vpow.pop %v2519
    %v2521 = vmul.f32 %v2518, 1.442695
    %v2522 = vpow.pop %v2521
    %v2523 = vsel %vm605, %v2520, 0.0
    %2524 = vadd.xlane.f32.xlu0 %v2523
    %v2525 = vpop.xlane.xlu0 %2524
    %v2526 = vsel %vm605, %v2522, 0.0
    %2527 = vadd.xlane.f32.xlu0 %v2526
    %v2528 = vpop.xlane.xlu0 %2527
    %v2529 = vrcp.pop %v2525
    %v2530 = vrcp.pop %v2528
    %v2531 = vmul.f32 %v2520, %v2529
    %v2532 = vmul.f32 %v2522, %v2530
    %2533 = vrot.lane.b32.xlu0 %v2215, 48
    %v2534 = vpop.permute.xlu0 %2533
    %2535 = vrot.lane.b32.xlu0 %v2218, 48
    %v2536 = vpop.permute.xlu0 %2535
    %v2540 = vsel %vm605, %v2531, 0
    %v2543 = vsel %vm605, %v2532, 0
    %2545 = vmatpush.msra.mxu0 0.0
    %2546 = vmatpush.msra.mxu0 0.0
    %2547 = vmatpush.msra.mxu0 0.0
    %2548 = vmatpush.msra.mxu0 0.0
    %2549 = vmatpush.msra.mxu0 0.0
    %2550 = vmatpush.msra.mxu0 0.0
    %2551 = vmatpush.msra.mxu0 0.0
    %2552 = vmatpush.msra.mxu0 0.0
    %2553 = vmatpush.msra.mxu0 0.0
    %2554 = vmatpush.msra.mxu0 0.0
    %2555 = vmatpush.msra.mxu0 0.0
    %2556 = vmatpush.msra.mxu0 0.0
    %2557 = vmatpush.msra.mxu0 0.0
    %2558 = vmatpush.msra.mxu0 0.0
    %2559 = vmatpush.msra.mxu0 %v2536
    %2560 = vmatpush.msra.mxu0 %v2534
    %2561 = vmatmul.f32.gmra.mxu0 %v2540
    %v2562 = vpop.f32.mrf.mxu0
    %v2563 = vadd.f32 0.0, %v2562
    %2564 = vmatmul.f32.gmra.mxu0 %v2543
    %v2565 = vpop.f32.mrf.mxu0
    %v2566 = vadd.f32 0.0, %v2565
    %2567 = vdwg.mxu0
    %v2569 = vsel %vm571, %v2563, 0
    %v2572 = vsel %vm571, %v2566, 0
    %2574 = vmatpush.msra.mxu0 0.0
    %2575 = vmatpush.msra.mxu0 0.0
    %2576 = vmatpush.msra.mxu0 0.0
    %2577 = vmatpush.msra.mxu0 0.0
    %2578 = vmatpush.msra.mxu0 0.0
    %2579 = vmatpush.msra.mxu0 0.0
    %2580 = vmatpush.msra.mxu0 0.0
    %2581 = vmatpush.msra.mxu0 0.0
    %2582 = vmatpush.msra.mxu0 0.0
    %2583 = vmatpush.msra.mxu0 0.0
    %2584 = vmatpush.msra.mxu0 0.0
    %2585 = vmatpush.msra.mxu0 0.0
    %2586 = vmatpush.msra.mxu0 0.0
    %2587 = vmatpush.msra.mxu0 0.0
    %2588 = vmatpush.msra.mxu0 0.0
    %2589 = vmatpush.msra.mxu0 %v2185
    %2590 = vmatmul.f32.gmra.mxu0 %v2569
    %v2591 = vpop.f32.mrf.mxu0
    %v2592 = vadd.f32 0.0, %v2591
    %2593 = vmatmul.f32.gmra.mxu0 %v2572
    %v2594 = vpop.f32.mrf.mxu0
    %v2595 = vadd.f32 0.0, %v2594
    %2596 = vdwg.mxu0
    %v2597 = vadd.f32 %v2467, %v2592
    %v2598 = vadd.f32 %v2470, %v2595
    %2599 = vrot.lane.b32.xlu0 %v2220, 104
    %v2600 = vpop.permute.xlu0 %2599
    %2601 = vrot.lane.b32.xlu0 %v2221, 104
    %v2602 = vpop.permute.xlu0 %2601
    %2603 = vrot.lane.b32.xlu0 %v2215, 72
    %v2604 = vpop.permute.xlu0 %2603
    %2605 = vrot.lane.b32.xlu0 %v2218, 72
    %v2606 = vpop.permute.xlu0 %2605
    %v2607 = vsel %vm571, %v2600, 0
    %v2609 = vsel %vm571, %v2602, 0
    %v2611 = vsel %vm571, %v2604, 0
    %v2613 = vsel %vm571, %v2606, 0
    %2615 = vmatpush.xpose.msra.mxu0 0.0
    %2616 = vmatpush.xpose.msra.mxu0 0.0
    %2617 = vmatpush.xpose.msra.mxu0 0.0
    %2618 = vmatpush.xpose.msra.mxu0 0.0
    %2619 = vmatpush.xpose.msra.mxu0 0.0
    %2620 = vmatpush.xpose.msra.mxu0 0.0
    %2621 = vmatpush.xpose.msra.mxu0 0.0
    %2622 = vmatpush.xpose.msra.mxu0 0.0
    %2623 = vmatpush.xpose.msra.mxu0 0.0
    %2624 = vmatpush.xpose.msra.mxu0 0.0
    %2625 = vmatpush.xpose.msra.mxu0 0.0
    %2626 = vmatpush.xpose.msra.mxu0 0.0
    %2627 = vmatpush.xpose.msra.mxu0 0.0
    %2628 = vmatpush.xpose.msra.mxu0 0.0
    %2629 = vmatpush.xpose.msra.mxu0 %v2613
    %2630 = vmatpush.xpose.msra.mxu0 %v2611
    %2631 = vmatmul.f32.gmra.mxu0 %v2607
    %v2632 = vpop.f32.mrf.mxu0
    %v2633 = vadd.f32 %v2076, %v2632
    %2634 = vmatmul.f32.gmra.mxu0 %v2609
    %v2635 = vpop.f32.mrf.mxu0
    %v2636 = vadd.f32 %v2077, %v2635
    %2637 = vdwg.mxu0
    %v2638 = vsel %vm605, %v2633, -inf
    %2639 = vmax.xlane.f32.xlu0 %v2638
    %v2640 = vpop.xlane.xlu0 %2639
    %v2641 = vsel %vm605, %v2636, -inf
    %2642 = vmax.xlane.f32.xlu0 %v2641
    %v2643 = vpop.xlane.xlu0 %2642
    %v2644 = vsub.f32 %v2633, %v2640
    %v2645 = vsub.f32 %v2636, %v2643
    %v2646 = vmul.f32 %v2644, 1.442695
    %v2647 = vpow.pop %v2646
    %v2648 = vmul.f32 %v2645, 1.442695
    %v2649 = vpow.pop %v2648
    %v2650 = vsel %vm605, %v2647, 0.0
    %2651 = vadd.xlane.f32.xlu0 %v2650
    %v2652 = vpop.xlane.xlu0 %2651
    %v2653 = vsel %vm605, %v2649, 0.0
    %2654 = vadd.xlane.f32.xlu0 %v2653
    %v2655 = vpop.xlane.xlu0 %2654
    %v2656 = vrcp.pop %v2652
    %v2657 = vrcp.pop %v2655
    %v2658 = vmul.f32 %v2647, %v2656
    %v2659 = vmul.f32 %v2649, %v2657
    %2660 = vrot.lane.b32.xlu0 %v2215, 40
    %v2661 = vpop.permute.xlu0 %2660
    %2662 = vrot.lane.b32.xlu0 %v2218, 40
    %v2663 = vpop.permute.xlu0 %2662
    %v2667 = vsel %vm605, %v2658, 0
    %v2670 = vsel %vm605, %v2659, 0
    %2672 = vmatpush.msra.mxu0 0.0
    %2673 = vmatpush.msra.mxu0 0.0
    %2674 = vmatpush.msra.mxu0 0.0
    %2675 = vmatpush.msra.mxu0 0.0
    %2676 = vmatpush.msra.mxu0 0.0
    %2677 = vmatpush.msra.mxu0 0.0
    %2678 = vmatpush.msra.mxu0 0.0
    %2679 = vmatpush.msra.mxu0 0.0
    %2680 = vmatpush.msra.mxu0 0.0
    %2681 = vmatpush.msra.mxu0 0.0
    %2682 = vmatpush.msra.mxu0 0.0
    %2683 = vmatpush.msra.mxu0 0.0
    %2684 = vmatpush.msra.mxu0 0.0
    %2685 = vmatpush.msra.mxu0 0.0
    %2686 = vmatpush.msra.mxu0 %v2663
    %2687 = vmatpush.msra.mxu0 %v2661
    %2688 = vmatmul.f32.gmra.mxu0 %v2667
    %v2689 = vpop.f32.mrf.mxu0
    %v2690 = vadd.f32 0.0, %v2689
    %2691 = vmatmul.f32.gmra.mxu0 %v2670
    %v2692 = vpop.f32.mrf.mxu0
    %v2693 = vadd.f32 0.0, %v2692
    %2694 = vdwg.mxu0
    %v2696 = vsel %vm571, %v2690, 0
    %v2699 = vsel %vm571, %v2693, 0
    %2701 = vmatpush.msra.mxu0 0.0
    %2702 = vmatpush.msra.mxu0 0.0
    %2703 = vmatpush.msra.mxu0 0.0
    %2704 = vmatpush.msra.mxu0 0.0
    %2705 = vmatpush.msra.mxu0 0.0
    %2706 = vmatpush.msra.mxu0 0.0
    %2707 = vmatpush.msra.mxu0 0.0
    %2708 = vmatpush.msra.mxu0 0.0
    %2709 = vmatpush.msra.mxu0 0.0
    %2710 = vmatpush.msra.mxu0 0.0
    %2711 = vmatpush.msra.mxu0 0.0
    %2712 = vmatpush.msra.mxu0 0.0
    %2713 = vmatpush.msra.mxu0 0.0
    %2714 = vmatpush.msra.mxu0 0.0
    %2715 = vmatpush.msra.mxu0 0.0
    %2716 = vmatpush.msra.mxu0 %v2186
    %2717 = vmatmul.f32.gmra.mxu0 %v2696
    %v2718 = vpop.f32.mrf.mxu0
    %v2719 = vadd.f32 0.0, %v2718
    %2720 = vmatmul.f32.gmra.mxu0 %v2699
    %v2721 = vpop.f32.mrf.mxu0
    %v2722 = vadd.f32 0.0, %v2721
    %2723 = vdwg.mxu0
    %v2724 = vadd.f32 %v2597, %v2719
    %v2725 = vadd.f32 %v2598, %v2722
    %v2727 = vperm.slane %v2187, 0
    %v2729 = vadd.f32 %v2724, %v2727
    %v2730 = vadd.f32 %v2725, %v2727
    %v2731 = vadd.f32 %v2176, %v2729
    %v2732 = vadd.f32 %v2177, %v2730
    %v2733 = vld [vmem:[%s61] sm:$0x1]
    %v2734 = vld [vmem:[%s63] sm:$0x1]
    %v2735 = vsel %vm459, %v2731, 0.0
    %2736 = vadd.xlane.f32.xlu0 %v2735
    %v2737 = vpop.xlane.xlu0 %2736
    %v2738 = vsel %vm459, %v2732, 0.0
    %2739 = vadd.xlane.f32.xlu0 %v2738
    %v2740 = vpop.xlane.xlu0 %2739
    %v2741 = vmul.f32 %v2737, %v472
    %v2742 = vmul.f32 %v2740, %v472
    %v2743 = vsub.f32 %v2731, %v2741
    %v2744 = vsub.f32 %v2732, %v2742
    %v2745 = vmul.f32 %v2743, %v2743
    %v2746 = vmul.f32 %v2744, %v2744
    %v2747 = vsel %vm459, %v2745, 0.0
    %2748 = vadd.xlane.f32.xlu0 %v2747
    %v2749 = vpop.xlane.xlu0 %2748
    %v2750 = vsel %vm459, %v2746, 0.0
    %2751 = vadd.xlane.f32.xlu0 %v2750
    %v2752 = vpop.xlane.xlu0 %2751
    %v2753 = vmul.f32 %v2749, %v472
    %v2754 = vmul.f32 %v2752, %v472
    %v2755 = vadd.f32 %v2753, 1e-05
    %v2756 = vadd.f32 %v2754, 1e-05
    %v2757 = vrsqrt.pop %v2755
    %v2758 = vmul.f32 %v2757, %v2755
    %v2759 = vmul.f32 %v2758, %v2757
    %v2760 = vmul.f32 0.5, %v2759
    %v2761 = vsub.f32 1.5, %v2760
    %v2762 = vmul.f32 %v2757, %v2761
    %vm2763 = vweird.f32 %v2755
    %vm2764 = vweird.f32 %v2757
    %vm2765 = vmor %vm2763, %vm2764
    %v2766 = vsel %vm2765, %v2757, %v2762
    %v2767 = vrsqrt.pop %v2756
    %v2768 = vmul.f32 %v2767, %v2756
    %v2769 = vmul.f32 %v2768, %v2767
    %v2770 = vmul.f32 0.5, %v2769
    %v2771 = vsub.f32 1.5, %v2770
    %v2772 = vmul.f32 %v2767, %v2771
    %vm2773 = vweird.f32 %v2756
    %vm2774 = vweird.f32 %v2767
    %vm2775 = vmor %vm2773, %vm2774
    %v2776 = vsel %vm2775, %v2767, %v2772
    %v2777 = vmul.f32 %v2743, %v2766
    %v2778 = vmul.f32 %v2744, %v2776
    %v2780 = vperm.slane %v2733, 0
    %v2782 = vmul.f32 %v2777, %v2780
    %v2783 = vmul.f32 %v2778, %v2780
    %v2785 = vperm.slane %v2734, 0
    %v2787 = vadd.f32 %v2782, %v2785
    %v2788 = vadd.f32 %v2783, %v2785
    %v2789 = vld [vmem:[#allocation16] sm:$0xff]
    %v2790 = vld [vmem:[#allocation16 + $0x8] sm:$0xff]
    %v2791 = vld [vmem:[#allocation16 + $0x10] sm:$0xff]
    %v2792 = vld [vmem:[#allocation16 + $0x18] sm:$0xff]
    %v2793 = vld [vmem:[%s67] sm:$0x1]
    %v2794 = vld [vmem:[#allocation17] sm:$0xff]
    %v2795 = vld [vmem:[#allocation17 + $0x8] sm:$0xff]
    %v2796 = vld [vmem:[#allocation17 + $0x10] sm:$0xff]
    %v2797 = vld [vmem:[#allocation17 + $0x18] sm:$0xff]
    %v2798 = vld [vmem:[%s71] sm:$0x1]
    %v2799 = vld [vmem:[#allocation19] sm:$0xff]
    %v2800 = vld [vmem:[#allocation19 + $0x8] sm:$0xff]
    %v2801 = vld [vmem:[#allocation19 + $0x10] sm:$0xff]
    %v2802 = vld [vmem:[#allocation19 + $0x18] sm:$0xff]
    %v2803 = vld [vmem:[%s75] sm:$0x1]
    %v2805 = vperm.slane %v2793, 0
    %v2808 = vsel %vm459, %v2787, 0
    %v2811 = vsel %vm459, %v2788, 0
    %2813 = vmatpush.msra.mxu0 0.0
    %2814 = vmatpush.msra.mxu0 0.0
    %2815 = vmatpush.msra.mxu0 0.0
    %2816 = vmatpush.msra.mxu0 0.0
    %2817 = vmatpush.msra.mxu0 0.0
    %2818 = vmatpush.msra.mxu0 0.0
    %2819 = vmatpush.msra.mxu0 0.0
    %2820 = vmatpush.msra.mxu0 0.0
    %2821 = vmatpush.msra.mxu0 0.0
    %2822 = vmatpush.msra.mxu0 0.0
    %2823 = vmatpush.msra.mxu0 0.0
    %2824 = vmatpush.msra.mxu0 0.0
    %2825 = vmatpush.msra.mxu0 %v2792
    %2826 = vmatpush.msra.mxu0 %v2791
    %2827 = vmatpush.msra.mxu0 %v2790
    %2828 = vmatpush.msra.mxu0 %v2789
    %2829 = vmatmul.f32.gmra.mxu0 %v2808
    %v2830 = vpop.f32.mrf.mxu0
    %v2831 = vadd.f32 %v2805, %v2830
    %2832 = vmatmul.f32.gmra.mxu0 %v2811
    %v2833 = vpop.f32.mrf.mxu0
    %v2834 = vadd.f32 %v2805, %v2833
    %2835 = vdwg.mxu0
    %v2837 = vperm.slane %v2798, 0
    %v2840 = vsel %vm459, %v2063, 0
    %v2843 = vsel %vm459, %v2064, 0
    %2845 = vmatpush.msra.mxu0 0.0
    %2846 = vmatpush.msra.mxu0 0.0
    %2847 = vmatpush.msra.mxu0 0.0
    %2848 = vmatpush.msra.mxu0 0.0
    %2849 = vmatpush.msra.mxu0 0.0
    %2850 = vmatpush.msra.mxu0 0.0
    %2851 = vmatpush.msra.mxu0 0.0
    %2852 = vmatpush.msra.mxu0 0.0
    %2853 = vmatpush.msra.mxu0 0.0
    %2854 = vmatpush.msra.mxu0 0.0
    %2855 = vmatpush.msra.mxu0 0.0
    %2856 = vmatpush.msra.mxu0 0.0
    %2857 = vmatpush.msra.mxu0 %v2797
    %2858 = vmatpush.msra.mxu0 %v2796
    %2859 = vmatpush.msra.mxu0 %v2795
    %2860 = vmatpush.msra.mxu0 %v2794
    %2861 = vmatmul.f32.gmra.mxu0 %v2840
    %v2862 = vpop.f32.mrf.mxu0
    %v2863 = vadd.f32 %v2837, %v2862
    %2864 = vmatmul.f32.gmra.mxu0 %v2843
    %v2865 = vpop.f32.mrf.mxu0
    %v2866 = vadd.f32 %v2837, %v2865
    %2867 = vdwg.mxu0
    %v2868 = vmul.f32 %v2831, 0.35355338
    %v2869 = vmul.f32 %v2834, 0.35355338
    %v2871 = vsel %vm571, %v2868, 0
    %v2874 = vsel %vm571, %v2869, 0
    %v2877 = vsel %vm571, %v2863, 0
    %v2880 = vsel %vm571, %v2866, 0
    %2882 = vmatpush.xpose.msra.mxu0 0.0
    %2883 = vmatpush.xpose.msra.mxu0 0.0
    %2884 = vmatpush.xpose.msra.mxu0 0.0
    %2885 = vmatpush.xpose.msra.mxu0 0.0
    %2886 = vmatpush.xpose.msra.mxu0 0.0
    %2887 = vmatpush.xpose.msra.mxu0 0.0
    %2888 = vmatpush.xpose.msra.mxu0 0.0
    %2889 = vmatpush.xpose.msra.mxu0 0.0
    %2890 = vmatpush.xpose.msra.mxu0 0.0
    %2891 = vmatpush.xpose.msra.mxu0 0.0
    %2892 = vmatpush.xpose.msra.mxu0 0.0
    %2893 = vmatpush.xpose.msra.mxu0 0.0
    %2894 = vmatpush.xpose.msra.mxu0 0.0
    %2895 = vmatpush.xpose.msra.mxu0 0.0
    %2896 = vmatpush.xpose.msra.mxu0 %v2880
    %2897 = vmatpush.xpose.msra.mxu0 %v2877
    %2898 = vmatmul.f32.gmra.mxu0 %v2871
    %v2899 = vpop.f32.mrf.mxu0
    %v2900 = vadd.f32 %v410, %v2899
    %2901 = vmatmul.f32.gmra.mxu0 %v2874
    %v2902 = vpop.f32.mrf.mxu0
    %v2903 = vadd.f32 %v411, %v2902
    %2904 = vdwg.mxu0
    %v2905 = vsel %vm605, %v2900, -inf
    %2906 = vmax.xlane.f32.xlu0 %v2905
    %v2907 = vpop.xlane.xlu0 %2906
    %v2908 = vsel %vm605, %v2903, -inf
    %2909 = vmax.xlane.f32.xlu0 %v2908
    %v2910 = vpop.xlane.xlu0 %2909
    %v2911 = vsub.f32 %v2900, %v2907
    %v2912 = vsub.f32 %v2903, %v2910
    %v2913 = vmul.f32 %v2911, 1.442695
    %v2914 = vpow.pop %v2913
    %v2915 = vmul.f32 %v2912, 1.442695
    %v2916 = vpow.pop %v2915
    %v2917 = vsel %vm605, %v2914, 0.0
    %2918 = vadd.xlane.f32.xlu0 %v2917
    %v2919 = vpop.xlane.xlu0 %2918
    %v2920 = vsel %vm605, %v2916, 0.0
    %2921 = vadd.xlane.f32.xlu0 %v2920
    %v2922 = vpop.xlane.xlu0 %2921
    %v2923 = vrcp.pop %v2919
    %v2924 = vrcp.pop %v2922
    %v2925 = vmul.f32 %v2914, %v2923
    %v2926 = vmul.f32 %v2916, %v2924
    %2927 = vrot.lane.b32.xlu0 %v2863, 96
    %v2928 = vpop.permute.xlu0 %2927
    %2929 = vrot.lane.b32.xlu0 %v2866, 96
    %v2930 = vpop.permute.xlu0 %2929
    %v2934 = vsel %vm605, %v2925, 0
    %v2937 = vsel %vm605, %v2926, 0
    %2939 = vmatpush.msra.mxu0 0.0
    %2940 = vmatpush.msra.mxu0 0.0
    %2941 = vmatpush.msra.mxu0 0.0
    %2942 = vmatpush.msra.mxu0 0.0
    %2943 = vmatpush.msra.mxu0 0.0
    %2944 = vmatpush.msra.mxu0 0.0
    %2945 = vmatpush.msra.mxu0 0.0
    %2946 = vmatpush.msra.mxu0 0.0
    %2947 = vmatpush.msra.mxu0 0.0
    %2948 = vmatpush.msra.mxu0 0.0
    %2949 = vmatpush.msra.mxu0 0.0
    %2950 = vmatpush.msra.mxu0 0.0
    %2951 = vmatpush.msra.mxu0 0.0
    %2952 = vmatpush.msra.mxu0 0.0
    %2953 = vmatpush.msra.mxu0 %v2930
    %2954 = vmatpush.msra.mxu0 %v2928
    %2955 = vmatmul.f32.gmra.mxu0 %v2934
    %v2956 = vpop.f32.mrf.mxu0
    %v2957 = vadd.f32 0.0, %v2956
    %2958 = vmatmul.f32.gmra.mxu0 %v2937
    %v2959 = vpop.f32.mrf.mxu0
    %v2960 = vadd.f32 0.0, %v2959
    %2961 = vdwg.mxu0
    %2962 = vrot.lane.b32.xlu0 %v2868, 120
    %v2963 = vpop.permute.xlu0 %2962
    %2964 = vrot.lane.b32.xlu0 %v2869, 120
    %v2965 = vpop.permute.xlu0 %2964
    %2966 = vrot.lane.b32.xlu0 %v2863, 120
    %v2967 = vpop.permute.xlu0 %2966
    %2968 = vrot.lane.b32.xlu0 %v2866, 120
    %v2969 = vpop.permute.xlu0 %2968
    %v2970 = vsel %vm571, %v2963, 0
    %v2972 = vsel %vm571, %v2965, 0
    %v2974 = vsel %vm571, %v2967, 0
    %v2976 = vsel %vm571, %v2969, 0
    %2978 = vmatpush.xpose.msra.mxu0 0.0
    %2979 = vmatpush.xpose.msra.mxu0 0.0
    %2980 = vmatpush.xpose.msra.mxu0 0.0
    %2981 = vmatpush.xpose.msra.mxu0 0.0
    %2982 = vmatpush.xpose.msra.mxu0 0.0
    %2983 = vmatpush.xpose.msra.mxu0 0.0
    %2984 = vmatpush.xpose.msra.mxu0 0.0
    %2985 = vmatpush.xpose.msra.mxu0 0.0
    %2986 = vmatpush.xpose.msra.mxu0 0.0
    %2987 = vmatpush.xpose.msra.mxu0 0.0
    %2988 = vmatpush.xpose.msra.mxu0 0.0
    %2989 = vmatpush.xpose.msra.mxu0 0.0
    %2990 = vmatpush.xpose.msra.mxu0 0.0
    %2991 = vmatpush.xpose.msra.mxu0 0.0
    %2992 = vmatpush.xpose.msra.mxu0 %v2976
    %2993 = vmatpush.xpose.msra.mxu0 %v2974
    %2994 = vmatmul.f32.gmra.mxu0 %v2970
    %v2995 = vpop.f32.mrf.mxu0
    %v2996 = vadd.f32 %v410, %v2995
    %2997 = vmatmul.f32.gmra.mxu0 %v2972
    %v2998 = vpop.f32.mrf.mxu0
    %v2999 = vadd.f32 %v411, %v2998
    %3000 = vdwg.mxu0
    %v3001 = vsel %vm605, %v2996, -inf
    %3002 = vmax.xlane.f32.xlu0 %v3001
    %v3003 = vpop.xlane.xlu0 %3002
    %v3004 = vsel %vm605, %v2999, -inf
    %3005 = vmax.xlane.f32.xlu0 %v3004
    %v3006 = vpop.xlane.xlu0 %3005
    %v3007 = vsub.f32 %v2996, %v3003
    %v3008 = vsub.f32 %v2999, %v3006
    %v3009 = vmul.f32 %v3007, 1.442695
    %v3010 = vpow.pop %v3009
    %v3011 = vmul.f32 %v3008, 1.442695
    %v3012 = vpow.pop %v3011
    %v3013 = vsel %vm605, %v3010, 0.0
    %3014 = vadd.xlane.f32.xlu0 %v3013
    %v3015 = vpop.xlane.xlu0 %3014
    %v3016 = vsel %vm605, %v3012, 0.0
    %3017 = vadd.xlane.f32.xlu0 %v3016
    %v3018 = vpop.xlane.xlu0 %3017
    %v3019 = vrcp.pop %v3015
    %v3020 = vrcp.pop %v3018
    %v3021 = vmul.f32 %v3010, %v3019
    %v3022 = vmul.f32 %v3012, %v3020
    %3023 = vrot.lane.b32.xlu0 %v2863, 88
    %v3024 = vpop.permute.xlu0 %3023
    %3025 = vrot.lane.b32.xlu0 %v2866, 88
    %v3026 = vpop.permute.xlu0 %3025
    %v3030 = vsel %vm605, %v3021, 0
    %v3033 = vsel %vm605, %v3022, 0
    %3035 = vmatpush.msra.mxu0 0.0
    %3036 = vmatpush.msra.mxu0 0.0
    %3037 = vmatpush.msra.mxu0 0.0
    %3038 = vmatpush.msra.mxu0 0.0
    %3039 = vmatpush.msra.mxu0 0.0
    %3040 = vmatpush.msra.mxu0 0.0
    %3041 = vmatpush.msra.mxu0 0.0
    %3042 = vmatpush.msra.mxu0 0.0
    %3043 = vmatpush.msra.mxu0 0.0
    %3044 = vmatpush.msra.mxu0 0.0
    %3045 = vmatpush.msra.mxu0 0.0
    %3046 = vmatpush.msra.mxu0 0.0
    %3047 = vmatpush.msra.mxu0 0.0
    %3048 = vmatpush.msra.mxu0 0.0
    %3049 = vmatpush.msra.mxu0 %v3026
    %3050 = vmatpush.msra.mxu0 %v3024
    %3051 = vmatmul.f32.gmra.mxu0 %v3030
    %v3052 = vpop.f32.mrf.mxu0
    %v3053 = vadd.f32 0.0, %v3052
    %3054 = vmatmul.f32.gmra.mxu0 %v3033
    %v3055 = vpop.f32.mrf.mxu0
    %v3056 = vadd.f32 0.0, %v3055
    %3057 = vdwg.mxu0
    %v3059 = vsel %vm571, %v3053, 0
    %v3062 = vsel %vm571, %v3056, 0
    %3064 = vmatpush.msra.mxu0 0.0
    %3065 = vmatpush.msra.mxu0 0.0
    %3066 = vmatpush.msra.mxu0 0.0
    %3067 = vmatpush.msra.mxu0 0.0
    %3068 = vmatpush.msra.mxu0 0.0
    %3069 = vmatpush.msra.mxu0 0.0
    %3070 = vmatpush.msra.mxu0 0.0
    %3071 = vmatpush.msra.mxu0 0.0
    %3072 = vmatpush.msra.mxu0 0.0
    %3073 = vmatpush.msra.mxu0 0.0
    %3074 = vmatpush.msra.mxu0 0.0
    %3075 = vmatpush.msra.mxu0 0.0
    %3076 = vmatpush.msra.mxu0 0.0
    %3077 = vmatpush.msra.mxu0 0.0
    %3078 = vmatpush.msra.mxu0 0.0
    %3079 = vmatpush.msra.mxu0 %v2800
    %3080 = vmatmul.f32.gmra.mxu0 %v3059
    %v3081 = vpop.f32.mrf.mxu0
    %v3082 = vadd.f32 0.0, %v3081
    %3083 = vmatmul.f32.gmra.mxu0 %v3062
    %v3084 = vpop.f32.mrf.mxu0
    %v3085 = vadd.f32 0.0, %v3084
    %3086 = vdwg.mxu0
    %v3088 = vsel %vm571, %v2957, 0
    %v3091 = vsel %vm571, %v2960, 0
    %3093 = vmatpush.msra.mxu0 0.0
    %3094 = vmatpush.msra.mxu0 0.0
    %3095 = vmatpush.msra.mxu0 0.0
    %3096 = vmatpush.msra.mxu0 0.0
    %3097 = vmatpush.msra.mxu0 0.0
    %3098 = vmatpush.msra.mxu0 0.0
    %3099 = vmatpush.msra.mxu0 0.0
    %3100 = vmatpush.msra.mxu0 0.0
    %3101 = vmatpush.msra.mxu0 0.0
    %3102 = vmatpush.msra.mxu0 0.0
    %3103 = vmatpush.msra.mxu0 0.0
    %3104 = vmatpush.msra.mxu0 0.0
    %3105 = vmatpush.msra.mxu0 0.0
    %3106 = vmatpush.msra.mxu0 0.0
    %3107 = vmatpush.msra.mxu0 0.0
    %3108 = vmatpush.msra.mxu0 %v2799
    %3109 = vmatmul.f32.gmra.mxu0 %v3088
    %v3110 = vpop.f32.mrf.mxu0
    %v3111 = vadd.f32 %v3082, %v3110
    %3112 = vmatmul.f32.gmra.mxu0 %v3091
    %v3113 = vpop.f32.mrf.mxu0
    %v3114 = vadd.f32 %v3085, %v3113
    %3115 = vdwg.mxu0
    %3116 = vrot.lane.b32.xlu0 %v2868, 112
    %v3117 = vpop.permute.xlu0 %3116
    %3118 = vrot.lane.b32.xlu0 %v2869, 112
    %v3119 = vpop.permute.xlu0 %3118
    %3120 = vrot.lane.b32.xlu0 %v2863, 112
    %v3121 = vpop.permute.xlu0 %3120
    %3122 = vrot.lane.b32.xlu0 %v2866, 112
    %v3123 = vpop.permute.xlu0 %3122
    %v3124 = vsel %vm571, %v3117, 0
    %v3126 = vsel %vm571, %v3119, 0
    %v3128 = vsel %vm571, %v3121, 0
    %v3130 = vsel %vm571, %v3123, 0
    %3132 = vmatpush.xpose.msra.mxu0 0.0
    %3133 = vmatpush.xpose.msra.mxu0 0.0
    %3134 = vmatpush.xpose.msra.mxu0 0.0
    %3135 = vmatpush.xpose.msra.mxu0 0.0
    %3136 = vmatpush.xpose.msra.mxu0 0.0
    %3137 = vmatpush.xpose.msra.mxu0 0.0
    %3138 = vmatpush.xpose.msra.mxu0 0.0
    %3139 = vmatpush.xpose.msra.mxu0 0.0
    %3140 = vmatpush.xpose.msra.mxu0 0.0
    %3141 = vmatpush.xpose.msra.mxu0 0.0
    %3142 = vmatpush.xpose.msra.mxu0 0.0
    %3143 = vmatpush.xpose.msra.mxu0 0.0
    %3144 = vmatpush.xpose.msra.mxu0 0.0
    %3145 = vmatpush.xpose.msra.mxu0 0.0
    %3146 = vmatpush.xpose.msra.mxu0 %v3130
    %3147 = vmatpush.xpose.msra.mxu0 %v3128
    %3148 = vmatmul.f32.gmra.mxu0 %v3124
    %v3149 = vpop.f32.mrf.mxu0
    %v3150 = vadd.f32 %v410, %v3149
    %3151 = vmatmul.f32.gmra.mxu0 %v3126
    %v3152 = vpop.f32.mrf.mxu0
    %v3153 = vadd.f32 %v411, %v3152
    %3154 = vdwg.mxu0
    %v3155 = vsel %vm605, %v3150, -inf
    %3156 = vmax.xlane.f32.xlu0 %v3155
    %v3157 = vpop.xlane.xlu0 %3156
    %v3158 = vsel %vm605, %v3153, -inf
    %3159 = vmax.xlane.f32.xlu0 %v3158
    %v3160 = vpop.xlane.xlu0 %3159
    %v3161 = vsub.f32 %v3150, %v3157
    %v3162 = vsub.f32 %v3153, %v3160
    %v3163 = vmul.f32 %v3161, 1.442695
    %v3164 = vpow.pop %v3163
    %v3165 = vmul.f32 %v3162, 1.442695
    %v3166 = vpow.pop %v3165
    %v3167 = vsel %vm605, %v3164, 0.0
    %3168 = vadd.xlane.f32.xlu0 %v3167
    %v3169 = vpop.xlane.xlu0 %3168
    %v3170 = vsel %vm605, %v3166, 0.0
    %3171 = vadd.xlane.f32.xlu0 %v3170
    %v3172 = vpop.xlane.xlu0 %3171
    %v3173 = vrcp.pop %v3169
    %v3174 = vrcp.pop %v3172
    %v3175 = vmul.f32 %v3164, %v3173
    %v3176 = vmul.f32 %v3166, %v3174
    %3177 = vrot.lane.b32.xlu0 %v2863, 80
    %v3178 = vpop.permute.xlu0 %3177
    %3179 = vrot.lane.b32.xlu0 %v2866, 80
    %v3180 = vpop.permute.xlu0 %3179
    %v3184 = vsel %vm605, %v3175, 0
    %v3187 = vsel %vm605, %v3176, 0
    %3189 = vmatpush.msra.mxu0 0.0
    %3190 = vmatpush.msra.mxu0 0.0
    %3191 = vmatpush.msra.mxu0 0.0
    %3192 = vmatpush.msra.mxu0 0.0
    %3193 = vmatpush.msra.mxu0 0.0
    %3194 = vmatpush.msra.mxu0 0.0
    %3195 = vmatpush.msra.mxu0 0.0
    %3196 = vmatpush.msra.mxu0 0.0
    %3197 = vmatpush.msra.mxu0 0.0
    %3198 = vmatpush.msra.mxu0 0.0
    %3199 = vmatpush.msra.mxu0 0.0
    %3200 = vmatpush.msra.mxu0 0.0
    %3201 = vmatpush.msra.mxu0 0.0
    %3202 = vmatpush.msra.mxu0 0.0
    %3203 = vmatpush.msra.mxu0 %v3180
    %3204 = vmatpush.msra.mxu0 %v3178
    %3205 = vmatmul.f32.gmra.mxu0 %v3184
    %v3206 = vpop.f32.mrf.mxu0
    %v3207 = vadd.f32 0.0, %v3206
    %3208 = vmatmul.f32.gmra.mxu0 %v3187
    %v3209 = vpop.f32.mrf.mxu0
    %v3210 = vadd.f32 0.0, %v3209
    %3211 = vdwg.mxu0
    %v3213 = vsel %vm571, %v3207, 0
    %v3216 = vsel %vm571, %v3210, 0
    %3218 = vmatpush.msra.mxu0 0.0
    %3219 = vmatpush.msra.mxu0 0.0
    %3220 = vmatpush.msra.mxu0 0.0
    %3221 = vmatpush.msra.mxu0 0.0
    %3222 = vmatpush.msra.mxu0 0.0
    %3223 = vmatpush.msra.mxu0 0.0
    %3224 = vmatpush.msra.mxu0 0.0
    %3225 = vmatpush.msra.mxu0 0.0
    %3226 = vmatpush.msra.mxu0 0.0
    %3227 = vmatpush.msra.mxu0 0.0
    %3228 = vmatpush.msra.mxu0 0.0
    %3229 = vmatpush.msra.mxu0 0.0
    %3230 = vmatpush.msra.mxu0 0.0
    %3231 = vmatpush.msra.mxu0 0.0
    %3232 = vmatpush.msra.mxu0 0.0
    %3233 = vmatpush.msra.mxu0 %v2801
    %3234 = vmatmul.f32.gmra.mxu0 %v3213
    %v3235 = vpop.f32.mrf.mxu0
    %v3236 = vadd.f32 0.0, %v3235
    %3237 = vmatmul.f32.gmra.mxu0 %v3216
    %v3238 = vpop.f32.mrf.mxu0
    %v3239 = vadd.f32 0.0, %v3238
    %3240 = vdwg.mxu0
    %v3241 = vadd.f32 %v3111, %v3236
    %v3242 = vadd.f32 %v3114, %v3239
    %3243 = vrot.lane.b32.xlu0 %v2868, 104
    %v3244 = vpop.permute.xlu0 %3243
    %3245 = vrot.lane.b32.xlu0 %v2869, 104
    %v3246 = vpop.permute.xlu0 %3245
    %3247 = vrot.lane.b32.xlu0 %v2863, 104
    %v3248 = vpop.permute.xlu0 %3247
    %3249 = vrot.lane.b32.xlu0 %v2866, 104
    %v3250 = vpop.permute.xlu0 %3249
    %v3251 = vsel %vm571, %v3244, 0
    %v3253 = vsel %vm571, %v3246, 0
    %v3255 = vsel %vm571, %v3248, 0
    %v3257 = vsel %vm571, %v3250, 0
    %3259 = vmatpush.xpose.msra.mxu0 0.0
    %3260 = vmatpush.xpose.msra.mxu0 0.0
    %3261 = vmatpush.xpose.msra.mxu0 0.0
    %3262 = vmatpush.xpose.msra.mxu0 0.0
    %3263 = vmatpush.xpose.msra.mxu0 0.0
    %3264 = vmatpush.xpose.msra.mxu0 0.0
    %3265 = vmatpush.xpose.msra.mxu0 0.0
    %3266 = vmatpush.xpose.msra.mxu0 0.0
    %3267 = vmatpush.xpose.msra.mxu0 0.0
    %3268 = vmatpush.xpose.msra.mxu0 0.0
    %3269 = vmatpush.xpose.msra.mxu0 0.0
    %3270 = vmatpush.xpose.msra.mxu0 0.0
    %3271 = vmatpush.xpose.msra.mxu0 0.0
    %3272 = vmatpush.xpose.msra.mxu0 0.0
    %3273 = vmatpush.xpose.msra.mxu0 %v3257
    %3274 = vmatpush.xpose.msra.mxu0 %v3255
    %3275 = vmatmul.f32.gmra.mxu0 %v3251
    %v3276 = vpop.f32.mrf.mxu0
    %v3277 = vadd.f32 %v410, %v3276
    %3278 = vmatmul.f32.gmra.mxu0 %v3253
    %v3279 = vpop.f32.mrf.mxu0
    %v3280 = vadd.f32 %v411, %v3279
    %3281 = vdwg.mxu0
    %v3282 = vsel %vm605, %v3277, -inf
    %3283 = vmax.xlane.f32.xlu0 %v3282
    %v3284 = vpop.xlane.xlu0 %3283
    %v3285 = vsel %vm605, %v3280, -inf
    %3286 = vmax.xlane.f32.xlu0 %v3285
    %v3287 = vpop.xlane.xlu0 %3286
    %v3288 = vsub.f32 %v3277, %v3284
    %v3289 = vsub.f32 %v3280, %v3287
    %v3290 = vmul.f32 %v3288, 1.442695
    %v3291 = vpow.pop %v3290
    %v3292 = vmul.f32 %v3289, 1.442695
    %v3293 = vpow.pop %v3292
    %v3294 = vsel %vm605, %v3291, 0.0
    %3295 = vadd.xlane.f32.xlu0 %v3294
    %v3296 = vpop.xlane.xlu0 %3295
    %v3297 = vsel %vm605, %v3293, 0.0
    %3298 = vadd.xlane.f32.xlu0 %v3297
    %v3299 = vpop.xlane.xlu0 %3298
    %v3300 = vrcp.pop %v3296
    %v3301 = vrcp.pop %v3299
    %v3302 = vmul.f32 %v3291, %v3300
    %v3303 = vmul.f32 %v3293, %v3301
    %3304 = vrot.lane.b32.xlu0 %v2863, 72
    %v3305 = vpop.permute.xlu0 %3304
    %3306 = vrot.lane.b32.xlu0 %v2866, 72
    %v3307 = vpop.permute.xlu0 %3306
    %v3311 = vsel %vm605, %v3302, 0
    %v3314 = vsel %vm605, %v3303, 0
    %3316 = vmatpush.msra.mxu0 0.0
    %3317 = vmatpush.msra.mxu0 0.0
    %3318 = vmatpush.msra.mxu0 0.0
    %3319 = vmatpush.msra.mxu0 0.0
    %3320 = vmatpush.msra.mxu0 0.0
    %3321 = vmatpush.msra.mxu0 0.0
    %3322 = vmatpush.msra.mxu0 0.0
    %3323 = vmatpush.msra.mxu0 0.0
    %3324 = vmatpush.msra.mxu0 0.0
    %3325 = vmatpush.msra.mxu0 0.0
    %3326 = vmatpush.msra.mxu0 0.0
    %3327 = vmatpush.msra.mxu0 0.0
    %3328 = vmatpush.msra.mxu0 0.0
    %3329 = vmatpush.msra.mxu0 0.0
    %3330 = vmatpush.msra.mxu0 %v3307
    %3331 = vmatpush.msra.mxu0 %v3305
    %3332 = vmatmul.f32.gmra.mxu0 %v3311
    %v3333 = vpop.f32.mrf.mxu0
    %v3334 = vadd.f32 0.0, %v3333
    %3335 = vmatmul.f32.gmra.mxu0 %v3314
    %v3336 = vpop.f32.mrf.mxu0
    %v3337 = vadd.f32 0.0, %v3336
    %3338 = vdwg.mxu0
    %v3340 = vsel %vm571, %v3334, 0
    %v3343 = vsel %vm571, %v3337, 0
    %3345 = vmatpush.msra.mxu0 0.0
    %3346 = vmatpush.msra.mxu0 0.0
    %3347 = vmatpush.msra.mxu0 0.0
    %3348 = vmatpush.msra.mxu0 0.0
    %3349 = vmatpush.msra.mxu0 0.0
    %3350 = vmatpush.msra.mxu0 0.0
    %3351 = vmatpush.msra.mxu0 0.0
    %3352 = vmatpush.msra.mxu0 0.0
    %3353 = vmatpush.msra.mxu0 0.0
    %3354 = vmatpush.msra.mxu0 0.0
    %3355 = vmatpush.msra.mxu0 0.0
    %3356 = vmatpush.msra.mxu0 0.0
    %3357 = vmatpush.msra.mxu0 0.0
    %3358 = vmatpush.msra.mxu0 0.0
    %3359 = vmatpush.msra.mxu0 0.0
    %3360 = vmatpush.msra.mxu0 %v2802
    %3361 = vmatmul.f32.gmra.mxu0 %v3340
    %v3362 = vpop.f32.mrf.mxu0
    %v3363 = vadd.f32 0.0, %v3362
    %3364 = vmatmul.f32.gmra.mxu0 %v3343
    %v3365 = vpop.f32.mrf.mxu0
    %v3366 = vadd.f32 0.0, %v3365
    %3367 = vdwg.mxu0
    %v3368 = vadd.f32 %v3241, %v3363
    %v3369 = vadd.f32 %v3242, %v3366
    %v3371 = vperm.slane %v2803, 0
    %v3373 = vadd.f32 %v3368, %v3371
    %v3374 = vadd.f32 %v3369, %v3371
    %v3375 = vadd.f32 %v2787, %v3373
    %v3376 = vadd.f32 %v2788, %v3374
    %v3377 = vld [vmem:[%s77] sm:$0x1]
    %v3378 = vld [vmem:[%s79] sm:$0x1]
    %v3379 = vsel %vm459, %v3375, 0.0
    %3380 = vadd.xlane.f32.xlu0 %v3379
    %v3381 = vpop.xlane.xlu0 %3380
    %v3382 = vsel %vm459, %v3376, 0.0
    %3383 = vadd.xlane.f32.xlu0 %v3382
    %v3384 = vpop.xlane.xlu0 %3383
    %v3385 = vmul.f32 %v3381, %v472
    %v3386 = vmul.f32 %v3384, %v472
    %v3387 = vsub.f32 %v3375, %v3385
    %v3388 = vsub.f32 %v3376, %v3386
    %v3389 = vmul.f32 %v3387, %v3387
    %v3390 = vmul.f32 %v3388, %v3388
    %v3391 = vsel %vm459, %v3389, 0.0
    %3392 = vadd.xlane.f32.xlu0 %v3391
    %v3393 = vpop.xlane.xlu0 %3392
    %v3394 = vsel %vm459, %v3390, 0.0
    %3395 = vadd.xlane.f32.xlu0 %v3394
    %v3396 = vpop.xlane.xlu0 %3395
    %v3397 = vmul.f32 %v3393, %v472
    %v3398 = vmul.f32 %v3396, %v472
    %v3399 = vadd.f32 %v3397, 1e-05
    %v3400 = vadd.f32 %v3398, 1e-05
    %v3401 = vrsqrt.pop %v3399
    %v3402 = vmul.f32 %v3401, %v3399
    %v3403 = vmul.f32 %v3402, %v3401
    %v3404 = vmul.f32 0.5, %v3403
    %v3405 = vsub.f32 1.5, %v3404
    %v3406 = vmul.f32 %v3401, %v3405
    %vm3407 = vweird.f32 %v3399
    %vm3408 = vweird.f32 %v3401
    %vm3409 = vmor %vm3407, %vm3408
    %v3410 = vsel %vm3409, %v3401, %v3406
    %v3411 = vrsqrt.pop %v3400
    %v3412 = vmul.f32 %v3411, %v3400
    %v3413 = vmul.f32 %v3412, %v3411
    %v3414 = vmul.f32 0.5, %v3413
    %v3415 = vsub.f32 1.5, %v3414
    %v3416 = vmul.f32 %v3411, %v3415
    %vm3417 = vweird.f32 %v3400
    %vm3418 = vweird.f32 %v3411
    %vm3419 = vmor %vm3417, %vm3418
    %v3420 = vsel %vm3419, %v3411, %v3416
    %v3421 = vmul.f32 %v3387, %v3410
    %v3422 = vmul.f32 %v3388, %v3420
    %v3424 = vperm.slane %v3377, 0
    %v3426 = vmul.f32 %v3421, %v3424
    %v3427 = vmul.f32 %v3422, %v3424
    %v3429 = vperm.slane %v3378, 0
    %v3431 = vadd.f32 %v3426, %v3429
    %v3432 = vadd.f32 %v3427, %v3429
    %v3433 = vld [vmem:[%s81] sm:$0xff]
    %v3434 = vld [vmem:[%s81 + $0x8] sm:$0xff]
    %v3435 = vld [vmem:[%s81 + $0x10] sm:$0xff]
    %v3436 = vld [vmem:[%s81 + $0x18] sm:$0xff]
    %v3437 = vld [vmem:[%s83] sm:$0x1]
    %v3438 = vld [vmem:[#allocation20] sm:$0xff]
    %v3439 = vld [vmem:[#allocation20 + $0x8] sm:$0xff]
    %v3440 = vld [vmem:[#allocation20 + $0x10] sm:$0xff]
    %v3441 = vld [vmem:[#allocation20 + $0x18] sm:$0xff]
    %v3442 = vld [vmem:[#allocation20 + $0x20] sm:$0xff]
    %v3443 = vld [vmem:[#allocation20 + $0x28] sm:$0xff]
    %v3444 = vld [vmem:[#allocation20 + $0x30] sm:$0xff]
    %v3445 = vld [vmem:[#allocation20 + $0x38] sm:$0xff]
    %v3446 = vld [vmem:[%s87] sm:$0x1]
    %v3448 = vperm.slane %v3437, 0
    %v3451 = vsel %vm459, %v3431, 0
    %v3454 = vsel %vm459, %v3432, 0
    %3456 = vmatpush.msra.mxu0 0.0
    %3457 = vmatpush.msra.mxu0 0.0
    %3458 = vmatpush.msra.mxu0 0.0
    %3459 = vmatpush.msra.mxu0 0.0
    %3460 = vmatpush.msra.mxu0 0.0
    %3461 = vmatpush.msra.mxu0 0.0
    %3462 = vmatpush.msra.mxu0 0.0
    %3463 = vmatpush.msra.mxu0 0.0
    %3464 = vmatpush.msra.mxu0 0.0
    %3465 = vmatpush.msra.mxu0 0.0
    %3466 = vmatpush.msra.mxu0 0.0
    %3467 = vmatpush.msra.mxu0 0.0
    %3468 = vmatpush.msra.mxu0 %v3436
    %3469 = vmatpush.msra.mxu0 %v3435
    %3470 = vmatpush.msra.mxu0 %v3434
    %3471 = vmatpush.msra.mxu0 %v3433
    %3472 = vmatmul.f32.gmra.mxu0 %v3451
    %v3473 = vpop.f32.mrf.mxu0
    %v3474 = vadd.f32 %v3448, %v3473
    %3475 = vmatmul.f32.gmra.mxu0 %v3454
    %v3476 = vpop.f32.mrf.mxu0
    %v3477 = vadd.f32 %v3448, %v3476
    %3478 = vdwg.mxu0
    %v3479 = vmul.f32 %v3474, %v3474
    %v3480 = vmul.f32 %v3477, %v3477
    %v3481 = vmul.f32 %v3474, %v3479
    %v3482 = vmul.f32 %v3477, %v3480
    %v3483 = vmul.f32 %v3481, 0.044715
    %v3484 = vmul.f32 %v3482, 0.044715
    %v3485 = vadd.f32 %v3474, %v3483
    %v3486 = vadd.f32 %v3477, %v3484
    %v3487 = vmul.f32 %v3485, 0.7978846
    %v3488 = vmul.f32 %v3486, 0.7978846
    %v3489 = vtanh.pop %v3487
    %v3490 = vtanh.pop %v3488
    %v3491 = vadd.f32 %v3489, 1.0
    %v3492 = vadd.f32 %v3490, 1.0
    %v3493 = vmul.f32 %v3491, 0.5
    %v3494 = vmul.f32 %v3492, 0.5
    %v3495 = vmul.f32 %v3474, %v3493
    %v3496 = vmul.f32 %v3477, %v3494
    %v3498 = vperm.slane %v3446, 0
    %v3501 = vsel %vm427, %v3495, 0
    %v3504 = vsel %vm427, %v3496, 0
    %3506 = vmatpush.msra.mxu0 0.0
    %3507 = vmatpush.msra.mxu0 0.0
    %3508 = vmatpush.msra.mxu0 0.0
    %3509 = vmatpush.msra.mxu0 0.0
    %3510 = vmatpush.msra.mxu0 0.0
    %3511 = vmatpush.msra.mxu0 0.0
    %3512 = vmatpush.msra.mxu0 0.0
    %3513 = vmatpush.msra.mxu0 0.0
    %3514 = vmatpush.msra.mxu0 %v3445
    %3515 = vmatpush.msra.mxu0 %v3444
    %3516 = vmatpush.msra.mxu0 %v3443
    %3517 = vmatpush.msra.mxu0 %v3442
    %3518 = vmatpush.msra.mxu0 %v3441
    %3519 = vmatpush.msra.mxu0 %v3440
    %3520 = vmatpush.msra.mxu0 %v3439
    %3521 = vmatpush.msra.mxu0 %v3438
    %3522 = vmatmul.f32.gmra.mxu0 %v3501
    %v3523 = vpop.f32.mrf.mxu0
    %v3524 = vadd.f32 %v3498, %v3523
    %3525 = vmatmul.f32.gmra.mxu0 %v3504
    %v3526 = vpop.f32.mrf.mxu0
    %v3527 = vadd.f32 %v3498, %v3526
    %3528 = vdwg.mxu0
    %v3529 = vadd.f32 %v3431, %v3524
    %v3530 = vadd.f32 %v3432, %v3527
    %v3531 = vld [vmem:[%s89] sm:$0x1]
    %v3532 = vld [vmem:[%s91] sm:$0x1]
    %v3533 = vsel %vm459, %v3529, 0.0
    %3534 = vadd.xlane.f32.xlu0 %v3533
    %v3535 = vpop.xlane.xlu0 %3534
    %v3536 = vsel %vm459, %v3530, 0.0
    %3537 = vadd.xlane.f32.xlu0 %v3536
    %v3538 = vpop.xlane.xlu0 %3537
    %v3539 = vmul.f32 %v3535, %v472
    %v3540 = vmul.f32 %v3538, %v472
    %v3541 = vsub.f32 %v3529, %v3539
    %v3542 = vsub.f32 %v3530, %v3540
    %v3543 = vmul.f32 %v3541, %v3541
    %v3544 = vmul.f32 %v3542, %v3542
    %v3545 = vsel %vm459, %v3543, 0.0
    %3546 = vadd.xlane.f32.xlu0 %v3545
    %v3547 = vpop.xlane.xlu0 %3546
    %v3548 = vsel %vm459, %v3544, 0.0
    %3549 = vadd.xlane.f32.xlu0 %v3548
    %v3550 = vpop.xlane.xlu0 %3549
    %v3551 = vmul.f32 %v3547, %v472
    %v3552 = vmul.f32 %v3550, %v472
    %v3553 = vadd.f32 %v3551, 1e-05
    %v3554 = vadd.f32 %v3552, 1e-05
    %v3555 = vrsqrt.pop %v3553
    %v3556 = vmul.f32 %v3555, %v3553
    %v3557 = vmul.f32 %v3556, %v3555
    %v3558 = vmul.f32 0.5, %v3557
    %v3559 = vsub.f32 1.5, %v3558
    %v3560 = vmul.f32 %v3555, %v3559
    %vm3561 = vweird.f32 %v3553
    %vm3562 = vweird.f32 %v3555
    %vm3563 = vmor %vm3561, %vm3562
    %v3564 = vsel %vm3563, %v3555, %v3560
    %v3565 = vrsqrt.pop %v3554
    %v3566 = vmul.f32 %v3565, %v3554
    %v3567 = vmul.f32 %v3566, %v3565
    %v3568 = vmul.f32 0.5, %v3567
    %v3569 = vsub.f32 1.5, %v3568
    %v3570 = vmul.f32 %v3565, %v3569
    %vm3571 = vweird.f32 %v3554
    %vm3572 = vweird.f32 %v3565
    %vm3573 = vmor %vm3571, %vm3572
    %v3574 = vsel %vm3573, %v3565, %v3570
    %v3575 = vmul.f32 %v3541, %v3564
    %v3576 = vmul.f32 %v3542, %v3574
    %v3578 = vperm.slane %v3531, 0
    %v3580 = vmul.f32 %v3575, %v3578
    %v3581 = vmul.f32 %v3576, %v3578
    %v3583 = vperm.slane %v3532, 0
    %v3585 = vadd.f32 %v3580, %v3583
    %v3586 = vadd.f32 %v3581, %v3583
    %s3587 = scalar_lea.vmem [#allocation13], 32
    %v3588 = vld [vmem:[%s3587] sm:$0xff]
    %v3589 = vld [vmem:[%s3587 + $0x8] sm:$0xff]
    %v3590 = vld [vmem:[%s3587 + $0x10] sm:$0xff]
    %v3591 = vld [vmem:[%s3587 + $0x18] sm:$0xff]
    %s3592 = scalar_lea.vmem %s55, 1
    %v3593 = vld [vmem:[%s3592] sm:$0x1]
    %s3594 = scalar_lea.vmem [#allocation14], 32
    %v3595 = vld [vmem:[%s3594] sm:$0xff]
    %v3596 = vld [vmem:[%s3594 + $0x8] sm:$0xff]
    %v3597 = vld [vmem:[%s3594 + $0x10] sm:$0xff]
    %v3598 = vld [vmem:[%s3594 + $0x18] sm:$0xff]
    %s3599 = scalar_lea.vmem %s59, 1
    %v3600 = vld [vmem:[%s3599] sm:$0x1]
    %v3602 = vperm.slane %v3593, 0
    %v3605 = vsel %vm459, %v3585, 0
    %v3608 = vsel %vm459, %v3586, 0
    %3610 = vmatpush.msra.mxu0 0.0
    %3611 = vmatpush.msra.mxu0 0.0
    %3612 = vmatpush.msra.mxu0 0.0
    %3613 = vmatpush.msra.mxu0 0.0
    %3614 = vmatpush.msra.mxu0 0.0
    %3615 = vmatpush.msra.mxu0 0.0
    %3616 = vmatpush.msra.mxu0 0.0
    %3617 = vmatpush.msra.mxu0 0.0
    %3618 = vmatpush.msra.mxu0 0.0
    %3619 = vmatpush.msra.mxu0 0.0
    %3620 = vmatpush.msra.mxu0 0.0
    %3621 = vmatpush.msra.mxu0 0.0
    %3622 = vmatpush.msra.mxu0 %v3591
    %3623 = vmatpush.msra.mxu0 %v3590
    %3624 = vmatpush.msra.mxu0 %v3589
    %3625 = vmatpush.msra.mxu0 %v3588
    %3626 = vmatmul.f32.gmra.mxu0 %v3605
    %v3627 = vpop.f32.mrf.mxu0
    %v3628 = vadd.f32 %v3602, %v3627
    %3629 = vmatmul.f32.gmra.mxu0 %v3608
    %v3630 = vpop.f32.mrf.mxu0
    %v3631 = vadd.f32 %v3602, %v3630
    %3632 = vdwg.mxu0
    %v3633 = vmul.f32 %v3628, 0.35355338
    %v3634 = vmul.f32 %v3631, 0.35355338
    %3637 = vrot.lane.b32.xlu0 %v3628, 96
    %v3638 = vpop.permute.xlu0 %3637
    %3639 = vrot.lane.b32.xlu0 %v3631, 96
    %v3640 = vpop.permute.xlu0 %3639
    %v3642 = vsel %vm571, %v3633, 0
    %v3645 = vsel %vm571, %v3634, 0
    %v3647 = vsel %vm571, %v3638, 0
    %v3649 = vsel %vm571, %v3640, 0
    %3651 = vmatpush.xpose.msra.mxu0 0.0
    %3652 = vmatpush.xpose.msra.mxu0 0.0
    %3653 = vmatpush.xpose.msra.mxu0 0.0
    %3654 = vmatpush.xpose.msra.mxu0 0.0
    %3655 = vmatpush.xpose.msra.mxu0 0.0
    %3656 = vmatpush.xpose.msra.mxu0 0.0
    %3657 = vmatpush.xpose.msra.mxu0 0.0
    %3658 = vmatpush.xpose.msra.mxu0 0.0
    %3659 = vmatpush.xpose.msra.mxu0 0.0
    %3660 = vmatpush.xpose.msra.mxu0 0.0
    %3661 = vmatpush.xpose.msra.mxu0 0.0
    %3662 = vmatpush.xpose.msra.mxu0 0.0
    %3663 = vmatpush.xpose.msra.mxu0 0.0
    %3664 = vmatpush.xpose.msra.mxu0 0.0
    %3665 = vmatpush.xpose.msra.mxu0 %v3649
    %3666 = vmatpush.xpose.msra.mxu0 %v3647
    %3667 = vmatmul.f32.gmra.mxu0 %v3642
    %v3668 = vpop.f32.mrf.mxu0
    %v3669 = vadd.f32 %v2076, %v3668
    %3670 = vmatmul.f32.gmra.mxu0 %v3645
    %v3671 = vpop.f32.mrf.mxu0
    %v3672 = vadd.f32 %v2077, %v3671
    %3673 = vdwg.mxu0
    %v3674 = vsel %vm605, %v3669, -inf
    %3675 = vmax.xlane.f32.xlu0 %v3674
    %v3676 = vpop.xlane.xlu0 %3675
    %v3677 = vsel %vm605, %v3672, -inf
    %3678 = vmax.xlane.f32.xlu0 %v3677
    %v3679 = vpop.xlane.xlu0 %3678
    %v3680 = vsub.f32 %v3669, %v3676
    %v3681 = vsub.f32 %v3672, %v3679
    %v3682 = vmul.f32 %v3680, 1.442695
    %v3683 = vpow.pop %v3682
    %v3684 = vmul.f32 %v3681, 1.442695
    %v3685 = vpow.pop %v3684
    %v3686 = vsel %vm605, %v3683, 0.0
    %3687 = vadd.xlane.f32.xlu0 %v3686
    %v3688 = vpop.xlane.xlu0 %3687
    %v3689 = vsel %vm605, %v3685, 0.0
    %3690 = vadd.xlane.f32.xlu0 %v3689
    %v3691 = vpop.xlane.xlu0 %3690
    %v3692 = vrcp.pop %v3688
    %v3693 = vrcp.pop %v3691
    %v3694 = vmul.f32 %v3683, %v3692
    %v3695 = vmul.f32 %v3685, %v3693
    %3696 = vrot.lane.b32.xlu0 %v3628, 64
    %v3697 = vpop.permute.xlu0 %3696
    %3698 = vrot.lane.b32.xlu0 %v3631, 64
    %v3699 = vpop.permute.xlu0 %3698
    %v3703 = vsel %vm605, %v3694, 0
    %v3706 = vsel %vm605, %v3695, 0
    %3708 = vmatpush.msra.mxu0 0.0
    %3709 = vmatpush.msra.mxu0 0.0
    %3710 = vmatpush.msra.mxu0 0.0
    %3711 = vmatpush.msra.mxu0 0.0
    %3712 = vmatpush.msra.mxu0 0.0
    %3713 = vmatpush.msra.mxu0 0.0
    %3714 = vmatpush.msra.mxu0 0.0
    %3715 = vmatpush.msra.mxu0 0.0
    %3716 = vmatpush.msra.mxu0 0.0
    %3717 = vmatpush.msra.mxu0 0.0
    %3718 = vmatpush.msra.mxu0 0.0
    %3719 = vmatpush.msra.mxu0 0.0
    %3720 = vmatpush.msra.mxu0 0.0
    %3721 = vmatpush.msra.mxu0 0.0
    %3722 = vmatpush.msra.mxu0 %v3699
    %3723 = vmatpush.msra.mxu0 %v3697
    %3724 = vmatmul.f32.gmra.mxu0 %v3703
    %v3725 = vpop.f32.mrf.mxu0
    %v3726 = vadd.f32 0.0, %v3725
    %3727 = vmatmul.f32.gmra.mxu0 %v3706
    %v3728 = vpop.f32.mrf.mxu0
    %v3729 = vadd.f32 0.0, %v3728
    %3730 = vdwg.mxu0
    %3731 = vrot.lane.b32.xlu0 %v3633, 120
    %v3732 = vpop.permute.xlu0 %3731
    %3733 = vrot.lane.b32.xlu0 %v3634, 120
    %v3734 = vpop.permute.xlu0 %3733
    %3735 = vrot.lane.b32.xlu0 %v3628, 88
    %v3736 = vpop.permute.xlu0 %3735
    %3737 = vrot.lane.b32.xlu0 %v3631, 88
    %v3738 = vpop.permute.xlu0 %3737
    %v3739 = vsel %vm571, %v3732, 0
    %v3741 = vsel %vm571, %v3734, 0
    %v3743 = vsel %vm571, %v3736, 0
    %v3745 = vsel %vm571, %v3738, 0
    %3747 = vmatpush.xpose.msra.mxu0 0.0
    %3748 = vmatpush.xpose.msra.mxu0 0.0
    %3749 = vmatpush.xpose.msra.mxu0 0.0
    %3750 = vmatpush.xpose.msra.mxu0 0.0
    %3751 = vmatpush.xpose.msra.mxu0 0.0
    %3752 = vmatpush.xpose.msra.mxu0 0.0
    %3753 = vmatpush.xpose.msra.mxu0 0.0
    %3754 = vmatpush.xpose.msra.mxu0 0.0
    %3755 = vmatpush.xpose.msra.mxu0 0.0
    %3756 = vmatpush.xpose.msra.mxu0 0.0
    %3757 = vmatpush.xpose.msra.mxu0 0.0
    %3758 = vmatpush.xpose.msra.mxu0 0.0
    %3759 = vmatpush.xpose.msra.mxu0 0.0
    %3760 = vmatpush.xpose.msra.mxu0 0.0
    %3761 = vmatpush.xpose.msra.mxu0 %v3745
    %3762 = vmatpush.xpose.msra.mxu0 %v3743
    %3763 = vmatmul.f32.gmra.mxu0 %v3739
    %v3764 = vpop.f32.mrf.mxu0
    %v3765 = vadd.f32 %v2076, %v3764
    %3766 = vmatmul.f32.gmra.mxu0 %v3741
    %v3767 = vpop.f32.mrf.mxu0
    %v3768 = vadd.f32 %v2077, %v3767
    %3769 = vdwg.mxu0
    %v3770 = vsel %vm605, %v3765, -inf
    %3771 = vmax.xlane.f32.xlu0 %v3770
    %v3772 = vpop.xlane.xlu0 %3771
    %v3773 = vsel %vm605, %v3768, -inf
    %3774 = vmax.xlane.f32.xlu0 %v3773
    %v3775 = vpop.xlane.xlu0 %3774
    %v3776 = vsub.f32 %v3765, %v3772
    %v3777 = vsub.f32 %v3768, %v3775
    %v3778 = vmul.f32 %v3776, 1.442695
    %v3779 = vpow.pop %v3778
    %v3780 = vmul.f32 %v3777, 1.442695
    %v3781 = vpow.pop %v3780
    %v3782 = vsel %vm605, %v3779, 0.0
    %3783 = vadd.xlane.f32.xlu0 %v3782
    %v3784 = vpop.xlane.xlu0 %3783
    %v3785 = vsel %vm605, %v3781, 0.0
    %3786 = vadd.xlane.f32.xlu0 %v3785
    %v3787 = vpop.xlane.xlu0 %3786
    %v3788 = vrcp.pop %v3784
    %v3789 = vrcp.pop %v3787
    %v3790 = vmul.f32 %v3779, %v3788
    %v3791 = vmul.f32 %v3781, %v3789
    %3792 = vrot.lane.b32.xlu0 %v3628, 56
    %v3793 = vpop.permute.xlu0 %3792
    %3794 = vrot.lane.b32.xlu0 %v3631, 56
    %v3795 = vpop.permute.xlu0 %3794
    %v3799 = vsel %vm605, %v3790, 0
    %v3802 = vsel %vm605, %v3791, 0
    %3804 = vmatpush.msra.mxu0 0.0
    %3805 = vmatpush.msra.mxu0 0.0
    %3806 = vmatpush.msra.mxu0 0.0
    %3807 = vmatpush.msra.mxu0 0.0
    %3808 = vmatpush.msra.mxu0 0.0
    %3809 = vmatpush.msra.mxu0 0.0
    %3810 = vmatpush.msra.mxu0 0.0
    %3811 = vmatpush.msra.mxu0 0.0
    %3812 = vmatpush.msra.mxu0 0.0
    %3813 = vmatpush.msra.mxu0 0.0
    %3814 = vmatpush.msra.mxu0 0.0
    %3815 = vmatpush.msra.mxu0 0.0
    %3816 = vmatpush.msra.mxu0 0.0
    %3817 = vmatpush.msra.mxu0 0.0
    %3818 = vmatpush.msra.mxu0 %v3795
    %3819 = vmatpush.msra.mxu0 %v3793
    %3820 = vmatmul.f32.gmra.mxu0 %v3799
    %v3821 = vpop.f32.mrf.mxu0
    %v3822 = vadd.f32 0.0, %v3821
    %3823 = vmatmul.f32.gmra.mxu0 %v3802
    %v3824 = vpop.f32.mrf.mxu0
    %v3825 = vadd.f32 0.0, %v3824
    %3826 = vdwg.mxu0
    %v3828 = vsel %vm571, %v3822, 0
    %v3831 = vsel %vm571, %v3825, 0
    %3833 = vmatpush.msra.mxu0 0.0
    %3834 = vmatpush.msra.mxu0 0.0
    %3835 = vmatpush.msra.mxu0 0.0
    %3836 = vmatpush.msra.mxu0 0.0
    %3837 = vmatpush.msra.mxu0 0.0
    %3838 = vmatpush.msra.mxu0 0.0
    %3839 = vmatpush.msra.mxu0 0.0
    %3840 = vmatpush.msra.mxu0 0.0
    %3841 = vmatpush.msra.mxu0 0.0
    %3842 = vmatpush.msra.mxu0 0.0
    %3843 = vmatpush.msra.mxu0 0.0
    %3844 = vmatpush.msra.mxu0 0.0
    %3845 = vmatpush.msra.mxu0 0.0
    %3846 = vmatpush.msra.mxu0 0.0
    %3847 = vmatpush.msra.mxu0 0.0
    %3848 = vmatpush.msra.mxu0 %v3596
    %3849 = vmatmul.f32.gmra.mxu0 %v3828
    %v3850 = vpop.f32.mrf.mxu0
    %v3851 = vadd.f32 0.0, %v3850
    %3852 = vmatmul.f32.gmra.mxu0 %v3831
    %v3853 = vpop.f32.mrf.mxu0
    %v3854 = vadd.f32 0.0, %v3853
    %3855 = vdwg.mxu0
    %v3857 = vsel %vm571, %v3726, 0
    %v3860 = vsel %vm571, %v3729, 0
    %3862 = vmatpush.msra.mxu0 0.0
    %3863 = vmatpush.msra.mxu0 0.0
    %3864 = vmatpush.msra.mxu0 0.0
    %3865 = vmatpush.msra.mxu0 0.0
    %3866 = vmatpush.msra.mxu0 0.0
    %3867 = vmatpush.msra.mxu0 0.0
    %3868 = vmatpush.msra.mxu0 0.0
    %3869 = vmatpush.msra.mxu0 0.0
    %3870 = vmatpush.msra.mxu0 0.0
    %3871 = vmatpush.msra.mxu0 0.0
    %3872 = vmatpush.msra.mxu0 0.0
    %3873 = vmatpush.msra.mxu0 0.0
    %3874 = vmatpush.msra.mxu0 0.0
    %3875 = vmatpush.msra.mxu0 0.0
    %3876 = vmatpush.msra.mxu0 0.0
    %3877 = vmatpush.msra.mxu0 %v3595
    %3878 = vmatmul.f32.gmra.mxu0 %v3857
    %v3879 = vpop.f32.mrf.mxu0
    %v3880 = vadd.f32 %v3851, %v3879
    %3881 = vmatmul.f32.gmra.mxu0 %v3860
    %v3882 = vpop.f32.mrf.mxu0
    %v3883 = vadd.f32 %v3854, %v3882
    %3884 = vdwg.mxu0
    %3885 = vrot.lane.b32.xlu0 %v3633, 112
    %v3886 = vpop.permute.xlu0 %3885
    %3887 = vrot.lane.b32.xlu0 %v3634, 112
    %v3888 = vpop.permute.xlu0 %3887
    %3889 = vrot.lane.b32.xlu0 %v3628, 80
    %v3890 = vpop.permute.xlu0 %3889
    %3891 = vrot.lane.b32.xlu0 %v3631, 80
    %v3892 = vpop.permute.xlu0 %3891
    %v3893 = vsel %vm571, %v3886, 0
    %v3895 = vsel %vm571, %v3888, 0
    %v3897 = vsel %vm571, %v3890, 0
    %v3899 = vsel %vm571, %v3892, 0
    %3901 = vmatpush.xpose.msra.mxu0 0.0
    %3902 = vmatpush.xpose.msra.mxu0 0.0
    %3903 = vmatpush.xpose.msra.mxu0 0.0
    %3904 = vmatpush.xpose.msra.mxu0 0.0
    %3905 = vmatpush.xpose.msra.mxu0 0.0
    %3906 = vmatpush.xpose.msra.mxu0 0.0
    %3907 = vmatpush.xpose.msra.mxu0 0.0
    %3908 = vmatpush.xpose.msra.mxu0 0.0
    %3909 = vmatpush.xpose.msra.mxu0 0.0
    %3910 = vmatpush.xpose.msra.mxu0 0.0
    %3911 = vmatpush.xpose.msra.mxu0 0.0
    %3912 = vmatpush.xpose.msra.mxu0 0.0
    %3913 = vmatpush.xpose.msra.mxu0 0.0
    %3914 = vmatpush.xpose.msra.mxu0 0.0
    %3915 = vmatpush.xpose.msra.mxu0 %v3899
    %3916 = vmatpush.xpose.msra.mxu0 %v3897
    %3917 = vmatmul.f32.gmra.mxu0 %v3893
    %v3918 = vpop.f32.mrf.mxu0
    %v3919 = vadd.f32 %v2076, %v3918
    %3920 = vmatmul.f32.gmra.mxu0 %v3895
    %v3921 = vpop.f32.mrf.mxu0
    %v3922 = vadd.f32 %v2077, %v3921
    %3923 = vdwg.mxu0
    %v3924 = vsel %vm605, %v3919, -inf
    %3925 = vmax.xlane.f32.xlu0 %v3924
    %v3926 = vpop.xlane.xlu0 %3925
    %v3927 = vsel %vm605, %v3922, -inf
    %3928 = vmax.xlane.f32.xlu0 %v3927
    %v3929 = vpop.xlane.xlu0 %3928
    %v3930 = vsub.f32 %v3919, %v3926
    %v3931 = vsub.f32 %v3922, %v3929
    %v3932 = vmul.f32 %v3930, 1.442695
    %v3933 = vpow.pop %v3932
    %v3934 = vmul.f32 %v3931, 1.442695
    %v3935 = vpow.pop %v3934
    %v3936 = vsel %vm605, %v3933, 0.0
    %3937 = vadd.xlane.f32.xlu0 %v3936
    %v3938 = vpop.xlane.xlu0 %3937
    %v3939 = vsel %vm605, %v3935, 0.0
    %3940 = vadd.xlane.f32.xlu0 %v3939
    %v3941 = vpop.xlane.xlu0 %3940
    %v3942 = vrcp.pop %v3938
    %v3943 = vrcp.pop %v3941
    %v3944 = vmul.f32 %v3933, %v3942
    %v3945 = vmul.f32 %v3935, %v3943
    %3946 = vrot.lane.b32.xlu0 %v3628, 48
    %v3947 = vpop.permute.xlu0 %3946
    %3948 = vrot.lane.b32.xlu0 %v3631, 48
    %v3949 = vpop.permute.xlu0 %3948
    %v3953 = vsel %vm605, %v3944, 0
    %v3956 = vsel %vm605, %v3945, 0
    %3958 = vmatpush.msra.mxu0 0.0
    %3959 = vmatpush.msra.mxu0 0.0
    %3960 = vmatpush.msra.mxu0 0.0
    %3961 = vmatpush.msra.mxu0 0.0
    %3962 = vmatpush.msra.mxu0 0.0
    %3963 = vmatpush.msra.mxu0 0.0
    %3964 = vmatpush.msra.mxu0 0.0
    %3965 = vmatpush.msra.mxu0 0.0
    %3966 = vmatpush.msra.mxu0 0.0
    %3967 = vmatpush.msra.mxu0 0.0
    %3968 = vmatpush.msra.mxu0 0.0
    %3969 = vmatpush.msra.mxu0 0.0
    %3970 = vmatpush.msra.mxu0 0.0
    %3971 = vmatpush.msra.mxu0 0.0
    %3972 = vmatpush.msra.mxu0 %v3949
    %3973 = vmatpush.msra.mxu0 %v3947
    %3974 = vmatmul.f32.gmra.mxu0 %v3953
    %v3975 = vpop.f32.mrf.mxu0
    %v3976 = vadd.f32 0.0, %v3975
    %3977 = vmatmul.f32.gmra.mxu0 %v3956
    %v3978 = vpop.f32.mrf.mxu0
    %v3979 = vadd.f32 0.0, %v3978
    %3980 = vdwg.mxu0
    %v3982 = vsel %vm571, %v3976, 0
    %v3985 = vsel %vm571, %v3979, 0
    %3987 = vmatpush.msra.mxu0 0.0
    %3988 = vmatpush.msra.mxu0 0.0
    %3989 = vmatpush.msra.mxu0 0.0
    %3990 = vmatpush.msra.mxu0 0.0
    %3991 = vmatpush.msra.mxu0 0.0
    %3992 = vmatpush.msra.mxu0 0.0
    %3993 = vmatpush.msra.mxu0 0.0
    %3994 = vmatpush.msra.mxu0 0.0
    %3995 = vmatpush.msra.mxu0 0.0
    %3996 = vmatpush.msra.mxu0 0.0
    %3997 = vmatpush.msra.mxu0 0.0
    %3998 = vmatpush.msra.mxu0 0.0
    %3999 = vmatpush.msra.mxu0 0.0
    %4000 = vmatpush.msra.mxu0 0.0
    %4001 = vmatpush.msra.mxu0 0.0
    %4002 = vmatpush.msra.mxu0 %v3597
    %4003 = vmatmul.f32.gmra.mxu0 %v3982
    %v4004 = vpop.f32.mrf.mxu0
    %v4005 = vadd.f32 0.0, %v4004
    %4006 = vmatmul.f32.gmra.mxu0 %v3985
    %v4007 = vpop.f32.mrf.mxu0
    %v4008 = vadd.f32 0.0, %v4007
    %4009 = vdwg.mxu0
    %v4010 = vadd.f32 %v3880, %v4005
    %v4011 = vadd.f32 %v3883, %v4008
    %4012 = vrot.lane.b32.xlu0 %v3633, 104
    %v4013 = vpop.permute.xlu0 %4012
    %4014 = vrot.lane.b32.xlu0 %v3634, 104
    %v4015 = vpop.permute.xlu0 %4014
    %4016 = vrot.lane.b32.xlu0 %v3628, 72
    %v4017 = vpop.permute.xlu0 %4016
    %4018 = vrot.lane.b32.xlu0 %v3631, 72
    %v4019 = vpop.permute.xlu0 %4018
    %v4020 = vsel %vm571, %v4013, 0
    %v4022 = vsel %vm571, %v4015, 0
    %v4024 = vsel %vm571, %v4017, 0
    %v4026 = vsel %vm571, %v4019, 0
    %4028 = vmatpush.xpose.msra.mxu0 0.0
    %4029 = vmatpush.xpose.msra.mxu0 0.0
    %4030 = vmatpush.xpose.msra.mxu0 0.0
    %4031 = vmatpush.xpose.msra.mxu0 0.0
    %4032 = vmatpush.xpose.msra.mxu0 0.0
    %4033 = vmatpush.xpose.msra.mxu0 0.0
    %4034 = vmatpush.xpose.msra.mxu0 0.0
    %4035 = vmatpush.xpose.msra.mxu0 0.0
    %4036 = vmatpush.xpose.msra.mxu0 0.0
    %4037 = vmatpush.xpose.msra.mxu0 0.0
    %4038 = vmatpush.xpose.msra.mxu0 0.0
    %4039 = vmatpush.xpose.msra.mxu0 0.0
    %4040 = vmatpush.xpose.msra.mxu0 0.0
    %4041 = vmatpush.xpose.msra.mxu0 0.0
    %4042 = vmatpush.xpose.msra.mxu0 %v4026
    %4043 = vmatpush.xpose.msra.mxu0 %v4024
    %4044 = vmatmul.f32.gmra.mxu0 %v4020
    %v4045 = vpop.f32.mrf.mxu0
    %v4046 = vadd.f32 %v2076, %v4045
    %4047 = vmatmul.f32.gmra.mxu0 %v4022
    %v4048 = vpop.f32.mrf.mxu0
    %v4049 = vadd.f32 %v2077, %v4048
    %4050 = vdwg.mxu0
    %v4051 = vsel %vm605, %v4046, -inf
    %4052 = vmax.xlane.f32.xlu0 %v4051
    %v4053 = vpop.xlane.xlu0 %4052
    %v4054 = vsel %vm605, %v4049, -inf
    %4055 = vmax.xlane.f32.xlu0 %v4054
    %v4056 = vpop.xlane.xlu0 %4055
    %v4057 = vsub.f32 %v4046, %v4053
    %v4058 = vsub.f32 %v4049, %v4056
    %v4059 = vmul.f32 %v4057, 1.442695
    %v4060 = vpow.pop %v4059
    %v4061 = vmul.f32 %v4058, 1.442695
    %v4062 = vpow.pop %v4061
    %v4063 = vsel %vm605, %v4060, 0.0
    %4064 = vadd.xlane.f32.xlu0 %v4063
    %v4065 = vpop.xlane.xlu0 %4064
    %v4066 = vsel %vm605, %v4062, 0.0
    %4067 = vadd.xlane.f32.xlu0 %v4066
    %v4068 = vpop.xlane.xlu0 %4067
    %v4069 = vrcp.pop %v4065
    %v4070 = vrcp.pop %v4068
    %v4071 = vmul.f32 %v4060, %v4069
    %v4072 = vmul.f32 %v4062, %v4070
    %4073 = vrot.lane.b32.xlu0 %v3628, 40
    %v4074 = vpop.permute.xlu0 %4073
    %4075 = vrot.lane.b32.xlu0 %v3631, 40
    %v4076 = vpop.permute.xlu0 %4075
    %v4080 = vsel %vm605, %v4071, 0
    %v4083 = vsel %vm605, %v4072, 0
    %4085 = vmatpush.msra.mxu0 0.0
    %4086 = vmatpush.msra.mxu0 0.0
    %4087 = vmatpush.msra.mxu0 0.0
    %4088 = vmatpush.msra.mxu0 0.0
    %4089 = vmatpush.msra.mxu0 0.0
    %4090 = vmatpush.msra.mxu0 0.0
    %4091 = vmatpush.msra.mxu0 0.0
    %4092 = vmatpush.msra.mxu0 0.0
    %4093 = vmatpush.msra.mxu0 0.0
    %4094 = vmatpush.msra.mxu0 0.0
    %4095 = vmatpush.msra.mxu0 0.0
    %4096 = vmatpush.msra.mxu0 0.0
    %4097 = vmatpush.msra.mxu0 0.0
    %4098 = vmatpush.msra.mxu0 0.0
    %4099 = vmatpush.msra.mxu0 %v4076
    %4100 = vmatpush.msra.mxu0 %v4074
    %4101 = vmatmul.f32.gmra.mxu0 %v4080
    %v4102 = vpop.f32.mrf.mxu0
    %v4103 = vadd.f32 0.0, %v4102
    %4104 = vmatmul.f32.gmra.mxu0 %v4083
    %v4105 = vpop.f32.mrf.mxu0
    %v4106 = vadd.f32 0.0, %v4105
    %4107 = vdwg.mxu0
    %v4109 = vsel %vm571, %v4103, 0
    %v4112 = vsel %vm571, %v4106, 0
    %4114 = vmatpush.msra.mxu0 0.0
    %4115 = vmatpush.msra.mxu0 0.0
    %4116 = vmatpush.msra.mxu0 0.0
    %4117 = vmatpush.msra.mxu0 0.0
    %4118 = vmatpush.msra.mxu0 0.0
    %4119 = vmatpush.msra.mxu0 0.0
    %4120 = vmatpush.msra.mxu0 0.0
    %4121 = vmatpush.msra.mxu0 0.0
    %4122 = vmatpush.msra.mxu0 0.0
    %4123 = vmatpush.msra.mxu0 0.0
    %4124 = vmatpush.msra.mxu0 0.0
    %4125 = vmatpush.msra.mxu0 0.0
    %4126 = vmatpush.msra.mxu0 0.0
    %4127 = vmatpush.msra.mxu0 0.0
    %4128 = vmatpush.msra.mxu0 0.0
    %4129 = vmatpush.msra.mxu0 %v3598
    %4130 = vmatmul.f32.gmra.mxu0 %v4109
    %v4131 = vpop.f32.mrf.mxu0
    %v4132 = vadd.f32 0.0, %v4131
    %4133 = vmatmul.f32.gmra.mxu0 %v4112
    %v4134 = vpop.f32.mrf.mxu0
    %v4135 = vadd.f32 0.0, %v4134
    %4136 = vdwg.mxu0
    %v4137 = vadd.f32 %v4010, %v4132
    %v4138 = vadd.f32 %v4011, %v4135
    %v4140 = vperm.slane %v3600, 0
    %v4142 = vadd.f32 %v4137, %v4140
    %v4143 = vadd.f32 %v4138, %v4140
    %v4144 = vadd.f32 %v3585, %v4142
    %v4145 = vadd.f32 %v3586, %v4143
    %s4146 = scalar_lea.vmem %s61, 1
    %v4147 = vld [vmem:[%s4146] sm:$0x1]
    %s4148 = scalar_lea.vmem %s63, 1
    %v4149 = vld [vmem:[%s4148] sm:$0x1]
    %v4150 = vsel %vm459, %v4144, 0.0
    %4151 = vadd.xlane.f32.xlu0 %v4150
    %v4152 = vpop.xlane.xlu0 %4151
    %v4153 = vsel %vm459, %v4145, 0.0
    %4154 = vadd.xlane.f32.xlu0 %v4153
    %v4155 = vpop.xlane.xlu0 %4154
    %v4156 = vmul.f32 %v4152, %v472
    %v4157 = vmul.f32 %v4155, %v472
    %v4158 = vsub.f32 %v4144, %v4156
    %v4159 = vsub.f32 %v4145, %v4157
    %v4160 = vmul.f32 %v4158, %v4158
    %v4161 = vmul.f32 %v4159, %v4159
    %v4162 = vsel %vm459, %v4160, 0.0
    %4163 = vadd.xlane.f32.xlu0 %v4162
    %v4164 = vpop.xlane.xlu0 %4163
    %v4165 = vsel %vm459, %v4161, 0.0
    %4166 = vadd.xlane.f32.xlu0 %v4165
    %v4167 = vpop.xlane.xlu0 %4166
    %v4168 = vmul.f32 %v4164, %v472
    %v4169 = vmul.f32 %v4167, %v472
    %v4170 = vadd.f32 %v4168, 1e-05
    %v4171 = vadd.f32 %v4169, 1e-05
    %v4172 = vrsqrt.pop %v4170
    %v4173 = vmul.f32 %v4172, %v4170
    %v4174 = vmul.f32 %v4173, %v4172
    %v4175 = vmul.f32 0.5, %v4174
    %v4176 = vsub.f32 1.5, %v4175
    %v4177 = vmul.f32 %v4172, %v4176
    %vm4178 = vweird.f32 %v4170
    %vm4179 = vweird.f32 %v4172
    %vm4180 = vmor %vm4178, %vm4179
    %v4181 = vsel %vm4180, %v4172, %v4177
    %v4182 = vrsqrt.pop %v4171
    %v4183 = vmul.f32 %v4182, %v4171
    %v4184 = vmul.f32 %v4183, %v4182
    %v4185 = vmul.f32 0.5, %v4184
    %v4186 = vsub.f32 1.5, %v4185
    %v4187 = vmul.f32 %v4182, %v4186
    %vm4188 = vweird.f32 %v4171
    %vm4189 = vweird.f32 %v4182
    %vm4190 = vmor %vm4188, %vm4189
    %v4191 = vsel %vm4190, %v4182, %v4187
    %v4192 = vmul.f32 %v4158, %v4181
    %v4193 = vmul.f32 %v4159, %v4191
    %v4195 = vperm.slane %v4147, 0
    %v4197 = vmul.f32 %v4192, %v4195
    %v4198 = vmul.f32 %v4193, %v4195
    %v4200 = vperm.slane %v4149, 0
    %v4202 = vadd.f32 %v4197, %v4200
    %v4203 = vadd.f32 %v4198, %v4200
    %s4204 = scalar_lea.vmem [#allocation16], 32
    %v4205 = vld [vmem:[%s4204] sm:$0xff]
    %v4206 = vld [vmem:[%s4204 + $0x8] sm:$0xff]
    %v4207 = vld [vmem:[%s4204 + $0x10] sm:$0xff]
    %v4208 = vld [vmem:[%s4204 + $0x18] sm:$0xff]
    %s4209 = scalar_lea.vmem %s67, 1
    %v4210 = vld [vmem:[%s4209] sm:$0x1]
    %s4211 = scalar_lea.vmem [#allocation17], 32
    %v4212 = vld [vmem:[%s4211] sm:$0xff]
    %v4213 = vld [vmem:[%s4211 + $0x8] sm:$0xff]
    %v4214 = vld [vmem:[%s4211 + $0x10] sm:$0xff]
    %v4215 = vld [vmem:[%s4211 + $0x18] sm:$0xff]
    %s4216 = scalar_lea.vmem %s71, 1
    %v4217 = vld [vmem:[%s4216] sm:$0x1]
    %s4218 = scalar_lea.vmem [#allocation19], 32
    %v4219 = vld [vmem:[%s4218] sm:$0xff]
    %v4220 = vld [vmem:[%s4218 + $0x8] sm:$0xff]
    %v4221 = vld [vmem:[%s4218 + $0x10] sm:$0xff]
    %v4222 = vld [vmem:[%s4218 + $0x18] sm:$0xff]
    %s4223 = scalar_lea.vmem %s75, 1
    %v4224 = vld [vmem:[%s4223] sm:$0x1]
    %v4226 = vperm.slane %v4210, 0
    %v4229 = vsel %vm459, %v4202, 0
    %v4232 = vsel %vm459, %v4203, 0
    %4234 = vmatpush.msra.mxu0 0.0
    %4235 = vmatpush.msra.mxu0 0.0
    %4236 = vmatpush.msra.mxu0 0.0
    %4237 = vmatpush.msra.mxu0 0.0
    %4238 = vmatpush.msra.mxu0 0.0
    %4239 = vmatpush.msra.mxu0 0.0
    %4240 = vmatpush.msra.mxu0 0.0
    %4241 = vmatpush.msra.mxu0 0.0
    %4242 = vmatpush.msra.mxu0 0.0
    %4243 = vmatpush.msra.mxu0 0.0
    %4244 = vmatpush.msra.mxu0 0.0
    %4245 = vmatpush.msra.mxu0 0.0
    %4246 = vmatpush.msra.mxu0 %v4208
    %4247 = vmatpush.msra.mxu0 %v4207
    %4248 = vmatpush.msra.mxu0 %v4206
    %4249 = vmatpush.msra.mxu0 %v4205
    %4250 = vmatmul.f32.gmra.mxu0 %v4229
    %v4251 = vpop.f32.mrf.mxu0
    %v4252 = vadd.f32 %v4226, %v4251
    %4253 = vmatmul.f32.gmra.mxu0 %v4232
    %v4254 = vpop.f32.mrf.mxu0
    %v4255 = vadd.f32 %v4226, %v4254
    %4256 = vdwg.mxu0
    %v4258 = vperm.slane %v4217, 0
    %4260 = vmatpush.msra.mxu0 0.0
    %4261 = vmatpush.msra.mxu0 0.0
    %4262 = vmatpush.msra.mxu0 0.0
    %4263 = vmatpush.msra.mxu0 0.0
    %4264 = vmatpush.msra.mxu0 0.0
    %4265 = vmatpush.msra.mxu0 0.0
    %4266 = vmatpush.msra.mxu0 0.0
    %4267 = vmatpush.msra.mxu0 0.0
    %4268 = vmatpush.msra.mxu0 0.0
    %4269 = vmatpush.msra.mxu0 0.0
    %4270 = vmatpush.msra.mxu0 0.0
    %4271 = vmatpush.msra.mxu0 0.0
    %4272 = vmatpush.msra.mxu0 %v4215
    %4273 = vmatpush.msra.mxu0 %v4214
    %4274 = vmatpush.msra.mxu0 %v4213
    %4275 = vmatpush.msra.mxu0 %v4212
    %4276 = vmatmul.f32.gmra.mxu0 %v2840
    %v4277 = vpop.f32.mrf.mxu0
    %v4278 = vadd.f32 %v4258, %v4277
    %4279 = vmatmul.f32.gmra.mxu0 %v2843
    %v4280 = vpop.f32.mrf.mxu0
    %v4281 = vadd.f32 %v4258, %v4280
    %4282 = vdwg.mxu0
    %v4283 = vmul.f32 %v4252, 0.35355338
    %v4284 = vmul.f32 %v4255, 0.35355338
    %v4286 = vsel %vm571, %v4283, 0
    %v4289 = vsel %vm571, %v4284, 0
    %v4292 = vsel %vm571, %v4278, 0
    %v4295 = vsel %vm571, %v4281, 0
    %4297 = vmatpush.xpose.msra.mxu0 0.0
    %4298 = vmatpush.xpose.msra.mxu0 0.0
    %4299 = vmatpush.xpose.msra.mxu0 0.0
    %4300 = vmatpush.xpose.msra.mxu0 0.0
    %4301 = vmatpush.xpose.msra.mxu0 0.0
    %4302 = vmatpush.xpose.msra.mxu0 0.0
    %4303 = vmatpush.xpose.msra.mxu0 0.0
    %4304 = vmatpush.xpose.msra.mxu0 0.0
    %4305 = vmatpush.xpose.msra.mxu0 0.0
    %4306 = vmatpush.xpose.msra.mxu0 0.0
    %4307 = vmatpush.xpose.msra.mxu0 0.0
    %4308 = vmatpush.xpose.msra.mxu0 0.0
    %4309 = vmatpush.xpose.msra.mxu0 0.0
    %4310 = vmatpush.xpose.msra.mxu0 0.0
    %4311 = vmatpush.xpose.msra.mxu0 %v4295
    %4312 = vmatpush.xpose.msra.mxu0 %v4292
    %4313 = vmatmul.f32.gmra.mxu0 %v4286
    %v4314 = vpop.f32.mrf.mxu0
    %v4315 = vadd.f32 %v410, %v4314
    %4316 = vmatmul.f32.gmra.mxu0 %v4289
    %v4317 = vpop.f32.mrf.mxu0
    %v4318 = vadd.f32 %v411, %v4317
    %4319 = vdwg.mxu0
    %v4320 = vsel %vm605, %v4315, -inf
    %4321 = vmax.xlane.f32.xlu0 %v4320
    %v4322 = vpop.xlane.xlu0 %4321
    %v4323 = vsel %vm605, %v4318, -inf
    %4324 = vmax.xlane.f32.xlu0 %v4323
    %v4325 = vpop.xlane.xlu0 %4324
    %v4326 = vsub.f32 %v4315, %v4322
    %v4327 = vsub.f32 %v4318, %v4325
    %v4328 = vmul.f32 %v4326, 1.442695
    %v4329 = vpow.pop %v4328
    %v4330 = vmul.f32 %v4327, 1.442695
    %v4331 = vpow.pop %v4330
    %v4332 = vsel %vm605, %v4329, 0.0
    %4333 = vadd.xlane.f32.xlu0 %v4332
    %v4334 = vpop.xlane.xlu0 %4333
    %v4335 = vsel %vm605, %v4331, 0.0
    %4336 = vadd.xlane.f32.xlu0 %v4335
    %v4337 = vpop.xlane.xlu0 %4336
    %v4338 = vrcp.pop %v4334
    %v4339 = vrcp.pop %v4337
    %v4340 = vmul.f32 %v4329, %v4338
    %v4341 = vmul.f32 %v4331, %v4339
    %4342 = vrot.lane.b32.xlu0 %v4278, 96
    %v4343 = vpop.permute.xlu0 %4342
    %4344 = vrot.lane.b32.xlu0 %v4281, 96
    %v4345 = vpop.permute.xlu0 %4344
    %v4349 = vsel %vm605, %v4340, 0
    %v4352 = vsel %vm605, %v4341, 0
    %4354 = vmatpush.msra.mxu0 0.0
    %4355 = vmatpush.msra.mxu0 0.0
    %4356 = vmatpush.msra.mxu0 0.0
    %4357 = vmatpush.msra.mxu0 0.0
    %4358 = vmatpush.msra.mxu0 0.0
    %4359 = vmatpush.msra.mxu0 0.0
    %4360 = vmatpush.msra.mxu0 0.0
    %4361 = vmatpush.msra.mxu0 0.0
    %4362 = vmatpush.msra.mxu0 0.0
    %4363 = vmatpush.msra.mxu0 0.0
    %4364 = vmatpush.msra.mxu0 0.0
    %4365 = vmatpush.msra.mxu0 0.0
    %4366 = vmatpush.msra.mxu0 0.0
    %4367 = vmatpush.msra.mxu0 0.0
    %4368 = vmatpush.msra.mxu0 %v4345
    %4369 = vmatpush.msra.mxu0 %v4343
    %4370 = vmatmul.f32.gmra.mxu0 %v4349
    %v4371 = vpop.f32.mrf.mxu0
    %v4372 = vadd.f32 0.0, %v4371
    %4373 = vmatmul.f32.gmra.mxu0 %v4352
    %v4374 = vpop.f32.mrf.mxu0
    %v4375 = vadd.f32 0.0, %v4374
    %4376 = vdwg.mxu0
    %4377 = vrot.lane.b32.xlu0 %v4283, 120
    %v4378 = vpop.permute.xlu0 %4377
    %4379 = vrot.lane.b32.xlu0 %v4284, 120
    %v4380 = vpop.permute.xlu0 %4379
    %4381 = vrot.lane.b32.xlu0 %v4278, 120
    %v4382 = vpop.permute.xlu0 %4381
    %4383 = vrot.lane.b32.xlu0 %v4281, 120
    %v4384 = vpop.permute.xlu0 %4383
    %v4385 = vsel %vm571, %v4378, 0
    %v4387 = vsel %vm571, %v4380, 0
    %v4389 = vsel %vm571, %v4382, 0
    %v4391 = vsel %vm571, %v4384, 0
    %4393 = vmatpush.xpose.msra.mxu0 0.0
    %4394 = vmatpush.xpose.msra.mxu0 0.0
    %4395 = vmatpush.xpose.msra.mxu0 0.0
    %4396 = vmatpush.xpose.msra.mxu0 0.0
    %4397 = vmatpush.xpose.msra.mxu0 0.0
    %4398 = vmatpush.xpose.msra.mxu0 0.0
    %4399 = vmatpush.xpose.msra.mxu0 0.0
    %4400 = vmatpush.xpose.msra.mxu0 0.0
    %4401 = vmatpush.xpose.msra.mxu0 0.0
    %4402 = vmatpush.xpose.msra.mxu0 0.0
    %4403 = vmatpush.xpose.msra.mxu0 0.0
    %4404 = vmatpush.xpose.msra.mxu0 0.0
    %4405 = vmatpush.xpose.msra.mxu0 0.0
    %4406 = vmatpush.xpose.msra.mxu0 0.0
    %4407 = vmatpush.xpose.msra.mxu0 %v4391
    %4408 = vmatpush.xpose.msra.mxu0 %v4389
    %4409 = vmatmul.f32.gmra.mxu0 %v4385
    %v4410 = vpop.f32.mrf.mxu0
    %v4411 = vadd.f32 %v410, %v4410
    %4412 = vmatmul.f32.gmra.mxu0 %v4387
    %v4413 = vpop.f32.mrf.mxu0
    %v4414 = vadd.f32 %v411, %v4413
    %4415 = vdwg.mxu0
    %v4416 = vsel %vm605, %v4411, -inf
    %4417 = vmax.xlane.f32.xlu0 %v4416
    %v4418 = vpop.xlane.xlu0 %4417
    %v4419 = vsel %vm605, %v4414, -inf
    %4420 = vmax.xlane.f32.xlu0 %v4419
    %v4421 = vpop.xlane.xlu0 %4420
    %v4422 = vsub.f32 %v4411, %v4418
    %v4423 = vsub.f32 %v4414, %v4421
    %v4424 = vmul.f32 %v4422, 1.442695
    %v4425 = vpow.pop %v4424
    %v4426 = vmul.f32 %v4423, 1.442695
    %v4427 = vpow.pop %v4426
    %v4428 = vsel %vm605, %v4425, 0.0
    %4429 = vadd.xlane.f32.xlu0 %v4428
    %v4430 = vpop.xlane.xlu0 %4429
    %v4431 = vsel %vm605, %v4427, 0.0
    %4432 = vadd.xlane.f32.xlu0 %v4431
    %v4433 = vpop.xlane.xlu0 %4432
    %v4434 = vrcp.pop %v4430
    %v4435 = vrcp.pop %v4433
    %v4436 = vmul.f32 %v4425, %v4434
    %v4437 = vmul.f32 %v4427, %v4435
    %4438 = vrot.lane.b32.xlu0 %v4278, 88
    %v4439 = vpop.permute.xlu0 %4438
    %4440 = vrot.lane.b32.xlu0 %v4281, 88
    %v4441 = vpop.permute.xlu0 %4440
    %v4445 = vsel %vm605, %v4436, 0
    %v4448 = vsel %vm605, %v4437, 0
    %4450 = vmatpush.msra.mxu0 0.0
    %4451 = vmatpush.msra.mxu0 0.0
    %4452 = vmatpush.msra.mxu0 0.0
    %4453 = vmatpush.msra.mxu0 0.0
    %4454 = vmatpush.msra.mxu0 0.0
    %4455 = vmatpush.msra.mxu0 0.0
    %4456 = vmatpush.msra.mxu0 0.0
    %4457 = vmatpush.msra.mxu0 0.0
    %4458 = vmatpush.msra.mxu0 0.0
    %4459 = vmatpush.msra.mxu0 0.0
    %4460 = vmatpush.msra.mxu0 0.0
    %4461 = vmatpush.msra.mxu0 0.0
    %4462 = vmatpush.msra.mxu0 0.0
    %4463 = vmatpush.msra.mxu0 0.0
    %4464 = vmatpush.msra.mxu0 %v4441
    %4465 = vmatpush.msra.mxu0 %v4439
    %4466 = vmatmul.f32.gmra.mxu0 %v4445
    %v4467 = vpop.f32.mrf.mxu0
    %v4468 = vadd.f32 0.0, %v4467
    %4469 = vmatmul.f32.gmra.mxu0 %v4448
    %v4470 = vpop.f32.mrf.mxu0
    %v4471 = vadd.f32 0.0, %v4470
    %4472 = vdwg.mxu0
    %v4474 = vsel %vm571, %v4468, 0
    %v4477 = vsel %vm571, %v4471, 0
    %4479 = vmatpush.msra.mxu0 0.0
    %4480 = vmatpush.msra.mxu0 0.0
    %4481 = vmatpush.msra.mxu0 0.0
    %4482 = vmatpush.msra.mxu0 0.0
    %4483 = vmatpush.msra.mxu0 0.0
    %4484 = vmatpush.msra.mxu0 0.0
    %4485 = vmatpush.msra.mxu0 0.0
    %4486 = vmatpush.msra.mxu0 0.0
    %4487 = vmatpush.msra.mxu0 0.0
    %4488 = vmatpush.msra.mxu0 0.0
    %4489 = vmatpush.msra.mxu0 0.0
    %4490 = vmatpush.msra.mxu0 0.0
    %4491 = vmatpush.msra.mxu0 0.0
    %4492 = vmatpush.msra.mxu0 0.0
    %4493 = vmatpush.msra.mxu0 0.0
    %4494 = vmatpush.msra.mxu0 %v4220
    %4495 = vmatmul.f32.gmra.mxu0 %v4474
    %v4496 = vpop.f32.mrf.mxu0
    %v4497 = vadd.f32 0.0, %v4496
    %4498 = vmatmul.f32.gmra.mxu0 %v4477
    %v4499 = vpop.f32.mrf.mxu0
    %v4500 = vadd.f32 0.0, %v4499
    %4501 = vdwg.mxu0
    %v4503 = vsel %vm571, %v4372, 0
    %v4506 = vsel %vm571, %v4375, 0
    %4508 = vmatpush.msra.mxu0 0.0
    %4509 = vmatpush.msra.mxu0 0.0
    %4510 = vmatpush.msra.mxu0 0.0
    %4511 = vmatpush.msra.mxu0 0.0
    %4512 = vmatpush.msra.mxu0 0.0
    %4513 = vmatpush.msra.mxu0 0.0
    %4514 = vmatpush.msra.mxu0 0.0
    %4515 = vmatpush.msra.mxu0 0.0
    %4516 = vmatpush.msra.mxu0 0.0
    %4517 = vmatpush.msra.mxu0 0.0
    %4518 = vmatpush.msra.mxu0 0.0
    %4519 = vmatpush.msra.mxu0 0.0
    %4520 = vmatpush.msra.mxu0 0.0
    %4521 = vmatpush.msra.mxu0 0.0
    %4522 = vmatpush.msra.mxu0 0.0
    %4523 = vmatpush.msra.mxu0 %v4219
    %4524 = vmatmul.f32.gmra.mxu0 %v4503
    %v4525 = vpop.f32.mrf.mxu0
    %v4526 = vadd.f32 %v4497, %v4525
    %4527 = vmatmul.f32.gmra.mxu0 %v4506
    %v4528 = vpop.f32.mrf.mxu0
    %v4529 = vadd.f32 %v4500, %v4528
    %4530 = vdwg.mxu0
    %4531 = vrot.lane.b32.xlu0 %v4283, 112
    %v4532 = vpop.permute.xlu0 %4531
    %4533 = vrot.lane.b32.xlu0 %v4284, 112
    %v4534 = vpop.permute.xlu0 %4533
    %4535 = vrot.lane.b32.xlu0 %v4278, 112
    %v4536 = vpop.permute.xlu0 %4535
    %4537 = vrot.lane.b32.xlu0 %v4281, 112
    %v4538 = vpop.permute.xlu0 %4537
    %v4539 = vsel %vm571, %v4532, 0
    %v4541 = vsel %vm571, %v4534, 0
    %v4543 = vsel %vm571, %v4536, 0
    %v4545 = vsel %vm571, %v4538, 0
    %4547 = vmatpush.xpose.msra.mxu0 0.0
    %4548 = vmatpush.xpose.msra.mxu0 0.0
    %4549 = vmatpush.xpose.msra.mxu0 0.0
    %4550 = vmatpush.xpose.msra.mxu0 0.0
    %4551 = vmatpush.xpose.msra.mxu0 0.0
    %4552 = vmatpush.xpose.msra.mxu0 0.0
    %4553 = vmatpush.xpose.msra.mxu0 0.0
    %4554 = vmatpush.xpose.msra.mxu0 0.0
    %4555 = vmatpush.xpose.msra.mxu0 0.0
    %4556 = vmatpush.xpose.msra.mxu0 0.0
    %4557 = vmatpush.xpose.msra.mxu0 0.0
    %4558 = vmatpush.xpose.msra.mxu0 0.0
    %4559 = vmatpush.xpose.msra.mxu0 0.0
    %4560 = vmatpush.xpose.msra.mxu0 0.0
    %4561 = vmatpush.xpose.msra.mxu0 %v4545
    %4562 = vmatpush.xpose.msra.mxu0 %v4543
    %4563 = vmatmul.f32.gmra.mxu0 %v4539
    %v4564 = vpop.f32.mrf.mxu0
    %v4565 = vadd.f32 %v410, %v4564
    %4566 = vmatmul.f32.gmra.mxu0 %v4541
    %v4567 = vpop.f32.mrf.mxu0
    %v4568 = vadd.f32 %v411, %v4567
    %4569 = vdwg.mxu0
    %v4570 = vsel %vm605, %v4565, -inf
    %4571 = vmax.xlane.f32.xlu0 %v4570
    %v4572 = vpop.xlane.xlu0 %4571
    %v4573 = vsel %vm605, %v4568, -inf
    %4574 = vmax.xlane.f32.xlu0 %v4573
    %v4575 = vpop.xlane.xlu0 %4574
    %v4576 = vsub.f32 %v4565, %v4572
    %v4577 = vsub.f32 %v4568, %v4575
    %v4578 = vmul.f32 %v4576, 1.442695
    %v4579 = vpow.pop %v4578
    %v4580 = vmul.f32 %v4577, 1.442695
    %v4581 = vpow.pop %v4580
    %v4582 = vsel %vm605, %v4579, 0.0
    %4583 = vadd.xlane.f32.xlu0 %v4582
    %v4584 = vpop.xlane.xlu0 %4583
    %v4585 = vsel %vm605, %v4581, 0.0
    %4586 = vadd.xlane.f32.xlu0 %v4585
    %v4587 = vpop.xlane.xlu0 %4586
    %v4588 = vrcp.pop %v4584
    %v4589 = vrcp.pop %v4587
    %v4590 = vmul.f32 %v4579, %v4588
    %v4591 = vmul.f32 %v4581, %v4589
    %4592 = vrot.lane.b32.xlu0 %v4278, 80
    %v4593 = vpop.permute.xlu0 %4592
    %4594 = vrot.lane.b32.xlu0 %v4281, 80
    %v4595 = vpop.permute.xlu0 %4594
    %v4599 = vsel %vm605, %v4590, 0
    %v4602 = vsel %vm605, %v4591, 0
    %4604 = vmatpush.msra.mxu0 0.0
    %4605 = vmatpush.msra.mxu0 0.0
    %4606 = vmatpush.msra.mxu0 0.0
    %4607 = vmatpush.msra.mxu0 0.0
    %4608 = vmatpush.msra.mxu0 0.0
    %4609 = vmatpush.msra.mxu0 0.0
    %4610 = vmatpush.msra.mxu0 0.0
    %4611 = vmatpush.msra.mxu0 0.0
    %4612 = vmatpush.msra.mxu0 0.0
    %4613 = vmatpush.msra.mxu0 0.0
    %4614 = vmatpush.msra.mxu0 0.0
    %4615 = vmatpush.msra.mxu0 0.0
    %4616 = vmatpush.msra.mxu0 0.0
    %4617 = vmatpush.msra.mxu0 0.0
    %4618 = vmatpush.msra.mxu0 %v4595
    %4619 = vmatpush.msra.mxu0 %v4593
    %4620 = vmatmul.f32.gmra.mxu0 %v4599
    %v4621 = vpop.f32.mrf.mxu0
    %v4622 = vadd.f32 0.0, %v4621
    %4623 = vmatmul.f32.gmra.mxu0 %v4602
    %v4624 = vpop.f32.mrf.mxu0
    %v4625 = vadd.f32 0.0, %v4624
    %4626 = vdwg.mxu0
    %v4628 = vsel %vm571, %v4622, 0
    %v4631 = vsel %vm571, %v4625, 0
    %4633 = vmatpush.msra.mxu0 0.0
    %4634 = vmatpush.msra.mxu0 0.0
    %4635 = vmatpush.msra.mxu0 0.0
    %4636 = vmatpush.msra.mxu0 0.0
    %4637 = vmatpush.msra.mxu0 0.0
    %4638 = vmatpush.msra.mxu0 0.0
    %4639 = vmatpush.msra.mxu0 0.0
    %4640 = vmatpush.msra.mxu0 0.0
    %4641 = vmatpush.msra.mxu0 0.0
    %4642 = vmatpush.msra.mxu0 0.0
    %4643 = vmatpush.msra.mxu0 0.0
    %4644 = vmatpush.msra.mxu0 0.0
    %4645 = vmatpush.msra.mxu0 0.0
    %4646 = vmatpush.msra.mxu0 0.0
    %4647 = vmatpush.msra.mxu0 0.0
    %4648 = vmatpush.msra.mxu0 %v4221
    %4649 = vmatmul.f32.gmra.mxu0 %v4628
    %v4650 = vpop.f32.mrf.mxu0
    %v4651 = vadd.f32 0.0, %v4650
    %4652 = vmatmul.f32.gmra.mxu0 %v4631
    %v4653 = vpop.f32.mrf.mxu0
    %v4654 = vadd.f32 0.0, %v4653
    %4655 = vdwg.mxu0
    %v4656 = vadd.f32 %v4526, %v4651
    %v4657 = vadd.f32 %v4529, %v4654
    %4658 = vrot.lane.b32.xlu0 %v4283, 104
    %v4659 = vpop.permute.xlu0 %4658
    %4660 = vrot.lane.b32.xlu0 %v4284, 104
    %v4661 = vpop.permute.xlu0 %4660
    %4662 = vrot.lane.b32.xlu0 %v4278, 104
    %v4663 = vpop.permute.xlu0 %4662
    %4664 = vrot.lane.b32.xlu0 %v4281, 104
    %v4665 = vpop.permute.xlu0 %4664
    %v4666 = vsel %vm571, %v4659, 0
    %v4668 = vsel %vm571, %v4661, 0
    %v4670 = vsel %vm571, %v4663, 0
    %v4672 = vsel %vm571, %v4665, 0
    %4674 = vmatpush.xpose.msra.mxu0 0.0
    %4675 = vmatpush.xpose.msra.mxu0 0.0
    %4676 = vmatpush.xpose.msra.mxu0 0.0
    %4677 = vmatpush.xpose.msra.mxu0 0.0
    %4678 = vmatpush.xpose.msra.mxu0 0.0
    %4679 = vmatpush.xpose.msra.mxu0 0.0
    %4680 = vmatpush.xpose.msra.mxu0 0.0
    %4681 = vmatpush.xpose.msra.mxu0 0.0
    %4682 = vmatpush.xpose.msra.mxu0 0.0
    %4683 = vmatpush.xpose.msra.mxu0 0.0
    %4684 = vmatpush.xpose.msra.mxu0 0.0
    %4685 = vmatpush.xpose.msra.mxu0 0.0
    %4686 = vmatpush.xpose.msra.mxu0 0.0
    %4687 = vmatpush.xpose.msra.mxu0 0.0
    %4688 = vmatpush.xpose.msra.mxu0 %v4672
    %4689 = vmatpush.xpose.msra.mxu0 %v4670
    %4690 = vmatmul.f32.gmra.mxu0 %v4666
    %v4691 = vpop.f32.mrf.mxu0
    %v4692 = vadd.f32 %v410, %v4691
    %4693 = vmatmul.f32.gmra.mxu0 %v4668
    %v4694 = vpop.f32.mrf.mxu0
    %v4695 = vadd.f32 %v411, %v4694
    %4696 = vdwg.mxu0
    %v4697 = vsel %vm605, %v4692, -inf
    %4698 = vmax.xlane.f32.xlu0 %v4697
    %v4699 = vpop.xlane.xlu0 %4698
    %v4700 = vsel %vm605, %v4695, -inf
    %4701 = vmax.xlane.f32.xlu0 %v4700
    %v4702 = vpop.xlane.xlu0 %4701
    %v4703 = vsub.f32 %v4692, %v4699
    %v4704 = vsub.f32 %v4695, %v4702
    %v4705 = vmul.f32 %v4703, 1.442695
    %v4706 = vpow.pop %v4705
    %v4707 = vmul.f32 %v4704, 1.442695
    %v4708 = vpow.pop %v4707
    %v4709 = vsel %vm605, %v4706, 0.0
    %4710 = vadd.xlane.f32.xlu0 %v4709
    %v4711 = vpop.xlane.xlu0 %4710
    %v4712 = vsel %vm605, %v4708, 0.0
    %4713 = vadd.xlane.f32.xlu0 %v4712
    %v4714 = vpop.xlane.xlu0 %4713
    %v4715 = vrcp.pop %v4711
    %v4716 = vrcp.pop %v4714
    %v4717 = vmul.f32 %v4706, %v4715
    %v4718 = vmul.f32 %v4708, %v4716
    %4719 = vrot.lane.b32.xlu0 %v4278, 72
    %v4720 = vpop.permute.xlu0 %4719
    %4721 = vrot.lane.b32.xlu0 %v4281, 72
    %v4722 = vpop.permute.xlu0 %4721
    %v4726 = vsel %vm605, %v4717, 0
    %v4729 = vsel %vm605, %v4718, 0
    %4731 = vmatpush.msra.mxu0 0.0
    %4732 = vmatpush.msra.mxu0 0.0
    %4733 = vmatpush.msra.mxu0 0.0
    %4734 = vmatpush.msra.mxu0 0.0
    %4735 = vmatpush.msra.mxu0 0.0
    %4736 = vmatpush.msra.mxu0 0.0
    %4737 = vmatpush.msra.mxu0 0.0
    %4738 = vmatpush.msra.mxu0 0.0
    %4739 = vmatpush.msra.mxu0 0.0
    %4740 = vmatpush.msra.mxu0 0.0
    %4741 = vmatpush.msra.mxu0 0.0
    %4742 = vmatpush.msra.mxu0 0.0
    %4743 = vmatpush.msra.mxu0 0.0
    %4744 = vmatpush.msra.mxu0 0.0
    %4745 = vmatpush.msra.mxu0 %v4722
    %4746 = vmatpush.msra.mxu0 %v4720
    %4747 = vmatmul.f32.gmra.mxu0 %v4726
    %v4748 = vpop.f32.mrf.mxu0
    %v4749 = vadd.f32 0.0, %v4748
    %4750 = vmatmul.f32.gmra.mxu0 %v4729
    %v4751 = vpop.f32.mrf.mxu0
    %v4752 = vadd.f32 0.0, %v4751
    %4753 = vdwg.mxu0
    %v4755 = vsel %vm571, %v4749, 0
    %v4758 = vsel %vm571, %v4752, 0
    %4760 = vmatpush.msra.mxu0 0.0
    %4761 = vmatpush.msra.mxu0 0.0
    %4762 = vmatpush.msra.mxu0 0.0
    %4763 = vmatpush.msra.mxu0 0.0
    %4764 = vmatpush.msra.mxu0 0.0
    %4765 = vmatpush.msra.mxu0 0.0
    %4766 = vmatpush.msra.mxu0 0.0
    %4767 = vmatpush.msra.mxu0 0.0
    %4768 = vmatpush.msra.mxu0 0.0
    %4769 = vmatpush.msra.mxu0 0.0
    %4770 = vmatpush.msra.mxu0 0.0
    %4771 = vmatpush.msra.mxu0 0.0
    %4772 = vmatpush.msra.mxu0 0.0
    %4773 = vmatpush.msra.mxu0 0.0
    %4774 = vmatpush.msra.mxu0 0.0
    %4775 = vmatpush.msra.mxu0 %v4222
    %4776 = vmatmul.f32.gmra.mxu0 %v4755
    %v4777 = vpop.f32.mrf.mxu0
    %v4778 = vadd.f32 0.0, %v4777
    %4779 = vmatmul.f32.gmra.mxu0 %v4758
    %v4780 = vpop.f32.mrf.mxu0
    %v4781 = vadd.f32 0.0, %v4780
    %4782 = vdwg.mxu0
    %v4783 = vadd.f32 %v4656, %v4778
    %v4784 = vadd.f32 %v4657, %v4781
    %v4786 = vperm.slane %v4224, 0
    %v4788 = vadd.f32 %v4783, %v4786
    %v4789 = vadd.f32 %v4784, %v4786
    %v4790 = vadd.f32 %v4202, %v4788
    %v4791 = vadd.f32 %v4203, %v4789
    %s4792 = scalar_lea.vmem %s77, 1
    %v4793 = vld [vmem:[%s4792] sm:$0x1]
    %s4794 = scalar_lea.vmem %s79, 1
    %v4795 = vld [vmem:[%s4794] sm:$0x1]
    %v4796 = vsel %vm459, %v4790, 0.0
    %4797 = vadd.xlane.f32.xlu0 %v4796
    %v4798 = vpop.xlane.xlu0 %4797
    %v4799 = vsel %vm459, %v4791, 0.0
    %4800 = vadd.xlane.f32.xlu0 %v4799
    %v4801 = vpop.xlane.xlu0 %4800
    %v4802 = vmul.f32 %v4798, %v472
    %v4803 = vmul.f32 %v4801, %v472
    %v4804 = vsub.f32 %v4790, %v4802
    %v4805 = vsub.f32 %v4791, %v4803
    %v4806 = vmul.f32 %v4804, %v4804
    %v4807 = vmul.f32 %v4805, %v4805
    %v4808 = vsel %vm459, %v4806, 0.0
    %4809 = vadd.xlane.f32.xlu0 %v4808
    %v4810 = vpop.xlane.xlu0 %4809
    %v4811 = vsel %vm459, %v4807, 0.0
    %4812 = vadd.xlane.f32.xlu0 %v4811
    %v4813 = vpop.xlane.xlu0 %4812
    %v4814 = vmul.f32 %v4810, %v472
    %v4815 = vmul.f32 %v4813, %v472
    %v4816 = vadd.f32 %v4814, 1e-05
    %v4817 = vadd.f32 %v4815, 1e-05
    %v4818 = vrsqrt.pop %v4816
    %v4819 = vmul.f32 %v4818, %v4816
    %v4820 = vmul.f32 %v4819, %v4818
    %v4821 = vmul.f32 0.5, %v4820
    %v4822 = vsub.f32 1.5, %v4821
    %v4823 = vmul.f32 %v4818, %v4822
    %vm4824 = vweird.f32 %v4816
    %vm4825 = vweird.f32 %v4818
    %vm4826 = vmor %vm4824, %vm4825
    %v4827 = vsel %vm4826, %v4818, %v4823
    %v4828 = vrsqrt.pop %v4817
    %v4829 = vmul.f32 %v4828, %v4817
    %v4830 = vmul.f32 %v4829, %v4828
    %v4831 = vmul.f32 0.5, %v4830
    %v4832 = vsub.f32 1.5, %v4831
    %v4833 = vmul.f32 %v4828, %v4832
    %vm4834 = vweird.f32 %v4817
    %vm4835 = vweird.f32 %v4828
    %vm4836 = vmor %vm4834, %vm4835
    %v4837 = vsel %vm4836, %v4828, %v4833
    %v4838 = vmul.f32 %v4804, %v4827
    %v4839 = vmul.f32 %v4805, %v4837
    %v4841 = vperm.slane %v4793, 0
    %v4843 = vmul.f32 %v4838, %v4841
    %v4844 = vmul.f32 %v4839, %v4841
    %v4846 = vperm.slane %v4795, 0
    %v4848 = vadd.f32 %v4843, %v4846
    %v4849 = vadd.f32 %v4844, %v4846
    %s4850 = scalar_lea.vmem %s81, 32
    %v4851 = vld [vmem:[%s4850] sm:$0xff]
    %v4852 = vld [vmem:[%s4850 + $0x8] sm:$0xff]
    %v4853 = vld [vmem:[%s4850 + $0x10] sm:$0xff]
    %v4854 = vld [vmem:[%s4850 + $0x18] sm:$0xff]
    %s4855 = scalar_lea.vmem %s83, 1
    %v4856 = vld [vmem:[%s4855] sm:$0x1]
    %s4857 = scalar_lea.vmem [#allocation20], 64
    %v4858 = vld [vmem:[%s4857] sm:$0xff]
    %v4859 = vld [vmem:[%s4857 + $0x8] sm:$0xff]
    %v4860 = vld [vmem:[%s4857 + $0x10] sm:$0xff]
    %v4861 = vld [vmem:[%s4857 + $0x18] sm:$0xff]
    %v4862 = vld [vmem:[%s4857 + $0x20] sm:$0xff]
    %v4863 = vld [vmem:[%s4857 + $0x28] sm:$0xff]
    %v4864 = vld [vmem:[%s4857 + $0x30] sm:$0xff]
    %v4865 = vld [vmem:[%s4857 + $0x38] sm:$0xff]
    %s4866 = scalar_lea.vmem %s87, 1
    %v4867 = vld [vmem:[%s4866] sm:$0x1]
    %v4869 = vperm.slane %v4856, 0
    %v4872 = vsel %vm459, %v4848, 0
    %v4875 = vsel %vm459, %v4849, 0
    %4877 = vmatpush.msra.mxu0 0.0
    %4878 = vmatpush.msra.mxu0 0.0
    %4879 = vmatpush.msra.mxu0 0.0
    %4880 = vmatpush.msra.mxu0 0.0
    %4881 = vmatpush.msra.mxu0 0.0
    %4882 = vmatpush.msra.mxu0 0.0
    %4883 = vmatpush.msra.mxu0 0.0
    %4884 = vmatpush.msra.mxu0 0.0
    %4885 = vmatpush.msra.mxu0 0.0
    %4886 = vmatpush.msra.mxu0 0.0
    %4887 = vmatpush.msra.mxu0 0.0
    %4888 = vmatpush.msra.mxu0 0.0
    %4889 = vmatpush.msra.mxu0 %v4854
    %4890 = vmatpush.msra.mxu0 %v4853
    %4891 = vmatpush.msra.mxu0 %v4852
    %4892 = vmatpush.msra.mxu0 %v4851
    %4893 = vmatmul.f32.gmra.mxu0 %v4872
    %v4894 = vpop.f32.mrf.mxu0
    %v4895 = vadd.f32 %v4869, %v4894
    %4896 = vmatmul.f32.gmra.mxu0 %v4875
    %v4897 = vpop.f32.mrf.mxu0
    %v4898 = vadd.f32 %v4869, %v4897
    %4899 = vdwg.mxu0
    %v4900 = vmul.f32 %v4895, %v4895
    %v4901 = vmul.f32 %v4898, %v4898
    %v4902 = vmul.f32 %v4895, %v4900
    %v4903 = vmul.f32 %v4898, %v4901
    %v4904 = vmul.f32 %v4902, 0.044715
    %v4905 = vmul.f32 %v4903, 0.044715
    %v4906 = vadd.f32 %v4895, %v4904
    %v4907 = vadd.f32 %v4898, %v4905
    %v4908 = vmul.f32 %v4906, 0.7978846
    %v4909 = vmul.f32 %v4907, 0.7978846
    %v4910 = vtanh.pop %v4908
    %v4911 = vtanh.pop %v4909
    %v4912 = vadd.f32 %v4910, 1.0
    %v4913 = vadd.f32 %v4911, 1.0
    %v4914 = vmul.f32 %v4912, 0.5
    %v4915 = vmul.f32 %v4913, 0.5
    %v4916 = vmul.f32 %v4895, %v4914
    %v4917 = vmul.f32 %v4898, %v4915
    %v4919 = vperm.slane %v4867, 0
    %v4922 = vsel %vm427, %v4916, 0
    %v4925 = vsel %vm427, %v4917, 0
    %4927 = vmatpush.msra.mxu0 0.0
    %4928 = vmatpush.msra.mxu0 0.0
    %4929 = vmatpush.msra.mxu0 0.0
    %4930 = vmatpush.msra.mxu0 0.0
    %4931 = vmatpush.msra.mxu0 0.0
    %4932 = vmatpush.msra.mxu0 0.0
    %4933 = vmatpush.msra.mxu0 0.0
    %4934 = vmatpush.msra.mxu0 0.0
    %4935 = vmatpush.msra.mxu0 %v4865
    %4936 = vmatpush.msra.mxu0 %v4864
    %4937 = vmatpush.msra.mxu0 %v4863
    %4938 = vmatpush.msra.mxu0 %v4862
    %4939 = vmatpush.msra.mxu0 %v4861
    %4940 = vmatpush.msra.mxu0 %v4860
    %4941 = vmatpush.msra.mxu0 %v4859
    %4942 = vmatpush.msra.mxu0 %v4858
    %4943 = vmatmul.f32.gmra.mxu0 %v4922
    %v4944 = vpop.f32.mrf.mxu0
    %v4945 = vadd.f32 %v4919, %v4944
    %4946 = vmatmul.f32.gmra.mxu0 %v4925
    %v4947 = vpop.f32.mrf.mxu0
    %v4948 = vadd.f32 %v4919, %v4947
    %4949 = vdwg.mxu0
    %v4950 = vadd.f32 %v4848, %v4945
    %v4951 = vadd.f32 %v4849, %v4948
    %s4952 = scalar_lea.vmem %s89, 1
    %v4953 = vld [vmem:[%s4952] sm:$0x1]
    %s4954 = scalar_lea.vmem %s91, 1
    %v4955 = vld [vmem:[%s4954] sm:$0x1]
    %v4956 = vsel %vm459, %v4950, 0.0
    %4957 = vadd.xlane.f32.xlu0 %v4956
    %v4958 = vpop.xlane.xlu0 %4957
    %v4959 = vsel %vm459, %v4951, 0.0
    %4960 = vadd.xlane.f32.xlu0 %v4959
    %v4961 = vpop.xlane.xlu0 %4960
    %v4962 = vmul.f32 %v4958, %v472
    %v4963 = vmul.f32 %v4961, %v472
    %v4964 = vsub.f32 %v4950, %v4962
    %v4965 = vsub.f32 %v4951, %v4963
    %v4966 = vmul.f32 %v4964, %v4964
    %v4967 = vmul.f32 %v4965, %v4965
    %v4968 = vsel %vm459, %v4966, 0.0
    %4969 = vadd.xlane.f32.xlu0 %v4968
    %v4970 = vpop.xlane.xlu0 %4969
    %v4971 = vsel %vm459, %v4967, 0.0
    %4972 = vadd.xlane.f32.xlu0 %v4971
    %v4973 = vpop.xlane.xlu0 %4972
    %v4974 = vmul.f32 %v4970, %v472
    %v4975 = vmul.f32 %v4973, %v472
    %v4976 = vadd.f32 %v4974, 1e-05
    %v4977 = vadd.f32 %v4975, 1e-05
    %v4978 = vrsqrt.pop %v4976
    %v4979 = vmul.f32 %v4978, %v4976
    %v4980 = vmul.f32 %v4979, %v4978
    %v4981 = vmul.f32 0.5, %v4980
    %v4982 = vsub.f32 1.5, %v4981
    %v4983 = vmul.f32 %v4978, %v4982
    %vm4984 = vweird.f32 %v4976
    %vm4985 = vweird.f32 %v4978
    %vm4986 = vmor %vm4984, %vm4985
    %v4987 = vsel %vm4986, %v4978, %v4983
    %v4988 = vrsqrt.pop %v4977
    %v4989 = vmul.f32 %v4988, %v4977
    %v4990 = vmul.f32 %v4989, %v4988
    %v4991 = vmul.f32 0.5, %v4990
    %v4992 = vsub.f32 1.5, %v4991
    %v4993 = vmul.f32 %v4988, %v4992
    %vm4994 = vweird.f32 %v4977
    %vm4995 = vweird.f32 %v4988
    %vm4996 = vmor %vm4994, %vm4995
    %v4997 = vsel %vm4996, %v4988, %v4993
    %v4998 = vmul.f32 %v4964, %v4987
    %v4999 = vmul.f32 %v4965, %v4997
    %v5001 = vperm.slane %v4953, 0
    %v5003 = vmul.f32 %v4998, %v5001
    %v5004 = vmul.f32 %v4999, %v5001
    %v5006 = vperm.slane %v4955, 0
    %v5008 = vadd.f32 %v5003, %v5006
    %v5009 = vadd.f32 %v5004, %v5006
    %v5010 = vld [vmem:[#allocation5] sm:$0xff]
    %v5011 = vld [vmem:[#allocation5 + $0x8] sm:$0xff]
    %v5012 = vld [vmem:[#allocation5 + $0x10] sm:$0xff]
    %v5013 = vld [vmem:[#allocation5 + $0x18] sm:$0xff]
    %v5014 = vld [vmem:[%s19] sm:$0x1]
    %v5016 = vperm.slane %v5014, 0
    %v5019 = vsel %vm459, %v5008, 0
    %v5022 = vsel %vm459, %v5009, 0
    %5024 = vmatpush.msra.mxu0 0.0
    %5025 = vmatpush.msra.mxu0 0.0
    %5026 = vmatpush.msra.mxu0 0.0
    %5027 = vmatpush.msra.mxu0 0.0
    %5028 = vmatpush.msra.mxu0 0.0
    %5029 = vmatpush.msra.mxu0 0.0
    %5030 = vmatpush.msra.mxu0 0.0
    %5031 = vmatpush.msra.mxu0 0.0
    %5032 = vmatpush.msra.mxu0 0.0
    %5033 = vmatpush.msra.mxu0 0.0
    %5034 = vmatpush.msra.mxu0 0.0
    %5035 = vmatpush.msra.mxu0 0.0
    %5036 = vmatpush.msra.mxu0 %v5013
    %5037 = vmatpush.msra.mxu0 %v5012
    %5038 = vmatpush.msra.mxu0 %v5011
    %5039 = vmatpush.msra.mxu0 %v5010
    %5040 = vmatmul.f32.gmra.mxu0 %v5019
    %v5041 = vpop.f32.mrf.mxu0
    %v5042 = vadd.f32 %v5016, %v5041
    %5043 = vmatmul.f32.gmra.mxu0 %v5022
    %v5044 = vpop.f32.mrf.mxu0
    %v5045 = vadd.f32 %v5016, %v5044
    %5046 = vdwg.mxu0
    %5047 = vst.msk [vmem:[#allocation22] sm:$0xff] %vm427, %v5042
    %5048 = vst.msk [vmem:[#allocation22 + $0x8] sm:$0xff] %vm427, %v5045
    %v5049 = vsel %vm427, %v5042, -inf
    %5050 = vmax.xlane.f32.xlu0 %v5049
    %v5051 = vpop.xlane.xlu0 %5050
    %v5052 = vsel %vm427, %v5045, -inf
    %5053 = vmax.xlane.f32.xlu0 %v5052
    %v5054 = vpop.xlane.xlu0 %5053
    %v5055 = vsub.f32 %v5042, %v5051
    %v5056 = vsub.f32 %v5045, %v5054
    %v5057 = vmul.f32 %v5055, 1.442695
    %v5058 = vpow.pop %v5057
    %v5059 = vmul.f32 %v5056, 1.442695
    %v5060 = vpow.pop %v5059
    %v5061 = vsel %vm427, %v5058, 0.0
    %5062 = vadd.xlane.f32.xlu0 %v5061
    %v5063 = vpop.xlane.xlu0 %5062
    %v5064 = vsel %vm427, %v5060, 0.0
    %5065 = vadd.xlane.f32.xlu0 %v5064
    %v5066 = vpop.xlane.xlu0 %5065
    %v5067 = vlog2.pop %v5063
    %v5068 = vmul.f32 %v5067, 0.6931472
    %v5069 = vlog2.pop %v5066
    %v5070 = vmul.f32 %v5069, 0.6931472
    %v5071 = vadd.f32 %v5068, %v5051
    %v5072 = vadd.f32 %v5070, %v5054
    %v5073 = vld [vmem:[%s5] sm:$0xff]
    %v5074 = vld [vmem:[%s5 + $0x8] sm:$0xff]
    %5075 = vset.pattern.permute.xlu0 0
    %5076 = vperm.xlu0 %5075, %v5073
    %v5077 = vpop.permute.xlu0 %5076
    %5078 = vset.pattern.permute.xlu0 0
    %5079 = vperm.xlu0 %5078, %v5074
    %v5080 = vpop.permute.xlu0 %5079
    %vm5081 = vcmp.eq.s32.totalorder %v396, %v5077
    %vm5082 = vcmp.eq.s32.totalorder %v396, %v5080
    %v5083 = vsel %vm5081, %v5042, 0.0
    %v5084 = vsel %vm5082, %v5045, 0.0
    %v5085 = vsel %vm427, %v5083, 0.0
    %5086 = vadd.xlane.f32.xlu0 %v5085
    %v5087 = vpop.xlane.xlu0 %5086
    %v5088 = vsel %vm427, %v5084, 0.0
    %5089 = vadd.xlane.f32.xlu0 %v5088
    %v5090 = vpop.xlane.xlu0 %5089
    %vm5091 = vcmp.ne.s32.totalorder %v5073, 4294967196
    %vm5092 = vcmp.ne.s32.totalorder %v5074, 4294967196
    %v5093 = vsel %vm5091, 1, 0
    %v5094 = vsel %vm5092, 1, 0
    %v5095 = vcvt.s32.f32 %v5093
    %v5096 = vcvt.s32.f32 %v5094
    %v5097 = vsub.f32 %v5071, %v5087
    %v5098 = vsub.f32 %v5072, %v5090
    %v5099 = vmul.f32 %v5097, %v5095
    %v5100 = vmul.f32 %v5098, %v5096
    %vm5101 = vcmask 7168
    %v5102 = vsel %vm5101, %v5099, 0.0
    %v5103 = vsel %vm5101, %v5100, 0.0
    %v5104 = vadd.f32 %v5102, %v5103
    %v5105 = vrot.slane %v5104, 4
    %v5106 = vadd.f32 %v5104, %v5105
    %v5107 = vrot.slane %v5106, 2
    %v5108 = vadd.f32 %v5106, %v5107
    %v5109 = vrot.slane %v5108, 1
    %v5110 = vadd.f32 %v5108, %v5109
    %v5111 = vsel %vm5101, %v5095, 0.0
    %v5112 = vsel %vm5101, %v5096, 0.0
    %v5113 = vadd.f32 %v5111, %v5112
    %v5114 = vrot.slane %v5113, 4
    %v5115 = vadd.f32 %v5113, %v5114
    %v5116 = vrot.slane %v5115, 2
    %v5117 = vadd.f32 %v5115, %v5116
    %v5118 = vrot.slane %v5117, 1
    %v5119 = vadd.f32 %v5117, %v5118
    %v5120 = vmax.f32 %v5119, 1.0
    %v5121 = vrcp.pop %v5120
    %v5122 = vmul.f32 %v5120, %v5121
    %v5123 = vsub.f32 1.0, %v5122
    %v5124 = vmul.f32 %v5121, %v5123
    %v5125 = vadd.f32 %v5121, %v5124
    %vm5126 = vweird.f32 %v5120
    %vm5127 = vweird.f32 %v5121
    %vm5128 = vmor %vm5126, %vm5127
    %v5129 = vsel %vm5128, %v5121, %v5125
    %v5130 = vand.u32 2147483647, %v5120
    %vm5131 = vcmp.eq.f32.partialorder %v5130, 8.507059e+37
    %v5132 = vand.u32 %v5120, 2147483648
    %v5133 = vor.u32 1.1754944e-38, %v5132
    %v5134 = vsel %vm5131, %v5133, %v5129
    %v5135 = vmul.f32 %v5110, %v5134
    %vm5136 = vcmask 0
    %5137 = vst.msk [vmem:[#allocation23] sm:$0x1] %vm5136, %v5135
    // Predicated region
    $region234: #{bart_forward.1} parent=1 // pred_check
      _
    $region235: #{bart_forward.1} parent=1 // pred_check_branch
      %5139 = sbr.rel (0) target = $region237
    $region236: #{bart_forward.1} parent=1 // pred_region
      %5141 = vsyncadd [#allocation4], 0
      %s5142 = sshll.u32 [#allocation22], 4
      %s5143 = int_to_ptr.vmem [resolvable:$true] %s5142
      %s5144 = sshll.u32 %s93, 4
      %s5145 = int_to_ptr.hbm [resolvable:$true] %s5144
      %5150 = dma.vmem_to_hbm [thread:$0]  %s5143, 256, %s5145, [#allocation4], 128, 128, 8
    $region237: #{bart_forward.1} parent=1 // pred_fallthru
      _
    // Predicated region
    $region238: #{bart_forward.1} parent=1 // pred_check
      _
    $region239: #{bart_forward.1} parent=1 // pred_check_branch
      %5152 = sbr.rel (0) target = $region241
    $region240: #{bart_forward.1} parent=1 // pred_region
      %5154 = vsyncadd [#allocation24], 0
      %s5156 = sshll.u32 [#allocation23], 4
      %s5157 = int_to_ptr.vmem [resolvable:$true] %s5156
      %s5158 = sshll.u32 %s95, 4
      %s5159 = int_to_ptr.hbm [resolvable:$true] %s5158
      %5161 = dma.vmem_to_hbm [thread:$0]  %s5157, 16, %s5159, [#allocation24]
    $region241: #{bart_forward.1} parent=1 // pred_fallthru
      _
    // Predicated region
    $region242: #{bart_forward.1} parent=1 // pred_check
      _
    $region243: #{bart_forward.1} parent=1 // pred_check_branch
      %5163 = sbr.rel (0) target = $region245
    $region244: #{bart_forward.1} parent=1 // pred_region
      %5165 = dma.done [#allocation4], 256
    $region245: #{bart_forward.1} parent=1 // pred_fallthru
      _
    // Predicated region
    $region246: #{bart_forward.1} parent=1 // pred_check
      _
    $region247: #{bart_forward.1} parent=1 // pred_check_branch
      %5167 = sbr.rel (0) target = $region249
    $region248: #{bart_forward.1} parent=1 // pred_region
      %5169 = dma.done [#allocation24], 16
    $region249: #{bart_forward.1} parent=1 // pred_fallthru
      _
    %5170 = vsyncpa [#allocation3], 1
    %5171 = vsyncpa [#allocation6], 1
    %5172 = vsyncpa [#allocation9], 1
    %5173 = vsyncpa [#allocation12], 1
    %5174 = vsyncpa [#allocation15], 1
    %5175 = vsyncpa [#allocation18], 1
    %5176 = vsyncpa [#allocation21], 1
    %5177 = vsyncpa [#allocation4], 1
    %5178 = vsyncpa [#allocation24], 1

</llo_original>
